<compile_context>
chip_gen: v5e
topology: v5e:2x2
jax: 0.10.0
libtpu: 0.0.40
codegen_flags: <defaults>
</compile_context>

<pallas_src>
import functools

import jax
import jax.numpy as jnp
from jax.experimental import pallas as pl
from jax.experimental.pallas import tpu as pltpu

_LANE = 128          # vreg lane width
_ACC_SUBL = 64       # accumulator sublanes per core -> 8 independent vregs
_NCORES = 2          # leading "core split" grid axis (2 TCs on v7x, no-op elsewhere)


@functools.lru_cache(maxsize=None)
def _kernel_config():
    """Returns (row_tile, vmem_limit_bytes) tuned per TPU generation."""
    try:
        vmem = int(pltpu.get_tpu_info().vmem_capacity_bytes)
    except Exception:
        vmem = 128 << 20  # conservative default
    if vmem >= (128 << 20):
        # v5e / v6e: 4 MiB per input block -> 16 MiB of double-buffered inputs.
        # Explicit limit keeps v5e (16 MiB default scoped VMEM) from shrinking it.
        return 8192, 40 << 20
    if vmem >= (64 << 20):
        # v7x-class: high HBM BW makes fixed per-step overhead the lever; 8 MiB
        # blocks -> 32 MiB of input buffers, limit kept < 64 MiB physical VMEM.
        return 16384, 48 << 20
    # Unknown / small-VMEM chip: stay inside the default scoped limit.
    return 4096, None


def _elem_loss(diff, loss_type):
    return jnp.abs(diff) if loss_type == "l1" else diff * diff


def _recon_sum_kernel(sr_ref, hr_ref, out_ref, *, loss_type, rows_valid,
                      row_tile, tiles_per_core, needs_mask):
    """Accumulates per-(sublane, lane) partial sums of |sr-hr| or (sr-hr)^2."""
    i = pl.program_id(1)  # reduction axis (last, "arbitrary")

    @pl.when(i == 0)
    def _():
        out_ref[...] = jnp.zeros_like(out_ref)

    d = sr_ref[...].astype(jnp.float32) - hr_ref[...].astype(jnp.float32)
    contrib = _elem_loss(d, loss_type)

    if needs_mask:
        # Only the trailing (partial / duplicated) tiles carry invalid rows:
        # zero them so the padded / clamped DMA contents never reach the sum.
        t = pl.program_id(0) * tiles_per_core + i          # global tile index
        base = t * row_tile
        row_idx = jax.lax.broadcasted_iota(jnp.int32, (row_tile, _LANE), 0)
        contrib = jnp.where(row_idx < (rows_valid - base), contrib, 0.0)

    # Fold (row_tile, 128) -> (row_tile/64, 64, 128) and reduce the leading
    # axis: 8 independent vreg accumulation chains (VPU ILP), no cross-lane
    # work.  The single cross-lane reduction happens once, in the wrapper.
    partial = jnp.sum(contrib.reshape(-1, _ACC_SUBL, _LANE), axis=0)
    out_ref[...] += partial.reshape(1, _ACC_SUBL, _LANE)


def reconstruction_loss(sr, hr, loss_type="l1"):
    """Pallas equivalent of ReconstructionLoss(type).forward(sr, hr)."""
    if loss_type not in ("l1", "l2"):
        raise SystemExit("Error: no such type of ReconstructionLoss!")
    assert sr.shape == hr.shape, "sr / hr shape mismatch"

    n = int(sr.size)
    sr_f = sr.reshape(-1)
    hr_f = hr.reshape(-1)

    row_tile, vmem_limit = _kernel_config()
    rows = n // _LANE

    # Fast path: tiny inputs (launch overhead dominates) or element count not a
    # multiple of 128.  A prefix-slice/pad would copy ~the whole tensor in HBM,
    # so the non-lane-aligned case uses the single fused XLA pass instead.
    # TODO(synk): cover n % 128 != 0 in-kernel with element-offset manual DMA
    # (memory_space=pl.ANY) to avoid even this fallback.
    if (n % _LANE) != 0 or rows < row_tile:
        d = sr_f.astype(jnp.float32) - hr_f.astype(jnp.float32)
        return jnp.mean(_elem_loss(d, loss_type))

    total_tiles = -(-rows // row_tile)                 # ceil-div, static
    tiles_per_core = -(-total_tiles // _NCORES)        # ceil-div, static
    assert tiles_per_core >= 1                         # grid=(2, 0) hazard guard
    needs_mask = (_NCORES * tiles_per_core * row_tile) != rows

    # Zero-copy reshape of the flat input; the kernel reads it in place.
    sr2d = sr_f.reshape(rows, _LANE)
    hr2d = hr_f.reshape(rows, _LANE)

    def in_map(c, i):
        # Clamp duplicated trailing tiles into range; they are fully masked
        # inside the kernel so they contribute exactly zero.
        return (jnp.minimum(c * tiles_per_core + i, total_tiles - 1), 0)

    kernel = functools.partial(
        _recon_sum_kernel, loss_type=loss_type, rows_valid=rows,
        row_tile=row_tile, tiles_per_core=tiles_per_core, needs_mask=needs_mask)

    bytes_in = n * (sr.dtype.itemsize + hr.dtype.itemsize)
    out_bytes = _NCORES * _ACC_SUBL * _LANE * 4

    # TODO(synk): on v7x, switch the leading axis to pltpu.CORE_PARALLEL once
    # chip-version detection is reliable, to guarantee the 2-TensorCore split.
    partial_sums = pl.pallas_call(
        kernel,
        out_shape=jax.ShapeDtypeStruct((_NCORES, _ACC_SUBL, _LANE), jnp.float32),
        grid=(_NCORES, tiles_per_core),
        in_specs=[
            pl.BlockSpec((row_tile, _LANE), in_map),
            pl.BlockSpec((row_tile, _LANE), in_map),
        ],
        # One resident accumulator block per core; lane-dense (64, 128) slab.
        out_specs=pl.BlockSpec((1, _ACC_SUBL, _LANE), lambda c, i: (c, 0, 0)),
        compiler_params=pltpu.CompilerParams(
            dimension_semantics=("parallel", "arbitrary"),
            vmem_limit_bytes=vmem_limit,
        ),
        cost_estimate=pl.CostEstimate(
            flops=3 * n, transcendentals=0, bytes_accessed=bytes_in + out_bytes),
    )(sr2d, hr2d)

    # Single final cross-lane reduction + 1/N scale, outside the kernel.
    return jnp.sum(partial_sums) / jnp.float32(n)


if __name__ == "__main__":
    key = jax.random.PRNGKey(0)
    k1, k2, k3, k4, k5, k6 = jax.random.split(key, 6)

    # Small NCHW shape (typical module use) -> pure-JAX fast path.
    sr_s = jax.random.normal(k1, (2, 4, 16, 16), dtype=jnp.float32)
    hr_s = jax.random.normal(k2, (2, 4, 16, 16), dtype=jnp.float32)

    # Larger shape exercising the Pallas kernel with an in-kernel masked tail
    # (3,686,400 elements = 28,800 lane-rows; not a multiple of any tile size).
    sr_m = jax.random.normal(k3, (2, 3, 1200, 512), dtype=jnp.float32)
    hr_m = jax.random.normal(k4, (2, 3, 1200, 512), dtype=jnp.float32)

    # Larger shape whose row count divides evenly on all generations
    # (4,194,304 elements = 32,768 lane-rows) -> unmasked kernel path.
    sr_b = jax.random.normal(k5, (2, 4, 1024, 512), dtype=jnp.float32)
    hr_b = jax.random.normal(k6, (2, 4, 1024, 512), dtype=jnp.float32)

    cases = ((sr_s, hr_s, 1e-5), (sr_m, hr_m, 1e-4), (sr_b, hr_b, 1e-4))
    refs = (("l1", lambda d: jnp.mean(jnp.abs(d))),
            ("l2", lambda d: jnp.mean(d * d)))

    for sr, hr, rtol in cases:
        for lt, ref_fn in refs:
            got = jax.block_until_ready(reconstruction_loss(sr, hr, loss_type=lt))
            ref = ref_fn(sr.astype(jnp.float32) - hr.astype(jnp.float32))
            assert jnp.allclose(got, ref, rtol=rtol, atol=1e-6), (
                lt, sr.shape, float(got), float(ref))

    print("KERNEL_OK")
</pallas_src>

<mosaic_0001>
module attributes {stable_mosaic.version = 11 : i64} {
  func.func @_recon_sum_kernel(%arg0: i32, %arg1: i32, %arg2: memref<8192x128xf32, #tpu.memory_space<vmem>>, %arg3: memref<8192x128xf32, #tpu.memory_space<vmem>>, %arg4: memref<1x64x128xf32, #tpu.memory_space<vmem>>) attributes {dimension_semantics = [#tpu.dimension_semantics<parallel>, #tpu.dimension_semantics<arbitrary>], iteration_bounds = array<i64: 2, 2>, scalar_prefetch = 0 : i64, scratch_operands = 0 : i64, tpu.core_type = #tpu.core_type<tc>, window_params = [{transform_indices = @transform_0, window_bounds = array<i64: 8192, 128>}, {transform_indices = @transform_1, window_bounds = array<i64: 8192, 128>}, {transform_indices = @transform_2, window_bounds = array<i64: 1, 64, 128>}]} {
    %c0_i32 = arith.constant 0 : i32
    %0 = arith.cmpi eq, %arg1, %c0_i32 : i32
    %1 = arith.extui %0 : i1 to i32
    %c0_i32_0 = arith.constant 0 : i32
    %2 = arith.cmpi ne, %1, %c0_i32_0 : i32
    scf.if %2 {
      %cst_11 = arith.constant 0.000000e+00 : f32
      %22 = vector.broadcast %cst_11 : f32 to vector<1x64x128xf32>
      %c0_12 = arith.constant 0 : index
      %c0_13 = arith.constant 0 : index
      %c0_14 = arith.constant 0 : index
      %23 = vector.load %arg4[%c0_12, %c0_13, %c0_14] : memref<1x64x128xf32, #tpu.memory_space<vmem>>, vector<1x64x128xf32>
      tpu.vector_store %arg4[%c0_12, %c0_13, %c0_14], %22 {strides = array<i32>} : memref<1x64x128xf32, #tpu.memory_space<vmem>>, vector<1x64x128xf32>,
    } else {
    }
    %c0 = arith.constant 0 : index
    %c0_1 = arith.constant 0 : index
    %3 = vector.load %arg2[%c0, %c0_1] : memref<8192x128xf32, #tpu.memory_space<vmem>>, vector<8192x128xf32>
    %c0_2 = arith.constant 0 : index
    %c0_3 = arith.constant 0 : index
    %4 = vector.load %arg3[%c0_2, %c0_3] : memref<8192x128xf32, #tpu.memory_space<vmem>>, vector<8192x128xf32>
    %5 = arith.subf %3, %4 : vector<8192x128xf32>
    %6 = math.absf %5 : vector<8192x128xf32>
    %c2_i32 = arith.constant 2 : i32
    %7 = arith.muli %arg0, %c2_i32 : i32
    %8 = arith.addi %7, %arg1 : i32
    %c8192_i32 = arith.constant 8192 : i32
    %9 = arith.muli %8, %c8192_i32 : i32
    %10 = tpu.iota {dimensions = array<i32: 0>} : vector<8192x128xi32>
    %c28800_i32 = arith.constant 28800 : i32
    %11 = arith.subi %c28800_i32, %9 : i32
    %12 = vector.broadcast %11 : i32 to vector<8192x128xi32>
    %13 = arith.cmpi slt, %10, %12 : vector<8192x128xi32>
    %cst = arith.constant 0.000000e+00 : f32
    %14 = vector.broadcast %cst : f32 to vector<8192x128xf32>
    %15 = arith.select %13, %6, %14 : vector<8192x128xi1>, vector<8192x128xf32>
    %16 = vector.shape_cast %15 : vector<8192x128xf32> to vector<128x64x128xf32>
    %cst_4 = arith.constant dense<0.000000e+00> : vector<64x128xf32>
    %17 = vector.multi_reduction <add>, %16, %cst_4 [0] : vector<128x64x128xf32> to vector<64x128xf32>
    %c0_5 = arith.constant 0 : index
    %c0_6 = arith.constant 0 : index
    %c0_7 = arith.constant 0 : index
    %18 = vector.load %arg4[%c0_5, %c0_6, %c0_7] : memref<1x64x128xf32, #tpu.memory_space<vmem>>, vector<1x64x128xf32>
    %19 = vector.shape_cast %17 : vector<64x128xf32> to vector<1x64x128xf32>
    %20 = arith.addf %18, %19 : vector<1x64x128xf32>
    %c0_8 = arith.constant 0 : index
    %c0_9 = arith.constant 0 : index
    %c0_10 = arith.constant 0 : index
    %21 = vector.load %arg4[%c0_8, %c0_9, %c0_10] : memref<1x64x128xf32, #tpu.memory_space<vmem>>, vector<1x64x128xf32>
    tpu.vector_store %arg4[%c0_8, %c0_9, %c0_10], %20 {strides = array<i32>} : memref<1x64x128xf32, #tpu.memory_space<vmem>>, vector<1x64x128xf32>,
    return
  }
  func.func @transform_0(%arg0: i32, %arg1: i32) -> (i32, i32) {
    %c2_i32 = arith.constant 2 : i32
    %0 = arith.muli %arg0, %c2_i32 : i32
    %1 = arith.addi %0, %arg1 : i32
    %c3_i32 = arith.constant 3 : i32
    %2 = arith.minsi %1, %c3_i32 : i32
    %c0_i32 = arith.constant 0 : i32
    %c0_i32_0 = arith.constant 0 : i32
    return %2, %c0_i32 : i32, i32
  }
  func.func @transform_1(%arg0: i32, %arg1: i32) -> (i32, i32) {
    %c2_i32 = arith.constant 2 : i32
    %0 = arith.muli %arg0, %c2_i32 : i32
    %1 = arith.addi %0, %arg1 : i32
    %c3_i32 = arith.constant 3 : i32
    %2 = arith.minsi %1, %c3_i32 : i32
    %c0_i32 = arith.constant 0 : i32
    %c0_i32_0 = arith.constant 0 : i32
    return %2, %c0_i32 : i32, i32
  }
  func.func @transform_2(%arg0: i32, %arg1: i32) -> (i32, i32, i32) {
    %c0_i32 = arith.constant 0 : i32
    %c0_i32_0 = arith.constant 0 : i32
    %c0_i32_1 = arith.constant 0 : i32
    return %arg0, %c0_i32, %c0_i32_0 : i32, i32, i32
  }
}

</mosaic_0001>

<llo_original>
// kernel: tpu_custom_call.1
$region0: #{tpu_custom_call.1}
  #allocation0 [shape = 'u32[]', space=smem, size = 0x4, offset = 0x4, fixed_abs, tag = 'smem constant byte address 0x4 - core index']
  #allocation1 [shape = 'u32[72,128]{1,0:T(1,128)}', space=vmem, size = 0x9000, scoped, tag = 'internal scratch']
  %s0 = inlined_call_operand.hbm [shape: f32[28800,128], index: 0, kind: input, shape index: {}]
  %s1 = inlined_call_operand.hbm [shape: f32[28800,128], index: 1, kind: input, shape index: {}]
  %s2 = inlined_call_operand.hbm [shape: f32[2,64,128], index: 2, kind: output, shape index: {}]
  %s3 = sld [smem:[#allocation0]]
  $region53: #{tpu_custom_call.1} parent=0
    _
  %s5 = ssub.s32 1, %s3
  %s6 = scalar_select 0, %s5, %s3
  $region1: #{tpu_custom_call.1} parent=0
    #allocation2 [shape = 'u8[8388608]{0}', space=vmem, size = 0x800000, scoped, tag = 'input window, operand 0']
    #allocation3 [shape = 's32[2]{0}', space=sflag, size = 0x8, scoped, tag = 'scoped memory for tpu_custom_call.1']
    #allocation4 [shape = 's32[2]{0}', space=sflag, size = 0x8, scoped, tag = 'scoped memory for tpu_custom_call.1']
    #allocation5 [shape = 'u8[8388608]{0}', space=vmem, size = 0x800000, scoped, tag = 'input window, operand 1']
    #allocation6 [shape = 's32[2]{0}', space=sflag, size = 0x8, scoped, tag = 'scoped memory for tpu_custom_call.1']
    #allocation7 [shape = 'u8[65536]{0}', space=vmem, size = 0x10000, scoped, tag = 'output window, operand 0']
    %7 = vsyncpa [#allocation3], 0
    %s8 = scalar_lea.sflag [#allocation3], 1
    %9 = vsyncpa %s8, 0
    %10 = vsyncpa [#allocation6], 0
    %s11 = scalar_lea.sflag [#allocation6], 1
    %12 = vsyncpa %s11, 0
    %13 = vsyncpa [#allocation4], 0
    %s14 = scalar_lea.sflag [#allocation4], 1
    %15 = vsyncpa %s14, 0
    loop: start=0, step=1, limit=6
    $region2: #{tpu_custom_call.1} parent=1 // loop_pre_header
      _
    $region3: #{tpu_custom_call.1} parent=1 // loop_header
      %s17 = sphi 0, %s21
      %p18 = scmp.ge.s32.totalorder %s17, 6
      %s24 = sphi 0, %s36
      %s25 = sphi 0, %s32
      %s26 = sphi 0, %s24
      %s27 = sphi 0, %s25
      %s28 = sphi 0, %s26
      %s29 = sphi 0, %s27
      %s47 = sphi 0, %s49
      %s50 = sphi 0, %s47
      %s51 = sphi 0, %s50
      %s67 = sphi 0, %s51
      %s81 = sphi 0, %s83
      %s84 = sphi 0, %s81
      %s85 = sphi 0, %s84
      %s101 = sphi 0, %s85
      %s107 = sphi 0, %s109
      %s110 = sphi 0, %s107
      %s111 = sphi 0, %s110
      %s127 = sphi 0, %s111
    $region4: #{tpu_custom_call.1} parent=1 // loop_header_branch
      %20 = sbr.rel (%p18) target = $region8
    $region5: #{tpu_custom_call.1} parent=1 // loop_body
      %s22 = ssub.s32 %s17, 1
      %s23 = ssub.s32 %s17, 2
      %s30 = sadd.s32 1, %s25
      %p31 = scmp.ge.s32.totalorder %s30, 2
      %s32 = scalar_select %p31, 0, %s30
      %s33 = sadd.s32 1, %s24
      %s34 = scalar_select %p31, %s33, %s24
      %p35 = scmp.ge.s32.totalorder %s34, 2
      %s36 = scalar_select %p35, 0, %s34
      %s37 = smul.u32 %s24, 2
      %s38 = sadd.s32 %s37, %s25
      %p39 = scmp.lt.s32.totalorder %s38, 3
      %s40 = scalar_select %p39, %s38, 3
      %s41 = smul.u32 %s36, 2
      %s42 = sadd.s32 %s41, %s32
      %p43 = scmp.lt.s32.totalorder %s42, 3
      %s44 = scalar_select %p43, %s42, 3
      %s45 = ssub.s32 %s40, %s44
      %p46 = scmp.eq.s32.totalorder %s45, 0
      %s48 = sadd.s32 %s47, 1
      %s49 = scalar_select %p46, %s47, %s48
      %p52 = pneg %p46
      %p53 = scmp.eq.s32.totalorder %s17, 3
      %p54 = por %p52, %p53
      %p55 = scmp.ne.s32.totalorder %s47, %s50
      %p56 = scmp.eq.s32.totalorder %s17, 0
      %p57 = por %p55, %p56
      %p58 = scmp.ne.s32.totalorder %s47, %s50
      %p59 = scmp.eq.s32.totalorder %s22, 3
      %p60 = por %p58, %p59
      %p61 = scmp.ne.s32.totalorder %s50, %s51
      %p62 = scmp.eq.s32.totalorder %s22, 0
      %p63 = por %p61, %p62
      %p64 = scmp.ne.s32.totalorder %s50, %s51
      %p65 = scmp.eq.s32.totalorder %s23, 3
      %p66 = por %p64, %p65
      %p68 = scmp.ne.s32.totalorder %s51, %s67
      %p69 = scmp.eq.s32.totalorder %s23, 0
      %p70 = por %p68, %p69
      %s71 = smul.u32 %s24, 2
      %s72 = sadd.s32 %s71, %s25
      %p73 = scmp.lt.s32.totalorder %s72, 3
      %s74 = scalar_select %p73, %s72, 3
      %s75 = smul.u32 %s36, 2
      %s76 = sadd.s32 %s75, %s32
      %p77 = scmp.lt.s32.totalorder %s76, 3
      %s78 = scalar_select %p77, %s76, 3
      %s79 = ssub.s32 %s74, %s78
      %p80 = scmp.eq.s32.totalorder %s79, 0
      %s82 = sadd.s32 %s81, 1
      %s83 = scalar_select %p80, %s81, %s82
      %p86 = pneg %p80
      %p87 = scmp.eq.s32.totalorder %s17, 3
      %p88 = por %p86, %p87
      %p89 = scmp.ne.s32.totalorder %s81, %s84
      %p90 = scmp.eq.s32.totalorder %s17, 0
      %p91 = por %p89, %p90
      %p92 = scmp.ne.s32.totalorder %s81, %s84
      %p93 = scmp.eq.s32.totalorder %s22, 3
      %p94 = por %p92, %p93
      %p95 = scmp.ne.s32.totalorder %s84, %s85
      %p96 = scmp.eq.s32.totalorder %s22, 0
      %p97 = por %p95, %p96
      %p98 = scmp.ne.s32.totalorder %s84, %s85
      %p99 = scmp.eq.s32.totalorder %s23, 3
      %p100 = por %p98, %p99
      %p102 = scmp.ne.s32.totalorder %s85, %s101
      %p103 = scmp.eq.s32.totalorder %s23, 0
      %p104 = por %p102, %p103
      %s105 = ssub.s32 %s24, %s36
      %p106 = scmp.eq.s32.totalorder %s105, 0
      %s108 = sadd.s32 %s107, 1
      %s109 = scalar_select %p106, %s107, %s108
      %p112 = pneg %p106
      %p113 = scmp.eq.s32.totalorder %s17, 3
      %p114 = por %p112, %p113
      %p115 = scmp.ne.s32.totalorder %s107, %s110
      %p116 = scmp.eq.s32.totalorder %s17, 0
      %p117 = por %p115, %p116
      %p118 = scmp.ne.s32.totalorder %s107, %s110
      %p119 = scmp.eq.s32.totalorder %s22, 3
      %p120 = por %p118, %p119
      %p121 = scmp.ne.s32.totalorder %s110, %s111
      %p122 = scmp.eq.s32.totalorder %s22, 0
      %p123 = por %p121, %p122
      %p124 = scmp.ne.s32.totalorder %s110, %s111
      %p125 = scmp.eq.s32.totalorder %s23, 3
      %p126 = por %p124, %p125
      %p128 = scmp.ne.s32.totalorder %s111, %s127
      %p129 = scmp.eq.s32.totalorder %s23, 0
      %p130 = por %p128, %p129
      %p131 = scmp.le.s32.totalorder 1, %s17
      %p132 = scmp.lt.s32.totalorder %s17, 5
      %p133 = pnand %p131, %p132
      %p134 = pneg %p133
      // Predicated region
      $region9: #{tpu_custom_call.1} parent=5 // pred_check
        _
      $region10: #{tpu_custom_call.1} parent=5 // pred_check_branch
        %136 = sbr.rel (%p133) target = $region12
      $region11: #{tpu_custom_call.1} parent=5 // pred_region
        %s137 = ssub.s32 %s17, 1
      $region12: #{tpu_custom_call.1} parent=5 // pred_fallthru
        _
      %p138 = scmp.lt.s32.totalorder %s17, 4
      // Predicated region
      $region13: #{tpu_custom_call.1} parent=5 // pred_check
        %p139 = pneg %p138
      $region14: #{tpu_custom_call.1} parent=5 // pred_check_branch
        %141 = sbr.rel (%p139) target = $region16
      $region15: #{tpu_custom_call.1} parent=5 // pred_region
        // Predicated region
        $region17: #{tpu_custom_call.1} parent=15 // pred_check
          %p142 = pneg %p57
        $region18: #{tpu_custom_call.1} parent=15 // pred_check_branch
          %144 = sbr.rel (%p142) target = $region20
        $region19: #{tpu_custom_call.1} parent=15 // pred_region
          %s145 = sand.u32 %s47, 1
          %s146 = scalar_lea.sflag [#allocation3], %s145
          %s147 = sand.u32 %s47, 1
          %s148 = smul.addr %s147, 8192
          %s149 = scalar_lea.vmem [#allocation2], %s148
          %s150 = smul.u32 %s24, 2
          %s151 = sadd.s32 %s150, %s25
          %p152 = scmp.lt.s32.totalorder %s151, 3
          %s153 = scalar_select %p152, %s151, 3
          %s154 = smul.u32 1024, %s153
          %s155 = ssub.s32 3600, %s154
          %p156 = scmp.lt.s32.totalorder %s155, 1024
          %s157 = scalar_select %p156, %s155, 1024
          %s158 = smul.u32 8, %s157
          %s159 = ssub.s32 8192, %s158
          %s160 = sshll.u32 %s159, 4
          %161 = vsyncadd %s146, %s160
          %p162 = scmp.ne.s32.totalorder 0, %s158
          %s163 = smul.addr %s154, 8
          %s164 = scalar_lea.hbm %s0, %s163
          %s165 = smul.u32 8, %s157
          %s166 = sshll.u32 %s164, 4
          %s167 = int_to_ptr.hbm [resolvable:$true] %s166
          %s168 = sshll.u32 %s149, 4
          %s169 = int_to_ptr.vmem [resolvable:$true] %s168
          %s170 = sshll.u32 %s165, 4
          %174 = dma.hbm_to_vmem [thread:$0]  (%p162), %s167, %s170, %s169, %s146, 128, 128, 8
        $region20: #{tpu_custom_call.1} parent=15 // pred_fallthru
          _
        // Predicated region
        $region21: #{tpu_custom_call.1} parent=15 // pred_check
          %p175 = pneg %p91
        $region22: #{tpu_custom_call.1} parent=15 // pred_check_branch
          %177 = sbr.rel (%p175) target = $region24
        $region23: #{tpu_custom_call.1} parent=15 // pred_region
          %s178 = sand.u32 %s81, 1
          %s179 = scalar_lea.sflag [#allocation6], %s178
          %s180 = sand.u32 %s81, 1
          %s181 = smul.addr %s180, 8192
          %s182 = scalar_lea.vmem [#allocation5], %s181
          %s183 = smul.u32 %s24, 2
          %s184 = sadd.s32 %s183, %s25
          %p185 = scmp.lt.s32.totalorder %s184, 3
          %s186 = scalar_select %p185, %s184, 3
          %s187 = smul.u32 1024, %s186
          %s188 = ssub.s32 3600, %s187
          %p189 = scmp.lt.s32.totalorder %s188, 1024
          %s190 = scalar_select %p189, %s188, 1024
          %s191 = smul.u32 8, %s190
          %s192 = ssub.s32 8192, %s191
          %s193 = sshll.u32 %s192, 4
          %194 = vsyncadd %s179, %s193
          %p195 = scmp.ne.s32.totalorder 0, %s191
          %s196 = smul.addr %s187, 8
          %s197 = scalar_lea.hbm %s1, %s196
          %s198 = smul.u32 8, %s190
          %s199 = sshll.u32 %s197, 4
          %s200 = int_to_ptr.hbm [resolvable:$true] %s199
          %s201 = sshll.u32 %s182, 4
          %s202 = int_to_ptr.vmem [resolvable:$true] %s201
          %s203 = sshll.u32 %s198, 4
          %207 = dma.hbm_to_vmem [thread:$0]  (%p195), %s200, %s203, %s202, %s179, 128, 128, 8
        $region24: #{tpu_custom_call.1} parent=15 // pred_fallthru
          _
      $region16: #{tpu_custom_call.1} parent=5 // pred_fallthru
        _
      %p208 = scmp.le.s32.totalorder 1, %s17
      %p209 = scmp.lt.s32.totalorder %s17, 5
      %p210 = pnand %p208, %p209
      %p211 = pneg %p210
      // Predicated region
      $region25: #{tpu_custom_call.1} parent=5 // pred_check
        _
      $region26: #{tpu_custom_call.1} parent=5 // pred_check_branch
        %213 = sbr.rel (%p210) target = $region28
      $region27: #{tpu_custom_call.1} parent=5 // pred_region
        %s214 = ssub.s32 %s17, 1
        %s215 = sand.u32 %s50, 1
        %s216 = scalar_lea.sflag [#allocation3], %s215
        %s217 = sand.u32 %s50, 1
        %s218 = smul.addr %s217, 8192
        %s219 = scalar_lea.vmem [#allocation2], %s218
        // Predicated region
        $region29: #{tpu_custom_call.1} parent=27 // pred_check
          %p220 = pneg %p63
        $region30: #{tpu_custom_call.1} parent=27 // pred_check_branch
          %222 = sbr.rel (%p220) target = $region32
        $region31: #{tpu_custom_call.1} parent=27 // pred_region
          %224 = dma.done %s216, 131072
        $region32: #{tpu_custom_call.1} parent=27 // pred_fallthru
          _
        %s225 = sand.u32 %s84, 1
        %s226 = scalar_lea.sflag [#allocation6], %s225
        %s227 = sand.u32 %s84, 1
        %s228 = smul.addr %s227, 8192
        %s229 = scalar_lea.vmem [#allocation5], %s228
        // Predicated region
        $region33: #{tpu_custom_call.1} parent=27 // pred_check
          %p230 = pneg %p97
        $region34: #{tpu_custom_call.1} parent=27 // pred_check_branch
          %232 = sbr.rel (%p230) target = $region36
        $region35: #{tpu_custom_call.1} parent=27 // pred_region
          %234 = dma.done %s226, 131072
        $region36: #{tpu_custom_call.1} parent=27 // pred_fallthru
          _
        %s235 = sand.u32 %s50, 1
        %s236 = scalar_lea.sflag [#allocation3], %s235
        %s237 = sand.u32 %s50, 1
        %s238 = smul.addr %s237, 8192
        %s239 = scalar_lea.vmem [#allocation2], %s238
        %p240 = pneg %p63
        %p241 = pneg %p60
        %s242 = sand.u32 %s84, 1
        %s243 = scalar_lea.sflag [#allocation6], %s242
        %s244 = sand.u32 %s84, 1
        %s245 = smul.addr %s244, 8192
        %s246 = scalar_lea.vmem [#allocation5], %s245
        %p247 = pneg %p97
        %p248 = pneg %p94
        %p249 = pneg %p123
        %p250 = pneg %p120
        %s251 = sand.u32 %s110, 1
        %s252 = scalar_lea.sflag [#allocation4], %s251
        %s253 = sand.u32 %s110, 1
        %s254 = smul.addr %s253, 64
        %s255 = scalar_lea.vmem [#allocation7], %s254
        %s256 = smul.u32 %s26, 2
        %s257 = sadd.s32 %s256, %s27
        %p258 = scmp.lt.s32.totalorder %s257, 3
        %s259 = scalar_select %p258, %s257, 3
        %s260 = smul.u32 1024, %s259
        %s261 = ssub.s32 3600, %s260
        %p262 = scmp.lt.s32.totalorder %s261, 1024
        %s263 = scalar_select %p262, %s261, 1024
        %s264 = smul.u32 8, %s263
        %s265 = smul.u32 %s26, 2
        %s266 = sadd.s32 %s265, %s27
        %p267 = scmp.lt.s32.totalorder %s266, 3
        %s268 = scalar_select %p267, %s266, 3
        %s269 = smul.u32 1024, %s268
        %s270 = ssub.s32 3600, %s269
        %p271 = scmp.lt.s32.totalorder %s270, 1024
        %s272 = scalar_select %p271, %s270, 1024
        %s273 = smul.u32 8, %s272
        %p274 = scmp.eq.s32.totalorder %s27, 0
        // Predicated region
        $region37: #{tpu_custom_call.1} parent=27 // pred_check
          %p275 = pneg %p274
        $region38: #{tpu_custom_call.1} parent=27 // pred_check_branch
          %277 = sbr.rel (%p275) target = $region40
        $region39: #{tpu_custom_call.1} parent=27 // pred_region
          %278 = vst [vmem:[%s255] sm:$0xff] 0.0
          %279 = vst [vmem:[%s255 + $0x8] sm:$0xff] 0.0
          %280 = vst [vmem:[%s255 + $0x10] sm:$0xff] 0.0
          %281 = vst [vmem:[%s255 + $0x18] sm:$0xff] 0.0
          %282 = vst [vmem:[%s255 + $0x20] sm:$0xff] 0.0
          %283 = vst [vmem:[%s255 + $0x28] sm:$0xff] 0.0
          %284 = vst [vmem:[%s255 + $0x30] sm:$0xff] 0.0
          %285 = vst [vmem:[%s255 + $0x38] sm:$0xff] 0.0
        $region40: #{tpu_custom_call.1} parent=27 // pred_fallthru
          _
        %v286 = vld [vmem:[%s219] sm:$0xff]
        %v287 = vld [vmem:[%s219 + $0x8] sm:$0xff]
        %v288 = vld [vmem:[%s219 + $0x10] sm:$0xff]
        %v289 = vld [vmem:[%s219 + $0x18] sm:$0xff]
        %v290 = vld [vmem:[%s219 + $0x20] sm:$0xff]
        %v291 = vld [vmem:[%s219 + $0x28] sm:$0xff]
        %v292 = vld [vmem:[%s219 + $0x30] sm:$0xff]
        %v293 = vld [vmem:[%s219 + $0x38] sm:$0xff]
        %v294 = vld [vmem:[%s219 + $0x40] sm:$0xff]
        %v295 = vld [vmem:[%s219 + $0x48] sm:$0xff]
        %v296 = vld [vmem:[%s219 + $0x50] sm:$0xff]
        %v297 = vld [vmem:[%s219 + $0x58] sm:$0xff]
        %v298 = vld [vmem:[%s219 + $0x60] sm:$0xff]
        %v299 = vld [vmem:[%s219 + $0x68] sm:$0xff]
        %v300 = vld [vmem:[%s219 + $0x70] sm:$0xff]
        %v301 = vld [vmem:[%s219 + $0x78] sm:$0xff]
        %v302 = vld [vmem:[%s219 + $0x80] sm:$0xff]
        %v303 = vld [vmem:[%s219 + $0x88] sm:$0xff]
        %v304 = vld [vmem:[%s219 + $0x90] sm:$0xff]
        %v305 = vld [vmem:[%s219 + $0x98] sm:$0xff]
        %v306 = vld [vmem:[%s219 + $0xa0] sm:$0xff]
        %v307 = vld [vmem:[%s219 + $0xa8] sm:$0xff]
        %v308 = vld [vmem:[%s219 + $0xb0] sm:$0xff]
        %v309 = vld [vmem:[%s219 + $0xb8] sm:$0xff]
        %v310 = vld [vmem:[%s219 + $0xc0] sm:$0xff]
        %v311 = vld [vmem:[%s219 + $0xc8] sm:$0xff]
        %v312 = vld [vmem:[%s219 + $0xd0] sm:$0xff]
        %v313 = vld [vmem:[%s219 + $0xd8] sm:$0xff]
        %v314 = vld [vmem:[%s219 + $0xe0] sm:$0xff]
        %v315 = vld [vmem:[%s219 + $0xe8] sm:$0xff]
        %v316 = vld [vmem:[%s219 + $0xf0] sm:$0xff]
        %v317 = vld [vmem:[%s219 + $0xf8] sm:$0xff]
        %v318 = vld [vmem:[%s219 + $0x100] sm:$0xff]
        %v319 = vld [vmem:[%s219 + $0x108] sm:$0xff]
        %v320 = vld [vmem:[%s219 + $0x110] sm:$0xff]
        %v321 = vld [vmem:[%s219 + $0x118] sm:$0xff]
        %v322 = vld [vmem:[%s219 + $0x120] sm:$0xff]
        %v323 = vld [vmem:[%s219 + $0x128] sm:$0xff]
        %v324 = vld [vmem:[%s219 + $0x130] sm:$0xff]
        %v325 = vld [vmem:[%s219 + $0x138] sm:$0xff]
        %v326 = vld [vmem:[%s219 + $0x140] sm:$0xff]
        %v327 = vld [vmem:[%s219 + $0x148] sm:$0xff]
        %v328 = vld [vmem:[%s219 + $0x150] sm:$0xff]
        %v329 = vld [vmem:[%s219 + $0x158] sm:$0xff]
        %v330 = vld [vmem:[%s219 + $0x160] sm:$0xff]
        %v331 = vld [vmem:[%s219 + $0x168] sm:$0xff]
        %v332 = vld [vmem:[%s219 + $0x170] sm:$0xff]
        %v333 = vld [vmem:[%s219 + $0x178] sm:$0xff]
        %v334 = vld [vmem:[%s219 + $0x180] sm:$0xff]
        %v335 = vld [vmem:[%s219 + $0x188] sm:$0xff]
        %v336 = vld [vmem:[%s219 + $0x190] sm:$0xff]
        %v337 = vld [vmem:[%s219 + $0x198] sm:$0xff]
        %v338 = vld [vmem:[%s219 + $0x1a0] sm:$0xff]
        %v339 = vld [vmem:[%s219 + $0x1a8] sm:$0xff]
        %v340 = vld [vmem:[%s219 + $0x1b0] sm:$0xff]
        %v341 = vld [vmem:[%s219 + $0x1b8] sm:$0xff]
        %v342 = vld [vmem:[%s219 + $0x1c0] sm:$0xff]
        %v343 = vld [vmem:[%s219 + $0x1c8] sm:$0xff]
        %v344 = vld [vmem:[%s219 + $0x1d0] sm:$0xff]
        %v345 = vld [vmem:[%s219 + $0x1d8] sm:$0xff]
        %v346 = vld [vmem:[%s219 + $0x1e0] sm:$0xff]
        %v347 = vld [vmem:[%s219 + $0x1e8] sm:$0xff]
        %v348 = vld [vmem:[%s219 + $0x1f0] sm:$0xff]
        %v349 = vld [vmem:[%s219 + $0x1f8] sm:$0xff]
        %v350 = vld [vmem:[%s219 + $0x200] sm:$0xff]
        %v351 = vld [vmem:[%s219 + $0x208] sm:$0xff]
        %v352 = vld [vmem:[%s219 + $0x210] sm:$0xff]
        %v353 = vld [vmem:[%s219 + $0x218] sm:$0xff]
        %v354 = vld [vmem:[%s219 + $0x220] sm:$0xff]
        %v355 = vld [vmem:[%s219 + $0x228] sm:$0xff]
        %v356 = vld [vmem:[%s219 + $0x230] sm:$0xff]
        %v357 = vld [vmem:[%s219 + $0x238] sm:$0xff]
        %v358 = vld [vmem:[%s219 + $0x240] sm:$0xff]
        %v359 = vld [vmem:[%s219 + $0x248] sm:$0xff]
        %v360 = vld [vmem:[%s219 + $0x250] sm:$0xff]
        %v361 = vld [vmem:[%s219 + $0x258] sm:$0xff]
        %v362 = vld [vmem:[%s219 + $0x260] sm:$0xff]
        %v363 = vld [vmem:[%s219 + $0x268] sm:$0xff]
        %v364 = vld [vmem:[%s219 + $0x270] sm:$0xff]
        %v365 = vld [vmem:[%s219 + $0x278] sm:$0xff]
        %v366 = vld [vmem:[%s219 + $0x280] sm:$0xff]
        %v367 = vld [vmem:[%s219 + $0x288] sm:$0xff]
        %v368 = vld [vmem:[%s219 + $0x290] sm:$0xff]
        %v369 = vld [vmem:[%s219 + $0x298] sm:$0xff]
        %v370 = vld [vmem:[%s219 + $0x2a0] sm:$0xff]
        %v371 = vld [vmem:[%s219 + $0x2a8] sm:$0xff]
        %v372 = vld [vmem:[%s219 + $0x2b0] sm:$0xff]
        %v373 = vld [vmem:[%s219 + $0x2b8] sm:$0xff]
        %v374 = vld [vmem:[%s219 + $0x2c0] sm:$0xff]
        %v375 = vld [vmem:[%s219 + $0x2c8] sm:$0xff]
        %v376 = vld [vmem:[%s219 + $0x2d0] sm:$0xff]
        %v377 = vld [vmem:[%s219 + $0x2d8] sm:$0xff]
        %v378 = vld [vmem:[%s219 + $0x2e0] sm:$0xff]
        %v379 = vld [vmem:[%s219 + $0x2e8] sm:$0xff]
        %v380 = vld [vmem:[%s219 + $0x2f0] sm:$0xff]
        %v381 = vld [vmem:[%s219 + $0x2f8] sm:$0xff]
        %v382 = vld [vmem:[%s219 + $0x300] sm:$0xff]
        %v383 = vld [vmem:[%s219 + $0x308] sm:$0xff]
        %v384 = vld [vmem:[%s219 + $0x310] sm:$0xff]
        %v385 = vld [vmem:[%s219 + $0x318] sm:$0xff]
        %v386 = vld [vmem:[%s219 + $0x320] sm:$0xff]
        %v387 = vld [vmem:[%s219 + $0x328] sm:$0xff]
        %v388 = vld [vmem:[%s219 + $0x330] sm:$0xff]
        %v389 = vld [vmem:[%s219 + $0x338] sm:$0xff]
        %v390 = vld [vmem:[%s219 + $0x340] sm:$0xff]
        %v391 = vld [vmem:[%s219 + $0x348] sm:$0xff]
        %v392 = vld [vmem:[%s219 + $0x350] sm:$0xff]
        %v393 = vld [vmem:[%s219 + $0x358] sm:$0xff]
        %v394 = vld [vmem:[%s219 + $0x360] sm:$0xff]
        %v395 = vld [vmem:[%s219 + $0x368] sm:$0xff]
        %v396 = vld [vmem:[%s219 + $0x370] sm:$0xff]
        %v397 = vld [vmem:[%s219 + $0x378] sm:$0xff]
        %v398 = vld [vmem:[%s219 + $0x380] sm:$0xff]
        %v399 = vld [vmem:[%s219 + $0x388] sm:$0xff]
        %v400 = vld [vmem:[%s219 + $0x390] sm:$0xff]
        %v401 = vld [vmem:[%s219 + $0x398] sm:$0xff]
        %v402 = vld [vmem:[%s219 + $0x3a0] sm:$0xff]
        %v403 = vld [vmem:[%s219 + $0x3a8] sm:$0xff]
        %v404 = vld [vmem:[%s219 + $0x3b0] sm:$0xff]
        %v405 = vld [vmem:[%s219 + $0x3b8] sm:$0xff]
        %v406 = vld [vmem:[%s219 + $0x3c0] sm:$0xff]
        %v407 = vld [vmem:[%s219 + $0x3c8] sm:$0xff]
        %v408 = vld [vmem:[%s219 + $0x3d0] sm:$0xff]
        %v409 = vld [vmem:[%s219 + $0x3d8] sm:$0xff]
        %v410 = vld [vmem:[%s219 + $0x3e0] sm:$0xff]
        %v411 = vld [vmem:[%s219 + $0x3e8] sm:$0xff]
        %v412 = vld [vmem:[%s219 + $0x3f0] sm:$0xff]
        %v413 = vld [vmem:[%s219 + $0x3f8] sm:$0xff]
        %v414 = vld [vmem:[%s219 + $0x400] sm:$0xff]
        %v415 = vld [vmem:[%s219 + $0x408] sm:$0xff]
        %v416 = vld [vmem:[%s219 + $0x410] sm:$0xff]
        %v417 = vld [vmem:[%s219 + $0x418] sm:$0xff]
        %v418 = vld [vmem:[%s219 + $0x420] sm:$0xff]
        %v419 = vld [vmem:[%s219 + $0x428] sm:$0xff]
        %v420 = vld [vmem:[%s219 + $0x430] sm:$0xff]
        %v421 = vld [vmem:[%s219 + $0x438] sm:$0xff]
        %v422 = vld [vmem:[%s219 + $0x440] sm:$0xff]
        %v423 = vld [vmem:[%s219 + $0x448] sm:$0xff]
        %v424 = vld [vmem:[%s219 + $0x450] sm:$0xff]
        %v425 = vld [vmem:[%s219 + $0x458] sm:$0xff]
        %v426 = vld [vmem:[%s219 + $0x460] sm:$0xff]
        %v427 = vld [vmem:[%s219 + $0x468] sm:$0xff]
        %v428 = vld [vmem:[%s219 + $0x470] sm:$0xff]
        %v429 = vld [vmem:[%s219 + $0x478] sm:$0xff]
        %v430 = vld [vmem:[%s219 + $0x480] sm:$0xff]
        %v431 = vld [vmem:[%s219 + $0x488] sm:$0xff]
        %v432 = vld [vmem:[%s219 + $0x490] sm:$0xff]
        %v433 = vld [vmem:[%s219 + $0x498] sm:$0xff]
        %v434 = vld [vmem:[%s219 + $0x4a0] sm:$0xff]
        %v435 = vld [vmem:[%s219 + $0x4a8] sm:$0xff]
        %v436 = vld [vmem:[%s219 + $0x4b0] sm:$0xff]
        %v437 = vld [vmem:[%s219 + $0x4b8] sm:$0xff]
        %v438 = vld [vmem:[%s219 + $0x4c0] sm:$0xff]
        %v439 = vld [vmem:[%s219 + $0x4c8] sm:$0xff]
        %v440 = vld [vmem:[%s219 + $0x4d0] sm:$0xff]
        %v441 = vld [vmem:[%s219 + $0x4d8] sm:$0xff]
        %v442 = vld [vmem:[%s219 + $0x4e0] sm:$0xff]
        %v443 = vld [vmem:[%s219 + $0x4e8] sm:$0xff]
        %v444 = vld [vmem:[%s219 + $0x4f0] sm:$0xff]
        %v445 = vld [vmem:[%s219 + $0x4f8] sm:$0xff]
        %v446 = vld [vmem:[%s219 + $0x500] sm:$0xff]
        %v447 = vld [vmem:[%s219 + $0x508] sm:$0xff]
        %v448 = vld [vmem:[%s219 + $0x510] sm:$0xff]
        %v449 = vld [vmem:[%s219 + $0x518] sm:$0xff]
        %v450 = vld [vmem:[%s219 + $0x520] sm:$0xff]
        %v451 = vld [vmem:[%s219 + $0x528] sm:$0xff]
        %v452 = vld [vmem:[%s219 + $0x530] sm:$0xff]
        %v453 = vld [vmem:[%s219 + $0x538] sm:$0xff]
        %v454 = vld [vmem:[%s219 + $0x540] sm:$0xff]
        %v455 = vld [vmem:[%s219 + $0x548] sm:$0xff]
        %v456 = vld [vmem:[%s219 + $0x550] sm:$0xff]
        %v457 = vld [vmem:[%s219 + $0x558] sm:$0xff]
        %v458 = vld [vmem:[%s219 + $0x560] sm:$0xff]
        %v459 = vld [vmem:[%s219 + $0x568] sm:$0xff]
        %v460 = vld [vmem:[%s219 + $0x570] sm:$0xff]
        %v461 = vld [vmem:[%s219 + $0x578] sm:$0xff]
        %v462 = vld [vmem:[%s219 + $0x580] sm:$0xff]
        %v463 = vld [vmem:[%s219 + $0x588] sm:$0xff]
        %v464 = vld [vmem:[%s219 + $0x590] sm:$0xff]
        %v465 = vld [vmem:[%s219 + $0x598] sm:$0xff]
        %v466 = vld [vmem:[%s219 + $0x5a0] sm:$0xff]
        %v467 = vld [vmem:[%s219 + $0x5a8] sm:$0xff]
        %v468 = vld [vmem:[%s219 + $0x5b0] sm:$0xff]
        %v469 = vld [vmem:[%s219 + $0x5b8] sm:$0xff]
        %v470 = vld [vmem:[%s219 + $0x5c0] sm:$0xff]
        %v471 = vld [vmem:[%s219 + $0x5c8] sm:$0xff]
        %v472 = vld [vmem:[%s219 + $0x5d0] sm:$0xff]
        %v473 = vld [vmem:[%s219 + $0x5d8] sm:$0xff]
        %v474 = vld [vmem:[%s219 + $0x5e0] sm:$0xff]
        %v475 = vld [vmem:[%s219 + $0x5e8] sm:$0xff]
        %v476 = vld [vmem:[%s219 + $0x5f0] sm:$0xff]
        %v477 = vld [vmem:[%s219 + $0x5f8] sm:$0xff]
        %v478 = vld [vmem:[%s219 + $0x600] sm:$0xff]
        %v479 = vld [vmem:[%s219 + $0x608] sm:$0xff]
        %v480 = vld [vmem:[%s219 + $0x610] sm:$0xff]
        %v481 = vld [vmem:[%s219 + $0x618] sm:$0xff]
        %v482 = vld [vmem:[%s219 + $0x620] sm:$0xff]
        %v483 = vld [vmem:[%s219 + $0x628] sm:$0xff]
        %v484 = vld [vmem:[%s219 + $0x630] sm:$0xff]
        %v485 = vld [vmem:[%s219 + $0x638] sm:$0xff]
        %v486 = vld [vmem:[%s219 + $0x640] sm:$0xff]
        %v487 = vld [vmem:[%s219 + $0x648] sm:$0xff]
        %v488 = vld [vmem:[%s219 + $0x650] sm:$0xff]
        %v489 = vld [vmem:[%s219 + $0x658] sm:$0xff]
        %v490 = vld [vmem:[%s219 + $0x660] sm:$0xff]
        %v491 = vld [vmem:[%s219 + $0x668] sm:$0xff]
        %v492 = vld [vmem:[%s219 + $0x670] sm:$0xff]
        %v493 = vld [vmem:[%s219 + $0x678] sm:$0xff]
        %v494 = vld [vmem:[%s219 + $0x680] sm:$0xff]
        %v495 = vld [vmem:[%s219 + $0x688] sm:$0xff]
        %v496 = vld [vmem:[%s219 + $0x690] sm:$0xff]
        %v497 = vld [vmem:[%s219 + $0x698] sm:$0xff]
        %v498 = vld [vmem:[%s219 + $0x6a0] sm:$0xff]
        %v499 = vld [vmem:[%s219 + $0x6a8] sm:$0xff]
        %v500 = vld [vmem:[%s219 + $0x6b0] sm:$0xff]
        %v501 = vld [vmem:[%s219 + $0x6b8] sm:$0xff]
        %v502 = vld [vmem:[%s219 + $0x6c0] sm:$0xff]
        %v503 = vld [vmem:[%s219 + $0x6c8] sm:$0xff]
        %v504 = vld [vmem:[%s219 + $0x6d0] sm:$0xff]
        %v505 = vld [vmem:[%s219 + $0x6d8] sm:$0xff]
        %v506 = vld [vmem:[%s219 + $0x6e0] sm:$0xff]
        %v507 = vld [vmem:[%s219 + $0x6e8] sm:$0xff]
        %v508 = vld [vmem:[%s219 + $0x6f0] sm:$0xff]
        %v509 = vld [vmem:[%s219 + $0x6f8] sm:$0xff]
        %v510 = vld [vmem:[%s219 + $0x700] sm:$0xff]
        %v511 = vld [vmem:[%s219 + $0x708] sm:$0xff]
        %v512 = vld [vmem:[%s219 + $0x710] sm:$0xff]
        %v513 = vld [vmem:[%s219 + $0x718] sm:$0xff]
        %v514 = vld [vmem:[%s219 + $0x720] sm:$0xff]
        %v515 = vld [vmem:[%s219 + $0x728] sm:$0xff]
        %v516 = vld [vmem:[%s219 + $0x730] sm:$0xff]
        %v517 = vld [vmem:[%s219 + $0x738] sm:$0xff]
        %v518 = vld [vmem:[%s219 + $0x740] sm:$0xff]
        %v519 = vld [vmem:[%s219 + $0x748] sm:$0xff]
        %v520 = vld [vmem:[%s219 + $0x750] sm:$0xff]
        %v521 = vld [vmem:[%s219 + $0x758] sm:$0xff]
        %v522 = vld [vmem:[%s219 + $0x760] sm:$0xff]
        %v523 = vld [vmem:[%s219 + $0x768] sm:$0xff]
        %v524 = vld [vmem:[%s219 + $0x770] sm:$0xff]
        %v525 = vld [vmem:[%s219 + $0x778] sm:$0xff]
        %v526 = vld [vmem:[%s219 + $0x780] sm:$0xff]
        %v527 = vld [vmem:[%s219 + $0x788] sm:$0xff]
        %v528 = vld [vmem:[%s219 + $0x790] sm:$0xff]
        %v529 = vld [vmem:[%s219 + $0x798] sm:$0xff]
        %v530 = vld [vmem:[%s219 + $0x7a0] sm:$0xff]
        %v531 = vld [vmem:[%s219 + $0x7a8] sm:$0xff]
        %v532 = vld [vmem:[%s219 + $0x7b0] sm:$0xff]
        %v533 = vld [vmem:[%s219 + $0x7b8] sm:$0xff]
        %v534 = vld [vmem:[%s219 + $0x7c0] sm:$0xff]
        %v535 = vld [vmem:[%s219 + $0x7c8] sm:$0xff]
        %v536 = vld [vmem:[%s219 + $0x7d0] sm:$0xff]
        %v537 = vld [vmem:[%s219 + $0x7d8] sm:$0xff]
        %v538 = vld [vmem:[%s219 + $0x7e0] sm:$0xff]
        %v539 = vld [vmem:[%s219 + $0x7e8] sm:$0xff]
        %v540 = vld [vmem:[%s219 + $0x7f0] sm:$0xff]
        %v541 = vld [vmem:[%s219 + $0x7f8] sm:$0xff]
        %v542 = vld [vmem:[%s219 + $0x800] sm:$0xff]
        %v543 = vld [vmem:[%s219 + $0x808] sm:$0xff]
        %v544 = vld [vmem:[%s219 + $0x810] sm:$0xff]
        %v545 = vld [vmem:[%s219 + $0x818] sm:$0xff]
        %v546 = vld [vmem:[%s219 + $0x820] sm:$0xff]
        %v547 = vld [vmem:[%s219 + $0x828] sm:$0xff]
        %v548 = vld [vmem:[%s219 + $0x830] sm:$0xff]
        %v549 = vld [vmem:[%s219 + $0x838] sm:$0xff]
        %v550 = vld [vmem:[%s219 + $0x840] sm:$0xff]
        %v551 = vld [vmem:[%s219 + $0x848] sm:$0xff]
        %v552 = vld [vmem:[%s219 + $0x850] sm:$0xff]
        %v553 = vld [vmem:[%s219 + $0x858] sm:$0xff]
        %v554 = vld [vmem:[%s219 + $0x860] sm:$0xff]
        %v555 = vld [vmem:[%s219 + $0x868] sm:$0xff]
        %v556 = vld [vmem:[%s219 + $0x870] sm:$0xff]
        %v557 = vld [vmem:[%s219 + $0x878] sm:$0xff]
        %v558 = vld [vmem:[%s219 + $0x880] sm:$0xff]
        %v559 = vld [vmem:[%s219 + $0x888] sm:$0xff]
        %v560 = vld [vmem:[%s219 + $0x890] sm:$0xff]
        %v561 = vld [vmem:[%s219 + $0x898] sm:$0xff]
        %v562 = vld [vmem:[%s219 + $0x8a0] sm:$0xff]
        %v563 = vld [vmem:[%s219 + $0x8a8] sm:$0xff]
        %v564 = vld [vmem:[%s219 + $0x8b0] sm:$0xff]
        %v565 = vld [vmem:[%s219 + $0x8b8] sm:$0xff]
        %v566 = vld [vmem:[%s219 + $0x8c0] sm:$0xff]
        %v567 = vld [vmem:[%s219 + $0x8c8] sm:$0xff]
        %v568 = vld [vmem:[%s219 + $0x8d0] sm:$0xff]
        %v569 = vld [vmem:[%s219 + $0x8d8] sm:$0xff]
        %v570 = vld [vmem:[%s219 + $0x8e0] sm:$0xff]
        %v571 = vld [vmem:[%s219 + $0x8e8] sm:$0xff]
        %v572 = vld [vmem:[%s219 + $0x8f0] sm:$0xff]
        %v573 = vld [vmem:[%s219 + $0x8f8] sm:$0xff]
        %v574 = vld [vmem:[%s219 + $0x900] sm:$0xff]
        %v575 = vld [vmem:[%s219 + $0x908] sm:$0xff]
        %v576 = vld [vmem:[%s219 + $0x910] sm:$0xff]
        %v577 = vld [vmem:[%s219 + $0x918] sm:$0xff]
        %v578 = vld [vmem:[%s219 + $0x920] sm:$0xff]
        %v579 = vld [vmem:[%s219 + $0x928] sm:$0xff]
        %v580 = vld [vmem:[%s219 + $0x930] sm:$0xff]
        %v581 = vld [vmem:[%s219 + $0x938] sm:$0xff]
        %v582 = vld [vmem:[%s219 + $0x940] sm:$0xff]
        %v583 = vld [vmem:[%s219 + $0x948] sm:$0xff]
        %v584 = vld [vmem:[%s219 + $0x950] sm:$0xff]
        %v585 = vld [vmem:[%s219 + $0x958] sm:$0xff]
        %v586 = vld [vmem:[%s219 + $0x960] sm:$0xff]
        %v587 = vld [vmem:[%s219 + $0x968] sm:$0xff]
        %v588 = vld [vmem:[%s219 + $0x970] sm:$0xff]
        %v589 = vld [vmem:[%s219 + $0x978] sm:$0xff]
        %v590 = vld [vmem:[%s219 + $0x980] sm:$0xff]
        %v591 = vld [vmem:[%s219 + $0x988] sm:$0xff]
        %v592 = vld [vmem:[%s219 + $0x990] sm:$0xff]
        %v593 = vld [vmem:[%s219 + $0x998] sm:$0xff]
        %v594 = vld [vmem:[%s219 + $0x9a0] sm:$0xff]
        %v595 = vld [vmem:[%s219 + $0x9a8] sm:$0xff]
        %v596 = vld [vmem:[%s219 + $0x9b0] sm:$0xff]
        %v597 = vld [vmem:[%s219 + $0x9b8] sm:$0xff]
        %v598 = vld [vmem:[%s219 + $0x9c0] sm:$0xff]
        %v599 = vld [vmem:[%s219 + $0x9c8] sm:$0xff]
        %v600 = vld [vmem:[%s219 + $0x9d0] sm:$0xff]
        %v601 = vld [vmem:[%s219 + $0x9d8] sm:$0xff]
        %v602 = vld [vmem:[%s219 + $0x9e0] sm:$0xff]
        %v603 = vld [vmem:[%s219 + $0x9e8] sm:$0xff]
        %v604 = vld [vmem:[%s219 + $0x9f0] sm:$0xff]
        %v605 = vld [vmem:[%s219 + $0x9f8] sm:$0xff]
        %v606 = vld [vmem:[%s219 + $0xa00] sm:$0xff]
        %v607 = vld [vmem:[%s219 + $0xa08] sm:$0xff]
        %v608 = vld [vmem:[%s219 + $0xa10] sm:$0xff]
        %v609 = vld [vmem:[%s219 + $0xa18] sm:$0xff]
        %v610 = vld [vmem:[%s219 + $0xa20] sm:$0xff]
        %v611 = vld [vmem:[%s219 + $0xa28] sm:$0xff]
        %v612 = vld [vmem:[%s219 + $0xa30] sm:$0xff]
        %v613 = vld [vmem:[%s219 + $0xa38] sm:$0xff]
        %v614 = vld [vmem:[%s219 + $0xa40] sm:$0xff]
        %v615 = vld [vmem:[%s219 + $0xa48] sm:$0xff]
        %v616 = vld [vmem:[%s219 + $0xa50] sm:$0xff]
        %v617 = vld [vmem:[%s219 + $0xa58] sm:$0xff]
        %v618 = vld [vmem:[%s219 + $0xa60] sm:$0xff]
        %v619 = vld [vmem:[%s219 + $0xa68] sm:$0xff]
        %v620 = vld [vmem:[%s219 + $0xa70] sm:$0xff]
        %v621 = vld [vmem:[%s219 + $0xa78] sm:$0xff]
        %v622 = vld [vmem:[%s219 + $0xa80] sm:$0xff]
        %v623 = vld [vmem:[%s219 + $0xa88] sm:$0xff]
        %v624 = vld [vmem:[%s219 + $0xa90] sm:$0xff]
        %v625 = vld [vmem:[%s219 + $0xa98] sm:$0xff]
        %v626 = vld [vmem:[%s219 + $0xaa0] sm:$0xff]
        %v627 = vld [vmem:[%s219 + $0xaa8] sm:$0xff]
        %v628 = vld [vmem:[%s219 + $0xab0] sm:$0xff]
        %v629 = vld [vmem:[%s219 + $0xab8] sm:$0xff]
        %v630 = vld [vmem:[%s219 + $0xac0] sm:$0xff]
        %v631 = vld [vmem:[%s219 + $0xac8] sm:$0xff]
        %v632 = vld [vmem:[%s219 + $0xad0] sm:$0xff]
        %v633 = vld [vmem:[%s219 + $0xad8] sm:$0xff]
        %v634 = vld [vmem:[%s219 + $0xae0] sm:$0xff]
        %v635 = vld [vmem:[%s219 + $0xae8] sm:$0xff]
        %v636 = vld [vmem:[%s219 + $0xaf0] sm:$0xff]
        %v637 = vld [vmem:[%s219 + $0xaf8] sm:$0xff]
        %v638 = vld [vmem:[%s219 + $0xb00] sm:$0xff]
        %v639 = vld [vmem:[%s219 + $0xb08] sm:$0xff]
        %v640 = vld [vmem:[%s219 + $0xb10] sm:$0xff]
        %v641 = vld [vmem:[%s219 + $0xb18] sm:$0xff]
        %v642 = vld [vmem:[%s219 + $0xb20] sm:$0xff]
        %v643 = vld [vmem:[%s219 + $0xb28] sm:$0xff]
        %v644 = vld [vmem:[%s219 + $0xb30] sm:$0xff]
        %v645 = vld [vmem:[%s219 + $0xb38] sm:$0xff]
        %v646 = vld [vmem:[%s219 + $0xb40] sm:$0xff]
        %v647 = vld [vmem:[%s219 + $0xb48] sm:$0xff]
        %v648 = vld [vmem:[%s219 + $0xb50] sm:$0xff]
        %v649 = vld [vmem:[%s219 + $0xb58] sm:$0xff]
        %v650 = vld [vmem:[%s219 + $0xb60] sm:$0xff]
        %v651 = vld [vmem:[%s219 + $0xb68] sm:$0xff]
        %v652 = vld [vmem:[%s219 + $0xb70] sm:$0xff]
        %v653 = vld [vmem:[%s219 + $0xb78] sm:$0xff]
        %v654 = vld [vmem:[%s219 + $0xb80] sm:$0xff]
        %v655 = vld [vmem:[%s219 + $0xb88] sm:$0xff]
        %v656 = vld [vmem:[%s219 + $0xb90] sm:$0xff]
        %v657 = vld [vmem:[%s219 + $0xb98] sm:$0xff]
        %v658 = vld [vmem:[%s219 + $0xba0] sm:$0xff]
        %v659 = vld [vmem:[%s219 + $0xba8] sm:$0xff]
        %v660 = vld [vmem:[%s219 + $0xbb0] sm:$0xff]
        %v661 = vld [vmem:[%s219 + $0xbb8] sm:$0xff]
        %v662 = vld [vmem:[%s219 + $0xbc0] sm:$0xff]
        %v663 = vld [vmem:[%s219 + $0xbc8] sm:$0xff]
        %v664 = vld [vmem:[%s219 + $0xbd0] sm:$0xff]
        %v665 = vld [vmem:[%s219 + $0xbd8] sm:$0xff]
        %v666 = vld [vmem:[%s219 + $0xbe0] sm:$0xff]
        %v667 = vld [vmem:[%s219 + $0xbe8] sm:$0xff]
        %v668 = vld [vmem:[%s219 + $0xbf0] sm:$0xff]
        %v669 = vld [vmem:[%s219 + $0xbf8] sm:$0xff]
        %v670 = vld [vmem:[%s219 + $0xc00] sm:$0xff]
        %v671 = vld [vmem:[%s219 + $0xc08] sm:$0xff]
        %v672 = vld [vmem:[%s219 + $0xc10] sm:$0xff]
        %v673 = vld [vmem:[%s219 + $0xc18] sm:$0xff]
        %v674 = vld [vmem:[%s219 + $0xc20] sm:$0xff]
        %v675 = vld [vmem:[%s219 + $0xc28] sm:$0xff]
        %v676 = vld [vmem:[%s219 + $0xc30] sm:$0xff]
        %v677 = vld [vmem:[%s219 + $0xc38] sm:$0xff]
        %v678 = vld [vmem:[%s219 + $0xc40] sm:$0xff]
        %v679 = vld [vmem:[%s219 + $0xc48] sm:$0xff]
        %v680 = vld [vmem:[%s219 + $0xc50] sm:$0xff]
        %v681 = vld [vmem:[%s219 + $0xc58] sm:$0xff]
        %v682 = vld [vmem:[%s219 + $0xc60] sm:$0xff]
        %v683 = vld [vmem:[%s219 + $0xc68] sm:$0xff]
        %v684 = vld [vmem:[%s219 + $0xc70] sm:$0xff]
        %v685 = vld [vmem:[%s219 + $0xc78] sm:$0xff]
        %v686 = vld [vmem:[%s219 + $0xc80] sm:$0xff]
        %v687 = vld [vmem:[%s219 + $0xc88] sm:$0xff]
        %v688 = vld [vmem:[%s219 + $0xc90] sm:$0xff]
        %v689 = vld [vmem:[%s219 + $0xc98] sm:$0xff]
        %v690 = vld [vmem:[%s219 + $0xca0] sm:$0xff]
        %v691 = vld [vmem:[%s219 + $0xca8] sm:$0xff]
        %v692 = vld [vmem:[%s219 + $0xcb0] sm:$0xff]
        %v693 = vld [vmem:[%s219 + $0xcb8] sm:$0xff]
        %v694 = vld [vmem:[%s219 + $0xcc0] sm:$0xff]
        %v695 = vld [vmem:[%s219 + $0xcc8] sm:$0xff]
        %v696 = vld [vmem:[%s219 + $0xcd0] sm:$0xff]
        %v697 = vld [vmem:[%s219 + $0xcd8] sm:$0xff]
        %v698 = vld [vmem:[%s219 + $0xce0] sm:$0xff]
        %v699 = vld [vmem:[%s219 + $0xce8] sm:$0xff]
        %v700 = vld [vmem:[%s219 + $0xcf0] sm:$0xff]
        %v701 = vld [vmem:[%s219 + $0xcf8] sm:$0xff]
        %v702 = vld [vmem:[%s219 + $0xd00] sm:$0xff]
        %v703 = vld [vmem:[%s219 + $0xd08] sm:$0xff]
        %v704 = vld [vmem:[%s219 + $0xd10] sm:$0xff]
        %v705 = vld [vmem:[%s219 + $0xd18] sm:$0xff]
        %v706 = vld [vmem:[%s219 + $0xd20] sm:$0xff]
        %v707 = vld [vmem:[%s219 + $0xd28] sm:$0xff]
        %v708 = vld [vmem:[%s219 + $0xd30] sm:$0xff]
        %v709 = vld [vmem:[%s219 + $0xd38] sm:$0xff]
        %v710 = vld [vmem:[%s219 + $0xd40] sm:$0xff]
        %v711 = vld [vmem:[%s219 + $0xd48] sm:$0xff]
        %v712 = vld [vmem:[%s219 + $0xd50] sm:$0xff]
        %v713 = vld [vmem:[%s219 + $0xd58] sm:$0xff]
        %v714 = vld [vmem:[%s219 + $0xd60] sm:$0xff]
        %v715 = vld [vmem:[%s219 + $0xd68] sm:$0xff]
        %v716 = vld [vmem:[%s219 + $0xd70] sm:$0xff]
        %v717 = vld [vmem:[%s219 + $0xd78] sm:$0xff]
        %v718 = vld [vmem:[%s219 + $0xd80] sm:$0xff]
        %v719 = vld [vmem:[%s219 + $0xd88] sm:$0xff]
        %v720 = vld [vmem:[%s219 + $0xd90] sm:$0xff]
        %v721 = vld [vmem:[%s219 + $0xd98] sm:$0xff]
        %v722 = vld [vmem:[%s219 + $0xda0] sm:$0xff]
        %v723 = vld [vmem:[%s219 + $0xda8] sm:$0xff]
        %v724 = vld [vmem:[%s219 + $0xdb0] sm:$0xff]
        %v725 = vld [vmem:[%s219 + $0xdb8] sm:$0xff]
        %v726 = vld [vmem:[%s219 + $0xdc0] sm:$0xff]
        %v727 = vld [vmem:[%s219 + $0xdc8] sm:$0xff]
        %v728 = vld [vmem:[%s219 + $0xdd0] sm:$0xff]
        %v729 = vld [vmem:[%s219 + $0xdd8] sm:$0xff]
        %v730 = vld [vmem:[%s219 + $0xde0] sm:$0xff]
        %v731 = vld [vmem:[%s219 + $0xde8] sm:$0xff]
        %v732 = vld [vmem:[%s219 + $0xdf0] sm:$0xff]
        %v733 = vld [vmem:[%s219 + $0xdf8] sm:$0xff]
        %v734 = vld [vmem:[%s219 + $0xe00] sm:$0xff]
        %v735 = vld [vmem:[%s219 + $0xe08] sm:$0xff]
        %v736 = vld [vmem:[%s219 + $0xe10] sm:$0xff]
        %v737 = vld [vmem:[%s219 + $0xe18] sm:$0xff]
        %v738 = vld [vmem:[%s219 + $0xe20] sm:$0xff]
        %v739 = vld [vmem:[%s219 + $0xe28] sm:$0xff]
        %v740 = vld [vmem:[%s219 + $0xe30] sm:$0xff]
        %v741 = vld [vmem:[%s219 + $0xe38] sm:$0xff]
        %v742 = vld [vmem:[%s219 + $0xe40] sm:$0xff]
        %v743 = vld [vmem:[%s219 + $0xe48] sm:$0xff]
        %v744 = vld [vmem:[%s219 + $0xe50] sm:$0xff]
        %v745 = vld [vmem:[%s219 + $0xe58] sm:$0xff]
        %v746 = vld [vmem:[%s219 + $0xe60] sm:$0xff]
        %v747 = vld [vmem:[%s219 + $0xe68] sm:$0xff]
        %v748 = vld [vmem:[%s219 + $0xe70] sm:$0xff]
        %v749 = vld [vmem:[%s219 + $0xe78] sm:$0xff]
        %v750 = vld [vmem:[%s219 + $0xe80] sm:$0xff]
        %v751 = vld [vmem:[%s219 + $0xe88] sm:$0xff]
        %v752 = vld [vmem:[%s219 + $0xe90] sm:$0xff]
        %v753 = vld [vmem:[%s219 + $0xe98] sm:$0xff]
        %v754 = vld [vmem:[%s219 + $0xea0] sm:$0xff]
        %v755 = vld [vmem:[%s219 + $0xea8] sm:$0xff]
        %v756 = vld [vmem:[%s219 + $0xeb0] sm:$0xff]
        %v757 = vld [vmem:[%s219 + $0xeb8] sm:$0xff]
        %v758 = vld [vmem:[%s219 + $0xec0] sm:$0xff]
        %v759 = vld [vmem:[%s219 + $0xec8] sm:$0xff]
        %v760 = vld [vmem:[%s219 + $0xed0] sm:$0xff]
        %v761 = vld [vmem:[%s219 + $0xed8] sm:$0xff]
        %v762 = vld [vmem:[%s219 + $0xee0] sm:$0xff]
        %v763 = vld [vmem:[%s219 + $0xee8] sm:$0xff]
        %v764 = vld [vmem:[%s219 + $0xef0] sm:$0xff]
        %v765 = vld [vmem:[%s219 + $0xef8] sm:$0xff]
        %v766 = vld [vmem:[%s219 + $0xf00] sm:$0xff]
        %v767 = vld [vmem:[%s219 + $0xf08] sm:$0xff]
        %v768 = vld [vmem:[%s219 + $0xf10] sm:$0xff]
        %v769 = vld [vmem:[%s219 + $0xf18] sm:$0xff]
        %v770 = vld [vmem:[%s219 + $0xf20] sm:$0xff]
        %v771 = vld [vmem:[%s219 + $0xf28] sm:$0xff]
        %v772 = vld [vmem:[%s219 + $0xf30] sm:$0xff]
        %v773 = vld [vmem:[%s219 + $0xf38] sm:$0xff]
        %v774 = vld [vmem:[%s219 + $0xf40] sm:$0xff]
        %v775 = vld [vmem:[%s219 + $0xf48] sm:$0xff]
        %v776 = vld [vmem:[%s219 + $0xf50] sm:$0xff]
        %v777 = vld [vmem:[%s219 + $0xf58] sm:$0xff]
        %v778 = vld [vmem:[%s219 + $0xf60] sm:$0xff]
        %v779 = vld [vmem:[%s219 + $0xf68] sm:$0xff]
        %v780 = vld [vmem:[%s219 + $0xf70] sm:$0xff]
        %v781 = vld [vmem:[%s219 + $0xf78] sm:$0xff]
        %v782 = vld [vmem:[%s219 + $0xf80] sm:$0xff]
        %v783 = vld [vmem:[%s219 + $0xf88] sm:$0xff]
        %v784 = vld [vmem:[%s219 + $0xf90] sm:$0xff]
        %v785 = vld [vmem:[%s219 + $0xf98] sm:$0xff]
        %v786 = vld [vmem:[%s219 + $0xfa0] sm:$0xff]
        %v787 = vld [vmem:[%s219 + $0xfa8] sm:$0xff]
        %v788 = vld [vmem:[%s219 + $0xfb0] sm:$0xff]
        %v789 = vld [vmem:[%s219 + $0xfb8] sm:$0xff]
        %v790 = vld [vmem:[%s219 + $0xfc0] sm:$0xff]
        %v791 = vld [vmem:[%s219 + $0xfc8] sm:$0xff]
        %v792 = vld [vmem:[%s219 + $0xfd0] sm:$0xff]
        %v793 = vld [vmem:[%s219 + $0xfd8] sm:$0xff]
        %v794 = vld [vmem:[%s219 + $0xfe0] sm:$0xff]
        %v795 = vld [vmem:[%s219 + $0xfe8] sm:$0xff]
        %v796 = vld [vmem:[%s219 + $0xff0] sm:$0xff]
        %v797 = vld [vmem:[%s219 + $0xff8] sm:$0xff]
        %v798 = vld [vmem:[%s219 + $0x1000] sm:$0xff]
        %v799 = vld [vmem:[%s219 + $0x1008] sm:$0xff]
        %v800 = vld [vmem:[%s219 + $0x1010] sm:$0xff]
        %v801 = vld [vmem:[%s219 + $0x1018] sm:$0xff]
        %v802 = vld [vmem:[%s219 + $0x1020] sm:$0xff]
        %v803 = vld [vmem:[%s219 + $0x1028] sm:$0xff]
        %v804 = vld [vmem:[%s219 + $0x1030] sm:$0xff]
        %v805 = vld [vmem:[%s219 + $0x1038] sm:$0xff]
        %v806 = vld [vmem:[%s219 + $0x1040] sm:$0xff]
        %v807 = vld [vmem:[%s219 + $0x1048] sm:$0xff]
        %v808 = vld [vmem:[%s219 + $0x1050] sm:$0xff]
        %v809 = vld [vmem:[%s219 + $0x1058] sm:$0xff]
        %v810 = vld [vmem:[%s219 + $0x1060] sm:$0xff]
        %v811 = vld [vmem:[%s219 + $0x1068] sm:$0xff]
        %v812 = vld [vmem:[%s219 + $0x1070] sm:$0xff]
        %v813 = vld [vmem:[%s219 + $0x1078] sm:$0xff]
        %v814 = vld [vmem:[%s219 + $0x1080] sm:$0xff]
        %v815 = vld [vmem:[%s219 + $0x1088] sm:$0xff]
        %v816 = vld [vmem:[%s219 + $0x1090] sm:$0xff]
        %v817 = vld [vmem:[%s219 + $0x1098] sm:$0xff]
        %v818 = vld [vmem:[%s219 + $0x10a0] sm:$0xff]
        %v819 = vld [vmem:[%s219 + $0x10a8] sm:$0xff]
        %v820 = vld [vmem:[%s219 + $0x10b0] sm:$0xff]
        %v821 = vld [vmem:[%s219 + $0x10b8] sm:$0xff]
        %v822 = vld [vmem:[%s219 + $0x10c0] sm:$0xff]
        %v823 = vld [vmem:[%s219 + $0x10c8] sm:$0xff]
        %v824 = vld [vmem:[%s219 + $0x10d0] sm:$0xff]
        %v825 = vld [vmem:[%s219 + $0x10d8] sm:$0xff]
        %v826 = vld [vmem:[%s219 + $0x10e0] sm:$0xff]
        %v827 = vld [vmem:[%s219 + $0x10e8] sm:$0xff]
        %v828 = vld [vmem:[%s219 + $0x10f0] sm:$0xff]
        %v829 = vld [vmem:[%s219 + $0x10f8] sm:$0xff]
        %v830 = vld [vmem:[%s219 + $0x1100] sm:$0xff]
        %v831 = vld [vmem:[%s219 + $0x1108] sm:$0xff]
        %v832 = vld [vmem:[%s219 + $0x1110] sm:$0xff]
        %v833 = vld [vmem:[%s219 + $0x1118] sm:$0xff]
        %v834 = vld [vmem:[%s219 + $0x1120] sm:$0xff]
        %v835 = vld [vmem:[%s219 + $0x1128] sm:$0xff]
        %v836 = vld [vmem:[%s219 + $0x1130] sm:$0xff]
        %v837 = vld [vmem:[%s219 + $0x1138] sm:$0xff]
        %v838 = vld [vmem:[%s219 + $0x1140] sm:$0xff]
        %v839 = vld [vmem:[%s219 + $0x1148] sm:$0xff]
        %v840 = vld [vmem:[%s219 + $0x1150] sm:$0xff]
        %v841 = vld [vmem:[%s219 + $0x1158] sm:$0xff]
        %v842 = vld [vmem:[%s219 + $0x1160] sm:$0xff]
        %v843 = vld [vmem:[%s219 + $0x1168] sm:$0xff]
        %v844 = vld [vmem:[%s219 + $0x1170] sm:$0xff]
        %v845 = vld [vmem:[%s219 + $0x1178] sm:$0xff]
        %v846 = vld [vmem:[%s219 + $0x1180] sm:$0xff]
        %v847 = vld [vmem:[%s219 + $0x1188] sm:$0xff]
        %v848 = vld [vmem:[%s219 + $0x1190] sm:$0xff]
        %v849 = vld [vmem:[%s219 + $0x1198] sm:$0xff]
        %v850 = vld [vmem:[%s219 + $0x11a0] sm:$0xff]
        %v851 = vld [vmem:[%s219 + $0x11a8] sm:$0xff]
        %v852 = vld [vmem:[%s219 + $0x11b0] sm:$0xff]
        %v853 = vld [vmem:[%s219 + $0x11b8] sm:$0xff]
        %v854 = vld [vmem:[%s219 + $0x11c0] sm:$0xff]
        %v855 = vld [vmem:[%s219 + $0x11c8] sm:$0xff]
        %v856 = vld [vmem:[%s219 + $0x11d0] sm:$0xff]
        %v857 = vld [vmem:[%s219 + $0x11d8] sm:$0xff]
        %v858 = vld [vmem:[%s219 + $0x11e0] sm:$0xff]
        %v859 = vld [vmem:[%s219 + $0x11e8] sm:$0xff]
        %v860 = vld [vmem:[%s219 + $0x11f0] sm:$0xff]
        %v861 = vld [vmem:[%s219 + $0x11f8] sm:$0xff]
        %v862 = vld [vmem:[%s219 + $0x1200] sm:$0xff]
        %v863 = vld [vmem:[%s219 + $0x1208] sm:$0xff]
        %v864 = vld [vmem:[%s219 + $0x1210] sm:$0xff]
        %v865 = vld [vmem:[%s219 + $0x1218] sm:$0xff]
        %v866 = vld [vmem:[%s219 + $0x1220] sm:$0xff]
        %v867 = vld [vmem:[%s219 + $0x1228] sm:$0xff]
        %v868 = vld [vmem:[%s219 + $0x1230] sm:$0xff]
        %v869 = vld [vmem:[%s219 + $0x1238] sm:$0xff]
        %v870 = vld [vmem:[%s219 + $0x1240] sm:$0xff]
        %v871 = vld [vmem:[%s219 + $0x1248] sm:$0xff]
        %v872 = vld [vmem:[%s219 + $0x1250] sm:$0xff]
        %v873 = vld [vmem:[%s219 + $0x1258] sm:$0xff]
        %v874 = vld [vmem:[%s219 + $0x1260] sm:$0xff]
        %v875 = vld [vmem:[%s219 + $0x1268] sm:$0xff]
        %v876 = vld [vmem:[%s219 + $0x1270] sm:$0xff]
        %v877 = vld [vmem:[%s219 + $0x1278] sm:$0xff]
        %v878 = vld [vmem:[%s219 + $0x1280] sm:$0xff]
        %v879 = vld [vmem:[%s219 + $0x1288] sm:$0xff]
        %v880 = vld [vmem:[%s219 + $0x1290] sm:$0xff]
        %v881 = vld [vmem:[%s219 + $0x1298] sm:$0xff]
        %v882 = vld [vmem:[%s219 + $0x12a0] sm:$0xff]
        %v883 = vld [vmem:[%s219 + $0x12a8] sm:$0xff]
        %v884 = vld [vmem:[%s219 + $0x12b0] sm:$0xff]
        %v885 = vld [vmem:[%s219 + $0x12b8] sm:$0xff]
        %v886 = vld [vmem:[%s219 + $0x12c0] sm:$0xff]
        %v887 = vld [vmem:[%s219 + $0x12c8] sm:$0xff]
        %v888 = vld [vmem:[%s219 + $0x12d0] sm:$0xff]
        %v889 = vld [vmem:[%s219 + $0x12d8] sm:$0xff]
        %v890 = vld [vmem:[%s219 + $0x12e0] sm:$0xff]
        %v891 = vld [vmem:[%s219 + $0x12e8] sm:$0xff]
        %v892 = vld [vmem:[%s219 + $0x12f0] sm:$0xff]
        %v893 = vld [vmem:[%s219 + $0x12f8] sm:$0xff]
        %v894 = vld [vmem:[%s219 + $0x1300] sm:$0xff]
        %v895 = vld [vmem:[%s219 + $0x1308] sm:$0xff]
        %v896 = vld [vmem:[%s219 + $0x1310] sm:$0xff]
        %v897 = vld [vmem:[%s219 + $0x1318] sm:$0xff]
        %v898 = vld [vmem:[%s219 + $0x1320] sm:$0xff]
        %v899 = vld [vmem:[%s219 + $0x1328] sm:$0xff]
        %v900 = vld [vmem:[%s219 + $0x1330] sm:$0xff]
        %v901 = vld [vmem:[%s219 + $0x1338] sm:$0xff]
        %v902 = vld [vmem:[%s219 + $0x1340] sm:$0xff]
        %v903 = vld [vmem:[%s219 + $0x1348] sm:$0xff]
        %v904 = vld [vmem:[%s219 + $0x1350] sm:$0xff]
        %v905 = vld [vmem:[%s219 + $0x1358] sm:$0xff]
        %v906 = vld [vmem:[%s219 + $0x1360] sm:$0xff]
        %v907 = vld [vmem:[%s219 + $0x1368] sm:$0xff]
        %v908 = vld [vmem:[%s219 + $0x1370] sm:$0xff]
        %v909 = vld [vmem:[%s219 + $0x1378] sm:$0xff]
        %v910 = vld [vmem:[%s219 + $0x1380] sm:$0xff]
        %v911 = vld [vmem:[%s219 + $0x1388] sm:$0xff]
        %v912 = vld [vmem:[%s219 + $0x1390] sm:$0xff]
        %v913 = vld [vmem:[%s219 + $0x1398] sm:$0xff]
        %v914 = vld [vmem:[%s219 + $0x13a0] sm:$0xff]
        %v915 = vld [vmem:[%s219 + $0x13a8] sm:$0xff]
        %v916 = vld [vmem:[%s219 + $0x13b0] sm:$0xff]
        %v917 = vld [vmem:[%s219 + $0x13b8] sm:$0xff]
        %v918 = vld [vmem:[%s219 + $0x13c0] sm:$0xff]
        %v919 = vld [vmem:[%s219 + $0x13c8] sm:$0xff]
        %v920 = vld [vmem:[%s219 + $0x13d0] sm:$0xff]
        %v921 = vld [vmem:[%s219 + $0x13d8] sm:$0xff]
        %v922 = vld [vmem:[%s219 + $0x13e0] sm:$0xff]
        %v923 = vld [vmem:[%s219 + $0x13e8] sm:$0xff]
        %v924 = vld [vmem:[%s219 + $0x13f0] sm:$0xff]
        %v925 = vld [vmem:[%s219 + $0x13f8] sm:$0xff]
        %v926 = vld [vmem:[%s219 + $0x1400] sm:$0xff]
        %v927 = vld [vmem:[%s219 + $0x1408] sm:$0xff]
        %v928 = vld [vmem:[%s219 + $0x1410] sm:$0xff]
        %v929 = vld [vmem:[%s219 + $0x1418] sm:$0xff]
        %v930 = vld [vmem:[%s219 + $0x1420] sm:$0xff]
        %v931 = vld [vmem:[%s219 + $0x1428] sm:$0xff]
        %v932 = vld [vmem:[%s219 + $0x1430] sm:$0xff]
        %v933 = vld [vmem:[%s219 + $0x1438] sm:$0xff]
        %v934 = vld [vmem:[%s219 + $0x1440] sm:$0xff]
        %v935 = vld [vmem:[%s219 + $0x1448] sm:$0xff]
        %v936 = vld [vmem:[%s219 + $0x1450] sm:$0xff]
        %v937 = vld [vmem:[%s219 + $0x1458] sm:$0xff]
        %v938 = vld [vmem:[%s219 + $0x1460] sm:$0xff]
        %v939 = vld [vmem:[%s219 + $0x1468] sm:$0xff]
        %v940 = vld [vmem:[%s219 + $0x1470] sm:$0xff]
        %v941 = vld [vmem:[%s219 + $0x1478] sm:$0xff]
        %v942 = vld [vmem:[%s219 + $0x1480] sm:$0xff]
        %v943 = vld [vmem:[%s219 + $0x1488] sm:$0xff]
        %v944 = vld [vmem:[%s219 + $0x1490] sm:$0xff]
        %v945 = vld [vmem:[%s219 + $0x1498] sm:$0xff]
        %v946 = vld [vmem:[%s219 + $0x14a0] sm:$0xff]
        %v947 = vld [vmem:[%s219 + $0x14a8] sm:$0xff]
        %v948 = vld [vmem:[%s219 + $0x14b0] sm:$0xff]
        %v949 = vld [vmem:[%s219 + $0x14b8] sm:$0xff]
        %v950 = vld [vmem:[%s219 + $0x14c0] sm:$0xff]
        %v951 = vld [vmem:[%s219 + $0x14c8] sm:$0xff]
        %v952 = vld [vmem:[%s219 + $0x14d0] sm:$0xff]
        %v953 = vld [vmem:[%s219 + $0x14d8] sm:$0xff]
        %v954 = vld [vmem:[%s219 + $0x14e0] sm:$0xff]
        %v955 = vld [vmem:[%s219 + $0x14e8] sm:$0xff]
        %v956 = vld [vmem:[%s219 + $0x14f0] sm:$0xff]
        %v957 = vld [vmem:[%s219 + $0x14f8] sm:$0xff]
        %v958 = vld [vmem:[%s219 + $0x1500] sm:$0xff]
        %v959 = vld [vmem:[%s219 + $0x1508] sm:$0xff]
        %v960 = vld [vmem:[%s219 + $0x1510] sm:$0xff]
        %v961 = vld [vmem:[%s219 + $0x1518] sm:$0xff]
        %v962 = vld [vmem:[%s219 + $0x1520] sm:$0xff]
        %v963 = vld [vmem:[%s219 + $0x1528] sm:$0xff]
        %v964 = vld [vmem:[%s219 + $0x1530] sm:$0xff]
        %v965 = vld [vmem:[%s219 + $0x1538] sm:$0xff]
        %v966 = vld [vmem:[%s219 + $0x1540] sm:$0xff]
        %v967 = vld [vmem:[%s219 + $0x1548] sm:$0xff]
        %v968 = vld [vmem:[%s219 + $0x1550] sm:$0xff]
        %v969 = vld [vmem:[%s219 + $0x1558] sm:$0xff]
        %v970 = vld [vmem:[%s219 + $0x1560] sm:$0xff]
        %v971 = vld [vmem:[%s219 + $0x1568] sm:$0xff]
        %v972 = vld [vmem:[%s219 + $0x1570] sm:$0xff]
        %v973 = vld [vmem:[%s219 + $0x1578] sm:$0xff]
        %v974 = vld [vmem:[%s219 + $0x1580] sm:$0xff]
        %v975 = vld [vmem:[%s219 + $0x1588] sm:$0xff]
        %v976 = vld [vmem:[%s219 + $0x1590] sm:$0xff]
        %v977 = vld [vmem:[%s219 + $0x1598] sm:$0xff]
        %v978 = vld [vmem:[%s219 + $0x15a0] sm:$0xff]
        %v979 = vld [vmem:[%s219 + $0x15a8] sm:$0xff]
        %v980 = vld [vmem:[%s219 + $0x15b0] sm:$0xff]
        %v981 = vld [vmem:[%s219 + $0x15b8] sm:$0xff]
        %v982 = vld [vmem:[%s219 + $0x15c0] sm:$0xff]
        %v983 = vld [vmem:[%s219 + $0x15c8] sm:$0xff]
        %v984 = vld [vmem:[%s219 + $0x15d0] sm:$0xff]
        %v985 = vld [vmem:[%s219 + $0x15d8] sm:$0xff]
        %v986 = vld [vmem:[%s219 + $0x15e0] sm:$0xff]
        %v987 = vld [vmem:[%s219 + $0x15e8] sm:$0xff]
        %v988 = vld [vmem:[%s219 + $0x15f0] sm:$0xff]
        %v989 = vld [vmem:[%s219 + $0x15f8] sm:$0xff]
        %v990 = vld [vmem:[%s219 + $0x1600] sm:$0xff]
        %v991 = vld [vmem:[%s219 + $0x1608] sm:$0xff]
        %v992 = vld [vmem:[%s219 + $0x1610] sm:$0xff]
        %v993 = vld [vmem:[%s219 + $0x1618] sm:$0xff]
        %v994 = vld [vmem:[%s219 + $0x1620] sm:$0xff]
        %v995 = vld [vmem:[%s219 + $0x1628] sm:$0xff]
        %v996 = vld [vmem:[%s219 + $0x1630] sm:$0xff]
        %v997 = vld [vmem:[%s219 + $0x1638] sm:$0xff]
        %v998 = vld [vmem:[%s219 + $0x1640] sm:$0xff]
        %v999 = vld [vmem:[%s219 + $0x1648] sm:$0xff]
        %v1000 = vld [vmem:[%s219 + $0x1650] sm:$0xff]
        %v1001 = vld [vmem:[%s219 + $0x1658] sm:$0xff]
        %v1002 = vld [vmem:[%s219 + $0x1660] sm:$0xff]
        %v1003 = vld [vmem:[%s219 + $0x1668] sm:$0xff]
        %v1004 = vld [vmem:[%s219 + $0x1670] sm:$0xff]
        %v1005 = vld [vmem:[%s219 + $0x1678] sm:$0xff]
        %v1006 = vld [vmem:[%s219 + $0x1680] sm:$0xff]
        %v1007 = vld [vmem:[%s219 + $0x1688] sm:$0xff]
        %v1008 = vld [vmem:[%s219 + $0x1690] sm:$0xff]
        %v1009 = vld [vmem:[%s219 + $0x1698] sm:$0xff]
        %v1010 = vld [vmem:[%s219 + $0x16a0] sm:$0xff]
        %v1011 = vld [vmem:[%s219 + $0x16a8] sm:$0xff]
        %v1012 = vld [vmem:[%s219 + $0x16b0] sm:$0xff]
        %v1013 = vld [vmem:[%s219 + $0x16b8] sm:$0xff]
        %v1014 = vld [vmem:[%s219 + $0x16c0] sm:$0xff]
        %v1015 = vld [vmem:[%s219 + $0x16c8] sm:$0xff]
        %v1016 = vld [vmem:[%s219 + $0x16d0] sm:$0xff]
        %v1017 = vld [vmem:[%s219 + $0x16d8] sm:$0xff]
        %v1018 = vld [vmem:[%s219 + $0x16e0] sm:$0xff]
        %v1019 = vld [vmem:[%s219 + $0x16e8] sm:$0xff]
        %v1020 = vld [vmem:[%s219 + $0x16f0] sm:$0xff]
        %v1021 = vld [vmem:[%s219 + $0x16f8] sm:$0xff]
        %v1022 = vld [vmem:[%s219 + $0x1700] sm:$0xff]
        %v1023 = vld [vmem:[%s219 + $0x1708] sm:$0xff]
        %v1024 = vld [vmem:[%s219 + $0x1710] sm:$0xff]
        %v1025 = vld [vmem:[%s219 + $0x1718] sm:$0xff]
        %v1026 = vld [vmem:[%s219 + $0x1720] sm:$0xff]
        %v1027 = vld [vmem:[%s219 + $0x1728] sm:$0xff]
        %v1028 = vld [vmem:[%s219 + $0x1730] sm:$0xff]
        %v1029 = vld [vmem:[%s219 + $0x1738] sm:$0xff]
        %v1030 = vld [vmem:[%s219 + $0x1740] sm:$0xff]
        %v1031 = vld [vmem:[%s219 + $0x1748] sm:$0xff]
        %v1032 = vld [vmem:[%s219 + $0x1750] sm:$0xff]
        %v1033 = vld [vmem:[%s219 + $0x1758] sm:$0xff]
        %v1034 = vld [vmem:[%s219 + $0x1760] sm:$0xff]
        %v1035 = vld [vmem:[%s219 + $0x1768] sm:$0xff]
        %v1036 = vld [vmem:[%s219 + $0x1770] sm:$0xff]
        %v1037 = vld [vmem:[%s219 + $0x1778] sm:$0xff]
        %v1038 = vld [vmem:[%s219 + $0x1780] sm:$0xff]
        %v1039 = vld [vmem:[%s219 + $0x1788] sm:$0xff]
        %v1040 = vld [vmem:[%s219 + $0x1790] sm:$0xff]
        %v1041 = vld [vmem:[%s219 + $0x1798] sm:$0xff]
        %v1042 = vld [vmem:[%s219 + $0x17a0] sm:$0xff]
        %v1043 = vld [vmem:[%s219 + $0x17a8] sm:$0xff]
        %v1044 = vld [vmem:[%s219 + $0x17b0] sm:$0xff]
        %v1045 = vld [vmem:[%s219 + $0x17b8] sm:$0xff]
        %v1046 = vld [vmem:[%s219 + $0x17c0] sm:$0xff]
        %v1047 = vld [vmem:[%s219 + $0x17c8] sm:$0xff]
        %v1048 = vld [vmem:[%s219 + $0x17d0] sm:$0xff]
        %v1049 = vld [vmem:[%s219 + $0x17d8] sm:$0xff]
        %v1050 = vld [vmem:[%s219 + $0x17e0] sm:$0xff]
        %v1051 = vld [vmem:[%s219 + $0x17e8] sm:$0xff]
        %v1052 = vld [vmem:[%s219 + $0x17f0] sm:$0xff]
        %v1053 = vld [vmem:[%s219 + $0x17f8] sm:$0xff]
        %v1054 = vld [vmem:[%s219 + $0x1800] sm:$0xff]
        %v1055 = vld [vmem:[%s219 + $0x1808] sm:$0xff]
        %v1056 = vld [vmem:[%s219 + $0x1810] sm:$0xff]
        %v1057 = vld [vmem:[%s219 + $0x1818] sm:$0xff]
        %v1058 = vld [vmem:[%s219 + $0x1820] sm:$0xff]
        %v1059 = vld [vmem:[%s219 + $0x1828] sm:$0xff]
        %v1060 = vld [vmem:[%s219 + $0x1830] sm:$0xff]
        %v1061 = vld [vmem:[%s219 + $0x1838] sm:$0xff]
        %v1062 = vld [vmem:[%s219 + $0x1840] sm:$0xff]
        %v1063 = vld [vmem:[%s219 + $0x1848] sm:$0xff]
        %v1064 = vld [vmem:[%s219 + $0x1850] sm:$0xff]
        %v1065 = vld [vmem:[%s219 + $0x1858] sm:$0xff]
        %v1066 = vld [vmem:[%s219 + $0x1860] sm:$0xff]
        %v1067 = vld [vmem:[%s219 + $0x1868] sm:$0xff]
        %v1068 = vld [vmem:[%s219 + $0x1870] sm:$0xff]
        %v1069 = vld [vmem:[%s219 + $0x1878] sm:$0xff]
        %v1070 = vld [vmem:[%s219 + $0x1880] sm:$0xff]
        %v1071 = vld [vmem:[%s219 + $0x1888] sm:$0xff]
        %v1072 = vld [vmem:[%s219 + $0x1890] sm:$0xff]
        %v1073 = vld [vmem:[%s219 + $0x1898] sm:$0xff]
        %v1074 = vld [vmem:[%s219 + $0x18a0] sm:$0xff]
        %v1075 = vld [vmem:[%s219 + $0x18a8] sm:$0xff]
        %v1076 = vld [vmem:[%s219 + $0x18b0] sm:$0xff]
        %v1077 = vld [vmem:[%s219 + $0x18b8] sm:$0xff]
        %v1078 = vld [vmem:[%s219 + $0x18c0] sm:$0xff]
        %v1079 = vld [vmem:[%s219 + $0x18c8] sm:$0xff]
        %v1080 = vld [vmem:[%s219 + $0x18d0] sm:$0xff]
        %v1081 = vld [vmem:[%s219 + $0x18d8] sm:$0xff]
        %v1082 = vld [vmem:[%s219 + $0x18e0] sm:$0xff]
        %v1083 = vld [vmem:[%s219 + $0x18e8] sm:$0xff]
        %v1084 = vld [vmem:[%s219 + $0x18f0] sm:$0xff]
        %v1085 = vld [vmem:[%s219 + $0x18f8] sm:$0xff]
        %v1086 = vld [vmem:[%s219 + $0x1900] sm:$0xff]
        %v1087 = vld [vmem:[%s219 + $0x1908] sm:$0xff]
        %v1088 = vld [vmem:[%s219 + $0x1910] sm:$0xff]
        %v1089 = vld [vmem:[%s219 + $0x1918] sm:$0xff]
        %v1090 = vld [vmem:[%s219 + $0x1920] sm:$0xff]
        %v1091 = vld [vmem:[%s219 + $0x1928] sm:$0xff]
        %v1092 = vld [vmem:[%s219 + $0x1930] sm:$0xff]
        %v1093 = vld [vmem:[%s219 + $0x1938] sm:$0xff]
        %v1094 = vld [vmem:[%s219 + $0x1940] sm:$0xff]
        %v1095 = vld [vmem:[%s219 + $0x1948] sm:$0xff]
        %v1096 = vld [vmem:[%s219 + $0x1950] sm:$0xff]
        %v1097 = vld [vmem:[%s219 + $0x1958] sm:$0xff]
        %v1098 = vld [vmem:[%s219 + $0x1960] sm:$0xff]
        %v1099 = vld [vmem:[%s219 + $0x1968] sm:$0xff]
        %v1100 = vld [vmem:[%s219 + $0x1970] sm:$0xff]
        %v1101 = vld [vmem:[%s219 + $0x1978] sm:$0xff]
        %v1102 = vld [vmem:[%s219 + $0x1980] sm:$0xff]
        %v1103 = vld [vmem:[%s219 + $0x1988] sm:$0xff]
        %v1104 = vld [vmem:[%s219 + $0x1990] sm:$0xff]
        %v1105 = vld [vmem:[%s219 + $0x1998] sm:$0xff]
        %v1106 = vld [vmem:[%s219 + $0x19a0] sm:$0xff]
        %v1107 = vld [vmem:[%s219 + $0x19a8] sm:$0xff]
        %v1108 = vld [vmem:[%s219 + $0x19b0] sm:$0xff]
        %v1109 = vld [vmem:[%s219 + $0x19b8] sm:$0xff]
        %v1110 = vld [vmem:[%s219 + $0x19c0] sm:$0xff]
        %v1111 = vld [vmem:[%s219 + $0x19c8] sm:$0xff]
        %v1112 = vld [vmem:[%s219 + $0x19d0] sm:$0xff]
        %v1113 = vld [vmem:[%s219 + $0x19d8] sm:$0xff]
        %v1114 = vld [vmem:[%s219 + $0x19e0] sm:$0xff]
        %v1115 = vld [vmem:[%s219 + $0x19e8] sm:$0xff]
        %v1116 = vld [vmem:[%s219 + $0x19f0] sm:$0xff]
        %v1117 = vld [vmem:[%s219 + $0x19f8] sm:$0xff]
        %v1118 = vld [vmem:[%s219 + $0x1a00] sm:$0xff]
        %v1119 = vld [vmem:[%s219 + $0x1a08] sm:$0xff]
        %v1120 = vld [vmem:[%s219 + $0x1a10] sm:$0xff]
        %v1121 = vld [vmem:[%s219 + $0x1a18] sm:$0xff]
        %v1122 = vld [vmem:[%s219 + $0x1a20] sm:$0xff]
        %v1123 = vld [vmem:[%s219 + $0x1a28] sm:$0xff]
        %v1124 = vld [vmem:[%s219 + $0x1a30] sm:$0xff]
        %v1125 = vld [vmem:[%s219 + $0x1a38] sm:$0xff]
        %v1126 = vld [vmem:[%s219 + $0x1a40] sm:$0xff]
        %v1127 = vld [vmem:[%s219 + $0x1a48] sm:$0xff]
        %v1128 = vld [vmem:[%s219 + $0x1a50] sm:$0xff]
        %v1129 = vld [vmem:[%s219 + $0x1a58] sm:$0xff]
        %v1130 = vld [vmem:[%s219 + $0x1a60] sm:$0xff]
        %v1131 = vld [vmem:[%s219 + $0x1a68] sm:$0xff]
        %v1132 = vld [vmem:[%s219 + $0x1a70] sm:$0xff]
        %v1133 = vld [vmem:[%s219 + $0x1a78] sm:$0xff]
        %v1134 = vld [vmem:[%s219 + $0x1a80] sm:$0xff]
        %v1135 = vld [vmem:[%s219 + $0x1a88] sm:$0xff]
        %v1136 = vld [vmem:[%s219 + $0x1a90] sm:$0xff]
        %v1137 = vld [vmem:[%s219 + $0x1a98] sm:$0xff]
        %v1138 = vld [vmem:[%s219 + $0x1aa0] sm:$0xff]
        %v1139 = vld [vmem:[%s219 + $0x1aa8] sm:$0xff]
        %v1140 = vld [vmem:[%s219 + $0x1ab0] sm:$0xff]
        %v1141 = vld [vmem:[%s219 + $0x1ab8] sm:$0xff]
        %v1142 = vld [vmem:[%s219 + $0x1ac0] sm:$0xff]
        %v1143 = vld [vmem:[%s219 + $0x1ac8] sm:$0xff]
        %v1144 = vld [vmem:[%s219 + $0x1ad0] sm:$0xff]
        %v1145 = vld [vmem:[%s219 + $0x1ad8] sm:$0xff]
        %v1146 = vld [vmem:[%s219 + $0x1ae0] sm:$0xff]
        %v1147 = vld [vmem:[%s219 + $0x1ae8] sm:$0xff]
        %v1148 = vld [vmem:[%s219 + $0x1af0] sm:$0xff]
        %v1149 = vld [vmem:[%s219 + $0x1af8] sm:$0xff]
        %v1150 = vld [vmem:[%s219 + $0x1b00] sm:$0xff]
        %v1151 = vld [vmem:[%s219 + $0x1b08] sm:$0xff]
        %v1152 = vld [vmem:[%s219 + $0x1b10] sm:$0xff]
        %v1153 = vld [vmem:[%s219 + $0x1b18] sm:$0xff]
        %v1154 = vld [vmem:[%s219 + $0x1b20] sm:$0xff]
        %v1155 = vld [vmem:[%s219 + $0x1b28] sm:$0xff]
        %v1156 = vld [vmem:[%s219 + $0x1b30] sm:$0xff]
        %v1157 = vld [vmem:[%s219 + $0x1b38] sm:$0xff]
        %v1158 = vld [vmem:[%s219 + $0x1b40] sm:$0xff]
        %v1159 = vld [vmem:[%s219 + $0x1b48] sm:$0xff]
        %v1160 = vld [vmem:[%s219 + $0x1b50] sm:$0xff]
        %v1161 = vld [vmem:[%s219 + $0x1b58] sm:$0xff]
        %v1162 = vld [vmem:[%s219 + $0x1b60] sm:$0xff]
        %v1163 = vld [vmem:[%s219 + $0x1b68] sm:$0xff]
        %v1164 = vld [vmem:[%s219 + $0x1b70] sm:$0xff]
        %v1165 = vld [vmem:[%s219 + $0x1b78] sm:$0xff]
        %v1166 = vld [vmem:[%s219 + $0x1b80] sm:$0xff]
        %v1167 = vld [vmem:[%s219 + $0x1b88] sm:$0xff]
        %v1168 = vld [vmem:[%s219 + $0x1b90] sm:$0xff]
        %v1169 = vld [vmem:[%s219 + $0x1b98] sm:$0xff]
        %v1170 = vld [vmem:[%s219 + $0x1ba0] sm:$0xff]
        %v1171 = vld [vmem:[%s219 + $0x1ba8] sm:$0xff]
        %v1172 = vld [vmem:[%s219 + $0x1bb0] sm:$0xff]
        %v1173 = vld [vmem:[%s219 + $0x1bb8] sm:$0xff]
        %v1174 = vld [vmem:[%s219 + $0x1bc0] sm:$0xff]
        %v1175 = vld [vmem:[%s219 + $0x1bc8] sm:$0xff]
        %v1176 = vld [vmem:[%s219 + $0x1bd0] sm:$0xff]
        %v1177 = vld [vmem:[%s219 + $0x1bd8] sm:$0xff]
        %v1178 = vld [vmem:[%s219 + $0x1be0] sm:$0xff]
        %v1179 = vld [vmem:[%s219 + $0x1be8] sm:$0xff]
        %v1180 = vld [vmem:[%s219 + $0x1bf0] sm:$0xff]
        %v1181 = vld [vmem:[%s219 + $0x1bf8] sm:$0xff]
        %v1182 = vld [vmem:[%s219 + $0x1c00] sm:$0xff]
        %v1183 = vld [vmem:[%s219 + $0x1c08] sm:$0xff]
        %v1184 = vld [vmem:[%s219 + $0x1c10] sm:$0xff]
        %v1185 = vld [vmem:[%s219 + $0x1c18] sm:$0xff]
        %v1186 = vld [vmem:[%s219 + $0x1c20] sm:$0xff]
        %v1187 = vld [vmem:[%s219 + $0x1c28] sm:$0xff]
        %v1188 = vld [vmem:[%s219 + $0x1c30] sm:$0xff]
        %v1189 = vld [vmem:[%s219 + $0x1c38] sm:$0xff]
        %v1190 = vld [vmem:[%s219 + $0x1c40] sm:$0xff]
        %v1191 = vld [vmem:[%s219 + $0x1c48] sm:$0xff]
        %v1192 = vld [vmem:[%s219 + $0x1c50] sm:$0xff]
        %v1193 = vld [vmem:[%s219 + $0x1c58] sm:$0xff]
        %v1194 = vld [vmem:[%s219 + $0x1c60] sm:$0xff]
        %v1195 = vld [vmem:[%s219 + $0x1c68] sm:$0xff]
        %v1196 = vld [vmem:[%s219 + $0x1c70] sm:$0xff]
        %v1197 = vld [vmem:[%s219 + $0x1c78] sm:$0xff]
        %v1198 = vld [vmem:[%s219 + $0x1c80] sm:$0xff]
        %v1199 = vld [vmem:[%s219 + $0x1c88] sm:$0xff]
        %v1200 = vld [vmem:[%s219 + $0x1c90] sm:$0xff]
        %v1201 = vld [vmem:[%s219 + $0x1c98] sm:$0xff]
        %v1202 = vld [vmem:[%s219 + $0x1ca0] sm:$0xff]
        %v1203 = vld [vmem:[%s219 + $0x1ca8] sm:$0xff]
        %v1204 = vld [vmem:[%s219 + $0x1cb0] sm:$0xff]
        %v1205 = vld [vmem:[%s219 + $0x1cb8] sm:$0xff]
        %v1206 = vld [vmem:[%s219 + $0x1cc0] sm:$0xff]
        %v1207 = vld [vmem:[%s219 + $0x1cc8] sm:$0xff]
        %v1208 = vld [vmem:[%s219 + $0x1cd0] sm:$0xff]
        %v1209 = vld [vmem:[%s219 + $0x1cd8] sm:$0xff]
        %v1210 = vld [vmem:[%s219 + $0x1ce0] sm:$0xff]
        %v1211 = vld [vmem:[%s219 + $0x1ce8] sm:$0xff]
        %v1212 = vld [vmem:[%s219 + $0x1cf0] sm:$0xff]
        %v1213 = vld [vmem:[%s219 + $0x1cf8] sm:$0xff]
        %v1214 = vld [vmem:[%s219 + $0x1d00] sm:$0xff]
        %v1215 = vld [vmem:[%s219 + $0x1d08] sm:$0xff]
        %v1216 = vld [vmem:[%s219 + $0x1d10] sm:$0xff]
        %v1217 = vld [vmem:[%s219 + $0x1d18] sm:$0xff]
        %v1218 = vld [vmem:[%s219 + $0x1d20] sm:$0xff]
        %v1219 = vld [vmem:[%s219 + $0x1d28] sm:$0xff]
        %v1220 = vld [vmem:[%s219 + $0x1d30] sm:$0xff]
        %v1221 = vld [vmem:[%s219 + $0x1d38] sm:$0xff]
        %v1222 = vld [vmem:[%s219 + $0x1d40] sm:$0xff]
        %v1223 = vld [vmem:[%s219 + $0x1d48] sm:$0xff]
        %v1224 = vld [vmem:[%s219 + $0x1d50] sm:$0xff]
        %v1225 = vld [vmem:[%s219 + $0x1d58] sm:$0xff]
        %v1226 = vld [vmem:[%s219 + $0x1d60] sm:$0xff]
        %v1227 = vld [vmem:[%s219 + $0x1d68] sm:$0xff]
        %v1228 = vld [vmem:[%s219 + $0x1d70] sm:$0xff]
        %v1229 = vld [vmem:[%s219 + $0x1d78] sm:$0xff]
        %v1230 = vld [vmem:[%s219 + $0x1d80] sm:$0xff]
        %v1231 = vld [vmem:[%s219 + $0x1d88] sm:$0xff]
        %v1232 = vld [vmem:[%s219 + $0x1d90] sm:$0xff]
        %v1233 = vld [vmem:[%s219 + $0x1d98] sm:$0xff]
        %v1234 = vld [vmem:[%s219 + $0x1da0] sm:$0xff]
        %v1235 = vld [vmem:[%s219 + $0x1da8] sm:$0xff]
        %v1236 = vld [vmem:[%s219 + $0x1db0] sm:$0xff]
        %v1237 = vld [vmem:[%s219 + $0x1db8] sm:$0xff]
        %v1238 = vld [vmem:[%s219 + $0x1dc0] sm:$0xff]
        %v1239 = vld [vmem:[%s219 + $0x1dc8] sm:$0xff]
        %v1240 = vld [vmem:[%s219 + $0x1dd0] sm:$0xff]
        %v1241 = vld [vmem:[%s219 + $0x1dd8] sm:$0xff]
        %v1242 = vld [vmem:[%s219 + $0x1de0] sm:$0xff]
        %v1243 = vld [vmem:[%s219 + $0x1de8] sm:$0xff]
        %v1244 = vld [vmem:[%s219 + $0x1df0] sm:$0xff]
        %v1245 = vld [vmem:[%s219 + $0x1df8] sm:$0xff]
        %v1246 = vld [vmem:[%s219 + $0x1e00] sm:$0xff]
        %v1247 = vld [vmem:[%s219 + $0x1e08] sm:$0xff]
        %v1248 = vld [vmem:[%s219 + $0x1e10] sm:$0xff]
        %v1249 = vld [vmem:[%s219 + $0x1e18] sm:$0xff]
        %v1250 = vld [vmem:[%s219 + $0x1e20] sm:$0xff]
        %v1251 = vld [vmem:[%s219 + $0x1e28] sm:$0xff]
        %v1252 = vld [vmem:[%s219 + $0x1e30] sm:$0xff]
        %v1253 = vld [vmem:[%s219 + $0x1e38] sm:$0xff]
        %v1254 = vld [vmem:[%s219 + $0x1e40] sm:$0xff]
        %v1255 = vld [vmem:[%s219 + $0x1e48] sm:$0xff]
        %v1256 = vld [vmem:[%s219 + $0x1e50] sm:$0xff]
        %v1257 = vld [vmem:[%s219 + $0x1e58] sm:$0xff]
        %v1258 = vld [vmem:[%s219 + $0x1e60] sm:$0xff]
        %v1259 = vld [vmem:[%s219 + $0x1e68] sm:$0xff]
        %v1260 = vld [vmem:[%s219 + $0x1e70] sm:$0xff]
        %v1261 = vld [vmem:[%s219 + $0x1e78] sm:$0xff]
        %v1262 = vld [vmem:[%s219 + $0x1e80] sm:$0xff]
        %v1263 = vld [vmem:[%s219 + $0x1e88] sm:$0xff]
        %v1264 = vld [vmem:[%s219 + $0x1e90] sm:$0xff]
        %v1265 = vld [vmem:[%s219 + $0x1e98] sm:$0xff]
        %v1266 = vld [vmem:[%s219 + $0x1ea0] sm:$0xff]
        %v1267 = vld [vmem:[%s219 + $0x1ea8] sm:$0xff]
        %v1268 = vld [vmem:[%s219 + $0x1eb0] sm:$0xff]
        %v1269 = vld [vmem:[%s219 + $0x1eb8] sm:$0xff]
        %v1270 = vld [vmem:[%s219 + $0x1ec0] sm:$0xff]
        %v1271 = vld [vmem:[%s219 + $0x1ec8] sm:$0xff]
        %v1272 = vld [vmem:[%s219 + $0x1ed0] sm:$0xff]
        %v1273 = vld [vmem:[%s219 + $0x1ed8] sm:$0xff]
        %v1274 = vld [vmem:[%s219 + $0x1ee0] sm:$0xff]
        %v1275 = vld [vmem:[%s219 + $0x1ee8] sm:$0xff]
        %v1276 = vld [vmem:[%s219 + $0x1ef0] sm:$0xff]
        %v1277 = vld [vmem:[%s219 + $0x1ef8] sm:$0xff]
        %v1278 = vld [vmem:[%s219 + $0x1f00] sm:$0xff]
        %v1279 = vld [vmem:[%s219 + $0x1f08] sm:$0xff]
        %v1280 = vld [vmem:[%s219 + $0x1f10] sm:$0xff]
        %v1281 = vld [vmem:[%s219 + $0x1f18] sm:$0xff]
        %v1282 = vld [vmem:[%s219 + $0x1f20] sm:$0xff]
        %v1283 = vld [vmem:[%s219 + $0x1f28] sm:$0xff]
        %v1284 = vld [vmem:[%s219 + $0x1f30] sm:$0xff]
        %v1285 = vld [vmem:[%s219 + $0x1f38] sm:$0xff]
        %v1286 = vld [vmem:[%s219 + $0x1f40] sm:$0xff]
        %v1287 = vld [vmem:[%s219 + $0x1f48] sm:$0xff]
        %v1288 = vld [vmem:[%s219 + $0x1f50] sm:$0xff]
        %v1289 = vld [vmem:[%s219 + $0x1f58] sm:$0xff]
        %v1290 = vld [vmem:[%s219 + $0x1f60] sm:$0xff]
        %v1291 = vld [vmem:[%s219 + $0x1f68] sm:$0xff]
        %v1292 = vld [vmem:[%s219 + $0x1f70] sm:$0xff]
        %v1293 = vld [vmem:[%s219 + $0x1f78] sm:$0xff]
        %v1294 = vld [vmem:[%s219 + $0x1f80] sm:$0xff]
        %v1295 = vld [vmem:[%s219 + $0x1f88] sm:$0xff]
        %v1296 = vld [vmem:[%s219 + $0x1f90] sm:$0xff]
        %v1297 = vld [vmem:[%s219 + $0x1f98] sm:$0xff]
        %v1298 = vld [vmem:[%s219 + $0x1fa0] sm:$0xff]
        %v1299 = vld [vmem:[%s219 + $0x1fa8] sm:$0xff]
        %v1300 = vld [vmem:[%s219 + $0x1fb0] sm:$0xff]
        %v1301 = vld [vmem:[%s219 + $0x1fb8] sm:$0xff]
        %v1302 = vld [vmem:[%s219 + $0x1fc0] sm:$0xff]
        %v1303 = vld [vmem:[%s219 + $0x1fc8] sm:$0xff]
        %v1304 = vld [vmem:[%s219 + $0x1fd0] sm:$0xff]
        %v1305 = vld [vmem:[%s219 + $0x1fd8] sm:$0xff]
        %v1306 = vld [vmem:[%s219 + $0x1fe0] sm:$0xff]
        %v1307 = vld [vmem:[%s219 + $0x1fe8] sm:$0xff]
        %v1308 = vld [vmem:[%s219 + $0x1ff0] sm:$0xff]
        %v1309 = vld [vmem:[%s219 + $0x1ff8] sm:$0xff]
        %v1310 = vld [vmem:[%s229] sm:$0xff]
        %v1311 = vld [vmem:[%s229 + $0x8] sm:$0xff]
        %v1312 = vld [vmem:[%s229 + $0x10] sm:$0xff]
        %v1313 = vld [vmem:[%s229 + $0x18] sm:$0xff]
        %v1314 = vld [vmem:[%s229 + $0x20] sm:$0xff]
        %v1315 = vld [vmem:[%s229 + $0x28] sm:$0xff]
        %v1316 = vld [vmem:[%s229 + $0x30] sm:$0xff]
        %v1317 = vld [vmem:[%s229 + $0x38] sm:$0xff]
        %v1318 = vld [vmem:[%s229 + $0x40] sm:$0xff]
        %v1319 = vld [vmem:[%s229 + $0x48] sm:$0xff]
        %v1320 = vld [vmem:[%s229 + $0x50] sm:$0xff]
        %v1321 = vld [vmem:[%s229 + $0x58] sm:$0xff]
        %v1322 = vld [vmem:[%s229 + $0x60] sm:$0xff]
        %v1323 = vld [vmem:[%s229 + $0x68] sm:$0xff]
        %v1324 = vld [vmem:[%s229 + $0x70] sm:$0xff]
        %v1325 = vld [vmem:[%s229 + $0x78] sm:$0xff]
        %v1326 = vld [vmem:[%s229 + $0x80] sm:$0xff]
        %v1327 = vld [vmem:[%s229 + $0x88] sm:$0xff]
        %v1328 = vld [vmem:[%s229 + $0x90] sm:$0xff]
        %v1329 = vld [vmem:[%s229 + $0x98] sm:$0xff]
        %v1330 = vld [vmem:[%s229 + $0xa0] sm:$0xff]
        %v1331 = vld [vmem:[%s229 + $0xa8] sm:$0xff]
        %v1332 = vld [vmem:[%s229 + $0xb0] sm:$0xff]
        %v1333 = vld [vmem:[%s229 + $0xb8] sm:$0xff]
        %v1334 = vld [vmem:[%s229 + $0xc0] sm:$0xff]
        %v1335 = vld [vmem:[%s229 + $0xc8] sm:$0xff]
        %v1336 = vld [vmem:[%s229 + $0xd0] sm:$0xff]
        %v1337 = vld [vmem:[%s229 + $0xd8] sm:$0xff]
        %v1338 = vld [vmem:[%s229 + $0xe0] sm:$0xff]
        %v1339 = vld [vmem:[%s229 + $0xe8] sm:$0xff]
        %v1340 = vld [vmem:[%s229 + $0xf0] sm:$0xff]
        %v1341 = vld [vmem:[%s229 + $0xf8] sm:$0xff]
        %v1342 = vld [vmem:[%s229 + $0x100] sm:$0xff]
        %v1343 = vld [vmem:[%s229 + $0x108] sm:$0xff]
        %v1344 = vld [vmem:[%s229 + $0x110] sm:$0xff]
        %v1345 = vld [vmem:[%s229 + $0x118] sm:$0xff]
        %v1346 = vld [vmem:[%s229 + $0x120] sm:$0xff]
        %v1347 = vld [vmem:[%s229 + $0x128] sm:$0xff]
        %v1348 = vld [vmem:[%s229 + $0x130] sm:$0xff]
        %v1349 = vld [vmem:[%s229 + $0x138] sm:$0xff]
        %v1350 = vld [vmem:[%s229 + $0x140] sm:$0xff]
        %v1351 = vld [vmem:[%s229 + $0x148] sm:$0xff]
        %v1352 = vld [vmem:[%s229 + $0x150] sm:$0xff]
        %v1353 = vld [vmem:[%s229 + $0x158] sm:$0xff]
        %v1354 = vld [vmem:[%s229 + $0x160] sm:$0xff]
        %v1355 = vld [vmem:[%s229 + $0x168] sm:$0xff]
        %v1356 = vld [vmem:[%s229 + $0x170] sm:$0xff]
        %v1357 = vld [vmem:[%s229 + $0x178] sm:$0xff]
        %v1358 = vld [vmem:[%s229 + $0x180] sm:$0xff]
        %v1359 = vld [vmem:[%s229 + $0x188] sm:$0xff]
        %v1360 = vld [vmem:[%s229 + $0x190] sm:$0xff]
        %v1361 = vld [vmem:[%s229 + $0x198] sm:$0xff]
        %v1362 = vld [vmem:[%s229 + $0x1a0] sm:$0xff]
        %v1363 = vld [vmem:[%s229 + $0x1a8] sm:$0xff]
        %v1364 = vld [vmem:[%s229 + $0x1b0] sm:$0xff]
        %v1365 = vld [vmem:[%s229 + $0x1b8] sm:$0xff]
        %v1366 = vld [vmem:[%s229 + $0x1c0] sm:$0xff]
        %v1367 = vld [vmem:[%s229 + $0x1c8] sm:$0xff]
        %v1368 = vld [vmem:[%s229 + $0x1d0] sm:$0xff]
        %v1369 = vld [vmem:[%s229 + $0x1d8] sm:$0xff]
        %v1370 = vld [vmem:[%s229 + $0x1e0] sm:$0xff]
        %v1371 = vld [vmem:[%s229 + $0x1e8] sm:$0xff]
        %v1372 = vld [vmem:[%s229 + $0x1f0] sm:$0xff]
        %v1373 = vld [vmem:[%s229 + $0x1f8] sm:$0xff]
        %v1374 = vld [vmem:[%s229 + $0x200] sm:$0xff]
        %v1375 = vld [vmem:[%s229 + $0x208] sm:$0xff]
        %v1376 = vld [vmem:[%s229 + $0x210] sm:$0xff]
        %v1377 = vld [vmem:[%s229 + $0x218] sm:$0xff]
        %v1378 = vld [vmem:[%s229 + $0x220] sm:$0xff]
        %v1379 = vld [vmem:[%s229 + $0x228] sm:$0xff]
        %v1380 = vld [vmem:[%s229 + $0x230] sm:$0xff]
        %v1381 = vld [vmem:[%s229 + $0x238] sm:$0xff]
        %v1382 = vld [vmem:[%s229 + $0x240] sm:$0xff]
        %v1383 = vld [vmem:[%s229 + $0x248] sm:$0xff]
        %v1384 = vld [vmem:[%s229 + $0x250] sm:$0xff]
        %v1385 = vld [vmem:[%s229 + $0x258] sm:$0xff]
        %v1386 = vld [vmem:[%s229 + $0x260] sm:$0xff]
        %v1387 = vld [vmem:[%s229 + $0x268] sm:$0xff]
        %v1388 = vld [vmem:[%s229 + $0x270] sm:$0xff]
        %v1389 = vld [vmem:[%s229 + $0x278] sm:$0xff]
        %v1390 = vld [vmem:[%s229 + $0x280] sm:$0xff]
        %v1391 = vld [vmem:[%s229 + $0x288] sm:$0xff]
        %v1392 = vld [vmem:[%s229 + $0x290] sm:$0xff]
        %v1393 = vld [vmem:[%s229 + $0x298] sm:$0xff]
        %v1394 = vld [vmem:[%s229 + $0x2a0] sm:$0xff]
        %v1395 = vld [vmem:[%s229 + $0x2a8] sm:$0xff]
        %v1396 = vld [vmem:[%s229 + $0x2b0] sm:$0xff]
        %v1397 = vld [vmem:[%s229 + $0x2b8] sm:$0xff]
        %v1398 = vld [vmem:[%s229 + $0x2c0] sm:$0xff]
        %v1399 = vld [vmem:[%s229 + $0x2c8] sm:$0xff]
        %v1400 = vld [vmem:[%s229 + $0x2d0] sm:$0xff]
        %v1401 = vld [vmem:[%s229 + $0x2d8] sm:$0xff]
        %v1402 = vld [vmem:[%s229 + $0x2e0] sm:$0xff]
        %v1403 = vld [vmem:[%s229 + $0x2e8] sm:$0xff]
        %v1404 = vld [vmem:[%s229 + $0x2f0] sm:$0xff]
        %v1405 = vld [vmem:[%s229 + $0x2f8] sm:$0xff]
        %v1406 = vld [vmem:[%s229 + $0x300] sm:$0xff]
        %v1407 = vld [vmem:[%s229 + $0x308] sm:$0xff]
        %v1408 = vld [vmem:[%s229 + $0x310] sm:$0xff]
        %v1409 = vld [vmem:[%s229 + $0x318] sm:$0xff]
        %v1410 = vld [vmem:[%s229 + $0x320] sm:$0xff]
        %v1411 = vld [vmem:[%s229 + $0x328] sm:$0xff]
        %v1412 = vld [vmem:[%s229 + $0x330] sm:$0xff]
        %v1413 = vld [vmem:[%s229 + $0x338] sm:$0xff]
        %v1414 = vld [vmem:[%s229 + $0x340] sm:$0xff]
        %v1415 = vld [vmem:[%s229 + $0x348] sm:$0xff]
        %v1416 = vld [vmem:[%s229 + $0x350] sm:$0xff]
        %v1417 = vld [vmem:[%s229 + $0x358] sm:$0xff]
        %v1418 = vld [vmem:[%s229 + $0x360] sm:$0xff]
        %v1419 = vld [vmem:[%s229 + $0x368] sm:$0xff]
        %v1420 = vld [vmem:[%s229 + $0x370] sm:$0xff]
        %v1421 = vld [vmem:[%s229 + $0x378] sm:$0xff]
        %v1422 = vld [vmem:[%s229 + $0x380] sm:$0xff]
        %v1423 = vld [vmem:[%s229 + $0x388] sm:$0xff]
        %v1424 = vld [vmem:[%s229 + $0x390] sm:$0xff]
        %v1425 = vld [vmem:[%s229 + $0x398] sm:$0xff]
        %v1426 = vld [vmem:[%s229 + $0x3a0] sm:$0xff]
        %v1427 = vld [vmem:[%s229 + $0x3a8] sm:$0xff]
        %v1428 = vld [vmem:[%s229 + $0x3b0] sm:$0xff]
        %v1429 = vld [vmem:[%s229 + $0x3b8] sm:$0xff]
        %v1430 = vld [vmem:[%s229 + $0x3c0] sm:$0xff]
        %v1431 = vld [vmem:[%s229 + $0x3c8] sm:$0xff]
        %v1432 = vld [vmem:[%s229 + $0x3d0] sm:$0xff]
        %v1433 = vld [vmem:[%s229 + $0x3d8] sm:$0xff]
        %v1434 = vld [vmem:[%s229 + $0x3e0] sm:$0xff]
        %v1435 = vld [vmem:[%s229 + $0x3e8] sm:$0xff]
        %v1436 = vld [vmem:[%s229 + $0x3f0] sm:$0xff]
        %v1437 = vld [vmem:[%s229 + $0x3f8] sm:$0xff]
        %v1438 = vld [vmem:[%s229 + $0x400] sm:$0xff]
        %v1439 = vld [vmem:[%s229 + $0x408] sm:$0xff]
        %v1440 = vld [vmem:[%s229 + $0x410] sm:$0xff]
        %v1441 = vld [vmem:[%s229 + $0x418] sm:$0xff]
        %v1442 = vld [vmem:[%s229 + $0x420] sm:$0xff]
        %v1443 = vld [vmem:[%s229 + $0x428] sm:$0xff]
        %v1444 = vld [vmem:[%s229 + $0x430] sm:$0xff]
        %v1445 = vld [vmem:[%s229 + $0x438] sm:$0xff]
        %v1446 = vld [vmem:[%s229 + $0x440] sm:$0xff]
        %v1447 = vld [vmem:[%s229 + $0x448] sm:$0xff]
        %v1448 = vld [vmem:[%s229 + $0x450] sm:$0xff]
        %v1449 = vld [vmem:[%s229 + $0x458] sm:$0xff]
        %v1450 = vld [vmem:[%s229 + $0x460] sm:$0xff]
        %v1451 = vld [vmem:[%s229 + $0x468] sm:$0xff]
        %v1452 = vld [vmem:[%s229 + $0x470] sm:$0xff]
        %v1453 = vld [vmem:[%s229 + $0x478] sm:$0xff]
        %v1454 = vld [vmem:[%s229 + $0x480] sm:$0xff]
        %v1455 = vld [vmem:[%s229 + $0x488] sm:$0xff]
        %v1456 = vld [vmem:[%s229 + $0x490] sm:$0xff]
        %v1457 = vld [vmem:[%s229 + $0x498] sm:$0xff]
        %v1458 = vld [vmem:[%s229 + $0x4a0] sm:$0xff]
        %v1459 = vld [vmem:[%s229 + $0x4a8] sm:$0xff]
        %v1460 = vld [vmem:[%s229 + $0x4b0] sm:$0xff]
        %v1461 = vld [vmem:[%s229 + $0x4b8] sm:$0xff]
        %v1462 = vld [vmem:[%s229 + $0x4c0] sm:$0xff]
        %v1463 = vld [vmem:[%s229 + $0x4c8] sm:$0xff]
        %v1464 = vld [vmem:[%s229 + $0x4d0] sm:$0xff]
        %v1465 = vld [vmem:[%s229 + $0x4d8] sm:$0xff]
        %v1466 = vld [vmem:[%s229 + $0x4e0] sm:$0xff]
        %v1467 = vld [vmem:[%s229 + $0x4e8] sm:$0xff]
        %v1468 = vld [vmem:[%s229 + $0x4f0] sm:$0xff]
        %v1469 = vld [vmem:[%s229 + $0x4f8] sm:$0xff]
        %v1470 = vld [vmem:[%s229 + $0x500] sm:$0xff]
        %v1471 = vld [vmem:[%s229 + $0x508] sm:$0xff]
        %v1472 = vld [vmem:[%s229 + $0x510] sm:$0xff]
        %v1473 = vld [vmem:[%s229 + $0x518] sm:$0xff]
        %v1474 = vld [vmem:[%s229 + $0x520] sm:$0xff]
        %v1475 = vld [vmem:[%s229 + $0x528] sm:$0xff]
        %v1476 = vld [vmem:[%s229 + $0x530] sm:$0xff]
        %v1477 = vld [vmem:[%s229 + $0x538] sm:$0xff]
        %v1478 = vld [vmem:[%s229 + $0x540] sm:$0xff]
        %v1479 = vld [vmem:[%s229 + $0x548] sm:$0xff]
        %v1480 = vld [vmem:[%s229 + $0x550] sm:$0xff]
        %v1481 = vld [vmem:[%s229 + $0x558] sm:$0xff]
        %v1482 = vld [vmem:[%s229 + $0x560] sm:$0xff]
        %v1483 = vld [vmem:[%s229 + $0x568] sm:$0xff]
        %v1484 = vld [vmem:[%s229 + $0x570] sm:$0xff]
        %v1485 = vld [vmem:[%s229 + $0x578] sm:$0xff]
        %v1486 = vld [vmem:[%s229 + $0x580] sm:$0xff]
        %v1487 = vld [vmem:[%s229 + $0x588] sm:$0xff]
        %v1488 = vld [vmem:[%s229 + $0x590] sm:$0xff]
        %v1489 = vld [vmem:[%s229 + $0x598] sm:$0xff]
        %v1490 = vld [vmem:[%s229 + $0x5a0] sm:$0xff]
        %v1491 = vld [vmem:[%s229 + $0x5a8] sm:$0xff]
        %v1492 = vld [vmem:[%s229 + $0x5b0] sm:$0xff]
        %v1493 = vld [vmem:[%s229 + $0x5b8] sm:$0xff]
        %v1494 = vld [vmem:[%s229 + $0x5c0] sm:$0xff]
        %v1495 = vld [vmem:[%s229 + $0x5c8] sm:$0xff]
        %v1496 = vld [vmem:[%s229 + $0x5d0] sm:$0xff]
        %v1497 = vld [vmem:[%s229 + $0x5d8] sm:$0xff]
        %v1498 = vld [vmem:[%s229 + $0x5e0] sm:$0xff]
        %v1499 = vld [vmem:[%s229 + $0x5e8] sm:$0xff]
        %v1500 = vld [vmem:[%s229 + $0x5f0] sm:$0xff]
        %v1501 = vld [vmem:[%s229 + $0x5f8] sm:$0xff]
        %v1502 = vld [vmem:[%s229 + $0x600] sm:$0xff]
        %v1503 = vld [vmem:[%s229 + $0x608] sm:$0xff]
        %v1504 = vld [vmem:[%s229 + $0x610] sm:$0xff]
        %v1505 = vld [vmem:[%s229 + $0x618] sm:$0xff]
        %v1506 = vld [vmem:[%s229 + $0x620] sm:$0xff]
        %v1507 = vld [vmem:[%s229 + $0x628] sm:$0xff]
        %v1508 = vld [vmem:[%s229 + $0x630] sm:$0xff]
        %v1509 = vld [vmem:[%s229 + $0x638] sm:$0xff]
        %v1510 = vld [vmem:[%s229 + $0x640] sm:$0xff]
        %v1511 = vld [vmem:[%s229 + $0x648] sm:$0xff]
        %v1512 = vld [vmem:[%s229 + $0x650] sm:$0xff]
        %v1513 = vld [vmem:[%s229 + $0x658] sm:$0xff]
        %v1514 = vld [vmem:[%s229 + $0x660] sm:$0xff]
        %v1515 = vld [vmem:[%s229 + $0x668] sm:$0xff]
        %v1516 = vld [vmem:[%s229 + $0x670] sm:$0xff]
        %v1517 = vld [vmem:[%s229 + $0x678] sm:$0xff]
        %v1518 = vld [vmem:[%s229 + $0x680] sm:$0xff]
        %v1519 = vld [vmem:[%s229 + $0x688] sm:$0xff]
        %v1520 = vld [vmem:[%s229 + $0x690] sm:$0xff]
        %v1521 = vld [vmem:[%s229 + $0x698] sm:$0xff]
        %v1522 = vld [vmem:[%s229 + $0x6a0] sm:$0xff]
        %v1523 = vld [vmem:[%s229 + $0x6a8] sm:$0xff]
        %v1524 = vld [vmem:[%s229 + $0x6b0] sm:$0xff]
        %v1525 = vld [vmem:[%s229 + $0x6b8] sm:$0xff]
        %v1526 = vld [vmem:[%s229 + $0x6c0] sm:$0xff]
        %v1527 = vld [vmem:[%s229 + $0x6c8] sm:$0xff]
        %v1528 = vld [vmem:[%s229 + $0x6d0] sm:$0xff]
        %v1529 = vld [vmem:[%s229 + $0x6d8] sm:$0xff]
        %v1530 = vld [vmem:[%s229 + $0x6e0] sm:$0xff]
        %v1531 = vld [vmem:[%s229 + $0x6e8] sm:$0xff]
        %v1532 = vld [vmem:[%s229 + $0x6f0] sm:$0xff]
        %v1533 = vld [vmem:[%s229 + $0x6f8] sm:$0xff]
        %v1534 = vld [vmem:[%s229 + $0x700] sm:$0xff]
        %v1535 = vld [vmem:[%s229 + $0x708] sm:$0xff]
        %v1536 = vld [vmem:[%s229 + $0x710] sm:$0xff]
        %v1537 = vld [vmem:[%s229 + $0x718] sm:$0xff]
        %v1538 = vld [vmem:[%s229 + $0x720] sm:$0xff]
        %v1539 = vld [vmem:[%s229 + $0x728] sm:$0xff]
        %v1540 = vld [vmem:[%s229 + $0x730] sm:$0xff]
        %v1541 = vld [vmem:[%s229 + $0x738] sm:$0xff]
        %v1542 = vld [vmem:[%s229 + $0x740] sm:$0xff]
        %v1543 = vld [vmem:[%s229 + $0x748] sm:$0xff]
        %v1544 = vld [vmem:[%s229 + $0x750] sm:$0xff]
        %v1545 = vld [vmem:[%s229 + $0x758] sm:$0xff]
        %v1546 = vld [vmem:[%s229 + $0x760] sm:$0xff]
        %v1547 = vld [vmem:[%s229 + $0x768] sm:$0xff]
        %v1548 = vld [vmem:[%s229 + $0x770] sm:$0xff]
        %v1549 = vld [vmem:[%s229 + $0x778] sm:$0xff]
        %v1550 = vld [vmem:[%s229 + $0x780] sm:$0xff]
        %v1551 = vld [vmem:[%s229 + $0x788] sm:$0xff]
        %v1552 = vld [vmem:[%s229 + $0x790] sm:$0xff]
        %v1553 = vld [vmem:[%s229 + $0x798] sm:$0xff]
        %v1554 = vld [vmem:[%s229 + $0x7a0] sm:$0xff]
        %v1555 = vld [vmem:[%s229 + $0x7a8] sm:$0xff]
        %v1556 = vld [vmem:[%s229 + $0x7b0] sm:$0xff]
        %v1557 = vld [vmem:[%s229 + $0x7b8] sm:$0xff]
        %v1558 = vld [vmem:[%s229 + $0x7c0] sm:$0xff]
        %v1559 = vld [vmem:[%s229 + $0x7c8] sm:$0xff]
        %v1560 = vld [vmem:[%s229 + $0x7d0] sm:$0xff]
        %v1561 = vld [vmem:[%s229 + $0x7d8] sm:$0xff]
        %v1562 = vld [vmem:[%s229 + $0x7e0] sm:$0xff]
        %v1563 = vld [vmem:[%s229 + $0x7e8] sm:$0xff]
        %v1564 = vld [vmem:[%s229 + $0x7f0] sm:$0xff]
        %v1565 = vld [vmem:[%s229 + $0x7f8] sm:$0xff]
        %v1566 = vld [vmem:[%s229 + $0x800] sm:$0xff]
        %v1567 = vld [vmem:[%s229 + $0x808] sm:$0xff]
        %v1568 = vld [vmem:[%s229 + $0x810] sm:$0xff]
        %v1569 = vld [vmem:[%s229 + $0x818] sm:$0xff]
        %v1570 = vld [vmem:[%s229 + $0x820] sm:$0xff]
        %v1571 = vld [vmem:[%s229 + $0x828] sm:$0xff]
        %v1572 = vld [vmem:[%s229 + $0x830] sm:$0xff]
        %v1573 = vld [vmem:[%s229 + $0x838] sm:$0xff]
        %v1574 = vld [vmem:[%s229 + $0x840] sm:$0xff]
        %v1575 = vld [vmem:[%s229 + $0x848] sm:$0xff]
        %v1576 = vld [vmem:[%s229 + $0x850] sm:$0xff]
        %v1577 = vld [vmem:[%s229 + $0x858] sm:$0xff]
        %v1578 = vld [vmem:[%s229 + $0x860] sm:$0xff]
        %v1579 = vld [vmem:[%s229 + $0x868] sm:$0xff]
        %v1580 = vld [vmem:[%s229 + $0x870] sm:$0xff]
        %v1581 = vld [vmem:[%s229 + $0x878] sm:$0xff]
        %v1582 = vld [vmem:[%s229 + $0x880] sm:$0xff]
        %v1583 = vld [vmem:[%s229 + $0x888] sm:$0xff]
        %v1584 = vld [vmem:[%s229 + $0x890] sm:$0xff]
        %v1585 = vld [vmem:[%s229 + $0x898] sm:$0xff]
        %v1586 = vld [vmem:[%s229 + $0x8a0] sm:$0xff]
        %v1587 = vld [vmem:[%s229 + $0x8a8] sm:$0xff]
        %v1588 = vld [vmem:[%s229 + $0x8b0] sm:$0xff]
        %v1589 = vld [vmem:[%s229 + $0x8b8] sm:$0xff]
        %v1590 = vld [vmem:[%s229 + $0x8c0] sm:$0xff]
        %v1591 = vld [vmem:[%s229 + $0x8c8] sm:$0xff]
        %v1592 = vld [vmem:[%s229 + $0x8d0] sm:$0xff]
        %v1593 = vld [vmem:[%s229 + $0x8d8] sm:$0xff]
        %v1594 = vld [vmem:[%s229 + $0x8e0] sm:$0xff]
        %v1595 = vld [vmem:[%s229 + $0x8e8] sm:$0xff]
        %v1596 = vld [vmem:[%s229 + $0x8f0] sm:$0xff]
        %v1597 = vld [vmem:[%s229 + $0x8f8] sm:$0xff]
        %v1598 = vld [vmem:[%s229 + $0x900] sm:$0xff]
        %v1599 = vld [vmem:[%s229 + $0x908] sm:$0xff]
        %v1600 = vld [vmem:[%s229 + $0x910] sm:$0xff]
        %v1601 = vld [vmem:[%s229 + $0x918] sm:$0xff]
        %v1602 = vld [vmem:[%s229 + $0x920] sm:$0xff]
        %v1603 = vld [vmem:[%s229 + $0x928] sm:$0xff]
        %v1604 = vld [vmem:[%s229 + $0x930] sm:$0xff]
        %v1605 = vld [vmem:[%s229 + $0x938] sm:$0xff]
        %v1606 = vld [vmem:[%s229 + $0x940] sm:$0xff]
        %v1607 = vld [vmem:[%s229 + $0x948] sm:$0xff]
        %v1608 = vld [vmem:[%s229 + $0x950] sm:$0xff]
        %v1609 = vld [vmem:[%s229 + $0x958] sm:$0xff]
        %v1610 = vld [vmem:[%s229 + $0x960] sm:$0xff]
        %v1611 = vld [vmem:[%s229 + $0x968] sm:$0xff]
        %v1612 = vld [vmem:[%s229 + $0x970] sm:$0xff]
        %v1613 = vld [vmem:[%s229 + $0x978] sm:$0xff]
        %v1614 = vld [vmem:[%s229 + $0x980] sm:$0xff]
        %v1615 = vld [vmem:[%s229 + $0x988] sm:$0xff]
        %v1616 = vld [vmem:[%s229 + $0x990] sm:$0xff]
        %v1617 = vld [vmem:[%s229 + $0x998] sm:$0xff]
        %v1618 = vld [vmem:[%s229 + $0x9a0] sm:$0xff]
        %v1619 = vld [vmem:[%s229 + $0x9a8] sm:$0xff]
        %v1620 = vld [vmem:[%s229 + $0x9b0] sm:$0xff]
        %v1621 = vld [vmem:[%s229 + $0x9b8] sm:$0xff]
        %v1622 = vld [vmem:[%s229 + $0x9c0] sm:$0xff]
        %v1623 = vld [vmem:[%s229 + $0x9c8] sm:$0xff]
        %v1624 = vld [vmem:[%s229 + $0x9d0] sm:$0xff]
        %v1625 = vld [vmem:[%s229 + $0x9d8] sm:$0xff]
        %v1626 = vld [vmem:[%s229 + $0x9e0] sm:$0xff]
        %v1627 = vld [vmem:[%s229 + $0x9e8] sm:$0xff]
        %v1628 = vld [vmem:[%s229 + $0x9f0] sm:$0xff]
        %v1629 = vld [vmem:[%s229 + $0x9f8] sm:$0xff]
        %v1630 = vld [vmem:[%s229 + $0xa00] sm:$0xff]
        %v1631 = vld [vmem:[%s229 + $0xa08] sm:$0xff]
        %v1632 = vld [vmem:[%s229 + $0xa10] sm:$0xff]
        %v1633 = vld [vmem:[%s229 + $0xa18] sm:$0xff]
        %v1634 = vld [vmem:[%s229 + $0xa20] sm:$0xff]
        %v1635 = vld [vmem:[%s229 + $0xa28] sm:$0xff]
        %v1636 = vld [vmem:[%s229 + $0xa30] sm:$0xff]
        %v1637 = vld [vmem:[%s229 + $0xa38] sm:$0xff]
        %v1638 = vld [vmem:[%s229 + $0xa40] sm:$0xff]
        %v1639 = vld [vmem:[%s229 + $0xa48] sm:$0xff]
        %v1640 = vld [vmem:[%s229 + $0xa50] sm:$0xff]
        %v1641 = vld [vmem:[%s229 + $0xa58] sm:$0xff]
        %v1642 = vld [vmem:[%s229 + $0xa60] sm:$0xff]
        %v1643 = vld [vmem:[%s229 + $0xa68] sm:$0xff]
        %v1644 = vld [vmem:[%s229 + $0xa70] sm:$0xff]
        %v1645 = vld [vmem:[%s229 + $0xa78] sm:$0xff]
        %v1646 = vld [vmem:[%s229 + $0xa80] sm:$0xff]
        %v1647 = vld [vmem:[%s229 + $0xa88] sm:$0xff]
        %v1648 = vld [vmem:[%s229 + $0xa90] sm:$0xff]
        %v1649 = vld [vmem:[%s229 + $0xa98] sm:$0xff]
        %v1650 = vld [vmem:[%s229 + $0xaa0] sm:$0xff]
        %v1651 = vld [vmem:[%s229 + $0xaa8] sm:$0xff]
        %v1652 = vld [vmem:[%s229 + $0xab0] sm:$0xff]
        %v1653 = vld [vmem:[%s229 + $0xab8] sm:$0xff]
        %v1654 = vld [vmem:[%s229 + $0xac0] sm:$0xff]
        %v1655 = vld [vmem:[%s229 + $0xac8] sm:$0xff]
        %v1656 = vld [vmem:[%s229 + $0xad0] sm:$0xff]
        %v1657 = vld [vmem:[%s229 + $0xad8] sm:$0xff]
        %v1658 = vld [vmem:[%s229 + $0xae0] sm:$0xff]
        %v1659 = vld [vmem:[%s229 + $0xae8] sm:$0xff]
        %v1660 = vld [vmem:[%s229 + $0xaf0] sm:$0xff]
        %v1661 = vld [vmem:[%s229 + $0xaf8] sm:$0xff]
        %v1662 = vld [vmem:[%s229 + $0xb00] sm:$0xff]
        %v1663 = vld [vmem:[%s229 + $0xb08] sm:$0xff]
        %v1664 = vld [vmem:[%s229 + $0xb10] sm:$0xff]
        %v1665 = vld [vmem:[%s229 + $0xb18] sm:$0xff]
        %v1666 = vld [vmem:[%s229 + $0xb20] sm:$0xff]
        %v1667 = vld [vmem:[%s229 + $0xb28] sm:$0xff]
        %v1668 = vld [vmem:[%s229 + $0xb30] sm:$0xff]
        %v1669 = vld [vmem:[%s229 + $0xb38] sm:$0xff]
        %v1670 = vld [vmem:[%s229 + $0xb40] sm:$0xff]
        %v1671 = vld [vmem:[%s229 + $0xb48] sm:$0xff]
        %v1672 = vld [vmem:[%s229 + $0xb50] sm:$0xff]
        %v1673 = vld [vmem:[%s229 + $0xb58] sm:$0xff]
        %v1674 = vld [vmem:[%s229 + $0xb60] sm:$0xff]
        %v1675 = vld [vmem:[%s229 + $0xb68] sm:$0xff]
        %v1676 = vld [vmem:[%s229 + $0xb70] sm:$0xff]
        %v1677 = vld [vmem:[%s229 + $0xb78] sm:$0xff]
        %v1678 = vld [vmem:[%s229 + $0xb80] sm:$0xff]
        %v1679 = vld [vmem:[%s229 + $0xb88] sm:$0xff]
        %v1680 = vld [vmem:[%s229 + $0xb90] sm:$0xff]
        %v1681 = vld [vmem:[%s229 + $0xb98] sm:$0xff]
        %v1682 = vld [vmem:[%s229 + $0xba0] sm:$0xff]
        %v1683 = vld [vmem:[%s229 + $0xba8] sm:$0xff]
        %v1684 = vld [vmem:[%s229 + $0xbb0] sm:$0xff]
        %v1685 = vld [vmem:[%s229 + $0xbb8] sm:$0xff]
        %v1686 = vld [vmem:[%s229 + $0xbc0] sm:$0xff]
        %v1687 = vld [vmem:[%s229 + $0xbc8] sm:$0xff]
        %v1688 = vld [vmem:[%s229 + $0xbd0] sm:$0xff]
        %v1689 = vld [vmem:[%s229 + $0xbd8] sm:$0xff]
        %v1690 = vld [vmem:[%s229 + $0xbe0] sm:$0xff]
        %v1691 = vld [vmem:[%s229 + $0xbe8] sm:$0xff]
        %v1692 = vld [vmem:[%s229 + $0xbf0] sm:$0xff]
        %v1693 = vld [vmem:[%s229 + $0xbf8] sm:$0xff]
        %v1694 = vld [vmem:[%s229 + $0xc00] sm:$0xff]
        %v1695 = vld [vmem:[%s229 + $0xc08] sm:$0xff]
        %v1696 = vld [vmem:[%s229 + $0xc10] sm:$0xff]
        %v1697 = vld [vmem:[%s229 + $0xc18] sm:$0xff]
        %v1698 = vld [vmem:[%s229 + $0xc20] sm:$0xff]
        %v1699 = vld [vmem:[%s229 + $0xc28] sm:$0xff]
        %v1700 = vld [vmem:[%s229 + $0xc30] sm:$0xff]
        %v1701 = vld [vmem:[%s229 + $0xc38] sm:$0xff]
        %v1702 = vld [vmem:[%s229 + $0xc40] sm:$0xff]
        %v1703 = vld [vmem:[%s229 + $0xc48] sm:$0xff]
        %v1704 = vld [vmem:[%s229 + $0xc50] sm:$0xff]
        %v1705 = vld [vmem:[%s229 + $0xc58] sm:$0xff]
        %v1706 = vld [vmem:[%s229 + $0xc60] sm:$0xff]
        %v1707 = vld [vmem:[%s229 + $0xc68] sm:$0xff]
        %v1708 = vld [vmem:[%s229 + $0xc70] sm:$0xff]
        %v1709 = vld [vmem:[%s229 + $0xc78] sm:$0xff]
        %v1710 = vld [vmem:[%s229 + $0xc80] sm:$0xff]
        %v1711 = vld [vmem:[%s229 + $0xc88] sm:$0xff]
        %v1712 = vld [vmem:[%s229 + $0xc90] sm:$0xff]
        %v1713 = vld [vmem:[%s229 + $0xc98] sm:$0xff]
        %v1714 = vld [vmem:[%s229 + $0xca0] sm:$0xff]
        %v1715 = vld [vmem:[%s229 + $0xca8] sm:$0xff]
        %v1716 = vld [vmem:[%s229 + $0xcb0] sm:$0xff]
        %v1717 = vld [vmem:[%s229 + $0xcb8] sm:$0xff]
        %v1718 = vld [vmem:[%s229 + $0xcc0] sm:$0xff]
        %v1719 = vld [vmem:[%s229 + $0xcc8] sm:$0xff]
        %v1720 = vld [vmem:[%s229 + $0xcd0] sm:$0xff]
        %v1721 = vld [vmem:[%s229 + $0xcd8] sm:$0xff]
        %v1722 = vld [vmem:[%s229 + $0xce0] sm:$0xff]
        %v1723 = vld [vmem:[%s229 + $0xce8] sm:$0xff]
        %v1724 = vld [vmem:[%s229 + $0xcf0] sm:$0xff]
        %v1725 = vld [vmem:[%s229 + $0xcf8] sm:$0xff]
        %v1726 = vld [vmem:[%s229 + $0xd00] sm:$0xff]
        %v1727 = vld [vmem:[%s229 + $0xd08] sm:$0xff]
        %v1728 = vld [vmem:[%s229 + $0xd10] sm:$0xff]
        %v1729 = vld [vmem:[%s229 + $0xd18] sm:$0xff]
        %v1730 = vld [vmem:[%s229 + $0xd20] sm:$0xff]
        %v1731 = vld [vmem:[%s229 + $0xd28] sm:$0xff]
        %v1732 = vld [vmem:[%s229 + $0xd30] sm:$0xff]
        %v1733 = vld [vmem:[%s229 + $0xd38] sm:$0xff]
        %v1734 = vld [vmem:[%s229 + $0xd40] sm:$0xff]
        %v1735 = vld [vmem:[%s229 + $0xd48] sm:$0xff]
        %v1736 = vld [vmem:[%s229 + $0xd50] sm:$0xff]
        %v1737 = vld [vmem:[%s229 + $0xd58] sm:$0xff]
        %v1738 = vld [vmem:[%s229 + $0xd60] sm:$0xff]
        %v1739 = vld [vmem:[%s229 + $0xd68] sm:$0xff]
        %v1740 = vld [vmem:[%s229 + $0xd70] sm:$0xff]
        %v1741 = vld [vmem:[%s229 + $0xd78] sm:$0xff]
        %v1742 = vld [vmem:[%s229 + $0xd80] sm:$0xff]
        %v1743 = vld [vmem:[%s229 + $0xd88] sm:$0xff]
        %v1744 = vld [vmem:[%s229 + $0xd90] sm:$0xff]
        %v1745 = vld [vmem:[%s229 + $0xd98] sm:$0xff]
        %v1746 = vld [vmem:[%s229 + $0xda0] sm:$0xff]
        %v1747 = vld [vmem:[%s229 + $0xda8] sm:$0xff]
        %v1748 = vld [vmem:[%s229 + $0xdb0] sm:$0xff]
        %v1749 = vld [vmem:[%s229 + $0xdb8] sm:$0xff]
        %v1750 = vld [vmem:[%s229 + $0xdc0] sm:$0xff]
        %v1751 = vld [vmem:[%s229 + $0xdc8] sm:$0xff]
        %v1752 = vld [vmem:[%s229 + $0xdd0] sm:$0xff]
        %v1753 = vld [vmem:[%s229 + $0xdd8] sm:$0xff]
        %v1754 = vld [vmem:[%s229 + $0xde0] sm:$0xff]
        %v1755 = vld [vmem:[%s229 + $0xde8] sm:$0xff]
        %v1756 = vld [vmem:[%s229 + $0xdf0] sm:$0xff]
        %v1757 = vld [vmem:[%s229 + $0xdf8] sm:$0xff]
        %v1758 = vld [vmem:[%s229 + $0xe00] sm:$0xff]
        %v1759 = vld [vmem:[%s229 + $0xe08] sm:$0xff]
        %v1760 = vld [vmem:[%s229 + $0xe10] sm:$0xff]
        %v1761 = vld [vmem:[%s229 + $0xe18] sm:$0xff]
        %v1762 = vld [vmem:[%s229 + $0xe20] sm:$0xff]
        %v1763 = vld [vmem:[%s229 + $0xe28] sm:$0xff]
        %v1764 = vld [vmem:[%s229 + $0xe30] sm:$0xff]
        %v1765 = vld [vmem:[%s229 + $0xe38] sm:$0xff]
        %v1766 = vld [vmem:[%s229 + $0xe40] sm:$0xff]
        %v1767 = vld [vmem:[%s229 + $0xe48] sm:$0xff]
        %v1768 = vld [vmem:[%s229 + $0xe50] sm:$0xff]
        %v1769 = vld [vmem:[%s229 + $0xe58] sm:$0xff]
        %v1770 = vld [vmem:[%s229 + $0xe60] sm:$0xff]
        %v1771 = vld [vmem:[%s229 + $0xe68] sm:$0xff]
        %v1772 = vld [vmem:[%s229 + $0xe70] sm:$0xff]
        %v1773 = vld [vmem:[%s229 + $0xe78] sm:$0xff]
        %v1774 = vld [vmem:[%s229 + $0xe80] sm:$0xff]
        %v1775 = vld [vmem:[%s229 + $0xe88] sm:$0xff]
        %v1776 = vld [vmem:[%s229 + $0xe90] sm:$0xff]
        %v1777 = vld [vmem:[%s229 + $0xe98] sm:$0xff]
        %v1778 = vld [vmem:[%s229 + $0xea0] sm:$0xff]
        %v1779 = vld [vmem:[%s229 + $0xea8] sm:$0xff]
        %v1780 = vld [vmem:[%s229 + $0xeb0] sm:$0xff]
        %v1781 = vld [vmem:[%s229 + $0xeb8] sm:$0xff]
        %v1782 = vld [vmem:[%s229 + $0xec0] sm:$0xff]
        %v1783 = vld [vmem:[%s229 + $0xec8] sm:$0xff]
        %v1784 = vld [vmem:[%s229 + $0xed0] sm:$0xff]
        %v1785 = vld [vmem:[%s229 + $0xed8] sm:$0xff]
        %v1786 = vld [vmem:[%s229 + $0xee0] sm:$0xff]
        %v1787 = vld [vmem:[%s229 + $0xee8] sm:$0xff]
        %v1788 = vld [vmem:[%s229 + $0xef0] sm:$0xff]
        %v1789 = vld [vmem:[%s229 + $0xef8] sm:$0xff]
        %v1790 = vld [vmem:[%s229 + $0xf00] sm:$0xff]
        %v1791 = vld [vmem:[%s229 + $0xf08] sm:$0xff]
        %v1792 = vld [vmem:[%s229 + $0xf10] sm:$0xff]
        %v1793 = vld [vmem:[%s229 + $0xf18] sm:$0xff]
        %v1794 = vld [vmem:[%s229 + $0xf20] sm:$0xff]
        %v1795 = vld [vmem:[%s229 + $0xf28] sm:$0xff]
        %v1796 = vld [vmem:[%s229 + $0xf30] sm:$0xff]
        %v1797 = vld [vmem:[%s229 + $0xf38] sm:$0xff]
        %v1798 = vld [vmem:[%s229 + $0xf40] sm:$0xff]
        %v1799 = vld [vmem:[%s229 + $0xf48] sm:$0xff]
        %v1800 = vld [vmem:[%s229 + $0xf50] sm:$0xff]
        %v1801 = vld [vmem:[%s229 + $0xf58] sm:$0xff]
        %v1802 = vld [vmem:[%s229 + $0xf60] sm:$0xff]
        %v1803 = vld [vmem:[%s229 + $0xf68] sm:$0xff]
        %v1804 = vld [vmem:[%s229 + $0xf70] sm:$0xff]
        %v1805 = vld [vmem:[%s229 + $0xf78] sm:$0xff]
        %v1806 = vld [vmem:[%s229 + $0xf80] sm:$0xff]
        %v1807 = vld [vmem:[%s229 + $0xf88] sm:$0xff]
        %v1808 = vld [vmem:[%s229 + $0xf90] sm:$0xff]
        %v1809 = vld [vmem:[%s229 + $0xf98] sm:$0xff]
        %v1810 = vld [vmem:[%s229 + $0xfa0] sm:$0xff]
        %v1811 = vld [vmem:[%s229 + $0xfa8] sm:$0xff]
        %v1812 = vld [vmem:[%s229 + $0xfb0] sm:$0xff]
        %v1813 = vld [vmem:[%s229 + $0xfb8] sm:$0xff]
        %v1814 = vld [vmem:[%s229 + $0xfc0] sm:$0xff]
        %v1815 = vld [vmem:[%s229 + $0xfc8] sm:$0xff]
        %v1816 = vld [vmem:[%s229 + $0xfd0] sm:$0xff]
        %v1817 = vld [vmem:[%s229 + $0xfd8] sm:$0xff]
        %v1818 = vld [vmem:[%s229 + $0xfe0] sm:$0xff]
        %v1819 = vld [vmem:[%s229 + $0xfe8] sm:$0xff]
        %v1820 = vld [vmem:[%s229 + $0xff0] sm:$0xff]
        %v1821 = vld [vmem:[%s229 + $0xff8] sm:$0xff]
        %v1822 = vld [vmem:[%s229 + $0x1000] sm:$0xff]
        %v1823 = vld [vmem:[%s229 + $0x1008] sm:$0xff]
        %v1824 = vld [vmem:[%s229 + $0x1010] sm:$0xff]
        %v1825 = vld [vmem:[%s229 + $0x1018] sm:$0xff]
        %v1826 = vld [vmem:[%s229 + $0x1020] sm:$0xff]
        %v1827 = vld [vmem:[%s229 + $0x1028] sm:$0xff]
        %v1828 = vld [vmem:[%s229 + $0x1030] sm:$0xff]
        %v1829 = vld [vmem:[%s229 + $0x1038] sm:$0xff]
        %v1830 = vld [vmem:[%s229 + $0x1040] sm:$0xff]
        %v1831 = vld [vmem:[%s229 + $0x1048] sm:$0xff]
        %v1832 = vld [vmem:[%s229 + $0x1050] sm:$0xff]
        %v1833 = vld [vmem:[%s229 + $0x1058] sm:$0xff]
        %v1834 = vld [vmem:[%s229 + $0x1060] sm:$0xff]
        %v1835 = vld [vmem:[%s229 + $0x1068] sm:$0xff]
        %v1836 = vld [vmem:[%s229 + $0x1070] sm:$0xff]
        %v1837 = vld [vmem:[%s229 + $0x1078] sm:$0xff]
        %v1838 = vld [vmem:[%s229 + $0x1080] sm:$0xff]
        %v1839 = vld [vmem:[%s229 + $0x1088] sm:$0xff]
        %v1840 = vld [vmem:[%s229 + $0x1090] sm:$0xff]
        %v1841 = vld [vmem:[%s229 + $0x1098] sm:$0xff]
        %v1842 = vld [vmem:[%s229 + $0x10a0] sm:$0xff]
        %v1843 = vld [vmem:[%s229 + $0x10a8] sm:$0xff]
        %v1844 = vld [vmem:[%s229 + $0x10b0] sm:$0xff]
        %v1845 = vld [vmem:[%s229 + $0x10b8] sm:$0xff]
        %v1846 = vld [vmem:[%s229 + $0x10c0] sm:$0xff]
        %v1847 = vld [vmem:[%s229 + $0x10c8] sm:$0xff]
        %v1848 = vld [vmem:[%s229 + $0x10d0] sm:$0xff]
        %v1849 = vld [vmem:[%s229 + $0x10d8] sm:$0xff]
        %v1850 = vld [vmem:[%s229 + $0x10e0] sm:$0xff]
        %v1851 = vld [vmem:[%s229 + $0x10e8] sm:$0xff]
        %v1852 = vld [vmem:[%s229 + $0x10f0] sm:$0xff]
        %v1853 = vld [vmem:[%s229 + $0x10f8] sm:$0xff]
        %v1854 = vld [vmem:[%s229 + $0x1100] sm:$0xff]
        %v1855 = vld [vmem:[%s229 + $0x1108] sm:$0xff]
        %v1856 = vld [vmem:[%s229 + $0x1110] sm:$0xff]
        %v1857 = vld [vmem:[%s229 + $0x1118] sm:$0xff]
        %v1858 = vld [vmem:[%s229 + $0x1120] sm:$0xff]
        %v1859 = vld [vmem:[%s229 + $0x1128] sm:$0xff]
        %v1860 = vld [vmem:[%s229 + $0x1130] sm:$0xff]
        %v1861 = vld [vmem:[%s229 + $0x1138] sm:$0xff]
        %v1862 = vld [vmem:[%s229 + $0x1140] sm:$0xff]
        %v1863 = vld [vmem:[%s229 + $0x1148] sm:$0xff]
        %v1864 = vld [vmem:[%s229 + $0x1150] sm:$0xff]
        %v1865 = vld [vmem:[%s229 + $0x1158] sm:$0xff]
        %v1866 = vld [vmem:[%s229 + $0x1160] sm:$0xff]
        %v1867 = vld [vmem:[%s229 + $0x1168] sm:$0xff]
        %v1868 = vld [vmem:[%s229 + $0x1170] sm:$0xff]
        %v1869 = vld [vmem:[%s229 + $0x1178] sm:$0xff]
        %v1870 = vld [vmem:[%s229 + $0x1180] sm:$0xff]
        %v1871 = vld [vmem:[%s229 + $0x1188] sm:$0xff]
        %v1872 = vld [vmem:[%s229 + $0x1190] sm:$0xff]
        %v1873 = vld [vmem:[%s229 + $0x1198] sm:$0xff]
        %v1874 = vld [vmem:[%s229 + $0x11a0] sm:$0xff]
        %v1875 = vld [vmem:[%s229 + $0x11a8] sm:$0xff]
        %v1876 = vld [vmem:[%s229 + $0x11b0] sm:$0xff]
        %v1877 = vld [vmem:[%s229 + $0x11b8] sm:$0xff]
        %v1878 = vld [vmem:[%s229 + $0x11c0] sm:$0xff]
        %v1879 = vld [vmem:[%s229 + $0x11c8] sm:$0xff]
        %v1880 = vld [vmem:[%s229 + $0x11d0] sm:$0xff]
        %v1881 = vld [vmem:[%s229 + $0x11d8] sm:$0xff]
        %v1882 = vld [vmem:[%s229 + $0x11e0] sm:$0xff]
        %v1883 = vld [vmem:[%s229 + $0x11e8] sm:$0xff]
        %v1884 = vld [vmem:[%s229 + $0x11f0] sm:$0xff]
        %v1885 = vld [vmem:[%s229 + $0x11f8] sm:$0xff]
        %v1886 = vld [vmem:[%s229 + $0x1200] sm:$0xff]
        %v1887 = vld [vmem:[%s229 + $0x1208] sm:$0xff]
        %v1888 = vld [vmem:[%s229 + $0x1210] sm:$0xff]
        %v1889 = vld [vmem:[%s229 + $0x1218] sm:$0xff]
        %v1890 = vld [vmem:[%s229 + $0x1220] sm:$0xff]
        %v1891 = vld [vmem:[%s229 + $0x1228] sm:$0xff]
        %v1892 = vld [vmem:[%s229 + $0x1230] sm:$0xff]
        %v1893 = vld [vmem:[%s229 + $0x1238] sm:$0xff]
        %v1894 = vld [vmem:[%s229 + $0x1240] sm:$0xff]
        %v1895 = vld [vmem:[%s229 + $0x1248] sm:$0xff]
        %v1896 = vld [vmem:[%s229 + $0x1250] sm:$0xff]
        %v1897 = vld [vmem:[%s229 + $0x1258] sm:$0xff]
        %v1898 = vld [vmem:[%s229 + $0x1260] sm:$0xff]
        %v1899 = vld [vmem:[%s229 + $0x1268] sm:$0xff]
        %v1900 = vld [vmem:[%s229 + $0x1270] sm:$0xff]
        %v1901 = vld [vmem:[%s229 + $0x1278] sm:$0xff]
        %v1902 = vld [vmem:[%s229 + $0x1280] sm:$0xff]
        %v1903 = vld [vmem:[%s229 + $0x1288] sm:$0xff]
        %v1904 = vld [vmem:[%s229 + $0x1290] sm:$0xff]
        %v1905 = vld [vmem:[%s229 + $0x1298] sm:$0xff]
        %v1906 = vld [vmem:[%s229 + $0x12a0] sm:$0xff]
        %v1907 = vld [vmem:[%s229 + $0x12a8] sm:$0xff]
        %v1908 = vld [vmem:[%s229 + $0x12b0] sm:$0xff]
        %v1909 = vld [vmem:[%s229 + $0x12b8] sm:$0xff]
        %v1910 = vld [vmem:[%s229 + $0x12c0] sm:$0xff]
        %v1911 = vld [vmem:[%s229 + $0x12c8] sm:$0xff]
        %v1912 = vld [vmem:[%s229 + $0x12d0] sm:$0xff]
        %v1913 = vld [vmem:[%s229 + $0x12d8] sm:$0xff]
        %v1914 = vld [vmem:[%s229 + $0x12e0] sm:$0xff]
        %v1915 = vld [vmem:[%s229 + $0x12e8] sm:$0xff]
        %v1916 = vld [vmem:[%s229 + $0x12f0] sm:$0xff]
        %v1917 = vld [vmem:[%s229 + $0x12f8] sm:$0xff]
        %v1918 = vld [vmem:[%s229 + $0x1300] sm:$0xff]
        %v1919 = vld [vmem:[%s229 + $0x1308] sm:$0xff]
        %v1920 = vld [vmem:[%s229 + $0x1310] sm:$0xff]
        %v1921 = vld [vmem:[%s229 + $0x1318] sm:$0xff]
        %v1922 = vld [vmem:[%s229 + $0x1320] sm:$0xff]
        %v1923 = vld [vmem:[%s229 + $0x1328] sm:$0xff]
        %v1924 = vld [vmem:[%s229 + $0x1330] sm:$0xff]
        %v1925 = vld [vmem:[%s229 + $0x1338] sm:$0xff]
        %v1926 = vld [vmem:[%s229 + $0x1340] sm:$0xff]
        %v1927 = vld [vmem:[%s229 + $0x1348] sm:$0xff]
        %v1928 = vld [vmem:[%s229 + $0x1350] sm:$0xff]
        %v1929 = vld [vmem:[%s229 + $0x1358] sm:$0xff]
        %v1930 = vld [vmem:[%s229 + $0x1360] sm:$0xff]
        %v1931 = vld [vmem:[%s229 + $0x1368] sm:$0xff]
        %v1932 = vld [vmem:[%s229 + $0x1370] sm:$0xff]
        %v1933 = vld [vmem:[%s229 + $0x1378] sm:$0xff]
        %v1934 = vld [vmem:[%s229 + $0x1380] sm:$0xff]
        %v1935 = vld [vmem:[%s229 + $0x1388] sm:$0xff]
        %v1936 = vld [vmem:[%s229 + $0x1390] sm:$0xff]
        %v1937 = vld [vmem:[%s229 + $0x1398] sm:$0xff]
        %v1938 = vld [vmem:[%s229 + $0x13a0] sm:$0xff]
        %v1939 = vld [vmem:[%s229 + $0x13a8] sm:$0xff]
        %v1940 = vld [vmem:[%s229 + $0x13b0] sm:$0xff]
        %v1941 = vld [vmem:[%s229 + $0x13b8] sm:$0xff]
        %v1942 = vld [vmem:[%s229 + $0x13c0] sm:$0xff]
        %v1943 = vld [vmem:[%s229 + $0x13c8] sm:$0xff]
        %v1944 = vld [vmem:[%s229 + $0x13d0] sm:$0xff]
        %v1945 = vld [vmem:[%s229 + $0x13d8] sm:$0xff]
        %v1946 = vld [vmem:[%s229 + $0x13e0] sm:$0xff]
        %v1947 = vld [vmem:[%s229 + $0x13e8] sm:$0xff]
        %v1948 = vld [vmem:[%s229 + $0x13f0] sm:$0xff]
        %v1949 = vld [vmem:[%s229 + $0x13f8] sm:$0xff]
        %v1950 = vld [vmem:[%s229 + $0x1400] sm:$0xff]
        %v1951 = vld [vmem:[%s229 + $0x1408] sm:$0xff]
        %v1952 = vld [vmem:[%s229 + $0x1410] sm:$0xff]
        %v1953 = vld [vmem:[%s229 + $0x1418] sm:$0xff]
        %v1954 = vld [vmem:[%s229 + $0x1420] sm:$0xff]
        %v1955 = vld [vmem:[%s229 + $0x1428] sm:$0xff]
        %v1956 = vld [vmem:[%s229 + $0x1430] sm:$0xff]
        %v1957 = vld [vmem:[%s229 + $0x1438] sm:$0xff]
        %v1958 = vld [vmem:[%s229 + $0x1440] sm:$0xff]
        %v1959 = vld [vmem:[%s229 + $0x1448] sm:$0xff]
        %v1960 = vld [vmem:[%s229 + $0x1450] sm:$0xff]
        %v1961 = vld [vmem:[%s229 + $0x1458] sm:$0xff]
        %v1962 = vld [vmem:[%s229 + $0x1460] sm:$0xff]
        %v1963 = vld [vmem:[%s229 + $0x1468] sm:$0xff]
        %v1964 = vld [vmem:[%s229 + $0x1470] sm:$0xff]
        %v1965 = vld [vmem:[%s229 + $0x1478] sm:$0xff]
        %v1966 = vld [vmem:[%s229 + $0x1480] sm:$0xff]
        %v1967 = vld [vmem:[%s229 + $0x1488] sm:$0xff]
        %v1968 = vld [vmem:[%s229 + $0x1490] sm:$0xff]
        %v1969 = vld [vmem:[%s229 + $0x1498] sm:$0xff]
        %v1970 = vld [vmem:[%s229 + $0x14a0] sm:$0xff]
        %v1971 = vld [vmem:[%s229 + $0x14a8] sm:$0xff]
        %v1972 = vld [vmem:[%s229 + $0x14b0] sm:$0xff]
        %v1973 = vld [vmem:[%s229 + $0x14b8] sm:$0xff]
        %v1974 = vld [vmem:[%s229 + $0x14c0] sm:$0xff]
        %v1975 = vld [vmem:[%s229 + $0x14c8] sm:$0xff]
        %v1976 = vld [vmem:[%s229 + $0x14d0] sm:$0xff]
        %v1977 = vld [vmem:[%s229 + $0x14d8] sm:$0xff]
        %v1978 = vld [vmem:[%s229 + $0x14e0] sm:$0xff]
        %v1979 = vld [vmem:[%s229 + $0x14e8] sm:$0xff]
        %v1980 = vld [vmem:[%s229 + $0x14f0] sm:$0xff]
        %v1981 = vld [vmem:[%s229 + $0x14f8] sm:$0xff]
        %v1982 = vld [vmem:[%s229 + $0x1500] sm:$0xff]
        %v1983 = vld [vmem:[%s229 + $0x1508] sm:$0xff]
        %v1984 = vld [vmem:[%s229 + $0x1510] sm:$0xff]
        %v1985 = vld [vmem:[%s229 + $0x1518] sm:$0xff]
        %v1986 = vld [vmem:[%s229 + $0x1520] sm:$0xff]
        %v1987 = vld [vmem:[%s229 + $0x1528] sm:$0xff]
        %v1988 = vld [vmem:[%s229 + $0x1530] sm:$0xff]
        %v1989 = vld [vmem:[%s229 + $0x1538] sm:$0xff]
        %v1990 = vld [vmem:[%s229 + $0x1540] sm:$0xff]
        %v1991 = vld [vmem:[%s229 + $0x1548] sm:$0xff]
        %v1992 = vld [vmem:[%s229 + $0x1550] sm:$0xff]
        %v1993 = vld [vmem:[%s229 + $0x1558] sm:$0xff]
        %v1994 = vld [vmem:[%s229 + $0x1560] sm:$0xff]
        %v1995 = vld [vmem:[%s229 + $0x1568] sm:$0xff]
        %v1996 = vld [vmem:[%s229 + $0x1570] sm:$0xff]
        %v1997 = vld [vmem:[%s229 + $0x1578] sm:$0xff]
        %v1998 = vld [vmem:[%s229 + $0x1580] sm:$0xff]
        %v1999 = vld [vmem:[%s229 + $0x1588] sm:$0xff]
        %v2000 = vld [vmem:[%s229 + $0x1590] sm:$0xff]
        %v2001 = vld [vmem:[%s229 + $0x1598] sm:$0xff]
        %v2002 = vld [vmem:[%s229 + $0x15a0] sm:$0xff]
        %v2003 = vld [vmem:[%s229 + $0x15a8] sm:$0xff]
        %v2004 = vld [vmem:[%s229 + $0x15b0] sm:$0xff]
        %v2005 = vld [vmem:[%s229 + $0x15b8] sm:$0xff]
        %v2006 = vld [vmem:[%s229 + $0x15c0] sm:$0xff]
        %v2007 = vld [vmem:[%s229 + $0x15c8] sm:$0xff]
        %v2008 = vld [vmem:[%s229 + $0x15d0] sm:$0xff]
        %v2009 = vld [vmem:[%s229 + $0x15d8] sm:$0xff]
        %v2010 = vld [vmem:[%s229 + $0x15e0] sm:$0xff]
        %v2011 = vld [vmem:[%s229 + $0x15e8] sm:$0xff]
        %v2012 = vld [vmem:[%s229 + $0x15f0] sm:$0xff]
        %v2013 = vld [vmem:[%s229 + $0x15f8] sm:$0xff]
        %v2014 = vld [vmem:[%s229 + $0x1600] sm:$0xff]
        %v2015 = vld [vmem:[%s229 + $0x1608] sm:$0xff]
        %v2016 = vld [vmem:[%s229 + $0x1610] sm:$0xff]
        %v2017 = vld [vmem:[%s229 + $0x1618] sm:$0xff]
        %v2018 = vld [vmem:[%s229 + $0x1620] sm:$0xff]
        %v2019 = vld [vmem:[%s229 + $0x1628] sm:$0xff]
        %v2020 = vld [vmem:[%s229 + $0x1630] sm:$0xff]
        %v2021 = vld [vmem:[%s229 + $0x1638] sm:$0xff]
        %v2022 = vld [vmem:[%s229 + $0x1640] sm:$0xff]
        %v2023 = vld [vmem:[%s229 + $0x1648] sm:$0xff]
        %v2024 = vld [vmem:[%s229 + $0x1650] sm:$0xff]
        %v2025 = vld [vmem:[%s229 + $0x1658] sm:$0xff]
        %v2026 = vld [vmem:[%s229 + $0x1660] sm:$0xff]
        %v2027 = vld [vmem:[%s229 + $0x1668] sm:$0xff]
        %v2028 = vld [vmem:[%s229 + $0x1670] sm:$0xff]
        %v2029 = vld [vmem:[%s229 + $0x1678] sm:$0xff]
        %v2030 = vld [vmem:[%s229 + $0x1680] sm:$0xff]
        %v2031 = vld [vmem:[%s229 + $0x1688] sm:$0xff]
        %v2032 = vld [vmem:[%s229 + $0x1690] sm:$0xff]
        %v2033 = vld [vmem:[%s229 + $0x1698] sm:$0xff]
        %v2034 = vld [vmem:[%s229 + $0x16a0] sm:$0xff]
        %v2035 = vld [vmem:[%s229 + $0x16a8] sm:$0xff]
        %v2036 = vld [vmem:[%s229 + $0x16b0] sm:$0xff]
        %v2037 = vld [vmem:[%s229 + $0x16b8] sm:$0xff]
        %v2038 = vld [vmem:[%s229 + $0x16c0] sm:$0xff]
        %v2039 = vld [vmem:[%s229 + $0x16c8] sm:$0xff]
        %v2040 = vld [vmem:[%s229 + $0x16d0] sm:$0xff]
        %v2041 = vld [vmem:[%s229 + $0x16d8] sm:$0xff]
        %v2042 = vld [vmem:[%s229 + $0x16e0] sm:$0xff]
        %v2043 = vld [vmem:[%s229 + $0x16e8] sm:$0xff]
        %v2044 = vld [vmem:[%s229 + $0x16f0] sm:$0xff]
        %v2045 = vld [vmem:[%s229 + $0x16f8] sm:$0xff]
        %v2046 = vld [vmem:[%s229 + $0x1700] sm:$0xff]
        %v2047 = vld [vmem:[%s229 + $0x1708] sm:$0xff]
        %v2048 = vld [vmem:[%s229 + $0x1710] sm:$0xff]
        %v2049 = vld [vmem:[%s229 + $0x1718] sm:$0xff]
        %v2050 = vld [vmem:[%s229 + $0x1720] sm:$0xff]
        %v2051 = vld [vmem:[%s229 + $0x1728] sm:$0xff]
        %v2052 = vld [vmem:[%s229 + $0x1730] sm:$0xff]
        %v2053 = vld [vmem:[%s229 + $0x1738] sm:$0xff]
        %v2054 = vld [vmem:[%s229 + $0x1740] sm:$0xff]
        %v2055 = vld [vmem:[%s229 + $0x1748] sm:$0xff]
        %v2056 = vld [vmem:[%s229 + $0x1750] sm:$0xff]
        %v2057 = vld [vmem:[%s229 + $0x1758] sm:$0xff]
        %v2058 = vld [vmem:[%s229 + $0x1760] sm:$0xff]
        %v2059 = vld [vmem:[%s229 + $0x1768] sm:$0xff]
        %v2060 = vld [vmem:[%s229 + $0x1770] sm:$0xff]
        %v2061 = vld [vmem:[%s229 + $0x1778] sm:$0xff]
        %v2062 = vld [vmem:[%s229 + $0x1780] sm:$0xff]
        %v2063 = vld [vmem:[%s229 + $0x1788] sm:$0xff]
        %v2064 = vld [vmem:[%s229 + $0x1790] sm:$0xff]
        %v2065 = vld [vmem:[%s229 + $0x1798] sm:$0xff]
        %v2066 = vld [vmem:[%s229 + $0x17a0] sm:$0xff]
        %v2067 = vld [vmem:[%s229 + $0x17a8] sm:$0xff]
        %v2068 = vld [vmem:[%s229 + $0x17b0] sm:$0xff]
        %v2069 = vld [vmem:[%s229 + $0x17b8] sm:$0xff]
        %v2070 = vld [vmem:[%s229 + $0x17c0] sm:$0xff]
        %v2071 = vld [vmem:[%s229 + $0x17c8] sm:$0xff]
        %v2072 = vld [vmem:[%s229 + $0x17d0] sm:$0xff]
        %v2073 = vld [vmem:[%s229 + $0x17d8] sm:$0xff]
        %v2074 = vld [vmem:[%s229 + $0x17e0] sm:$0xff]
        %v2075 = vld [vmem:[%s229 + $0x17e8] sm:$0xff]
        %v2076 = vld [vmem:[%s229 + $0x17f0] sm:$0xff]
        %v2077 = vld [vmem:[%s229 + $0x17f8] sm:$0xff]
        %v2078 = vld [vmem:[%s229 + $0x1800] sm:$0xff]
        %v2079 = vld [vmem:[%s229 + $0x1808] sm:$0xff]
        %v2080 = vld [vmem:[%s229 + $0x1810] sm:$0xff]
        %v2081 = vld [vmem:[%s229 + $0x1818] sm:$0xff]
        %v2082 = vld [vmem:[%s229 + $0x1820] sm:$0xff]
        %v2083 = vld [vmem:[%s229 + $0x1828] sm:$0xff]
        %v2084 = vld [vmem:[%s229 + $0x1830] sm:$0xff]
        %v2085 = vld [vmem:[%s229 + $0x1838] sm:$0xff]
        %v2086 = vld [vmem:[%s229 + $0x1840] sm:$0xff]
        %v2087 = vld [vmem:[%s229 + $0x1848] sm:$0xff]
        %v2088 = vld [vmem:[%s229 + $0x1850] sm:$0xff]
        %v2089 = vld [vmem:[%s229 + $0x1858] sm:$0xff]
        %v2090 = vld [vmem:[%s229 + $0x1860] sm:$0xff]
        %v2091 = vld [vmem:[%s229 + $0x1868] sm:$0xff]
        %v2092 = vld [vmem:[%s229 + $0x1870] sm:$0xff]
        %v2093 = vld [vmem:[%s229 + $0x1878] sm:$0xff]
        %v2094 = vld [vmem:[%s229 + $0x1880] sm:$0xff]
        %v2095 = vld [vmem:[%s229 + $0x1888] sm:$0xff]
        %v2096 = vld [vmem:[%s229 + $0x1890] sm:$0xff]
        %v2097 = vld [vmem:[%s229 + $0x1898] sm:$0xff]
        %v2098 = vld [vmem:[%s229 + $0x18a0] sm:$0xff]
        %v2099 = vld [vmem:[%s229 + $0x18a8] sm:$0xff]
        %v2100 = vld [vmem:[%s229 + $0x18b0] sm:$0xff]
        %v2101 = vld [vmem:[%s229 + $0x18b8] sm:$0xff]
        %v2102 = vld [vmem:[%s229 + $0x18c0] sm:$0xff]
        %v2103 = vld [vmem:[%s229 + $0x18c8] sm:$0xff]
        %v2104 = vld [vmem:[%s229 + $0x18d0] sm:$0xff]
        %v2105 = vld [vmem:[%s229 + $0x18d8] sm:$0xff]
        %v2106 = vld [vmem:[%s229 + $0x18e0] sm:$0xff]
        %v2107 = vld [vmem:[%s229 + $0x18e8] sm:$0xff]
        %v2108 = vld [vmem:[%s229 + $0x18f0] sm:$0xff]
        %v2109 = vld [vmem:[%s229 + $0x18f8] sm:$0xff]
        %v2110 = vld [vmem:[%s229 + $0x1900] sm:$0xff]
        %v2111 = vld [vmem:[%s229 + $0x1908] sm:$0xff]
        %v2112 = vld [vmem:[%s229 + $0x1910] sm:$0xff]
        %v2113 = vld [vmem:[%s229 + $0x1918] sm:$0xff]
        %v2114 = vld [vmem:[%s229 + $0x1920] sm:$0xff]
        %v2115 = vld [vmem:[%s229 + $0x1928] sm:$0xff]
        %v2116 = vld [vmem:[%s229 + $0x1930] sm:$0xff]
        %v2117 = vld [vmem:[%s229 + $0x1938] sm:$0xff]
        %v2118 = vld [vmem:[%s229 + $0x1940] sm:$0xff]
        %v2119 = vld [vmem:[%s229 + $0x1948] sm:$0xff]
        %v2120 = vld [vmem:[%s229 + $0x1950] sm:$0xff]
        %v2121 = vld [vmem:[%s229 + $0x1958] sm:$0xff]
        %v2122 = vld [vmem:[%s229 + $0x1960] sm:$0xff]
        %v2123 = vld [vmem:[%s229 + $0x1968] sm:$0xff]
        %v2124 = vld [vmem:[%s229 + $0x1970] sm:$0xff]
        %v2125 = vld [vmem:[%s229 + $0x1978] sm:$0xff]
        %v2126 = vld [vmem:[%s229 + $0x1980] sm:$0xff]
        %v2127 = vld [vmem:[%s229 + $0x1988] sm:$0xff]
        %v2128 = vld [vmem:[%s229 + $0x1990] sm:$0xff]
        %v2129 = vld [vmem:[%s229 + $0x1998] sm:$0xff]
        %v2130 = vld [vmem:[%s229 + $0x19a0] sm:$0xff]
        %v2131 = vld [vmem:[%s229 + $0x19a8] sm:$0xff]
        %v2132 = vld [vmem:[%s229 + $0x19b0] sm:$0xff]
        %v2133 = vld [vmem:[%s229 + $0x19b8] sm:$0xff]
        %v2134 = vld [vmem:[%s229 + $0x19c0] sm:$0xff]
        %v2135 = vld [vmem:[%s229 + $0x19c8] sm:$0xff]
        %v2136 = vld [vmem:[%s229 + $0x19d0] sm:$0xff]
        %v2137 = vld [vmem:[%s229 + $0x19d8] sm:$0xff]
        %v2138 = vld [vmem:[%s229 + $0x19e0] sm:$0xff]
        %v2139 = vld [vmem:[%s229 + $0x19e8] sm:$0xff]
        %v2140 = vld [vmem:[%s229 + $0x19f0] sm:$0xff]
        %v2141 = vld [vmem:[%s229 + $0x19f8] sm:$0xff]
        %v2142 = vld [vmem:[%s229 + $0x1a00] sm:$0xff]
        %v2143 = vld [vmem:[%s229 + $0x1a08] sm:$0xff]
        %v2144 = vld [vmem:[%s229 + $0x1a10] sm:$0xff]
        %v2145 = vld [vmem:[%s229 + $0x1a18] sm:$0xff]
        %v2146 = vld [vmem:[%s229 + $0x1a20] sm:$0xff]
        %v2147 = vld [vmem:[%s229 + $0x1a28] sm:$0xff]
        %v2148 = vld [vmem:[%s229 + $0x1a30] sm:$0xff]
        %v2149 = vld [vmem:[%s229 + $0x1a38] sm:$0xff]
        %v2150 = vld [vmem:[%s229 + $0x1a40] sm:$0xff]
        %v2151 = vld [vmem:[%s229 + $0x1a48] sm:$0xff]
        %v2152 = vld [vmem:[%s229 + $0x1a50] sm:$0xff]
        %v2153 = vld [vmem:[%s229 + $0x1a58] sm:$0xff]
        %v2154 = vld [vmem:[%s229 + $0x1a60] sm:$0xff]
        %v2155 = vld [vmem:[%s229 + $0x1a68] sm:$0xff]
        %v2156 = vld [vmem:[%s229 + $0x1a70] sm:$0xff]
        %v2157 = vld [vmem:[%s229 + $0x1a78] sm:$0xff]
        %v2158 = vld [vmem:[%s229 + $0x1a80] sm:$0xff]
        %v2159 = vld [vmem:[%s229 + $0x1a88] sm:$0xff]
        %v2160 = vld [vmem:[%s229 + $0x1a90] sm:$0xff]
        %v2161 = vld [vmem:[%s229 + $0x1a98] sm:$0xff]
        %v2162 = vld [vmem:[%s229 + $0x1aa0] sm:$0xff]
        %v2163 = vld [vmem:[%s229 + $0x1aa8] sm:$0xff]
        %v2164 = vld [vmem:[%s229 + $0x1ab0] sm:$0xff]
        %v2165 = vld [vmem:[%s229 + $0x1ab8] sm:$0xff]
        %v2166 = vld [vmem:[%s229 + $0x1ac0] sm:$0xff]
        %v2167 = vld [vmem:[%s229 + $0x1ac8] sm:$0xff]
        %v2168 = vld [vmem:[%s229 + $0x1ad0] sm:$0xff]
        %v2169 = vld [vmem:[%s229 + $0x1ad8] sm:$0xff]
        %v2170 = vld [vmem:[%s229 + $0x1ae0] sm:$0xff]
        %v2171 = vld [vmem:[%s229 + $0x1ae8] sm:$0xff]
        %v2172 = vld [vmem:[%s229 + $0x1af0] sm:$0xff]
        %v2173 = vld [vmem:[%s229 + $0x1af8] sm:$0xff]
        %v2174 = vld [vmem:[%s229 + $0x1b00] sm:$0xff]
        %v2175 = vld [vmem:[%s229 + $0x1b08] sm:$0xff]
        %v2176 = vld [vmem:[%s229 + $0x1b10] sm:$0xff]
        %v2177 = vld [vmem:[%s229 + $0x1b18] sm:$0xff]
        %v2178 = vld [vmem:[%s229 + $0x1b20] sm:$0xff]
        %v2179 = vld [vmem:[%s229 + $0x1b28] sm:$0xff]
        %v2180 = vld [vmem:[%s229 + $0x1b30] sm:$0xff]
        %v2181 = vld [vmem:[%s229 + $0x1b38] sm:$0xff]
        %v2182 = vld [vmem:[%s229 + $0x1b40] sm:$0xff]
        %v2183 = vld [vmem:[%s229 + $0x1b48] sm:$0xff]
        %v2184 = vld [vmem:[%s229 + $0x1b50] sm:$0xff]
        %v2185 = vld [vmem:[%s229 + $0x1b58] sm:$0xff]
        %v2186 = vld [vmem:[%s229 + $0x1b60] sm:$0xff]
        %v2187 = vld [vmem:[%s229 + $0x1b68] sm:$0xff]
        %v2188 = vld [vmem:[%s229 + $0x1b70] sm:$0xff]
        %v2189 = vld [vmem:[%s229 + $0x1b78] sm:$0xff]
        %v2190 = vld [vmem:[%s229 + $0x1b80] sm:$0xff]
        %v2191 = vld [vmem:[%s229 + $0x1b88] sm:$0xff]
        %v2192 = vld [vmem:[%s229 + $0x1b90] sm:$0xff]
        %v2193 = vld [vmem:[%s229 + $0x1b98] sm:$0xff]
        %v2194 = vld [vmem:[%s229 + $0x1ba0] sm:$0xff]
        %v2195 = vld [vmem:[%s229 + $0x1ba8] sm:$0xff]
        %v2196 = vld [vmem:[%s229 + $0x1bb0] sm:$0xff]
        %v2197 = vld [vmem:[%s229 + $0x1bb8] sm:$0xff]
        %v2198 = vld [vmem:[%s229 + $0x1bc0] sm:$0xff]
        %v2199 = vld [vmem:[%s229 + $0x1bc8] sm:$0xff]
        %v2200 = vld [vmem:[%s229 + $0x1bd0] sm:$0xff]
        %v2201 = vld [vmem:[%s229 + $0x1bd8] sm:$0xff]
        %v2202 = vld [vmem:[%s229 + $0x1be0] sm:$0xff]
        %v2203 = vld [vmem:[%s229 + $0x1be8] sm:$0xff]
        %v2204 = vld [vmem:[%s229 + $0x1bf0] sm:$0xff]
        %v2205 = vld [vmem:[%s229 + $0x1bf8] sm:$0xff]
        %v2206 = vld [vmem:[%s229 + $0x1c00] sm:$0xff]
        %v2207 = vld [vmem:[%s229 + $0x1c08] sm:$0xff]
        %v2208 = vld [vmem:[%s229 + $0x1c10] sm:$0xff]
        %v2209 = vld [vmem:[%s229 + $0x1c18] sm:$0xff]
        %v2210 = vld [vmem:[%s229 + $0x1c20] sm:$0xff]
        %v2211 = vld [vmem:[%s229 + $0x1c28] sm:$0xff]
        %v2212 = vld [vmem:[%s229 + $0x1c30] sm:$0xff]
        %v2213 = vld [vmem:[%s229 + $0x1c38] sm:$0xff]
        %v2214 = vld [vmem:[%s229 + $0x1c40] sm:$0xff]
        %v2215 = vld [vmem:[%s229 + $0x1c48] sm:$0xff]
        %v2216 = vld [vmem:[%s229 + $0x1c50] sm:$0xff]
        %v2217 = vld [vmem:[%s229 + $0x1c58] sm:$0xff]
        %v2218 = vld [vmem:[%s229 + $0x1c60] sm:$0xff]
        %v2219 = vld [vmem:[%s229 + $0x1c68] sm:$0xff]
        %v2220 = vld [vmem:[%s229 + $0x1c70] sm:$0xff]
        %v2221 = vld [vmem:[%s229 + $0x1c78] sm:$0xff]
        %v2222 = vld [vmem:[%s229 + $0x1c80] sm:$0xff]
        %v2223 = vld [vmem:[%s229 + $0x1c88] sm:$0xff]
        %v2224 = vld [vmem:[%s229 + $0x1c90] sm:$0xff]
        %v2225 = vld [vmem:[%s229 + $0x1c98] sm:$0xff]
        %v2226 = vld [vmem:[%s229 + $0x1ca0] sm:$0xff]
        %v2227 = vld [vmem:[%s229 + $0x1ca8] sm:$0xff]
        %v2228 = vld [vmem:[%s229 + $0x1cb0] sm:$0xff]
        %v2229 = vld [vmem:[%s229 + $0x1cb8] sm:$0xff]
        %v2230 = vld [vmem:[%s229 + $0x1cc0] sm:$0xff]
        %v2231 = vld [vmem:[%s229 + $0x1cc8] sm:$0xff]
        %v2232 = vld [vmem:[%s229 + $0x1cd0] sm:$0xff]
        %v2233 = vld [vmem:[%s229 + $0x1cd8] sm:$0xff]
        %v2234 = vld [vmem:[%s229 + $0x1ce0] sm:$0xff]
        %v2235 = vld [vmem:[%s229 + $0x1ce8] sm:$0xff]
        %v2236 = vld [vmem:[%s229 + $0x1cf0] sm:$0xff]
        %v2237 = vld [vmem:[%s229 + $0x1cf8] sm:$0xff]
        %v2238 = vld [vmem:[%s229 + $0x1d00] sm:$0xff]
        %v2239 = vld [vmem:[%s229 + $0x1d08] sm:$0xff]
        %v2240 = vld [vmem:[%s229 + $0x1d10] sm:$0xff]
        %v2241 = vld [vmem:[%s229 + $0x1d18] sm:$0xff]
        %v2242 = vld [vmem:[%s229 + $0x1d20] sm:$0xff]
        %v2243 = vld [vmem:[%s229 + $0x1d28] sm:$0xff]
        %v2244 = vld [vmem:[%s229 + $0x1d30] sm:$0xff]
        %v2245 = vld [vmem:[%s229 + $0x1d38] sm:$0xff]
        %v2246 = vld [vmem:[%s229 + $0x1d40] sm:$0xff]
        %v2247 = vld [vmem:[%s229 + $0x1d48] sm:$0xff]
        %v2248 = vld [vmem:[%s229 + $0x1d50] sm:$0xff]
        %v2249 = vld [vmem:[%s229 + $0x1d58] sm:$0xff]
        %v2250 = vld [vmem:[%s229 + $0x1d60] sm:$0xff]
        %v2251 = vld [vmem:[%s229 + $0x1d68] sm:$0xff]
        %v2252 = vld [vmem:[%s229 + $0x1d70] sm:$0xff]
        %v2253 = vld [vmem:[%s229 + $0x1d78] sm:$0xff]
        %v2254 = vld [vmem:[%s229 + $0x1d80] sm:$0xff]
        %v2255 = vld [vmem:[%s229 + $0x1d88] sm:$0xff]
        %v2256 = vld [vmem:[%s229 + $0x1d90] sm:$0xff]
        %v2257 = vld [vmem:[%s229 + $0x1d98] sm:$0xff]
        %v2258 = vld [vmem:[%s229 + $0x1da0] sm:$0xff]
        %v2259 = vld [vmem:[%s229 + $0x1da8] sm:$0xff]
        %v2260 = vld [vmem:[%s229 + $0x1db0] sm:$0xff]
        %v2261 = vld [vmem:[%s229 + $0x1db8] sm:$0xff]
        %v2262 = vld [vmem:[%s229 + $0x1dc0] sm:$0xff]
        %v2263 = vld [vmem:[%s229 + $0x1dc8] sm:$0xff]
        %v2264 = vld [vmem:[%s229 + $0x1dd0] sm:$0xff]
        %v2265 = vld [vmem:[%s229 + $0x1dd8] sm:$0xff]
        %v2266 = vld [vmem:[%s229 + $0x1de0] sm:$0xff]
        %v2267 = vld [vmem:[%s229 + $0x1de8] sm:$0xff]
        %v2268 = vld [vmem:[%s229 + $0x1df0] sm:$0xff]
        %v2269 = vld [vmem:[%s229 + $0x1df8] sm:$0xff]
        %v2270 = vld [vmem:[%s229 + $0x1e00] sm:$0xff]
        %v2271 = vld [vmem:[%s229 + $0x1e08] sm:$0xff]
        %v2272 = vld [vmem:[%s229 + $0x1e10] sm:$0xff]
        %v2273 = vld [vmem:[%s229 + $0x1e18] sm:$0xff]
        %v2274 = vld [vmem:[%s229 + $0x1e20] sm:$0xff]
        %v2275 = vld [vmem:[%s229 + $0x1e28] sm:$0xff]
        %v2276 = vld [vmem:[%s229 + $0x1e30] sm:$0xff]
        %v2277 = vld [vmem:[%s229 + $0x1e38] sm:$0xff]
        %v2278 = vld [vmem:[%s229 + $0x1e40] sm:$0xff]
        %v2279 = vld [vmem:[%s229 + $0x1e48] sm:$0xff]
        %v2280 = vld [vmem:[%s229 + $0x1e50] sm:$0xff]
        %v2281 = vld [vmem:[%s229 + $0x1e58] sm:$0xff]
        %v2282 = vld [vmem:[%s229 + $0x1e60] sm:$0xff]
        %v2283 = vld [vmem:[%s229 + $0x1e68] sm:$0xff]
        %v2284 = vld [vmem:[%s229 + $0x1e70] sm:$0xff]
        %v2285 = vld [vmem:[%s229 + $0x1e78] sm:$0xff]
        %v2286 = vld [vmem:[%s229 + $0x1e80] sm:$0xff]
        %v2287 = vld [vmem:[%s229 + $0x1e88] sm:$0xff]
        %v2288 = vld [vmem:[%s229 + $0x1e90] sm:$0xff]
        %v2289 = vld [vmem:[%s229 + $0x1e98] sm:$0xff]
        %v2290 = vld [vmem:[%s229 + $0x1ea0] sm:$0xff]
        %v2291 = vld [vmem:[%s229 + $0x1ea8] sm:$0xff]
        %v2292 = vld [vmem:[%s229 + $0x1eb0] sm:$0xff]
        %v2293 = vld [vmem:[%s229 + $0x1eb8] sm:$0xff]
        %v2294 = vld [vmem:[%s229 + $0x1ec0] sm:$0xff]
        %v2295 = vld [vmem:[%s229 + $0x1ec8] sm:$0xff]
        %v2296 = vld [vmem:[%s229 + $0x1ed0] sm:$0xff]
        %v2297 = vld [vmem:[%s229 + $0x1ed8] sm:$0xff]
        %v2298 = vld [vmem:[%s229 + $0x1ee0] sm:$0xff]
        %v2299 = vld [vmem:[%s229 + $0x1ee8] sm:$0xff]
        %v2300 = vld [vmem:[%s229 + $0x1ef0] sm:$0xff]
        %v2301 = vld [vmem:[%s229 + $0x1ef8] sm:$0xff]
        %v2302 = vld [vmem:[%s229 + $0x1f00] sm:$0xff]
        %v2303 = vld [vmem:[%s229 + $0x1f08] sm:$0xff]
        %v2304 = vld [vmem:[%s229 + $0x1f10] sm:$0xff]
        %v2305 = vld [vmem:[%s229 + $0x1f18] sm:$0xff]
        %v2306 = vld [vmem:[%s229 + $0x1f20] sm:$0xff]
        %v2307 = vld [vmem:[%s229 + $0x1f28] sm:$0xff]
        %v2308 = vld [vmem:[%s229 + $0x1f30] sm:$0xff]
        %v2309 = vld [vmem:[%s229 + $0x1f38] sm:$0xff]
        %v2310 = vld [vmem:[%s229 + $0x1f40] sm:$0xff]
        %v2311 = vld [vmem:[%s229 + $0x1f48] sm:$0xff]
        %v2312 = vld [vmem:[%s229 + $0x1f50] sm:$0xff]
        %v2313 = vld [vmem:[%s229 + $0x1f58] sm:$0xff]
        %v2314 = vld [vmem:[%s229 + $0x1f60] sm:$0xff]
        %v2315 = vld [vmem:[%s229 + $0x1f68] sm:$0xff]
        %v2316 = vld [vmem:[%s229 + $0x1f70] sm:$0xff]
        %v2317 = vld [vmem:[%s229 + $0x1f78] sm:$0xff]
        %v2318 = vld [vmem:[%s229 + $0x1f80] sm:$0xff]
        %v2319 = vld [vmem:[%s229 + $0x1f88] sm:$0xff]
        %v2320 = vld [vmem:[%s229 + $0x1f90] sm:$0xff]
        %v2321 = vld [vmem:[%s229 + $0x1f98] sm:$0xff]
        %v2322 = vld [vmem:[%s229 + $0x1fa0] sm:$0xff]
        %v2323 = vld [vmem:[%s229 + $0x1fa8] sm:$0xff]
        %v2324 = vld [vmem:[%s229 + $0x1fb0] sm:$0xff]
        %v2325 = vld [vmem:[%s229 + $0x1fb8] sm:$0xff]
        %v2326 = vld [vmem:[%s229 + $0x1fc0] sm:$0xff]
        %v2327 = vld [vmem:[%s229 + $0x1fc8] sm:$0xff]
        %v2328 = vld [vmem:[%s229 + $0x1fd0] sm:$0xff]
        %v2329 = vld [vmem:[%s229 + $0x1fd8] sm:$0xff]
        %v2330 = vld [vmem:[%s229 + $0x1fe0] sm:$0xff]
        %v2331 = vld [vmem:[%s229 + $0x1fe8] sm:$0xff]
        %v2332 = vld [vmem:[%s229 + $0x1ff0] sm:$0xff]
        %v2333 = vld [vmem:[%s229 + $0x1ff8] sm:$0xff]
        %v2334 = vsub.f32 %v286, %v1310
        %v2335 = vsub.f32 %v287, %v1311
        %v2336 = vsub.f32 %v288, %v1312
        %v2337 = vsub.f32 %v289, %v1313
        %v2338 = vsub.f32 %v290, %v1314
        %v2339 = vsub.f32 %v291, %v1315
        %v2340 = vsub.f32 %v292, %v1316
        %v2341 = vsub.f32 %v293, %v1317
        %v2342 = vsub.f32 %v294, %v1318
        %v2343 = vsub.f32 %v295, %v1319
        %v2344 = vsub.f32 %v296, %v1320
        %v2345 = vsub.f32 %v297, %v1321
        %v2346 = vsub.f32 %v298, %v1322
        %v2347 = vsub.f32 %v299, %v1323
        %v2348 = vsub.f32 %v300, %v1324
        %v2349 = vsub.f32 %v301, %v1325
        %v2350 = vsub.f32 %v302, %v1326
        %v2351 = vsub.f32 %v303, %v1327
        %v2352 = vsub.f32 %v304, %v1328
        %v2353 = vsub.f32 %v305, %v1329
        %v2354 = vsub.f32 %v306, %v1330
        %v2355 = vsub.f32 %v307, %v1331
        %v2356 = vsub.f32 %v308, %v1332
        %v2357 = vsub.f32 %v309, %v1333
        %v2358 = vsub.f32 %v310, %v1334
        %v2359 = vsub.f32 %v311, %v1335
        %v2360 = vsub.f32 %v312, %v1336
        %v2361 = vsub.f32 %v313, %v1337
        %v2362 = vsub.f32 %v314, %v1338
        %v2363 = vsub.f32 %v315, %v1339
        %v2364 = vsub.f32 %v316, %v1340
        %v2365 = vsub.f32 %v317, %v1341
        %v2366 = vsub.f32 %v318, %v1342
        %v2367 = vsub.f32 %v319, %v1343
        %v2368 = vsub.f32 %v320, %v1344
        %v2369 = vsub.f32 %v321, %v1345
        %v2370 = vsub.f32 %v322, %v1346
        %v2371 = vsub.f32 %v323, %v1347
        %v2372 = vsub.f32 %v324, %v1348
        %v2373 = vsub.f32 %v325, %v1349
        %v2374 = vsub.f32 %v326, %v1350
        %v2375 = vsub.f32 %v327, %v1351
        %v2376 = vsub.f32 %v328, %v1352
        %v2377 = vsub.f32 %v329, %v1353
        %v2378 = vsub.f32 %v330, %v1354
        %v2379 = vsub.f32 %v331, %v1355
        %v2380 = vsub.f32 %v332, %v1356
        %v2381 = vsub.f32 %v333, %v1357
        %v2382 = vsub.f32 %v334, %v1358
        %v2383 = vsub.f32 %v335, %v1359
        %v2384 = vsub.f32 %v336, %v1360
        %v2385 = vsub.f32 %v337, %v1361
        %v2386 = vsub.f32 %v338, %v1362
        %v2387 = vsub.f32 %v339, %v1363
        %v2388 = vsub.f32 %v340, %v1364
        %v2389 = vsub.f32 %v341, %v1365
        %v2390 = vsub.f32 %v342, %v1366
        %v2391 = vsub.f32 %v343, %v1367
        %v2392 = vsub.f32 %v344, %v1368
        %v2393 = vsub.f32 %v345, %v1369
        %v2394 = vsub.f32 %v346, %v1370
        %v2395 = vsub.f32 %v347, %v1371
        %v2396 = vsub.f32 %v348, %v1372
        %v2397 = vsub.f32 %v349, %v1373
        %v2398 = vsub.f32 %v350, %v1374
        %v2399 = vsub.f32 %v351, %v1375
        %v2400 = vsub.f32 %v352, %v1376
        %v2401 = vsub.f32 %v353, %v1377
        %v2402 = vsub.f32 %v354, %v1378
        %v2403 = vsub.f32 %v355, %v1379
        %v2404 = vsub.f32 %v356, %v1380
        %v2405 = vsub.f32 %v357, %v1381
        %v2406 = vsub.f32 %v358, %v1382
        %v2407 = vsub.f32 %v359, %v1383
        %v2408 = vsub.f32 %v360, %v1384
        %v2409 = vsub.f32 %v361, %v1385
        %v2410 = vsub.f32 %v362, %v1386
        %v2411 = vsub.f32 %v363, %v1387
        %v2412 = vsub.f32 %v364, %v1388
        %v2413 = vsub.f32 %v365, %v1389
        %v2414 = vsub.f32 %v366, %v1390
        %v2415 = vsub.f32 %v367, %v1391
        %v2416 = vsub.f32 %v368, %v1392
        %v2417 = vsub.f32 %v369, %v1393
        %v2418 = vsub.f32 %v370, %v1394
        %v2419 = vsub.f32 %v371, %v1395
        %v2420 = vsub.f32 %v372, %v1396
        %v2421 = vsub.f32 %v373, %v1397
        %v2422 = vsub.f32 %v374, %v1398
        %v2423 = vsub.f32 %v375, %v1399
        %v2424 = vsub.f32 %v376, %v1400
        %v2425 = vsub.f32 %v377, %v1401
        %v2426 = vsub.f32 %v378, %v1402
        %v2427 = vsub.f32 %v379, %v1403
        %v2428 = vsub.f32 %v380, %v1404
        %v2429 = vsub.f32 %v381, %v1405
        %v2430 = vsub.f32 %v382, %v1406
        %v2431 = vsub.f32 %v383, %v1407
        %v2432 = vsub.f32 %v384, %v1408
        %v2433 = vsub.f32 %v385, %v1409
        %v2434 = vsub.f32 %v386, %v1410
        %v2435 = vsub.f32 %v387, %v1411
        %v2436 = vsub.f32 %v388, %v1412
        %v2437 = vsub.f32 %v389, %v1413
        %v2438 = vsub.f32 %v390, %v1414
        %v2439 = vsub.f32 %v391, %v1415
        %v2440 = vsub.f32 %v392, %v1416
        %v2441 = vsub.f32 %v393, %v1417
        %v2442 = vsub.f32 %v394, %v1418
        %v2443 = vsub.f32 %v395, %v1419
        %v2444 = vsub.f32 %v396, %v1420
        %v2445 = vsub.f32 %v397, %v1421
        %v2446 = vsub.f32 %v398, %v1422
        %v2447 = vsub.f32 %v399, %v1423
        %v2448 = vsub.f32 %v400, %v1424
        %v2449 = vsub.f32 %v401, %v1425
        %v2450 = vsub.f32 %v402, %v1426
        %v2451 = vsub.f32 %v403, %v1427
        %v2452 = vsub.f32 %v404, %v1428
        %v2453 = vsub.f32 %v405, %v1429
        %v2454 = vsub.f32 %v406, %v1430
        %v2455 = vsub.f32 %v407, %v1431
        %v2456 = vsub.f32 %v408, %v1432
        %v2457 = vsub.f32 %v409, %v1433
        %v2458 = vsub.f32 %v410, %v1434
        %v2459 = vsub.f32 %v411, %v1435
        %v2460 = vsub.f32 %v412, %v1436
        %v2461 = vsub.f32 %v413, %v1437
        %v2462 = vsub.f32 %v414, %v1438
        %v2463 = vsub.f32 %v415, %v1439
        %v2464 = vsub.f32 %v416, %v1440
        %v2465 = vsub.f32 %v417, %v1441
        %v2466 = vsub.f32 %v418, %v1442
        %v2467 = vsub.f32 %v419, %v1443
        %v2468 = vsub.f32 %v420, %v1444
        %v2469 = vsub.f32 %v421, %v1445
        %v2470 = vsub.f32 %v422, %v1446
        %v2471 = vsub.f32 %v423, %v1447
        %v2472 = vsub.f32 %v424, %v1448
        %v2473 = vsub.f32 %v425, %v1449
        %v2474 = vsub.f32 %v426, %v1450
        %v2475 = vsub.f32 %v427, %v1451
        %v2476 = vsub.f32 %v428, %v1452
        %v2477 = vsub.f32 %v429, %v1453
        %v2478 = vsub.f32 %v430, %v1454
        %v2479 = vsub.f32 %v431, %v1455
        %v2480 = vsub.f32 %v432, %v1456
        %v2481 = vsub.f32 %v433, %v1457
        %v2482 = vsub.f32 %v434, %v1458
        %v2483 = vsub.f32 %v435, %v1459
        %v2484 = vsub.f32 %v436, %v1460
        %v2485 = vsub.f32 %v437, %v1461
        %v2486 = vsub.f32 %v438, %v1462
        %v2487 = vsub.f32 %v439, %v1463
        %v2488 = vsub.f32 %v440, %v1464
        %v2489 = vsub.f32 %v441, %v1465
        %v2490 = vsub.f32 %v442, %v1466
        %v2491 = vsub.f32 %v443, %v1467
        %v2492 = vsub.f32 %v444, %v1468
        %v2493 = vsub.f32 %v445, %v1469
        %v2494 = vsub.f32 %v446, %v1470
        %v2495 = vsub.f32 %v447, %v1471
        %v2496 = vsub.f32 %v448, %v1472
        %v2497 = vsub.f32 %v449, %v1473
        %v2498 = vsub.f32 %v450, %v1474
        %v2499 = vsub.f32 %v451, %v1475
        %v2500 = vsub.f32 %v452, %v1476
        %v2501 = vsub.f32 %v453, %v1477
        %v2502 = vsub.f32 %v454, %v1478
        %v2503 = vsub.f32 %v455, %v1479
        %v2504 = vsub.f32 %v456, %v1480
        %v2505 = vsub.f32 %v457, %v1481
        %v2506 = vsub.f32 %v458, %v1482
        %v2507 = vsub.f32 %v459, %v1483
        %v2508 = vsub.f32 %v460, %v1484
        %v2509 = vsub.f32 %v461, %v1485
        %v2510 = vsub.f32 %v462, %v1486
        %v2511 = vsub.f32 %v463, %v1487
        %v2512 = vsub.f32 %v464, %v1488
        %v2513 = vsub.f32 %v465, %v1489
        %v2514 = vsub.f32 %v466, %v1490
        %v2515 = vsub.f32 %v467, %v1491
        %v2516 = vsub.f32 %v468, %v1492
        %v2517 = vsub.f32 %v469, %v1493
        %v2518 = vsub.f32 %v470, %v1494
        %v2519 = vsub.f32 %v471, %v1495
        %v2520 = vsub.f32 %v472, %v1496
        %v2521 = vsub.f32 %v473, %v1497
        %v2522 = vsub.f32 %v474, %v1498
        %v2523 = vsub.f32 %v475, %v1499
        %v2524 = vsub.f32 %v476, %v1500
        %v2525 = vsub.f32 %v477, %v1501
        %v2526 = vsub.f32 %v478, %v1502
        %v2527 = vsub.f32 %v479, %v1503
        %v2528 = vsub.f32 %v480, %v1504
        %v2529 = vsub.f32 %v481, %v1505
        %v2530 = vsub.f32 %v482, %v1506
        %v2531 = vsub.f32 %v483, %v1507
        %v2532 = vsub.f32 %v484, %v1508
        %v2533 = vsub.f32 %v485, %v1509
        %v2534 = vsub.f32 %v486, %v1510
        %v2535 = vsub.f32 %v487, %v1511
        %v2536 = vsub.f32 %v488, %v1512
        %v2537 = vsub.f32 %v489, %v1513
        %v2538 = vsub.f32 %v490, %v1514
        %v2539 = vsub.f32 %v491, %v1515
        %v2540 = vsub.f32 %v492, %v1516
        %v2541 = vsub.f32 %v493, %v1517
        %v2542 = vsub.f32 %v494, %v1518
        %v2543 = vsub.f32 %v495, %v1519
        %v2544 = vsub.f32 %v496, %v1520
        %v2545 = vsub.f32 %v497, %v1521
        %v2546 = vsub.f32 %v498, %v1522
        %v2547 = vsub.f32 %v499, %v1523
        %v2548 = vsub.f32 %v500, %v1524
        %v2549 = vsub.f32 %v501, %v1525
        %v2550 = vsub.f32 %v502, %v1526
        %v2551 = vsub.f32 %v503, %v1527
        %v2552 = vsub.f32 %v504, %v1528
        %v2553 = vsub.f32 %v505, %v1529
        %v2554 = vsub.f32 %v506, %v1530
        %v2555 = vsub.f32 %v507, %v1531
        %v2556 = vsub.f32 %v508, %v1532
        %v2557 = vsub.f32 %v509, %v1533
        %v2558 = vsub.f32 %v510, %v1534
        %v2559 = vsub.f32 %v511, %v1535
        %v2560 = vsub.f32 %v512, %v1536
        %v2561 = vsub.f32 %v513, %v1537
        %v2562 = vsub.f32 %v514, %v1538
        %v2563 = vsub.f32 %v515, %v1539
        %v2564 = vsub.f32 %v516, %v1540
        %v2565 = vsub.f32 %v517, %v1541
        %v2566 = vsub.f32 %v518, %v1542
        %v2567 = vsub.f32 %v519, %v1543
        %v2568 = vsub.f32 %v520, %v1544
        %v2569 = vsub.f32 %v521, %v1545
        %v2570 = vsub.f32 %v522, %v1546
        %v2571 = vsub.f32 %v523, %v1547
        %v2572 = vsub.f32 %v524, %v1548
        %v2573 = vsub.f32 %v525, %v1549
        %v2574 = vsub.f32 %v526, %v1550
        %v2575 = vsub.f32 %v527, %v1551
        %v2576 = vsub.f32 %v528, %v1552
        %v2577 = vsub.f32 %v529, %v1553
        %v2578 = vsub.f32 %v530, %v1554
        %v2579 = vsub.f32 %v531, %v1555
        %v2580 = vsub.f32 %v532, %v1556
        %v2581 = vsub.f32 %v533, %v1557
        %v2582 = vsub.f32 %v534, %v1558
        %v2583 = vsub.f32 %v535, %v1559
        %v2584 = vsub.f32 %v536, %v1560
        %v2585 = vsub.f32 %v537, %v1561
        %v2586 = vsub.f32 %v538, %v1562
        %v2587 = vsub.f32 %v539, %v1563
        %v2588 = vsub.f32 %v540, %v1564
        %v2589 = vsub.f32 %v541, %v1565
        %v2590 = vsub.f32 %v542, %v1566
        %v2591 = vsub.f32 %v543, %v1567
        %v2592 = vsub.f32 %v544, %v1568
        %v2593 = vsub.f32 %v545, %v1569
        %v2594 = vsub.f32 %v546, %v1570
        %v2595 = vsub.f32 %v547, %v1571
        %v2596 = vsub.f32 %v548, %v1572
        %v2597 = vsub.f32 %v549, %v1573
        %v2598 = vsub.f32 %v550, %v1574
        %v2599 = vsub.f32 %v551, %v1575
        %v2600 = vsub.f32 %v552, %v1576
        %v2601 = vsub.f32 %v553, %v1577
        %v2602 = vsub.f32 %v554, %v1578
        %v2603 = vsub.f32 %v555, %v1579
        %v2604 = vsub.f32 %v556, %v1580
        %v2605 = vsub.f32 %v557, %v1581
        %v2606 = vsub.f32 %v558, %v1582
        %v2607 = vsub.f32 %v559, %v1583
        %v2608 = vsub.f32 %v560, %v1584
        %v2609 = vsub.f32 %v561, %v1585
        %v2610 = vsub.f32 %v562, %v1586
        %v2611 = vsub.f32 %v563, %v1587
        %v2612 = vsub.f32 %v564, %v1588
        %v2613 = vsub.f32 %v565, %v1589
        %v2614 = vsub.f32 %v566, %v1590
        %v2615 = vsub.f32 %v567, %v1591
        %v2616 = vsub.f32 %v568, %v1592
        %v2617 = vsub.f32 %v569, %v1593
        %v2618 = vsub.f32 %v570, %v1594
        %v2619 = vsub.f32 %v571, %v1595
        %v2620 = vsub.f32 %v572, %v1596
        %v2621 = vsub.f32 %v573, %v1597
        %v2622 = vsub.f32 %v574, %v1598
        %v2623 = vsub.f32 %v575, %v1599
        %v2624 = vsub.f32 %v576, %v1600
        %v2625 = vsub.f32 %v577, %v1601
        %v2626 = vsub.f32 %v578, %v1602
        %v2627 = vsub.f32 %v579, %v1603
        %v2628 = vsub.f32 %v580, %v1604
        %v2629 = vsub.f32 %v581, %v1605
        %v2630 = vsub.f32 %v582, %v1606
        %v2631 = vsub.f32 %v583, %v1607
        %v2632 = vsub.f32 %v584, %v1608
        %v2633 = vsub.f32 %v585, %v1609
        %v2634 = vsub.f32 %v586, %v1610
        %v2635 = vsub.f32 %v587, %v1611
        %v2636 = vsub.f32 %v588, %v1612
        %v2637 = vsub.f32 %v589, %v1613
        %v2638 = vsub.f32 %v590, %v1614
        %v2639 = vsub.f32 %v591, %v1615
        %v2640 = vsub.f32 %v592, %v1616
        %v2641 = vsub.f32 %v593, %v1617
        %v2642 = vsub.f32 %v594, %v1618
        %v2643 = vsub.f32 %v595, %v1619
        %v2644 = vsub.f32 %v596, %v1620
        %v2645 = vsub.f32 %v597, %v1621
        %v2646 = vsub.f32 %v598, %v1622
        %v2647 = vsub.f32 %v599, %v1623
        %v2648 = vsub.f32 %v600, %v1624
        %v2649 = vsub.f32 %v601, %v1625
        %v2650 = vsub.f32 %v602, %v1626
        %v2651 = vsub.f32 %v603, %v1627
        %v2652 = vsub.f32 %v604, %v1628
        %v2653 = vsub.f32 %v605, %v1629
        %v2654 = vsub.f32 %v606, %v1630
        %v2655 = vsub.f32 %v607, %v1631
        %v2656 = vsub.f32 %v608, %v1632
        %v2657 = vsub.f32 %v609, %v1633
        %v2658 = vsub.f32 %v610, %v1634
        %v2659 = vsub.f32 %v611, %v1635
        %v2660 = vsub.f32 %v612, %v1636
        %v2661 = vsub.f32 %v613, %v1637
        %v2662 = vsub.f32 %v614, %v1638
        %v2663 = vsub.f32 %v615, %v1639
        %v2664 = vsub.f32 %v616, %v1640
        %v2665 = vsub.f32 %v617, %v1641
        %v2666 = vsub.f32 %v618, %v1642
        %v2667 = vsub.f32 %v619, %v1643
        %v2668 = vsub.f32 %v620, %v1644
        %v2669 = vsub.f32 %v621, %v1645
        %v2670 = vsub.f32 %v622, %v1646
        %v2671 = vsub.f32 %v623, %v1647
        %v2672 = vsub.f32 %v624, %v1648
        %v2673 = vsub.f32 %v625, %v1649
        %v2674 = vsub.f32 %v626, %v1650
        %v2675 = vsub.f32 %v627, %v1651
        %v2676 = vsub.f32 %v628, %v1652
        %v2677 = vsub.f32 %v629, %v1653
        %v2678 = vsub.f32 %v630, %v1654
        %v2679 = vsub.f32 %v631, %v1655
        %v2680 = vsub.f32 %v632, %v1656
        %v2681 = vsub.f32 %v633, %v1657
        %v2682 = vsub.f32 %v634, %v1658
        %v2683 = vsub.f32 %v635, %v1659
        %v2684 = vsub.f32 %v636, %v1660
        %v2685 = vsub.f32 %v637, %v1661
        %v2686 = vsub.f32 %v638, %v1662
        %v2687 = vsub.f32 %v639, %v1663
        %v2688 = vsub.f32 %v640, %v1664
        %v2689 = vsub.f32 %v641, %v1665
        %v2690 = vsub.f32 %v642, %v1666
        %v2691 = vsub.f32 %v643, %v1667
        %v2692 = vsub.f32 %v644, %v1668
        %v2693 = vsub.f32 %v645, %v1669
        %v2694 = vsub.f32 %v646, %v1670
        %v2695 = vsub.f32 %v647, %v1671
        %v2696 = vsub.f32 %v648, %v1672
        %v2697 = vsub.f32 %v649, %v1673
        %v2698 = vsub.f32 %v650, %v1674
        %v2699 = vsub.f32 %v651, %v1675
        %v2700 = vsub.f32 %v652, %v1676
        %v2701 = vsub.f32 %v653, %v1677
        %v2702 = vsub.f32 %v654, %v1678
        %v2703 = vsub.f32 %v655, %v1679
        %v2704 = vsub.f32 %v656, %v1680
        %v2705 = vsub.f32 %v657, %v1681
        %v2706 = vsub.f32 %v658, %v1682
        %v2707 = vsub.f32 %v659, %v1683
        %v2708 = vsub.f32 %v660, %v1684
        %v2709 = vsub.f32 %v661, %v1685
        %v2710 = vsub.f32 %v662, %v1686
        %v2711 = vsub.f32 %v663, %v1687
        %v2712 = vsub.f32 %v664, %v1688
        %v2713 = vsub.f32 %v665, %v1689
        %v2714 = vsub.f32 %v666, %v1690
        %v2715 = vsub.f32 %v667, %v1691
        %v2716 = vsub.f32 %v668, %v1692
        %v2717 = vsub.f32 %v669, %v1693
        %v2718 = vsub.f32 %v670, %v1694
        %v2719 = vsub.f32 %v671, %v1695
        %v2720 = vsub.f32 %v672, %v1696
        %v2721 = vsub.f32 %v673, %v1697
        %v2722 = vsub.f32 %v674, %v1698
        %v2723 = vsub.f32 %v675, %v1699
        %v2724 = vsub.f32 %v676, %v1700
        %v2725 = vsub.f32 %v677, %v1701
        %v2726 = vsub.f32 %v678, %v1702
        %v2727 = vsub.f32 %v679, %v1703
        %v2728 = vsub.f32 %v680, %v1704
        %v2729 = vsub.f32 %v681, %v1705
        %v2730 = vsub.f32 %v682, %v1706
        %v2731 = vsub.f32 %v683, %v1707
        %v2732 = vsub.f32 %v684, %v1708
        %v2733 = vsub.f32 %v685, %v1709
        %v2734 = vsub.f32 %v686, %v1710
        %v2735 = vsub.f32 %v687, %v1711
        %v2736 = vsub.f32 %v688, %v1712
        %v2737 = vsub.f32 %v689, %v1713
        %v2738 = vsub.f32 %v690, %v1714
        %v2739 = vsub.f32 %v691, %v1715
        %v2740 = vsub.f32 %v692, %v1716
        %v2741 = vsub.f32 %v693, %v1717
        %v2742 = vsub.f32 %v694, %v1718
        %v2743 = vsub.f32 %v695, %v1719
        %v2744 = vsub.f32 %v696, %v1720
        %v2745 = vsub.f32 %v697, %v1721
        %v2746 = vsub.f32 %v698, %v1722
        %v2747 = vsub.f32 %v699, %v1723
        %v2748 = vsub.f32 %v700, %v1724
        %v2749 = vsub.f32 %v701, %v1725
        %v2750 = vsub.f32 %v702, %v1726
        %v2751 = vsub.f32 %v703, %v1727
        %v2752 = vsub.f32 %v704, %v1728
        %v2753 = vsub.f32 %v705, %v1729
        %v2754 = vsub.f32 %v706, %v1730
        %v2755 = vsub.f32 %v707, %v1731
        %v2756 = vsub.f32 %v708, %v1732
        %v2757 = vsub.f32 %v709, %v1733
        %v2758 = vsub.f32 %v710, %v1734
        %v2759 = vsub.f32 %v711, %v1735
        %v2760 = vsub.f32 %v712, %v1736
        %v2761 = vsub.f32 %v713, %v1737
        %v2762 = vsub.f32 %v714, %v1738
        %v2763 = vsub.f32 %v715, %v1739
        %v2764 = vsub.f32 %v716, %v1740
        %v2765 = vsub.f32 %v717, %v1741
        %v2766 = vsub.f32 %v718, %v1742
        %v2767 = vsub.f32 %v719, %v1743
        %v2768 = vsub.f32 %v720, %v1744
        %v2769 = vsub.f32 %v721, %v1745
        %v2770 = vsub.f32 %v722, %v1746
        %v2771 = vsub.f32 %v723, %v1747
        %v2772 = vsub.f32 %v724, %v1748
        %v2773 = vsub.f32 %v725, %v1749
        %v2774 = vsub.f32 %v726, %v1750
        %v2775 = vsub.f32 %v727, %v1751
        %v2776 = vsub.f32 %v728, %v1752
        %v2777 = vsub.f32 %v729, %v1753
        %v2778 = vsub.f32 %v730, %v1754
        %v2779 = vsub.f32 %v731, %v1755
        %v2780 = vsub.f32 %v732, %v1756
        %v2781 = vsub.f32 %v733, %v1757
        %v2782 = vsub.f32 %v734, %v1758
        %v2783 = vsub.f32 %v735, %v1759
        %v2784 = vsub.f32 %v736, %v1760
        %v2785 = vsub.f32 %v737, %v1761
        %v2786 = vsub.f32 %v738, %v1762
        %v2787 = vsub.f32 %v739, %v1763
        %v2788 = vsub.f32 %v740, %v1764
        %v2789 = vsub.f32 %v741, %v1765
        %v2790 = vsub.f32 %v742, %v1766
        %v2791 = vsub.f32 %v743, %v1767
        %v2792 = vsub.f32 %v744, %v1768
        %v2793 = vsub.f32 %v745, %v1769
        %v2794 = vsub.f32 %v746, %v1770
        %v2795 = vsub.f32 %v747, %v1771
        %v2796 = vsub.f32 %v748, %v1772
        %v2797 = vsub.f32 %v749, %v1773
        %v2798 = vsub.f32 %v750, %v1774
        %v2799 = vsub.f32 %v751, %v1775
        %v2800 = vsub.f32 %v752, %v1776
        %v2801 = vsub.f32 %v753, %v1777
        %v2802 = vsub.f32 %v754, %v1778
        %v2803 = vsub.f32 %v755, %v1779
        %v2804 = vsub.f32 %v756, %v1780
        %v2805 = vsub.f32 %v757, %v1781
        %v2806 = vsub.f32 %v758, %v1782
        %v2807 = vsub.f32 %v759, %v1783
        %v2808 = vsub.f32 %v760, %v1784
        %v2809 = vsub.f32 %v761, %v1785
        %v2810 = vsub.f32 %v762, %v1786
        %v2811 = vsub.f32 %v763, %v1787
        %v2812 = vsub.f32 %v764, %v1788
        %v2813 = vsub.f32 %v765, %v1789
        %v2814 = vsub.f32 %v766, %v1790
        %v2815 = vsub.f32 %v767, %v1791
        %v2816 = vsub.f32 %v768, %v1792
        %v2817 = vsub.f32 %v769, %v1793
        %v2818 = vsub.f32 %v770, %v1794
        %v2819 = vsub.f32 %v771, %v1795
        %v2820 = vsub.f32 %v772, %v1796
        %v2821 = vsub.f32 %v773, %v1797
        %v2822 = vsub.f32 %v774, %v1798
        %v2823 = vsub.f32 %v775, %v1799
        %v2824 = vsub.f32 %v776, %v1800
        %v2825 = vsub.f32 %v777, %v1801
        %v2826 = vsub.f32 %v778, %v1802
        %v2827 = vsub.f32 %v779, %v1803
        %v2828 = vsub.f32 %v780, %v1804
        %v2829 = vsub.f32 %v781, %v1805
        %v2830 = vsub.f32 %v782, %v1806
        %v2831 = vsub.f32 %v783, %v1807
        %v2832 = vsub.f32 %v784, %v1808
        %v2833 = vsub.f32 %v785, %v1809
        %v2834 = vsub.f32 %v786, %v1810
        %v2835 = vsub.f32 %v787, %v1811
        %v2836 = vsub.f32 %v788, %v1812
        %v2837 = vsub.f32 %v789, %v1813
        %v2838 = vsub.f32 %v790, %v1814
        %v2839 = vsub.f32 %v791, %v1815
        %v2840 = vsub.f32 %v792, %v1816
        %v2841 = vsub.f32 %v793, %v1817
        %v2842 = vsub.f32 %v794, %v1818
        %v2843 = vsub.f32 %v795, %v1819
        %v2844 = vsub.f32 %v796, %v1820
        %v2845 = vsub.f32 %v797, %v1821
        %v2846 = vsub.f32 %v798, %v1822
        %v2847 = vsub.f32 %v799, %v1823
        %v2848 = vsub.f32 %v800, %v1824
        %v2849 = vsub.f32 %v801, %v1825
        %v2850 = vsub.f32 %v802, %v1826
        %v2851 = vsub.f32 %v803, %v1827
        %v2852 = vsub.f32 %v804, %v1828
        %v2853 = vsub.f32 %v805, %v1829
        %v2854 = vsub.f32 %v806, %v1830
        %v2855 = vsub.f32 %v807, %v1831
        %v2856 = vsub.f32 %v808, %v1832
        %v2857 = vsub.f32 %v809, %v1833
        %v2858 = vsub.f32 %v810, %v1834
        %v2859 = vsub.f32 %v811, %v1835
        %v2860 = vsub.f32 %v812, %v1836
        %v2861 = vsub.f32 %v813, %v1837
        %v2862 = vsub.f32 %v814, %v1838
        %v2863 = vsub.f32 %v815, %v1839
        %v2864 = vsub.f32 %v816, %v1840
        %v2865 = vsub.f32 %v817, %v1841
        %v2866 = vsub.f32 %v818, %v1842
        %v2867 = vsub.f32 %v819, %v1843
        %v2868 = vsub.f32 %v820, %v1844
        %v2869 = vsub.f32 %v821, %v1845
        %v2870 = vsub.f32 %v822, %v1846
        %v2871 = vsub.f32 %v823, %v1847
        %v2872 = vsub.f32 %v824, %v1848
        %v2873 = vsub.f32 %v825, %v1849
        %v2874 = vsub.f32 %v826, %v1850
        %v2875 = vsub.f32 %v827, %v1851
        %v2876 = vsub.f32 %v828, %v1852
        %v2877 = vsub.f32 %v829, %v1853
        %v2878 = vsub.f32 %v830, %v1854
        %v2879 = vsub.f32 %v831, %v1855
        %v2880 = vsub.f32 %v832, %v1856
        %v2881 = vsub.f32 %v833, %v1857
        %v2882 = vsub.f32 %v834, %v1858
        %v2883 = vsub.f32 %v835, %v1859
        %v2884 = vsub.f32 %v836, %v1860
        %v2885 = vsub.f32 %v837, %v1861
        %v2886 = vsub.f32 %v838, %v1862
        %v2887 = vsub.f32 %v839, %v1863
        %v2888 = vsub.f32 %v840, %v1864
        %v2889 = vsub.f32 %v841, %v1865
        %v2890 = vsub.f32 %v842, %v1866
        %v2891 = vsub.f32 %v843, %v1867
        %v2892 = vsub.f32 %v844, %v1868
        %v2893 = vsub.f32 %v845, %v1869
        %v2894 = vsub.f32 %v846, %v1870
        %v2895 = vsub.f32 %v847, %v1871
        %v2896 = vsub.f32 %v848, %v1872
        %v2897 = vsub.f32 %v849, %v1873
        %v2898 = vsub.f32 %v850, %v1874
        %v2899 = vsub.f32 %v851, %v1875
        %v2900 = vsub.f32 %v852, %v1876
        %v2901 = vsub.f32 %v853, %v1877
        %v2902 = vsub.f32 %v854, %v1878
        %v2903 = vsub.f32 %v855, %v1879
        %v2904 = vsub.f32 %v856, %v1880
        %v2905 = vsub.f32 %v857, %v1881
        %v2906 = vsub.f32 %v858, %v1882
        %v2907 = vsub.f32 %v859, %v1883
        %v2908 = vsub.f32 %v860, %v1884
        %v2909 = vsub.f32 %v861, %v1885
        %v2910 = vsub.f32 %v862, %v1886
        %v2911 = vsub.f32 %v863, %v1887
        %v2912 = vsub.f32 %v864, %v1888
        %v2913 = vsub.f32 %v865, %v1889
        %v2914 = vsub.f32 %v866, %v1890
        %v2915 = vsub.f32 %v867, %v1891
        %v2916 = vsub.f32 %v868, %v1892
        %v2917 = vsub.f32 %v869, %v1893
        %v2918 = vsub.f32 %v870, %v1894
        %v2919 = vsub.f32 %v871, %v1895
        %v2920 = vsub.f32 %v872, %v1896
        %v2921 = vsub.f32 %v873, %v1897
        %v2922 = vsub.f32 %v874, %v1898
        %v2923 = vsub.f32 %v875, %v1899
        %v2924 = vsub.f32 %v876, %v1900
        %v2925 = vsub.f32 %v877, %v1901
        %v2926 = vsub.f32 %v878, %v1902
        %v2927 = vsub.f32 %v879, %v1903
        %v2928 = vsub.f32 %v880, %v1904
        %v2929 = vsub.f32 %v881, %v1905
        %v2930 = vsub.f32 %v882, %v1906
        %v2931 = vsub.f32 %v883, %v1907
        %v2932 = vsub.f32 %v884, %v1908
        %v2933 = vsub.f32 %v885, %v1909
        %v2934 = vsub.f32 %v886, %v1910
        %v2935 = vsub.f32 %v887, %v1911
        %v2936 = vsub.f32 %v888, %v1912
        %v2937 = vsub.f32 %v889, %v1913
        %v2938 = vsub.f32 %v890, %v1914
        %v2939 = vsub.f32 %v891, %v1915
        %v2940 = vsub.f32 %v892, %v1916
        %v2941 = vsub.f32 %v893, %v1917
        %v2942 = vsub.f32 %v894, %v1918
        %v2943 = vsub.f32 %v895, %v1919
        %v2944 = vsub.f32 %v896, %v1920
        %v2945 = vsub.f32 %v897, %v1921
        %v2946 = vsub.f32 %v898, %v1922
        %v2947 = vsub.f32 %v899, %v1923
        %v2948 = vsub.f32 %v900, %v1924
        %v2949 = vsub.f32 %v901, %v1925
        %v2950 = vsub.f32 %v902, %v1926
        %v2951 = vsub.f32 %v903, %v1927
        %v2952 = vsub.f32 %v904, %v1928
        %v2953 = vsub.f32 %v905, %v1929
        %v2954 = vsub.f32 %v906, %v1930
        %v2955 = vsub.f32 %v907, %v1931
        %v2956 = vsub.f32 %v908, %v1932
        %v2957 = vsub.f32 %v909, %v1933
        %v2958 = vsub.f32 %v910, %v1934
        %v2959 = vsub.f32 %v911, %v1935
        %v2960 = vsub.f32 %v912, %v1936
        %v2961 = vsub.f32 %v913, %v1937
        %v2962 = vsub.f32 %v914, %v1938
        %v2963 = vsub.f32 %v915, %v1939
        %v2964 = vsub.f32 %v916, %v1940
        %v2965 = vsub.f32 %v917, %v1941
        %v2966 = vsub.f32 %v918, %v1942
        %v2967 = vsub.f32 %v919, %v1943
        %v2968 = vsub.f32 %v920, %v1944
        %v2969 = vsub.f32 %v921, %v1945
        %v2970 = vsub.f32 %v922, %v1946
        %v2971 = vsub.f32 %v923, %v1947
        %v2972 = vsub.f32 %v924, %v1948
        %v2973 = vsub.f32 %v925, %v1949
        %v2974 = vsub.f32 %v926, %v1950
        %v2975 = vsub.f32 %v927, %v1951
        %v2976 = vsub.f32 %v928, %v1952
        %v2977 = vsub.f32 %v929, %v1953
        %v2978 = vsub.f32 %v930, %v1954
        %v2979 = vsub.f32 %v931, %v1955
        %v2980 = vsub.f32 %v932, %v1956
        %v2981 = vsub.f32 %v933, %v1957
        %v2982 = vsub.f32 %v934, %v1958
        %v2983 = vsub.f32 %v935, %v1959
        %v2984 = vsub.f32 %v936, %v1960
        %v2985 = vsub.f32 %v937, %v1961
        %v2986 = vsub.f32 %v938, %v1962
        %v2987 = vsub.f32 %v939, %v1963
        %v2988 = vsub.f32 %v940, %v1964
        %v2989 = vsub.f32 %v941, %v1965
        %v2990 = vsub.f32 %v942, %v1966
        %v2991 = vsub.f32 %v943, %v1967
        %v2992 = vsub.f32 %v944, %v1968
        %v2993 = vsub.f32 %v945, %v1969
        %v2994 = vsub.f32 %v946, %v1970
        %v2995 = vsub.f32 %v947, %v1971
        %v2996 = vsub.f32 %v948, %v1972
        %v2997 = vsub.f32 %v949, %v1973
        %v2998 = vsub.f32 %v950, %v1974
        %v2999 = vsub.f32 %v951, %v1975
        %v3000 = vsub.f32 %v952, %v1976
        %v3001 = vsub.f32 %v953, %v1977
        %v3002 = vsub.f32 %v954, %v1978
        %v3003 = vsub.f32 %v955, %v1979
        %v3004 = vsub.f32 %v956, %v1980
        %v3005 = vsub.f32 %v957, %v1981
        %v3006 = vsub.f32 %v958, %v1982
        %v3007 = vsub.f32 %v959, %v1983
        %v3008 = vsub.f32 %v960, %v1984
        %v3009 = vsub.f32 %v961, %v1985
        %v3010 = vsub.f32 %v962, %v1986
        %v3011 = vsub.f32 %v963, %v1987
        %v3012 = vsub.f32 %v964, %v1988
        %v3013 = vsub.f32 %v965, %v1989
        %v3014 = vsub.f32 %v966, %v1990
        %v3015 = vsub.f32 %v967, %v1991
        %v3016 = vsub.f32 %v968, %v1992
        %v3017 = vsub.f32 %v969, %v1993
        %v3018 = vsub.f32 %v970, %v1994
        %v3019 = vsub.f32 %v971, %v1995
        %v3020 = vsub.f32 %v972, %v1996
        %v3021 = vsub.f32 %v973, %v1997
        %v3022 = vsub.f32 %v974, %v1998
        %v3023 = vsub.f32 %v975, %v1999
        %v3024 = vsub.f32 %v976, %v2000
        %v3025 = vsub.f32 %v977, %v2001
        %v3026 = vsub.f32 %v978, %v2002
        %v3027 = vsub.f32 %v979, %v2003
        %v3028 = vsub.f32 %v980, %v2004
        %v3029 = vsub.f32 %v981, %v2005
        %v3030 = vsub.f32 %v982, %v2006
        %v3031 = vsub.f32 %v983, %v2007
        %v3032 = vsub.f32 %v984, %v2008
        %v3033 = vsub.f32 %v985, %v2009
        %v3034 = vsub.f32 %v986, %v2010
        %v3035 = vsub.f32 %v987, %v2011
        %v3036 = vsub.f32 %v988, %v2012
        %v3037 = vsub.f32 %v989, %v2013
        %v3038 = vsub.f32 %v990, %v2014
        %v3039 = vsub.f32 %v991, %v2015
        %v3040 = vsub.f32 %v992, %v2016
        %v3041 = vsub.f32 %v993, %v2017
        %v3042 = vsub.f32 %v994, %v2018
        %v3043 = vsub.f32 %v995, %v2019
        %v3044 = vsub.f32 %v996, %v2020
        %v3045 = vsub.f32 %v997, %v2021
        %v3046 = vsub.f32 %v998, %v2022
        %v3047 = vsub.f32 %v999, %v2023
        %v3048 = vsub.f32 %v1000, %v2024
        %v3049 = vsub.f32 %v1001, %v2025
        %v3050 = vsub.f32 %v1002, %v2026
        %v3051 = vsub.f32 %v1003, %v2027
        %v3052 = vsub.f32 %v1004, %v2028
        %v3053 = vsub.f32 %v1005, %v2029
        %v3054 = vsub.f32 %v1006, %v2030
        %v3055 = vsub.f32 %v1007, %v2031
        %v3056 = vsub.f32 %v1008, %v2032
        %v3057 = vsub.f32 %v1009, %v2033
        %v3058 = vsub.f32 %v1010, %v2034
        %v3059 = vsub.f32 %v1011, %v2035
        %v3060 = vsub.f32 %v1012, %v2036
        %v3061 = vsub.f32 %v1013, %v2037
        %v3062 = vsub.f32 %v1014, %v2038
        %v3063 = vsub.f32 %v1015, %v2039
        %v3064 = vsub.f32 %v1016, %v2040
        %v3065 = vsub.f32 %v1017, %v2041
        %v3066 = vsub.f32 %v1018, %v2042
        %v3067 = vsub.f32 %v1019, %v2043
        %v3068 = vsub.f32 %v1020, %v2044
        %v3069 = vsub.f32 %v1021, %v2045
        %v3070 = vsub.f32 %v1022, %v2046
        %v3071 = vsub.f32 %v1023, %v2047
        %v3072 = vsub.f32 %v1024, %v2048
        %v3073 = vsub.f32 %v1025, %v2049
        %v3074 = vsub.f32 %v1026, %v2050
        %v3075 = vsub.f32 %v1027, %v2051
        %v3076 = vsub.f32 %v1028, %v2052
        %v3077 = vsub.f32 %v1029, %v2053
        %v3078 = vsub.f32 %v1030, %v2054
        %v3079 = vsub.f32 %v1031, %v2055
        %v3080 = vsub.f32 %v1032, %v2056
        %v3081 = vsub.f32 %v1033, %v2057
        %v3082 = vsub.f32 %v1034, %v2058
        %v3083 = vsub.f32 %v1035, %v2059
        %v3084 = vsub.f32 %v1036, %v2060
        %v3085 = vsub.f32 %v1037, %v2061
        %v3086 = vsub.f32 %v1038, %v2062
        %v3087 = vsub.f32 %v1039, %v2063
        %v3088 = vsub.f32 %v1040, %v2064
        %v3089 = vsub.f32 %v1041, %v2065
        %v3090 = vsub.f32 %v1042, %v2066
        %v3091 = vsub.f32 %v1043, %v2067
        %v3092 = vsub.f32 %v1044, %v2068
        %v3093 = vsub.f32 %v1045, %v2069
        %v3094 = vsub.f32 %v1046, %v2070
        %v3095 = vsub.f32 %v1047, %v2071
        %v3096 = vsub.f32 %v1048, %v2072
        %v3097 = vsub.f32 %v1049, %v2073
        %v3098 = vsub.f32 %v1050, %v2074
        %v3099 = vsub.f32 %v1051, %v2075
        %v3100 = vsub.f32 %v1052, %v2076
        %v3101 = vsub.f32 %v1053, %v2077
        %v3102 = vsub.f32 %v1054, %v2078
        %v3103 = vsub.f32 %v1055, %v2079
        %v3104 = vsub.f32 %v1056, %v2080
        %v3105 = vsub.f32 %v1057, %v2081
        %v3106 = vsub.f32 %v1058, %v2082
        %v3107 = vsub.f32 %v1059, %v2083
        %v3108 = vsub.f32 %v1060, %v2084
        %v3109 = vsub.f32 %v1061, %v2085
        %v3110 = vsub.f32 %v1062, %v2086
        %v3111 = vsub.f32 %v1063, %v2087
        %v3112 = vsub.f32 %v1064, %v2088
        %v3113 = vsub.f32 %v1065, %v2089
        %v3114 = vsub.f32 %v1066, %v2090
        %v3115 = vsub.f32 %v1067, %v2091
        %v3116 = vsub.f32 %v1068, %v2092
        %v3117 = vsub.f32 %v1069, %v2093
        %v3118 = vsub.f32 %v1070, %v2094
        %v3119 = vsub.f32 %v1071, %v2095
        %v3120 = vsub.f32 %v1072, %v2096
        %v3121 = vsub.f32 %v1073, %v2097
        %v3122 = vsub.f32 %v1074, %v2098
        %v3123 = vsub.f32 %v1075, %v2099
        %v3124 = vsub.f32 %v1076, %v2100
        %v3125 = vsub.f32 %v1077, %v2101
        %v3126 = vsub.f32 %v1078, %v2102
        %v3127 = vsub.f32 %v1079, %v2103
        %v3128 = vsub.f32 %v1080, %v2104
        %v3129 = vsub.f32 %v1081, %v2105
        %v3130 = vsub.f32 %v1082, %v2106
        %v3131 = vsub.f32 %v1083, %v2107
        %v3132 = vsub.f32 %v1084, %v2108
        %v3133 = vsub.f32 %v1085, %v2109
        %v3134 = vsub.f32 %v1086, %v2110
        %v3135 = vsub.f32 %v1087, %v2111
        %v3136 = vsub.f32 %v1088, %v2112
        %v3137 = vsub.f32 %v1089, %v2113
        %v3138 = vsub.f32 %v1090, %v2114
        %v3139 = vsub.f32 %v1091, %v2115
        %v3140 = vsub.f32 %v1092, %v2116
        %v3141 = vsub.f32 %v1093, %v2117
        %v3142 = vsub.f32 %v1094, %v2118
        %v3143 = vsub.f32 %v1095, %v2119
        %v3144 = vsub.f32 %v1096, %v2120
        %v3145 = vsub.f32 %v1097, %v2121
        %v3146 = vsub.f32 %v1098, %v2122
        %v3147 = vsub.f32 %v1099, %v2123
        %v3148 = vsub.f32 %v1100, %v2124
        %v3149 = vsub.f32 %v1101, %v2125
        %v3150 = vsub.f32 %v1102, %v2126
        %v3151 = vsub.f32 %v1103, %v2127
        %v3152 = vsub.f32 %v1104, %v2128
        %v3153 = vsub.f32 %v1105, %v2129
        %v3154 = vsub.f32 %v1106, %v2130
        %v3155 = vsub.f32 %v1107, %v2131
        %v3156 = vsub.f32 %v1108, %v2132
        %v3157 = vsub.f32 %v1109, %v2133
        %v3158 = vsub.f32 %v1110, %v2134
        %v3159 = vsub.f32 %v1111, %v2135
        %v3160 = vsub.f32 %v1112, %v2136
        %v3161 = vsub.f32 %v1113, %v2137
        %v3162 = vsub.f32 %v1114, %v2138
        %v3163 = vsub.f32 %v1115, %v2139
        %v3164 = vsub.f32 %v1116, %v2140
        %v3165 = vsub.f32 %v1117, %v2141
        %v3166 = vsub.f32 %v1118, %v2142
        %v3167 = vsub.f32 %v1119, %v2143
        %v3168 = vsub.f32 %v1120, %v2144
        %v3169 = vsub.f32 %v1121, %v2145
        %v3170 = vsub.f32 %v1122, %v2146
        %v3171 = vsub.f32 %v1123, %v2147
        %v3172 = vsub.f32 %v1124, %v2148
        %v3173 = vsub.f32 %v1125, %v2149
        %v3174 = vsub.f32 %v1126, %v2150
        %v3175 = vsub.f32 %v1127, %v2151
        %v3176 = vsub.f32 %v1128, %v2152
        %v3177 = vsub.f32 %v1129, %v2153
        %v3178 = vsub.f32 %v1130, %v2154
        %v3179 = vsub.f32 %v1131, %v2155
        %v3180 = vsub.f32 %v1132, %v2156
        %v3181 = vsub.f32 %v1133, %v2157
        %v3182 = vsub.f32 %v1134, %v2158
        %v3183 = vsub.f32 %v1135, %v2159
        %v3184 = vsub.f32 %v1136, %v2160
        %v3185 = vsub.f32 %v1137, %v2161
        %v3186 = vsub.f32 %v1138, %v2162
        %v3187 = vsub.f32 %v1139, %v2163
        %v3188 = vsub.f32 %v1140, %v2164
        %v3189 = vsub.f32 %v1141, %v2165
        %v3190 = vsub.f32 %v1142, %v2166
        %v3191 = vsub.f32 %v1143, %v2167
        %v3192 = vsub.f32 %v1144, %v2168
        %v3193 = vsub.f32 %v1145, %v2169
        %v3194 = vsub.f32 %v1146, %v2170
        %v3195 = vsub.f32 %v1147, %v2171
        %v3196 = vsub.f32 %v1148, %v2172
        %v3197 = vsub.f32 %v1149, %v2173
        %v3198 = vsub.f32 %v1150, %v2174
        %v3199 = vsub.f32 %v1151, %v2175
        %v3200 = vsub.f32 %v1152, %v2176
        %v3201 = vsub.f32 %v1153, %v2177
        %v3202 = vsub.f32 %v1154, %v2178
        %v3203 = vsub.f32 %v1155, %v2179
        %v3204 = vsub.f32 %v1156, %v2180
        %v3205 = vsub.f32 %v1157, %v2181
        %v3206 = vsub.f32 %v1158, %v2182
        %v3207 = vsub.f32 %v1159, %v2183
        %v3208 = vsub.f32 %v1160, %v2184
        %v3209 = vsub.f32 %v1161, %v2185
        %v3210 = vsub.f32 %v1162, %v2186
        %v3211 = vsub.f32 %v1163, %v2187
        %v3212 = vsub.f32 %v1164, %v2188
        %v3213 = vsub.f32 %v1165, %v2189
        %v3214 = vsub.f32 %v1166, %v2190
        %v3215 = vsub.f32 %v1167, %v2191
        %v3216 = vsub.f32 %v1168, %v2192
        %v3217 = vsub.f32 %v1169, %v2193
        %v3218 = vsub.f32 %v1170, %v2194
        %v3219 = vsub.f32 %v1171, %v2195
        %v3220 = vsub.f32 %v1172, %v2196
        %v3221 = vsub.f32 %v1173, %v2197
        %v3222 = vsub.f32 %v1174, %v2198
        %v3223 = vsub.f32 %v1175, %v2199
        %v3224 = vsub.f32 %v1176, %v2200
        %v3225 = vsub.f32 %v1177, %v2201
        %v3226 = vsub.f32 %v1178, %v2202
        %v3227 = vsub.f32 %v1179, %v2203
        %v3228 = vsub.f32 %v1180, %v2204
        %v3229 = vsub.f32 %v1181, %v2205
        %v3230 = vsub.f32 %v1182, %v2206
        %v3231 = vsub.f32 %v1183, %v2207
        %v3232 = vsub.f32 %v1184, %v2208
        %v3233 = vsub.f32 %v1185, %v2209
        %v3234 = vsub.f32 %v1186, %v2210
        %v3235 = vsub.f32 %v1187, %v2211
        %v3236 = vsub.f32 %v1188, %v2212
        %v3237 = vsub.f32 %v1189, %v2213
        %v3238 = vsub.f32 %v1190, %v2214
        %v3239 = vsub.f32 %v1191, %v2215
        %v3240 = vsub.f32 %v1192, %v2216
        %v3241 = vsub.f32 %v1193, %v2217
        %v3242 = vsub.f32 %v1194, %v2218
        %v3243 = vsub.f32 %v1195, %v2219
        %v3244 = vsub.f32 %v1196, %v2220
        %v3245 = vsub.f32 %v1197, %v2221
        %v3246 = vsub.f32 %v1198, %v2222
        %v3247 = vsub.f32 %v1199, %v2223
        %v3248 = vsub.f32 %v1200, %v2224
        %v3249 = vsub.f32 %v1201, %v2225
        %v3250 = vsub.f32 %v1202, %v2226
        %v3251 = vsub.f32 %v1203, %v2227
        %v3252 = vsub.f32 %v1204, %v2228
        %v3253 = vsub.f32 %v1205, %v2229
        %v3254 = vsub.f32 %v1206, %v2230
        %v3255 = vsub.f32 %v1207, %v2231
        %v3256 = vsub.f32 %v1208, %v2232
        %v3257 = vsub.f32 %v1209, %v2233
        %v3258 = vsub.f32 %v1210, %v2234
        %v3259 = vsub.f32 %v1211, %v2235
        %v3260 = vsub.f32 %v1212, %v2236
        %v3261 = vsub.f32 %v1213, %v2237
        %v3262 = vsub.f32 %v1214, %v2238
        %v3263 = vsub.f32 %v1215, %v2239
        %v3264 = vsub.f32 %v1216, %v2240
        %v3265 = vsub.f32 %v1217, %v2241
        %v3266 = vsub.f32 %v1218, %v2242
        %v3267 = vsub.f32 %v1219, %v2243
        %v3268 = vsub.f32 %v1220, %v2244
        %v3269 = vsub.f32 %v1221, %v2245
        %v3270 = vsub.f32 %v1222, %v2246
        %v3271 = vsub.f32 %v1223, %v2247
        %v3272 = vsub.f32 %v1224, %v2248
        %v3273 = vsub.f32 %v1225, %v2249
        %v3274 = vsub.f32 %v1226, %v2250
        %v3275 = vsub.f32 %v1227, %v2251
        %v3276 = vsub.f32 %v1228, %v2252
        %v3277 = vsub.f32 %v1229, %v2253
        %v3278 = vsub.f32 %v1230, %v2254
        %v3279 = vsub.f32 %v1231, %v2255
        %v3280 = vsub.f32 %v1232, %v2256
        %v3281 = vsub.f32 %v1233, %v2257
        %v3282 = vsub.f32 %v1234, %v2258
        %v3283 = vsub.f32 %v1235, %v2259
        %v3284 = vsub.f32 %v1236, %v2260
        %v3285 = vsub.f32 %v1237, %v2261
        %v3286 = vsub.f32 %v1238, %v2262
        %v3287 = vsub.f32 %v1239, %v2263
        %v3288 = vsub.f32 %v1240, %v2264
        %v3289 = vsub.f32 %v1241, %v2265
        %v3290 = vsub.f32 %v1242, %v2266
        %v3291 = vsub.f32 %v1243, %v2267
        %v3292 = vsub.f32 %v1244, %v2268
        %v3293 = vsub.f32 %v1245, %v2269
        %v3294 = vsub.f32 %v1246, %v2270
        %v3295 = vsub.f32 %v1247, %v2271
        %v3296 = vsub.f32 %v1248, %v2272
        %v3297 = vsub.f32 %v1249, %v2273
        %v3298 = vsub.f32 %v1250, %v2274
        %v3299 = vsub.f32 %v1251, %v2275
        %v3300 = vsub.f32 %v1252, %v2276
        %v3301 = vsub.f32 %v1253, %v2277
        %v3302 = vsub.f32 %v1254, %v2278
        %v3303 = vsub.f32 %v1255, %v2279
        %v3304 = vsub.f32 %v1256, %v2280
        %v3305 = vsub.f32 %v1257, %v2281
        %v3306 = vsub.f32 %v1258, %v2282
        %v3307 = vsub.f32 %v1259, %v2283
        %v3308 = vsub.f32 %v1260, %v2284
        %v3309 = vsub.f32 %v1261, %v2285
        %v3310 = vsub.f32 %v1262, %v2286
        %v3311 = vsub.f32 %v1263, %v2287
        %v3312 = vsub.f32 %v1264, %v2288
        %v3313 = vsub.f32 %v1265, %v2289
        %v3314 = vsub.f32 %v1266, %v2290
        %v3315 = vsub.f32 %v1267, %v2291
        %v3316 = vsub.f32 %v1268, %v2292
        %v3317 = vsub.f32 %v1269, %v2293
        %v3318 = vsub.f32 %v1270, %v2294
        %v3319 = vsub.f32 %v1271, %v2295
        %v3320 = vsub.f32 %v1272, %v2296
        %v3321 = vsub.f32 %v1273, %v2297
        %v3322 = vsub.f32 %v1274, %v2298
        %v3323 = vsub.f32 %v1275, %v2299
        %v3324 = vsub.f32 %v1276, %v2300
        %v3325 = vsub.f32 %v1277, %v2301
        %v3326 = vsub.f32 %v1278, %v2302
        %v3327 = vsub.f32 %v1279, %v2303
        %v3328 = vsub.f32 %v1280, %v2304
        %v3329 = vsub.f32 %v1281, %v2305
        %v3330 = vsub.f32 %v1282, %v2306
        %v3331 = vsub.f32 %v1283, %v2307
        %v3332 = vsub.f32 %v1284, %v2308
        %v3333 = vsub.f32 %v1285, %v2309
        %v3334 = vsub.f32 %v1286, %v2310
        %v3335 = vsub.f32 %v1287, %v2311
        %v3336 = vsub.f32 %v1288, %v2312
        %v3337 = vsub.f32 %v1289, %v2313
        %v3338 = vsub.f32 %v1290, %v2314
        %v3339 = vsub.f32 %v1291, %v2315
        %v3340 = vsub.f32 %v1292, %v2316
        %v3341 = vsub.f32 %v1293, %v2317
        %v3342 = vsub.f32 %v1294, %v2318
        %v3343 = vsub.f32 %v1295, %v2319
        %v3344 = vsub.f32 %v1296, %v2320
        %v3345 = vsub.f32 %v1297, %v2321
        %v3346 = vsub.f32 %v1298, %v2322
        %v3347 = vsub.f32 %v1299, %v2323
        %v3348 = vsub.f32 %v1300, %v2324
        %v3349 = vsub.f32 %v1301, %v2325
        %v3350 = vsub.f32 %v1302, %v2326
        %v3351 = vsub.f32 %v1303, %v2327
        %v3352 = vsub.f32 %v1304, %v2328
        %v3353 = vsub.f32 %v1305, %v2329
        %v3354 = vsub.f32 %v1306, %v2330
        %v3355 = vsub.f32 %v1307, %v2331
        %v3356 = vsub.f32 %v1308, %v2332
        %v3357 = vsub.f32 %v1309, %v2333
        %v3358 = vand.u32 2147483647, %v2334
        %v3359 = vand.u32 2147483647, %v2335
        %v3360 = vand.u32 2147483647, %v2336
        %v3361 = vand.u32 2147483647, %v2337
        %v3362 = vand.u32 2147483647, %v2338
        %v3363 = vand.u32 2147483647, %v2339
        %v3364 = vand.u32 2147483647, %v2340
        %v3365 = vand.u32 2147483647, %v2341
        %v3366 = vand.u32 2147483647, %v2342
        %v3367 = vand.u32 2147483647, %v2343
        %v3368 = vand.u32 2147483647, %v2344
        %v3369 = vand.u32 2147483647, %v2345
        %v3370 = vand.u32 2147483647, %v2346
        %v3371 = vand.u32 2147483647, %v2347
        %v3372 = vand.u32 2147483647, %v2348
        %v3373 = vand.u32 2147483647, %v2349
        %v3374 = vand.u32 2147483647, %v2350
        %v3375 = vand.u32 2147483647, %v2351
        %v3376 = vand.u32 2147483647, %v2352
        %v3377 = vand.u32 2147483647, %v2353
        %v3378 = vand.u32 2147483647, %v2354
        %v3379 = vand.u32 2147483647, %v2355
        %v3380 = vand.u32 2147483647, %v2356
        %v3381 = vand.u32 2147483647, %v2357
        %v3382 = vand.u32 2147483647, %v2358
        %v3383 = vand.u32 2147483647, %v2359
        %v3384 = vand.u32 2147483647, %v2360
        %v3385 = vand.u32 2147483647, %v2361
        %v3386 = vand.u32 2147483647, %v2362
        %v3387 = vand.u32 2147483647, %v2363
        %v3388 = vand.u32 2147483647, %v2364
        %v3389 = vand.u32 2147483647, %v2365
        %v3390 = vand.u32 2147483647, %v2366
        %v3391 = vand.u32 2147483647, %v2367
        %v3392 = vand.u32 2147483647, %v2368
        %v3393 = vand.u32 2147483647, %v2369
        %v3394 = vand.u32 2147483647, %v2370
        %v3395 = vand.u32 2147483647, %v2371
        %v3396 = vand.u32 2147483647, %v2372
        %v3397 = vand.u32 2147483647, %v2373
        %v3398 = vand.u32 2147483647, %v2374
        %v3399 = vand.u32 2147483647, %v2375
        %v3400 = vand.u32 2147483647, %v2376
        %v3401 = vand.u32 2147483647, %v2377
        %v3402 = vand.u32 2147483647, %v2378
        %v3403 = vand.u32 2147483647, %v2379
        %v3404 = vand.u32 2147483647, %v2380
        %v3405 = vand.u32 2147483647, %v2381
        %v3406 = vand.u32 2147483647, %v2382
        %v3407 = vand.u32 2147483647, %v2383
        %v3408 = vand.u32 2147483647, %v2384
        %v3409 = vand.u32 2147483647, %v2385
        %v3410 = vand.u32 2147483647, %v2386
        %v3411 = vand.u32 2147483647, %v2387
        %v3412 = vand.u32 2147483647, %v2388
        %v3413 = vand.u32 2147483647, %v2389
        %v3414 = vand.u32 2147483647, %v2390
        %v3415 = vand.u32 2147483647, %v2391
        %v3416 = vand.u32 2147483647, %v2392
        %v3417 = vand.u32 2147483647, %v2393
        %v3418 = vand.u32 2147483647, %v2394
        %v3419 = vand.u32 2147483647, %v2395
        %v3420 = vand.u32 2147483647, %v2396
        %v3421 = vand.u32 2147483647, %v2397
        %v3422 = vand.u32 2147483647, %v2398
        %v3423 = vand.u32 2147483647, %v2399
        %v3424 = vand.u32 2147483647, %v2400
        %v3425 = vand.u32 2147483647, %v2401
        %v3426 = vand.u32 2147483647, %v2402
        %v3427 = vand.u32 2147483647, %v2403
        %v3428 = vand.u32 2147483647, %v2404
        %v3429 = vand.u32 2147483647, %v2405
        %v3430 = vand.u32 2147483647, %v2406
        %v3431 = vand.u32 2147483647, %v2407
        %v3432 = vand.u32 2147483647, %v2408
        %v3433 = vand.u32 2147483647, %v2409
        %v3434 = vand.u32 2147483647, %v2410
        %v3435 = vand.u32 2147483647, %v2411
        %v3436 = vand.u32 2147483647, %v2412
        %v3437 = vand.u32 2147483647, %v2413
        %v3438 = vand.u32 2147483647, %v2414
        %v3439 = vand.u32 2147483647, %v2415
        %v3440 = vand.u32 2147483647, %v2416
        %v3441 = vand.u32 2147483647, %v2417
        %v3442 = vand.u32 2147483647, %v2418
        %v3443 = vand.u32 2147483647, %v2419
        %v3444 = vand.u32 2147483647, %v2420
        %v3445 = vand.u32 2147483647, %v2421
        %v3446 = vand.u32 2147483647, %v2422
        %v3447 = vand.u32 2147483647, %v2423
        %v3448 = vand.u32 2147483647, %v2424
        %v3449 = vand.u32 2147483647, %v2425
        %v3450 = vand.u32 2147483647, %v2426
        %v3451 = vand.u32 2147483647, %v2427
        %v3452 = vand.u32 2147483647, %v2428
        %v3453 = vand.u32 2147483647, %v2429
        %v3454 = vand.u32 2147483647, %v2430
        %v3455 = vand.u32 2147483647, %v2431
        %v3456 = vand.u32 2147483647, %v2432
        %v3457 = vand.u32 2147483647, %v2433
        %v3458 = vand.u32 2147483647, %v2434
        %v3459 = vand.u32 2147483647, %v2435
        %v3460 = vand.u32 2147483647, %v2436
        %v3461 = vand.u32 2147483647, %v2437
        %v3462 = vand.u32 2147483647, %v2438
        %v3463 = vand.u32 2147483647, %v2439
        %v3464 = vand.u32 2147483647, %v2440
        %v3465 = vand.u32 2147483647, %v2441
        %v3466 = vand.u32 2147483647, %v2442
        %v3467 = vand.u32 2147483647, %v2443
        %v3468 = vand.u32 2147483647, %v2444
        %v3469 = vand.u32 2147483647, %v2445
        %v3470 = vand.u32 2147483647, %v2446
        %v3471 = vand.u32 2147483647, %v2447
        %v3472 = vand.u32 2147483647, %v2448
        %v3473 = vand.u32 2147483647, %v2449
        %v3474 = vand.u32 2147483647, %v2450
        %v3475 = vand.u32 2147483647, %v2451
        %v3476 = vand.u32 2147483647, %v2452
        %v3477 = vand.u32 2147483647, %v2453
        %v3478 = vand.u32 2147483647, %v2454
        %v3479 = vand.u32 2147483647, %v2455
        %v3480 = vand.u32 2147483647, %v2456
        %v3481 = vand.u32 2147483647, %v2457
        %v3482 = vand.u32 2147483647, %v2458
        %v3483 = vand.u32 2147483647, %v2459
        %v3484 = vand.u32 2147483647, %v2460
        %v3485 = vand.u32 2147483647, %v2461
        %v3486 = vand.u32 2147483647, %v2462
        %v3487 = vand.u32 2147483647, %v2463
        %v3488 = vand.u32 2147483647, %v2464
        %v3489 = vand.u32 2147483647, %v2465
        %v3490 = vand.u32 2147483647, %v2466
        %v3491 = vand.u32 2147483647, %v2467
        %v3492 = vand.u32 2147483647, %v2468
        %v3493 = vand.u32 2147483647, %v2469
        %v3494 = vand.u32 2147483647, %v2470
        %v3495 = vand.u32 2147483647, %v2471
        %v3496 = vand.u32 2147483647, %v2472
        %v3497 = vand.u32 2147483647, %v2473
        %v3498 = vand.u32 2147483647, %v2474
        %v3499 = vand.u32 2147483647, %v2475
        %v3500 = vand.u32 2147483647, %v2476
        %v3501 = vand.u32 2147483647, %v2477
        %v3502 = vand.u32 2147483647, %v2478
        %v3503 = vand.u32 2147483647, %v2479
        %v3504 = vand.u32 2147483647, %v2480
        %v3505 = vand.u32 2147483647, %v2481
        %v3506 = vand.u32 2147483647, %v2482
        %v3507 = vand.u32 2147483647, %v2483
        %v3508 = vand.u32 2147483647, %v2484
        %v3509 = vand.u32 2147483647, %v2485
        %v3510 = vand.u32 2147483647, %v2486
        %v3511 = vand.u32 2147483647, %v2487
        %v3512 = vand.u32 2147483647, %v2488
        %v3513 = vand.u32 2147483647, %v2489
        %v3514 = vand.u32 2147483647, %v2490
        %v3515 = vand.u32 2147483647, %v2491
        %v3516 = vand.u32 2147483647, %v2492
        %v3517 = vand.u32 2147483647, %v2493
        %v3518 = vand.u32 2147483647, %v2494
        %v3519 = vand.u32 2147483647, %v2495
        %v3520 = vand.u32 2147483647, %v2496
        %v3521 = vand.u32 2147483647, %v2497
        %v3522 = vand.u32 2147483647, %v2498
        %v3523 = vand.u32 2147483647, %v2499
        %v3524 = vand.u32 2147483647, %v2500
        %v3525 = vand.u32 2147483647, %v2501
        %v3526 = vand.u32 2147483647, %v2502
        %v3527 = vand.u32 2147483647, %v2503
        %v3528 = vand.u32 2147483647, %v2504
        %v3529 = vand.u32 2147483647, %v2505
        %v3530 = vand.u32 2147483647, %v2506
        %v3531 = vand.u32 2147483647, %v2507
        %v3532 = vand.u32 2147483647, %v2508
        %v3533 = vand.u32 2147483647, %v2509
        %v3534 = vand.u32 2147483647, %v2510
        %v3535 = vand.u32 2147483647, %v2511
        %v3536 = vand.u32 2147483647, %v2512
        %v3537 = vand.u32 2147483647, %v2513
        %v3538 = vand.u32 2147483647, %v2514
        %v3539 = vand.u32 2147483647, %v2515
        %v3540 = vand.u32 2147483647, %v2516
        %v3541 = vand.u32 2147483647, %v2517
        %v3542 = vand.u32 2147483647, %v2518
        %v3543 = vand.u32 2147483647, %v2519
        %v3544 = vand.u32 2147483647, %v2520
        %v3545 = vand.u32 2147483647, %v2521
        %v3546 = vand.u32 2147483647, %v2522
        %v3547 = vand.u32 2147483647, %v2523
        %v3548 = vand.u32 2147483647, %v2524
        %v3549 = vand.u32 2147483647, %v2525
        %v3550 = vand.u32 2147483647, %v2526
        %v3551 = vand.u32 2147483647, %v2527
        %v3552 = vand.u32 2147483647, %v2528
        %v3553 = vand.u32 2147483647, %v2529
        %v3554 = vand.u32 2147483647, %v2530
        %v3555 = vand.u32 2147483647, %v2531
        %v3556 = vand.u32 2147483647, %v2532
        %v3557 = vand.u32 2147483647, %v2533
        %v3558 = vand.u32 2147483647, %v2534
        %v3559 = vand.u32 2147483647, %v2535
        %v3560 = vand.u32 2147483647, %v2536
        %v3561 = vand.u32 2147483647, %v2537
        %v3562 = vand.u32 2147483647, %v2538
        %v3563 = vand.u32 2147483647, %v2539
        %v3564 = vand.u32 2147483647, %v2540
        %v3565 = vand.u32 2147483647, %v2541
        %v3566 = vand.u32 2147483647, %v2542
        %v3567 = vand.u32 2147483647, %v2543
        %v3568 = vand.u32 2147483647, %v2544
        %v3569 = vand.u32 2147483647, %v2545
        %v3570 = vand.u32 2147483647, %v2546
        %v3571 = vand.u32 2147483647, %v2547
        %v3572 = vand.u32 2147483647, %v2548
        %v3573 = vand.u32 2147483647, %v2549
        %v3574 = vand.u32 2147483647, %v2550
        %v3575 = vand.u32 2147483647, %v2551
        %v3576 = vand.u32 2147483647, %v2552
        %v3577 = vand.u32 2147483647, %v2553
        %v3578 = vand.u32 2147483647, %v2554
        %v3579 = vand.u32 2147483647, %v2555
        %v3580 = vand.u32 2147483647, %v2556
        %v3581 = vand.u32 2147483647, %v2557
        %v3582 = vand.u32 2147483647, %v2558
        %v3583 = vand.u32 2147483647, %v2559
        %v3584 = vand.u32 2147483647, %v2560
        %v3585 = vand.u32 2147483647, %v2561
        %v3586 = vand.u32 2147483647, %v2562
        %v3587 = vand.u32 2147483647, %v2563
        %v3588 = vand.u32 2147483647, %v2564
        %v3589 = vand.u32 2147483647, %v2565
        %v3590 = vand.u32 2147483647, %v2566
        %v3591 = vand.u32 2147483647, %v2567
        %v3592 = vand.u32 2147483647, %v2568
        %v3593 = vand.u32 2147483647, %v2569
        %v3594 = vand.u32 2147483647, %v2570
        %v3595 = vand.u32 2147483647, %v2571
        %v3596 = vand.u32 2147483647, %v2572
        %v3597 = vand.u32 2147483647, %v2573
        %v3598 = vand.u32 2147483647, %v2574
        %v3599 = vand.u32 2147483647, %v2575
        %v3600 = vand.u32 2147483647, %v2576
        %v3601 = vand.u32 2147483647, %v2577
        %v3602 = vand.u32 2147483647, %v2578
        %v3603 = vand.u32 2147483647, %v2579
        %v3604 = vand.u32 2147483647, %v2580
        %v3605 = vand.u32 2147483647, %v2581
        %v3606 = vand.u32 2147483647, %v2582
        %v3607 = vand.u32 2147483647, %v2583
        %v3608 = vand.u32 2147483647, %v2584
        %v3609 = vand.u32 2147483647, %v2585
        %v3610 = vand.u32 2147483647, %v2586
        %v3611 = vand.u32 2147483647, %v2587
        %v3612 = vand.u32 2147483647, %v2588
        %v3613 = vand.u32 2147483647, %v2589
        %v3614 = vand.u32 2147483647, %v2590
        %v3615 = vand.u32 2147483647, %v2591
        %v3616 = vand.u32 2147483647, %v2592
        %v3617 = vand.u32 2147483647, %v2593
        %v3618 = vand.u32 2147483647, %v2594
        %v3619 = vand.u32 2147483647, %v2595
        %v3620 = vand.u32 2147483647, %v2596
        %v3621 = vand.u32 2147483647, %v2597
        %v3622 = vand.u32 2147483647, %v2598
        %v3623 = vand.u32 2147483647, %v2599
        %v3624 = vand.u32 2147483647, %v2600
        %v3625 = vand.u32 2147483647, %v2601
        %v3626 = vand.u32 2147483647, %v2602
        %v3627 = vand.u32 2147483647, %v2603
        %v3628 = vand.u32 2147483647, %v2604
        %v3629 = vand.u32 2147483647, %v2605
        %v3630 = vand.u32 2147483647, %v2606
        %v3631 = vand.u32 2147483647, %v2607
        %v3632 = vand.u32 2147483647, %v2608
        %v3633 = vand.u32 2147483647, %v2609
        %v3634 = vand.u32 2147483647, %v2610
        %v3635 = vand.u32 2147483647, %v2611
        %v3636 = vand.u32 2147483647, %v2612
        %v3637 = vand.u32 2147483647, %v2613
        %v3638 = vand.u32 2147483647, %v2614
        %v3639 = vand.u32 2147483647, %v2615
        %v3640 = vand.u32 2147483647, %v2616
        %v3641 = vand.u32 2147483647, %v2617
        %v3642 = vand.u32 2147483647, %v2618
        %v3643 = vand.u32 2147483647, %v2619
        %v3644 = vand.u32 2147483647, %v2620
        %v3645 = vand.u32 2147483647, %v2621
        %v3646 = vand.u32 2147483647, %v2622
        %v3647 = vand.u32 2147483647, %v2623
        %v3648 = vand.u32 2147483647, %v2624
        %v3649 = vand.u32 2147483647, %v2625
        %v3650 = vand.u32 2147483647, %v2626
        %v3651 = vand.u32 2147483647, %v2627
        %v3652 = vand.u32 2147483647, %v2628
        %v3653 = vand.u32 2147483647, %v2629
        %v3654 = vand.u32 2147483647, %v2630
        %v3655 = vand.u32 2147483647, %v2631
        %v3656 = vand.u32 2147483647, %v2632
        %v3657 = vand.u32 2147483647, %v2633
        %v3658 = vand.u32 2147483647, %v2634
        %v3659 = vand.u32 2147483647, %v2635
        %v3660 = vand.u32 2147483647, %v2636
        %v3661 = vand.u32 2147483647, %v2637
        %v3662 = vand.u32 2147483647, %v2638
        %v3663 = vand.u32 2147483647, %v2639
        %v3664 = vand.u32 2147483647, %v2640
        %v3665 = vand.u32 2147483647, %v2641
        %v3666 = vand.u32 2147483647, %v2642
        %v3667 = vand.u32 2147483647, %v2643
        %v3668 = vand.u32 2147483647, %v2644
        %v3669 = vand.u32 2147483647, %v2645
        %v3670 = vand.u32 2147483647, %v2646
        %v3671 = vand.u32 2147483647, %v2647
        %v3672 = vand.u32 2147483647, %v2648
        %v3673 = vand.u32 2147483647, %v2649
        %v3674 = vand.u32 2147483647, %v2650
        %v3675 = vand.u32 2147483647, %v2651
        %v3676 = vand.u32 2147483647, %v2652
        %v3677 = vand.u32 2147483647, %v2653
        %v3678 = vand.u32 2147483647, %v2654
        %v3679 = vand.u32 2147483647, %v2655
        %v3680 = vand.u32 2147483647, %v2656
        %v3681 = vand.u32 2147483647, %v2657
        %v3682 = vand.u32 2147483647, %v2658
        %v3683 = vand.u32 2147483647, %v2659
        %v3684 = vand.u32 2147483647, %v2660
        %v3685 = vand.u32 2147483647, %v2661
        %v3686 = vand.u32 2147483647, %v2662
        %v3687 = vand.u32 2147483647, %v2663
        %v3688 = vand.u32 2147483647, %v2664
        %v3689 = vand.u32 2147483647, %v2665
        %v3690 = vand.u32 2147483647, %v2666
        %v3691 = vand.u32 2147483647, %v2667
        %v3692 = vand.u32 2147483647, %v2668
        %v3693 = vand.u32 2147483647, %v2669
        %v3694 = vand.u32 2147483647, %v2670
        %v3695 = vand.u32 2147483647, %v2671
        %v3696 = vand.u32 2147483647, %v2672
        %v3697 = vand.u32 2147483647, %v2673
        %v3698 = vand.u32 2147483647, %v2674
        %v3699 = vand.u32 2147483647, %v2675
        %v3700 = vand.u32 2147483647, %v2676
        %v3701 = vand.u32 2147483647, %v2677
        %v3702 = vand.u32 2147483647, %v2678
        %v3703 = vand.u32 2147483647, %v2679
        %v3704 = vand.u32 2147483647, %v2680
        %v3705 = vand.u32 2147483647, %v2681
        %v3706 = vand.u32 2147483647, %v2682
        %v3707 = vand.u32 2147483647, %v2683
        %v3708 = vand.u32 2147483647, %v2684
        %v3709 = vand.u32 2147483647, %v2685
        %v3710 = vand.u32 2147483647, %v2686
        %v3711 = vand.u32 2147483647, %v2687
        %v3712 = vand.u32 2147483647, %v2688
        %v3713 = vand.u32 2147483647, %v2689
        %v3714 = vand.u32 2147483647, %v2690
        %v3715 = vand.u32 2147483647, %v2691
        %v3716 = vand.u32 2147483647, %v2692
        %v3717 = vand.u32 2147483647, %v2693
        %v3718 = vand.u32 2147483647, %v2694
        %v3719 = vand.u32 2147483647, %v2695
        %v3720 = vand.u32 2147483647, %v2696
        %v3721 = vand.u32 2147483647, %v2697
        %v3722 = vand.u32 2147483647, %v2698
        %v3723 = vand.u32 2147483647, %v2699
        %v3724 = vand.u32 2147483647, %v2700
        %v3725 = vand.u32 2147483647, %v2701
        %v3726 = vand.u32 2147483647, %v2702
        %v3727 = vand.u32 2147483647, %v2703
        %v3728 = vand.u32 2147483647, %v2704
        %v3729 = vand.u32 2147483647, %v2705
        %v3730 = vand.u32 2147483647, %v2706
        %v3731 = vand.u32 2147483647, %v2707
        %v3732 = vand.u32 2147483647, %v2708
        %v3733 = vand.u32 2147483647, %v2709
        %v3734 = vand.u32 2147483647, %v2710
        %v3735 = vand.u32 2147483647, %v2711
        %v3736 = vand.u32 2147483647, %v2712
        %v3737 = vand.u32 2147483647, %v2713
        %v3738 = vand.u32 2147483647, %v2714
        %v3739 = vand.u32 2147483647, %v2715
        %v3740 = vand.u32 2147483647, %v2716
        %v3741 = vand.u32 2147483647, %v2717
        %v3742 = vand.u32 2147483647, %v2718
        %v3743 = vand.u32 2147483647, %v2719
        %v3744 = vand.u32 2147483647, %v2720
        %v3745 = vand.u32 2147483647, %v2721
        %v3746 = vand.u32 2147483647, %v2722
        %v3747 = vand.u32 2147483647, %v2723
        %v3748 = vand.u32 2147483647, %v2724
        %v3749 = vand.u32 2147483647, %v2725
        %v3750 = vand.u32 2147483647, %v2726
        %v3751 = vand.u32 2147483647, %v2727
        %v3752 = vand.u32 2147483647, %v2728
        %v3753 = vand.u32 2147483647, %v2729
        %v3754 = vand.u32 2147483647, %v2730
        %v3755 = vand.u32 2147483647, %v2731
        %v3756 = vand.u32 2147483647, %v2732
        %v3757 = vand.u32 2147483647, %v2733
        %v3758 = vand.u32 2147483647, %v2734
        %v3759 = vand.u32 2147483647, %v2735
        %v3760 = vand.u32 2147483647, %v2736
        %v3761 = vand.u32 2147483647, %v2737
        %v3762 = vand.u32 2147483647, %v2738
        %v3763 = vand.u32 2147483647, %v2739
        %v3764 = vand.u32 2147483647, %v2740
        %v3765 = vand.u32 2147483647, %v2741
        %v3766 = vand.u32 2147483647, %v2742
        %v3767 = vand.u32 2147483647, %v2743
        %v3768 = vand.u32 2147483647, %v2744
        %v3769 = vand.u32 2147483647, %v2745
        %v3770 = vand.u32 2147483647, %v2746
        %v3771 = vand.u32 2147483647, %v2747
        %v3772 = vand.u32 2147483647, %v2748
        %v3773 = vand.u32 2147483647, %v2749
        %v3774 = vand.u32 2147483647, %v2750
        %v3775 = vand.u32 2147483647, %v2751
        %v3776 = vand.u32 2147483647, %v2752
        %v3777 = vand.u32 2147483647, %v2753
        %v3778 = vand.u32 2147483647, %v2754
        %v3779 = vand.u32 2147483647, %v2755
        %v3780 = vand.u32 2147483647, %v2756
        %v3781 = vand.u32 2147483647, %v2757
        %v3782 = vand.u32 2147483647, %v2758
        %v3783 = vand.u32 2147483647, %v2759
        %v3784 = vand.u32 2147483647, %v2760
        %v3785 = vand.u32 2147483647, %v2761
        %v3786 = vand.u32 2147483647, %v2762
        %v3787 = vand.u32 2147483647, %v2763
        %v3788 = vand.u32 2147483647, %v2764
        %v3789 = vand.u32 2147483647, %v2765
        %v3790 = vand.u32 2147483647, %v2766
        %v3791 = vand.u32 2147483647, %v2767
        %v3792 = vand.u32 2147483647, %v2768
        %v3793 = vand.u32 2147483647, %v2769
        %v3794 = vand.u32 2147483647, %v2770
        %v3795 = vand.u32 2147483647, %v2771
        %v3796 = vand.u32 2147483647, %v2772
        %v3797 = vand.u32 2147483647, %v2773
        %v3798 = vand.u32 2147483647, %v2774
        %v3799 = vand.u32 2147483647, %v2775
        %v3800 = vand.u32 2147483647, %v2776
        %v3801 = vand.u32 2147483647, %v2777
        %v3802 = vand.u32 2147483647, %v2778
        %v3803 = vand.u32 2147483647, %v2779
        %v3804 = vand.u32 2147483647, %v2780
        %v3805 = vand.u32 2147483647, %v2781
        %v3806 = vand.u32 2147483647, %v2782
        %v3807 = vand.u32 2147483647, %v2783
        %v3808 = vand.u32 2147483647, %v2784
        %v3809 = vand.u32 2147483647, %v2785
        %v3810 = vand.u32 2147483647, %v2786
        %v3811 = vand.u32 2147483647, %v2787
        %v3812 = vand.u32 2147483647, %v2788
        %v3813 = vand.u32 2147483647, %v2789
        %v3814 = vand.u32 2147483647, %v2790
        %v3815 = vand.u32 2147483647, %v2791
        %v3816 = vand.u32 2147483647, %v2792
        %v3817 = vand.u32 2147483647, %v2793
        %v3818 = vand.u32 2147483647, %v2794
        %v3819 = vand.u32 2147483647, %v2795
        %v3820 = vand.u32 2147483647, %v2796
        %v3821 = vand.u32 2147483647, %v2797
        %v3822 = vand.u32 2147483647, %v2798
        %v3823 = vand.u32 2147483647, %v2799
        %v3824 = vand.u32 2147483647, %v2800
        %v3825 = vand.u32 2147483647, %v2801
        %v3826 = vand.u32 2147483647, %v2802
        %v3827 = vand.u32 2147483647, %v2803
        %v3828 = vand.u32 2147483647, %v2804
        %v3829 = vand.u32 2147483647, %v2805
        %v3830 = vand.u32 2147483647, %v2806
        %v3831 = vand.u32 2147483647, %v2807
        %v3832 = vand.u32 2147483647, %v2808
        %v3833 = vand.u32 2147483647, %v2809
        %v3834 = vand.u32 2147483647, %v2810
        %v3835 = vand.u32 2147483647, %v2811
        %v3836 = vand.u32 2147483647, %v2812
        %v3837 = vand.u32 2147483647, %v2813
        %v3838 = vand.u32 2147483647, %v2814
        %v3839 = vand.u32 2147483647, %v2815
        %v3840 = vand.u32 2147483647, %v2816
        %v3841 = vand.u32 2147483647, %v2817
        %v3842 = vand.u32 2147483647, %v2818
        %v3843 = vand.u32 2147483647, %v2819
        %v3844 = vand.u32 2147483647, %v2820
        %v3845 = vand.u32 2147483647, %v2821
        %v3846 = vand.u32 2147483647, %v2822
        %v3847 = vand.u32 2147483647, %v2823
        %v3848 = vand.u32 2147483647, %v2824
        %v3849 = vand.u32 2147483647, %v2825
        %v3850 = vand.u32 2147483647, %v2826
        %v3851 = vand.u32 2147483647, %v2827
        %v3852 = vand.u32 2147483647, %v2828
        %v3853 = vand.u32 2147483647, %v2829
        %v3854 = vand.u32 2147483647, %v2830
        %v3855 = vand.u32 2147483647, %v2831
        %v3856 = vand.u32 2147483647, %v2832
        %v3857 = vand.u32 2147483647, %v2833
        %v3858 = vand.u32 2147483647, %v2834
        %v3859 = vand.u32 2147483647, %v2835
        %v3860 = vand.u32 2147483647, %v2836
        %v3861 = vand.u32 2147483647, %v2837
        %v3862 = vand.u32 2147483647, %v2838
        %v3863 = vand.u32 2147483647, %v2839
        %v3864 = vand.u32 2147483647, %v2840
        %v3865 = vand.u32 2147483647, %v2841
        %v3866 = vand.u32 2147483647, %v2842
        %v3867 = vand.u32 2147483647, %v2843
        %v3868 = vand.u32 2147483647, %v2844
        %v3869 = vand.u32 2147483647, %v2845
        %v3870 = vand.u32 2147483647, %v2846
        %v3871 = vand.u32 2147483647, %v2847
        %v3872 = vand.u32 2147483647, %v2848
        %v3873 = vand.u32 2147483647, %v2849
        %v3874 = vand.u32 2147483647, %v2850
        %v3875 = vand.u32 2147483647, %v2851
        %v3876 = vand.u32 2147483647, %v2852
        %v3877 = vand.u32 2147483647, %v2853
        %v3878 = vand.u32 2147483647, %v2854
        %v3879 = vand.u32 2147483647, %v2855
        %v3880 = vand.u32 2147483647, %v2856
        %v3881 = vand.u32 2147483647, %v2857
        %v3882 = vand.u32 2147483647, %v2858
        %v3883 = vand.u32 2147483647, %v2859
        %v3884 = vand.u32 2147483647, %v2860
        %v3885 = vand.u32 2147483647, %v2861
        %v3886 = vand.u32 2147483647, %v2862
        %v3887 = vand.u32 2147483647, %v2863
        %v3888 = vand.u32 2147483647, %v2864
        %v3889 = vand.u32 2147483647, %v2865
        %v3890 = vand.u32 2147483647, %v2866
        %v3891 = vand.u32 2147483647, %v2867
        %v3892 = vand.u32 2147483647, %v2868
        %v3893 = vand.u32 2147483647, %v2869
        %v3894 = vand.u32 2147483647, %v2870
        %v3895 = vand.u32 2147483647, %v2871
        %v3896 = vand.u32 2147483647, %v2872
        %v3897 = vand.u32 2147483647, %v2873
        %v3898 = vand.u32 2147483647, %v2874
        %v3899 = vand.u32 2147483647, %v2875
        %v3900 = vand.u32 2147483647, %v2876
        %v3901 = vand.u32 2147483647, %v2877
        %v3902 = vand.u32 2147483647, %v2878
        %v3903 = vand.u32 2147483647, %v2879
        %v3904 = vand.u32 2147483647, %v2880
        %v3905 = vand.u32 2147483647, %v2881
        %v3906 = vand.u32 2147483647, %v2882
        %v3907 = vand.u32 2147483647, %v2883
        %v3908 = vand.u32 2147483647, %v2884
        %v3909 = vand.u32 2147483647, %v2885
        %v3910 = vand.u32 2147483647, %v2886
        %v3911 = vand.u32 2147483647, %v2887
        %v3912 = vand.u32 2147483647, %v2888
        %v3913 = vand.u32 2147483647, %v2889
        %v3914 = vand.u32 2147483647, %v2890
        %v3915 = vand.u32 2147483647, %v2891
        %v3916 = vand.u32 2147483647, %v2892
        %v3917 = vand.u32 2147483647, %v2893
        %v3918 = vand.u32 2147483647, %v2894
        %v3919 = vand.u32 2147483647, %v2895
        %v3920 = vand.u32 2147483647, %v2896
        %v3921 = vand.u32 2147483647, %v2897
        %v3922 = vand.u32 2147483647, %v2898
        %v3923 = vand.u32 2147483647, %v2899
        %v3924 = vand.u32 2147483647, %v2900
        %v3925 = vand.u32 2147483647, %v2901
        %v3926 = vand.u32 2147483647, %v2902
        %v3927 = vand.u32 2147483647, %v2903
        %v3928 = vand.u32 2147483647, %v2904
        %v3929 = vand.u32 2147483647, %v2905
        %v3930 = vand.u32 2147483647, %v2906
        %v3931 = vand.u32 2147483647, %v2907
        %v3932 = vand.u32 2147483647, %v2908
        %v3933 = vand.u32 2147483647, %v2909
        %v3934 = vand.u32 2147483647, %v2910
        %v3935 = vand.u32 2147483647, %v2911
        %v3936 = vand.u32 2147483647, %v2912
        %v3937 = vand.u32 2147483647, %v2913
        %v3938 = vand.u32 2147483647, %v2914
        %v3939 = vand.u32 2147483647, %v2915
        %v3940 = vand.u32 2147483647, %v2916
        %v3941 = vand.u32 2147483647, %v2917
        %v3942 = vand.u32 2147483647, %v2918
        %v3943 = vand.u32 2147483647, %v2919
        %v3944 = vand.u32 2147483647, %v2920
        %v3945 = vand.u32 2147483647, %v2921
        %v3946 = vand.u32 2147483647, %v2922
        %v3947 = vand.u32 2147483647, %v2923
        %v3948 = vand.u32 2147483647, %v2924
        %v3949 = vand.u32 2147483647, %v2925
        %v3950 = vand.u32 2147483647, %v2926
        %v3951 = vand.u32 2147483647, %v2927
        %v3952 = vand.u32 2147483647, %v2928
        %v3953 = vand.u32 2147483647, %v2929
        %v3954 = vand.u32 2147483647, %v2930
        %v3955 = vand.u32 2147483647, %v2931
        %v3956 = vand.u32 2147483647, %v2932
        %v3957 = vand.u32 2147483647, %v2933
        %v3958 = vand.u32 2147483647, %v2934
        %v3959 = vand.u32 2147483647, %v2935
        %v3960 = vand.u32 2147483647, %v2936
        %v3961 = vand.u32 2147483647, %v2937
        %v3962 = vand.u32 2147483647, %v2938
        %v3963 = vand.u32 2147483647, %v2939
        %v3964 = vand.u32 2147483647, %v2940
        %v3965 = vand.u32 2147483647, %v2941
        %v3966 = vand.u32 2147483647, %v2942
        %v3967 = vand.u32 2147483647, %v2943
        %v3968 = vand.u32 2147483647, %v2944
        %v3969 = vand.u32 2147483647, %v2945
        %v3970 = vand.u32 2147483647, %v2946
        %v3971 = vand.u32 2147483647, %v2947
        %v3972 = vand.u32 2147483647, %v2948
        %v3973 = vand.u32 2147483647, %v2949
        %v3974 = vand.u32 2147483647, %v2950
        %v3975 = vand.u32 2147483647, %v2951
        %v3976 = vand.u32 2147483647, %v2952
        %v3977 = vand.u32 2147483647, %v2953
        %v3978 = vand.u32 2147483647, %v2954
        %v3979 = vand.u32 2147483647, %v2955
        %v3980 = vand.u32 2147483647, %v2956
        %v3981 = vand.u32 2147483647, %v2957
        %v3982 = vand.u32 2147483647, %v2958
        %v3983 = vand.u32 2147483647, %v2959
        %v3984 = vand.u32 2147483647, %v2960
        %v3985 = vand.u32 2147483647, %v2961
        %v3986 = vand.u32 2147483647, %v2962
        %v3987 = vand.u32 2147483647, %v2963
        %v3988 = vand.u32 2147483647, %v2964
        %v3989 = vand.u32 2147483647, %v2965
        %v3990 = vand.u32 2147483647, %v2966
        %v3991 = vand.u32 2147483647, %v2967
        %v3992 = vand.u32 2147483647, %v2968
        %v3993 = vand.u32 2147483647, %v2969
        %v3994 = vand.u32 2147483647, %v2970
        %v3995 = vand.u32 2147483647, %v2971
        %v3996 = vand.u32 2147483647, %v2972
        %v3997 = vand.u32 2147483647, %v2973
        %v3998 = vand.u32 2147483647, %v2974
        %v3999 = vand.u32 2147483647, %v2975
        %v4000 = vand.u32 2147483647, %v2976
        %v4001 = vand.u32 2147483647, %v2977
        %v4002 = vand.u32 2147483647, %v2978
        %v4003 = vand.u32 2147483647, %v2979
        %v4004 = vand.u32 2147483647, %v2980
        %v4005 = vand.u32 2147483647, %v2981
        %v4006 = vand.u32 2147483647, %v2982
        %v4007 = vand.u32 2147483647, %v2983
        %v4008 = vand.u32 2147483647, %v2984
        %v4009 = vand.u32 2147483647, %v2985
        %v4010 = vand.u32 2147483647, %v2986
        %v4011 = vand.u32 2147483647, %v2987
        %v4012 = vand.u32 2147483647, %v2988
        %v4013 = vand.u32 2147483647, %v2989
        %v4014 = vand.u32 2147483647, %v2990
        %v4015 = vand.u32 2147483647, %v2991
        %v4016 = vand.u32 2147483647, %v2992
        %v4017 = vand.u32 2147483647, %v2993
        %v4018 = vand.u32 2147483647, %v2994
        %v4019 = vand.u32 2147483647, %v2995
        %v4020 = vand.u32 2147483647, %v2996
        %v4021 = vand.u32 2147483647, %v2997
        %v4022 = vand.u32 2147483647, %v2998
        %v4023 = vand.u32 2147483647, %v2999
        %v4024 = vand.u32 2147483647, %v3000
        %v4025 = vand.u32 2147483647, %v3001
        %v4026 = vand.u32 2147483647, %v3002
        %v4027 = vand.u32 2147483647, %v3003
        %v4028 = vand.u32 2147483647, %v3004
        %v4029 = vand.u32 2147483647, %v3005
        %v4030 = vand.u32 2147483647, %v3006
        %v4031 = vand.u32 2147483647, %v3007
        %v4032 = vand.u32 2147483647, %v3008
        %v4033 = vand.u32 2147483647, %v3009
        %v4034 = vand.u32 2147483647, %v3010
        %v4035 = vand.u32 2147483647, %v3011
        %v4036 = vand.u32 2147483647, %v3012
        %v4037 = vand.u32 2147483647, %v3013
        %v4038 = vand.u32 2147483647, %v3014
        %v4039 = vand.u32 2147483647, %v3015
        %v4040 = vand.u32 2147483647, %v3016
        %v4041 = vand.u32 2147483647, %v3017
        %v4042 = vand.u32 2147483647, %v3018
        %v4043 = vand.u32 2147483647, %v3019
        %v4044 = vand.u32 2147483647, %v3020
        %v4045 = vand.u32 2147483647, %v3021
        %v4046 = vand.u32 2147483647, %v3022
        %v4047 = vand.u32 2147483647, %v3023
        %v4048 = vand.u32 2147483647, %v3024
        %v4049 = vand.u32 2147483647, %v3025
        %v4050 = vand.u32 2147483647, %v3026
        %v4051 = vand.u32 2147483647, %v3027
        %v4052 = vand.u32 2147483647, %v3028
        %v4053 = vand.u32 2147483647, %v3029
        %v4054 = vand.u32 2147483647, %v3030
        %v4055 = vand.u32 2147483647, %v3031
        %v4056 = vand.u32 2147483647, %v3032
        %v4057 = vand.u32 2147483647, %v3033
        %v4058 = vand.u32 2147483647, %v3034
        %v4059 = vand.u32 2147483647, %v3035
        %v4060 = vand.u32 2147483647, %v3036
        %v4061 = vand.u32 2147483647, %v3037
        %v4062 = vand.u32 2147483647, %v3038
        %v4063 = vand.u32 2147483647, %v3039
        %v4064 = vand.u32 2147483647, %v3040
        %v4065 = vand.u32 2147483647, %v3041
        %v4066 = vand.u32 2147483647, %v3042
        %v4067 = vand.u32 2147483647, %v3043
        %v4068 = vand.u32 2147483647, %v3044
        %v4069 = vand.u32 2147483647, %v3045
        %v4070 = vand.u32 2147483647, %v3046
        %v4071 = vand.u32 2147483647, %v3047
        %v4072 = vand.u32 2147483647, %v3048
        %v4073 = vand.u32 2147483647, %v3049
        %v4074 = vand.u32 2147483647, %v3050
        %v4075 = vand.u32 2147483647, %v3051
        %v4076 = vand.u32 2147483647, %v3052
        %v4077 = vand.u32 2147483647, %v3053
        %v4078 = vand.u32 2147483647, %v3054
        %v4079 = vand.u32 2147483647, %v3055
        %v4080 = vand.u32 2147483647, %v3056
        %v4081 = vand.u32 2147483647, %v3057
        %v4082 = vand.u32 2147483647, %v3058
        %v4083 = vand.u32 2147483647, %v3059
        %v4084 = vand.u32 2147483647, %v3060
        %v4085 = vand.u32 2147483647, %v3061
        %v4086 = vand.u32 2147483647, %v3062
        %v4087 = vand.u32 2147483647, %v3063
        %v4088 = vand.u32 2147483647, %v3064
        %v4089 = vand.u32 2147483647, %v3065
        %v4090 = vand.u32 2147483647, %v3066
        %v4091 = vand.u32 2147483647, %v3067
        %v4092 = vand.u32 2147483647, %v3068
        %v4093 = vand.u32 2147483647, %v3069
        %v4094 = vand.u32 2147483647, %v3070
        %v4095 = vand.u32 2147483647, %v3071
        %v4096 = vand.u32 2147483647, %v3072
        %v4097 = vand.u32 2147483647, %v3073
        %v4098 = vand.u32 2147483647, %v3074
        %v4099 = vand.u32 2147483647, %v3075
        %v4100 = vand.u32 2147483647, %v3076
        %v4101 = vand.u32 2147483647, %v3077
        %v4102 = vand.u32 2147483647, %v3078
        %v4103 = vand.u32 2147483647, %v3079
        %v4104 = vand.u32 2147483647, %v3080
        %v4105 = vand.u32 2147483647, %v3081
        %v4106 = vand.u32 2147483647, %v3082
        %v4107 = vand.u32 2147483647, %v3083
        %v4108 = vand.u32 2147483647, %v3084
        %v4109 = vand.u32 2147483647, %v3085
        %v4110 = vand.u32 2147483647, %v3086
        %v4111 = vand.u32 2147483647, %v3087
        %v4112 = vand.u32 2147483647, %v3088
        %v4113 = vand.u32 2147483647, %v3089
        %v4114 = vand.u32 2147483647, %v3090
        %v4115 = vand.u32 2147483647, %v3091
        %v4116 = vand.u32 2147483647, %v3092
        %v4117 = vand.u32 2147483647, %v3093
        %v4118 = vand.u32 2147483647, %v3094
        %v4119 = vand.u32 2147483647, %v3095
        %v4120 = vand.u32 2147483647, %v3096
        %v4121 = vand.u32 2147483647, %v3097
        %v4122 = vand.u32 2147483647, %v3098
        %v4123 = vand.u32 2147483647, %v3099
        %v4124 = vand.u32 2147483647, %v3100
        %v4125 = vand.u32 2147483647, %v3101
        %v4126 = vand.u32 2147483647, %v3102
        %v4127 = vand.u32 2147483647, %v3103
        %v4128 = vand.u32 2147483647, %v3104
        %v4129 = vand.u32 2147483647, %v3105
        %v4130 = vand.u32 2147483647, %v3106
        %v4131 = vand.u32 2147483647, %v3107
        %v4132 = vand.u32 2147483647, %v3108
        %v4133 = vand.u32 2147483647, %v3109
        %v4134 = vand.u32 2147483647, %v3110
        %v4135 = vand.u32 2147483647, %v3111
        %v4136 = vand.u32 2147483647, %v3112
        %v4137 = vand.u32 2147483647, %v3113
        %v4138 = vand.u32 2147483647, %v3114
        %v4139 = vand.u32 2147483647, %v3115
        %v4140 = vand.u32 2147483647, %v3116
        %v4141 = vand.u32 2147483647, %v3117
        %v4142 = vand.u32 2147483647, %v3118
        %v4143 = vand.u32 2147483647, %v3119
        %v4144 = vand.u32 2147483647, %v3120
        %v4145 = vand.u32 2147483647, %v3121
        %v4146 = vand.u32 2147483647, %v3122
        %v4147 = vand.u32 2147483647, %v3123
        %v4148 = vand.u32 2147483647, %v3124
        %v4149 = vand.u32 2147483647, %v3125
        %v4150 = vand.u32 2147483647, %v3126
        %v4151 = vand.u32 2147483647, %v3127
        %v4152 = vand.u32 2147483647, %v3128
        %v4153 = vand.u32 2147483647, %v3129
        %v4154 = vand.u32 2147483647, %v3130
        %v4155 = vand.u32 2147483647, %v3131
        %v4156 = vand.u32 2147483647, %v3132
        %v4157 = vand.u32 2147483647, %v3133
        %v4158 = vand.u32 2147483647, %v3134
        %v4159 = vand.u32 2147483647, %v3135
        %v4160 = vand.u32 2147483647, %v3136
        %v4161 = vand.u32 2147483647, %v3137
        %v4162 = vand.u32 2147483647, %v3138
        %v4163 = vand.u32 2147483647, %v3139
        %v4164 = vand.u32 2147483647, %v3140
        %v4165 = vand.u32 2147483647, %v3141
        %v4166 = vand.u32 2147483647, %v3142
        %v4167 = vand.u32 2147483647, %v3143
        %v4168 = vand.u32 2147483647, %v3144
        %v4169 = vand.u32 2147483647, %v3145
        %v4170 = vand.u32 2147483647, %v3146
        %v4171 = vand.u32 2147483647, %v3147
        %v4172 = vand.u32 2147483647, %v3148
        %v4173 = vand.u32 2147483647, %v3149
        %v4174 = vand.u32 2147483647, %v3150
        %v4175 = vand.u32 2147483647, %v3151
        %v4176 = vand.u32 2147483647, %v3152
        %v4177 = vand.u32 2147483647, %v3153
        %v4178 = vand.u32 2147483647, %v3154
        %v4179 = vand.u32 2147483647, %v3155
        %v4180 = vand.u32 2147483647, %v3156
        %v4181 = vand.u32 2147483647, %v3157
        %v4182 = vand.u32 2147483647, %v3158
        %v4183 = vand.u32 2147483647, %v3159
        %v4184 = vand.u32 2147483647, %v3160
        %v4185 = vand.u32 2147483647, %v3161
        %v4186 = vand.u32 2147483647, %v3162
        %v4187 = vand.u32 2147483647, %v3163
        %v4188 = vand.u32 2147483647, %v3164
        %v4189 = vand.u32 2147483647, %v3165
        %v4190 = vand.u32 2147483647, %v3166
        %v4191 = vand.u32 2147483647, %v3167
        %v4192 = vand.u32 2147483647, %v3168
        %v4193 = vand.u32 2147483647, %v3169
        %v4194 = vand.u32 2147483647, %v3170
        %v4195 = vand.u32 2147483647, %v3171
        %v4196 = vand.u32 2147483647, %v3172
        %v4197 = vand.u32 2147483647, %v3173
        %v4198 = vand.u32 2147483647, %v3174
        %v4199 = vand.u32 2147483647, %v3175
        %v4200 = vand.u32 2147483647, %v3176
        %v4201 = vand.u32 2147483647, %v3177
        %v4202 = vand.u32 2147483647, %v3178
        %v4203 = vand.u32 2147483647, %v3179
        %v4204 = vand.u32 2147483647, %v3180
        %v4205 = vand.u32 2147483647, %v3181
        %v4206 = vand.u32 2147483647, %v3182
        %v4207 = vand.u32 2147483647, %v3183
        %v4208 = vand.u32 2147483647, %v3184
        %v4209 = vand.u32 2147483647, %v3185
        %v4210 = vand.u32 2147483647, %v3186
        %v4211 = vand.u32 2147483647, %v3187
        %v4212 = vand.u32 2147483647, %v3188
        %v4213 = vand.u32 2147483647, %v3189
        %v4214 = vand.u32 2147483647, %v3190
        %v4215 = vand.u32 2147483647, %v3191
        %v4216 = vand.u32 2147483647, %v3192
        %v4217 = vand.u32 2147483647, %v3193
        %v4218 = vand.u32 2147483647, %v3194
        %v4219 = vand.u32 2147483647, %v3195
        %v4220 = vand.u32 2147483647, %v3196
        %v4221 = vand.u32 2147483647, %v3197
        %v4222 = vand.u32 2147483647, %v3198
        %v4223 = vand.u32 2147483647, %v3199
        %v4224 = vand.u32 2147483647, %v3200
        %v4225 = vand.u32 2147483647, %v3201
        %v4226 = vand.u32 2147483647, %v3202
        %v4227 = vand.u32 2147483647, %v3203
        %v4228 = vand.u32 2147483647, %v3204
        %v4229 = vand.u32 2147483647, %v3205
        %v4230 = vand.u32 2147483647, %v3206
        %v4231 = vand.u32 2147483647, %v3207
        %v4232 = vand.u32 2147483647, %v3208
        %v4233 = vand.u32 2147483647, %v3209
        %v4234 = vand.u32 2147483647, %v3210
        %v4235 = vand.u32 2147483647, %v3211
        %v4236 = vand.u32 2147483647, %v3212
        %v4237 = vand.u32 2147483647, %v3213
        %v4238 = vand.u32 2147483647, %v3214
        %v4239 = vand.u32 2147483647, %v3215
        %v4240 = vand.u32 2147483647, %v3216
        %v4241 = vand.u32 2147483647, %v3217
        %v4242 = vand.u32 2147483647, %v3218
        %v4243 = vand.u32 2147483647, %v3219
        %v4244 = vand.u32 2147483647, %v3220
        %v4245 = vand.u32 2147483647, %v3221
        %v4246 = vand.u32 2147483647, %v3222
        %v4247 = vand.u32 2147483647, %v3223
        %v4248 = vand.u32 2147483647, %v3224
        %v4249 = vand.u32 2147483647, %v3225
        %v4250 = vand.u32 2147483647, %v3226
        %v4251 = vand.u32 2147483647, %v3227
        %v4252 = vand.u32 2147483647, %v3228
        %v4253 = vand.u32 2147483647, %v3229
        %v4254 = vand.u32 2147483647, %v3230
        %v4255 = vand.u32 2147483647, %v3231
        %v4256 = vand.u32 2147483647, %v3232
        %v4257 = vand.u32 2147483647, %v3233
        %v4258 = vand.u32 2147483647, %v3234
        %v4259 = vand.u32 2147483647, %v3235
        %v4260 = vand.u32 2147483647, %v3236
        %v4261 = vand.u32 2147483647, %v3237
        %v4262 = vand.u32 2147483647, %v3238
        %v4263 = vand.u32 2147483647, %v3239
        %v4264 = vand.u32 2147483647, %v3240
        %v4265 = vand.u32 2147483647, %v3241
        %v4266 = vand.u32 2147483647, %v3242
        %v4267 = vand.u32 2147483647, %v3243
        %v4268 = vand.u32 2147483647, %v3244
        %v4269 = vand.u32 2147483647, %v3245
        %v4270 = vand.u32 2147483647, %v3246
        %v4271 = vand.u32 2147483647, %v3247
        %v4272 = vand.u32 2147483647, %v3248
        %v4273 = vand.u32 2147483647, %v3249
        %v4274 = vand.u32 2147483647, %v3250
        %v4275 = vand.u32 2147483647, %v3251
        %v4276 = vand.u32 2147483647, %v3252
        %v4277 = vand.u32 2147483647, %v3253
        %v4278 = vand.u32 2147483647, %v3254
        %v4279 = vand.u32 2147483647, %v3255
        %v4280 = vand.u32 2147483647, %v3256
        %v4281 = vand.u32 2147483647, %v3257
        %v4282 = vand.u32 2147483647, %v3258
        %v4283 = vand.u32 2147483647, %v3259
        %v4284 = vand.u32 2147483647, %v3260
        %v4285 = vand.u32 2147483647, %v3261
        %v4286 = vand.u32 2147483647, %v3262
        %v4287 = vand.u32 2147483647, %v3263
        %v4288 = vand.u32 2147483647, %v3264
        %v4289 = vand.u32 2147483647, %v3265
        %v4290 = vand.u32 2147483647, %v3266
        %v4291 = vand.u32 2147483647, %v3267
        %v4292 = vand.u32 2147483647, %v3268
        %v4293 = vand.u32 2147483647, %v3269
        %v4294 = vand.u32 2147483647, %v3270
        %v4295 = vand.u32 2147483647, %v3271
        %v4296 = vand.u32 2147483647, %v3272
        %v4297 = vand.u32 2147483647, %v3273
        %v4298 = vand.u32 2147483647, %v3274
        %v4299 = vand.u32 2147483647, %v3275
        %v4300 = vand.u32 2147483647, %v3276
        %v4301 = vand.u32 2147483647, %v3277
        %v4302 = vand.u32 2147483647, %v3278
        %v4303 = vand.u32 2147483647, %v3279
        %v4304 = vand.u32 2147483647, %v3280
        %v4305 = vand.u32 2147483647, %v3281
        %v4306 = vand.u32 2147483647, %v3282
        %v4307 = vand.u32 2147483647, %v3283
        %v4308 = vand.u32 2147483647, %v3284
        %v4309 = vand.u32 2147483647, %v3285
        %v4310 = vand.u32 2147483647, %v3286
        %v4311 = vand.u32 2147483647, %v3287
        %v4312 = vand.u32 2147483647, %v3288
        %v4313 = vand.u32 2147483647, %v3289
        %v4314 = vand.u32 2147483647, %v3290
        %v4315 = vand.u32 2147483647, %v3291
        %v4316 = vand.u32 2147483647, %v3292
        %v4317 = vand.u32 2147483647, %v3293
        %v4318 = vand.u32 2147483647, %v3294
        %v4319 = vand.u32 2147483647, %v3295
        %v4320 = vand.u32 2147483647, %v3296
        %v4321 = vand.u32 2147483647, %v3297
        %v4322 = vand.u32 2147483647, %v3298
        %v4323 = vand.u32 2147483647, %v3299
        %v4324 = vand.u32 2147483647, %v3300
        %v4325 = vand.u32 2147483647, %v3301
        %v4326 = vand.u32 2147483647, %v3302
        %v4327 = vand.u32 2147483647, %v3303
        %v4328 = vand.u32 2147483647, %v3304
        %v4329 = vand.u32 2147483647, %v3305
        %v4330 = vand.u32 2147483647, %v3306
        %v4331 = vand.u32 2147483647, %v3307
        %v4332 = vand.u32 2147483647, %v3308
        %v4333 = vand.u32 2147483647, %v3309
        %v4334 = vand.u32 2147483647, %v3310
        %v4335 = vand.u32 2147483647, %v3311
        %v4336 = vand.u32 2147483647, %v3312
        %v4337 = vand.u32 2147483647, %v3313
        %v4338 = vand.u32 2147483647, %v3314
        %v4339 = vand.u32 2147483647, %v3315
        %v4340 = vand.u32 2147483647, %v3316
        %v4341 = vand.u32 2147483647, %v3317
        %v4342 = vand.u32 2147483647, %v3318
        %v4343 = vand.u32 2147483647, %v3319
        %v4344 = vand.u32 2147483647, %v3320
        %v4345 = vand.u32 2147483647, %v3321
        %v4346 = vand.u32 2147483647, %v3322
        %v4347 = vand.u32 2147483647, %v3323
        %v4348 = vand.u32 2147483647, %v3324
        %v4349 = vand.u32 2147483647, %v3325
        %v4350 = vand.u32 2147483647, %v3326
        %v4351 = vand.u32 2147483647, %v3327
        %v4352 = vand.u32 2147483647, %v3328
        %v4353 = vand.u32 2147483647, %v3329
        %v4354 = vand.u32 2147483647, %v3330
        %v4355 = vand.u32 2147483647, %v3331
        %v4356 = vand.u32 2147483647, %v3332
        %v4357 = vand.u32 2147483647, %v3333
        %v4358 = vand.u32 2147483647, %v3334
        %v4359 = vand.u32 2147483647, %v3335
        %v4360 = vand.u32 2147483647, %v3336
        %v4361 = vand.u32 2147483647, %v3337
        %v4362 = vand.u32 2147483647, %v3338
        %v4363 = vand.u32 2147483647, %v3339
        %v4364 = vand.u32 2147483647, %v3340
        %v4365 = vand.u32 2147483647, %v3341
        %v4366 = vand.u32 2147483647, %v3342
        %v4367 = vand.u32 2147483647, %v3343
        %v4368 = vand.u32 2147483647, %v3344
        %v4369 = vand.u32 2147483647, %v3345
        %v4370 = vand.u32 2147483647, %v3346
        %v4371 = vand.u32 2147483647, %v3347
        %v4372 = vand.u32 2147483647, %v3348
        %v4373 = vand.u32 2147483647, %v3349
        %v4374 = vand.u32 2147483647, %v3350
        %v4375 = vand.u32 2147483647, %v3351
        %v4376 = vand.u32 2147483647, %v3352
        %v4377 = vand.u32 2147483647, %v3353
        %v4378 = vand.u32 2147483647, %v3354
        %v4379 = vand.u32 2147483647, %v3355
        %v4380 = vand.u32 2147483647, %v3356
        %v4381 = vand.u32 2147483647, %v3357
        %s4382 = smul.u32 %s26, 2
        %s4383 = sadd.s32 %s4382, %s27
        %s4384 = smul.u32 %s4383, 8192
        %v4385 = vlaneseq
        %v4386 = vshrl.u32 %v4385, 7
        %v4387 = vadd.s32 %v4386, 8
        %v4388 = vadd.s32 %v4386, 16
        %v4389 = vadd.s32 %v4386, 24
        %v4390 = vadd.s32 %v4386, 32
        %v4391 = vadd.s32 %v4386, 40
        %v4392 = vadd.s32 %v4386, 48
        %v4393 = vadd.s32 %v4386, 56
        %v4394 = vadd.s32 %v4386, 64
        %v4395 = vadd.s32 %v4386, 72
        %v4396 = vadd.s32 %v4386, 80
        %v4397 = vadd.s32 %v4386, 88
        %v4398 = vadd.s32 %v4386, 96
        %v4399 = vadd.s32 %v4386, 104
        %v4400 = vadd.s32 %v4386, 112
        %v4401 = vadd.s32 %v4386, 120
        %v4402 = vadd.s32 %v4386, 128
        %v4403 = vadd.s32 %v4386, 136
        %v4404 = vadd.s32 %v4386, 144
        %v4405 = vadd.s32 %v4386, 152
        %v4406 = vadd.s32 %v4386, 160
        %v4407 = vadd.s32 %v4386, 168
        %v4408 = vadd.s32 %v4386, 176
        %v4409 = vadd.s32 %v4386, 184
        %v4410 = vadd.s32 %v4386, 192
        %v4411 = vadd.s32 %v4386, 200
        %v4412 = vadd.s32 %v4386, 208
        %v4413 = vadd.s32 %v4386, 216
        %v4414 = vadd.s32 %v4386, 224
        %v4415 = vadd.s32 %v4386, 232
        %v4416 = vadd.s32 %v4386, 240
        %v4417 = vadd.s32 %v4386, 248
        %v4418 = vadd.s32 %v4386, 256
        %v4419 = vadd.s32 %v4386, 264
        %v4420 = vadd.s32 %v4386, 272
        %v4421 = vadd.s32 %v4386, 280
        %v4422 = vadd.s32 %v4386, 288
        %v4423 = vadd.s32 %v4386, 296
        %v4424 = vadd.s32 %v4386, 304
        %v4425 = vadd.s32 %v4386, 312
        %v4426 = vadd.s32 %v4386, 320
        %v4427 = vadd.s32 %v4386, 328
        %v4428 = vadd.s32 %v4386, 336
        %v4429 = vadd.s32 %v4386, 344
        %v4430 = vadd.s32 %v4386, 352
        %v4431 = vadd.s32 %v4386, 360
        %v4432 = vadd.s32 %v4386, 368
        %v4433 = vadd.s32 %v4386, 376
        %v4434 = vadd.s32 %v4386, 384
        %v4435 = vadd.s32 %v4386, 392
        %v4436 = vadd.s32 %v4386, 400
        %v4437 = vadd.s32 %v4386, 408
        %v4438 = vadd.s32 %v4386, 416
        %v4439 = vadd.s32 %v4386, 424
        %v4440 = vadd.s32 %v4386, 432
        %v4441 = vadd.s32 %v4386, 440
        %v4442 = vadd.s32 %v4386, 448
        %v4443 = vadd.s32 %v4386, 456
        %v4444 = vadd.s32 %v4386, 464
        %v4445 = vadd.s32 %v4386, 472
        %v4446 = vadd.s32 %v4386, 480
        %v4447 = vadd.s32 %v4386, 488
        %v4448 = vadd.s32 %v4386, 496
        %v4449 = vadd.s32 %v4386, 504
        %v4450 = vadd.s32 %v4386, 512
        %v4451 = vadd.s32 %v4386, 520
        %v4452 = vadd.s32 %v4386, 528
        %v4453 = vadd.s32 %v4386, 536
        %v4454 = vadd.s32 %v4386, 544
        %v4455 = vadd.s32 %v4386, 552
        %v4456 = vadd.s32 %v4386, 560
        %v4457 = vadd.s32 %v4386, 568
        %v4458 = vadd.s32 %v4386, 576
        %v4459 = vadd.s32 %v4386, 584
        %v4460 = vadd.s32 %v4386, 592
        %v4461 = vadd.s32 %v4386, 600
        %v4462 = vadd.s32 %v4386, 608
        %v4463 = vadd.s32 %v4386, 616
        %v4464 = vadd.s32 %v4386, 624
        %v4465 = vadd.s32 %v4386, 632
        %v4466 = vadd.s32 %v4386, 640
        %v4467 = vadd.s32 %v4386, 648
        %v4468 = vadd.s32 %v4386, 656
        %v4469 = vadd.s32 %v4386, 664
        %v4470 = vadd.s32 %v4386, 672
        %v4471 = vadd.s32 %v4386, 680
        %v4472 = vadd.s32 %v4386, 688
        %v4473 = vadd.s32 %v4386, 696
        %v4474 = vadd.s32 %v4386, 704
        %v4475 = vadd.s32 %v4386, 712
        %v4476 = vadd.s32 %v4386, 720
        %v4477 = vadd.s32 %v4386, 728
        %v4478 = vadd.s32 %v4386, 736
        %v4479 = vadd.s32 %v4386, 744
        %v4480 = vadd.s32 %v4386, 752
        %v4481 = vadd.s32 %v4386, 760
        %v4482 = vadd.s32 %v4386, 768
        %v4483 = vadd.s32 %v4386, 776
        %v4484 = vadd.s32 %v4386, 784
        %v4485 = vadd.s32 %v4386, 792
        %v4486 = vadd.s32 %v4386, 800
        %v4487 = vadd.s32 %v4386, 808
        %v4488 = vadd.s32 %v4386, 816
        %v4489 = vadd.s32 %v4386, 824
        %v4490 = vadd.s32 %v4386, 832
        %v4491 = vadd.s32 %v4386, 840
        %v4492 = vadd.s32 %v4386, 848
        %v4493 = vadd.s32 %v4386, 856
        %v4494 = vadd.s32 %v4386, 864
        %v4495 = vadd.s32 %v4386, 872
        %v4496 = vadd.s32 %v4386, 880
        %v4497 = vadd.s32 %v4386, 888
        %v4498 = vadd.s32 %v4386, 896
        %v4499 = vadd.s32 %v4386, 904
        %v4500 = vadd.s32 %v4386, 912
        %v4501 = vadd.s32 %v4386, 920
        %v4502 = vadd.s32 %v4386, 928
        %v4503 = vadd.s32 %v4386, 936
        %v4504 = vadd.s32 %v4386, 944
        %v4505 = vadd.s32 %v4386, 952
        %v4506 = vadd.s32 %v4386, 960
        %v4507 = vadd.s32 %v4386, 968
        %v4508 = vadd.s32 %v4386, 976
        %v4509 = vadd.s32 %v4386, 984
        %v4510 = vadd.s32 %v4386, 992
        %v4511 = vadd.s32 %v4386, 1000
        %v4512 = vadd.s32 %v4386, 1008
        %v4513 = vadd.s32 %v4386, 1016
        %v4514 = vadd.s32 %v4386, 1024
        %v4515 = vadd.s32 %v4386, 1032
        %v4516 = vadd.s32 %v4386, 1040
        %v4517 = vadd.s32 %v4386, 1048
        %v4518 = vadd.s32 %v4386, 1056
        %v4519 = vadd.s32 %v4386, 1064
        %v4520 = vadd.s32 %v4386, 1072
        %v4521 = vadd.s32 %v4386, 1080
        %v4522 = vadd.s32 %v4386, 1088
        %v4523 = vadd.s32 %v4386, 1096
        %v4524 = vadd.s32 %v4386, 1104
        %v4525 = vadd.s32 %v4386, 1112
        %v4526 = vadd.s32 %v4386, 1120
        %v4527 = vadd.s32 %v4386, 1128
        %v4528 = vadd.s32 %v4386, 1136
        %v4529 = vadd.s32 %v4386, 1144
        %v4530 = vadd.s32 %v4386, 1152
        %v4531 = vadd.s32 %v4386, 1160
        %v4532 = vadd.s32 %v4386, 1168
        %v4533 = vadd.s32 %v4386, 1176
        %v4534 = vadd.s32 %v4386, 1184
        %v4535 = vadd.s32 %v4386, 1192
        %v4536 = vadd.s32 %v4386, 1200
        %v4537 = vadd.s32 %v4386, 1208
        %v4538 = vadd.s32 %v4386, 1216
        %v4539 = vadd.s32 %v4386, 1224
        %v4540 = vadd.s32 %v4386, 1232
        %v4541 = vadd.s32 %v4386, 1240
        %v4542 = vadd.s32 %v4386, 1248
        %v4543 = vadd.s32 %v4386, 1256
        %v4544 = vadd.s32 %v4386, 1264
        %v4545 = vadd.s32 %v4386, 1272
        %v4546 = vadd.s32 %v4386, 1280
        %v4547 = vadd.s32 %v4386, 1288
        %v4548 = vadd.s32 %v4386, 1296
        %v4549 = vadd.s32 %v4386, 1304
        %v4550 = vadd.s32 %v4386, 1312
        %v4551 = vadd.s32 %v4386, 1320
        %v4552 = vadd.s32 %v4386, 1328
        %v4553 = vadd.s32 %v4386, 1336
        %v4554 = vadd.s32 %v4386, 1344
        %v4555 = vadd.s32 %v4386, 1352
        %v4556 = vadd.s32 %v4386, 1360
        %v4557 = vadd.s32 %v4386, 1368
        %v4558 = vadd.s32 %v4386, 1376
        %v4559 = vadd.s32 %v4386, 1384
        %v4560 = vadd.s32 %v4386, 1392
        %v4561 = vadd.s32 %v4386, 1400
        %v4562 = vadd.s32 %v4386, 1408
        %v4563 = vadd.s32 %v4386, 1416
        %v4564 = vadd.s32 %v4386, 1424
        %v4565 = vadd.s32 %v4386, 1432
        %v4566 = vadd.s32 %v4386, 1440
        %v4567 = vadd.s32 %v4386, 1448
        %v4568 = vadd.s32 %v4386, 1456
        %v4569 = vadd.s32 %v4386, 1464
        %v4570 = vadd.s32 %v4386, 1472
        %v4571 = vadd.s32 %v4386, 1480
        %v4572 = vadd.s32 %v4386, 1488
        %v4573 = vadd.s32 %v4386, 1496
        %v4574 = vadd.s32 %v4386, 1504
        %v4575 = vadd.s32 %v4386, 1512
        %v4576 = vadd.s32 %v4386, 1520
        %v4577 = vadd.s32 %v4386, 1528
        %v4578 = vadd.s32 %v4386, 1536
        %v4579 = vadd.s32 %v4386, 1544
        %v4580 = vadd.s32 %v4386, 1552
        %v4581 = vadd.s32 %v4386, 1560
        %v4582 = vadd.s32 %v4386, 1568
        %v4583 = vadd.s32 %v4386, 1576
        %v4584 = vadd.s32 %v4386, 1584
        %v4585 = vadd.s32 %v4386, 1592
        %v4586 = vadd.s32 %v4386, 1600
        %v4587 = vadd.s32 %v4386, 1608
        %v4588 = vadd.s32 %v4386, 1616
        %v4589 = vadd.s32 %v4386, 1624
        %v4590 = vadd.s32 %v4386, 1632
        %v4591 = vadd.s32 %v4386, 1640
        %v4592 = vadd.s32 %v4386, 1648
        %v4593 = vadd.s32 %v4386, 1656
        %v4594 = vadd.s32 %v4386, 1664
        %v4595 = vadd.s32 %v4386, 1672
        %v4596 = vadd.s32 %v4386, 1680
        %v4597 = vadd.s32 %v4386, 1688
        %v4598 = vadd.s32 %v4386, 1696
        %v4599 = vadd.s32 %v4386, 1704
        %v4600 = vadd.s32 %v4386, 1712
        %v4601 = vadd.s32 %v4386, 1720
        %v4602 = vadd.s32 %v4386, 1728
        %v4603 = vadd.s32 %v4386, 1736
        %v4604 = vadd.s32 %v4386, 1744
        %v4605 = vadd.s32 %v4386, 1752
        %v4606 = vadd.s32 %v4386, 1760
        %v4607 = vadd.s32 %v4386, 1768
        %v4608 = vadd.s32 %v4386, 1776
        %v4609 = vadd.s32 %v4386, 1784
        %v4610 = vadd.s32 %v4386, 1792
        %v4611 = vadd.s32 %v4386, 1800
        %v4612 = vadd.s32 %v4386, 1808
        %v4613 = vadd.s32 %v4386, 1816
        %v4614 = vadd.s32 %v4386, 1824
        %v4615 = vadd.s32 %v4386, 1832
        %v4616 = vadd.s32 %v4386, 1840
        %v4617 = vadd.s32 %v4386, 1848
        %v4618 = vadd.s32 %v4386, 1856
        %v4619 = vadd.s32 %v4386, 1864
        %v4620 = vadd.s32 %v4386, 1872
        %v4621 = vadd.s32 %v4386, 1880
        %v4622 = vadd.s32 %v4386, 1888
        %v4623 = vadd.s32 %v4386, 1896
        %v4624 = vadd.s32 %v4386, 1904
        %v4625 = vadd.s32 %v4386, 1912
        %v4626 = vadd.s32 %v4386, 1920
        %v4627 = vadd.s32 %v4386, 1928
        %v4628 = vadd.s32 %v4386, 1936
        %v4629 = vadd.s32 %v4386, 1944
        %v4630 = vadd.s32 %v4386, 1952
        %v4631 = vadd.s32 %v4386, 1960
        %v4632 = vadd.s32 %v4386, 1968
        %v4633 = vadd.s32 %v4386, 1976
        %v4634 = vadd.s32 %v4386, 1984
        %v4635 = vadd.s32 %v4386, 1992
        %v4636 = vadd.s32 %v4386, 2000
        %v4637 = vadd.s32 %v4386, 2008
        %v4638 = vadd.s32 %v4386, 2016
        %v4639 = vadd.s32 %v4386, 2024
        %v4640 = vadd.s32 %v4386, 2032
        %v4641 = vadd.s32 %v4386, 2040
        %v4642 = vadd.s32 %v4386, 2048
        %v4643 = vadd.s32 %v4386, 2056
        %v4644 = vadd.s32 %v4386, 2064
        %v4645 = vadd.s32 %v4386, 2072
        %v4646 = vadd.s32 %v4386, 2080
        %v4647 = vadd.s32 %v4386, 2088
        %v4648 = vadd.s32 %v4386, 2096
        %v4649 = vadd.s32 %v4386, 2104
        %v4650 = vadd.s32 %v4386, 2112
        %v4651 = vadd.s32 %v4386, 2120
        %v4652 = vadd.s32 %v4386, 2128
        %v4653 = vadd.s32 %v4386, 2136
        %v4654 = vadd.s32 %v4386, 2144
        %v4655 = vadd.s32 %v4386, 2152
        %v4656 = vadd.s32 %v4386, 2160
        %v4657 = vadd.s32 %v4386, 2168
        %v4658 = vadd.s32 %v4386, 2176
        %v4659 = vadd.s32 %v4386, 2184
        %v4660 = vadd.s32 %v4386, 2192
        %v4661 = vadd.s32 %v4386, 2200
        %v4662 = vadd.s32 %v4386, 2208
        %v4663 = vadd.s32 %v4386, 2216
        %v4664 = vadd.s32 %v4386, 2224
        %v4665 = vadd.s32 %v4386, 2232
        %v4666 = vadd.s32 %v4386, 2240
        %v4667 = vadd.s32 %v4386, 2248
        %v4668 = vadd.s32 %v4386, 2256
        %v4669 = vadd.s32 %v4386, 2264
        %v4670 = vadd.s32 %v4386, 2272
        %v4671 = vadd.s32 %v4386, 2280
        %v4672 = vadd.s32 %v4386, 2288
        %v4673 = vadd.s32 %v4386, 2296
        %v4674 = vadd.s32 %v4386, 2304
        %v4675 = vadd.s32 %v4386, 2312
        %v4676 = vadd.s32 %v4386, 2320
        %v4677 = vadd.s32 %v4386, 2328
        %v4678 = vadd.s32 %v4386, 2336
        %v4679 = vadd.s32 %v4386, 2344
        %v4680 = vadd.s32 %v4386, 2352
        %v4681 = vadd.s32 %v4386, 2360
        %v4682 = vadd.s32 %v4386, 2368
        %v4683 = vadd.s32 %v4386, 2376
        %v4684 = vadd.s32 %v4386, 2384
        %v4685 = vadd.s32 %v4386, 2392
        %v4686 = vadd.s32 %v4386, 2400
        %v4687 = vadd.s32 %v4386, 2408
        %v4688 = vadd.s32 %v4386, 2416
        %v4689 = vadd.s32 %v4386, 2424
        %v4690 = vadd.s32 %v4386, 2432
        %v4691 = vadd.s32 %v4386, 2440
        %v4692 = vadd.s32 %v4386, 2448
        %v4693 = vadd.s32 %v4386, 2456
        %v4694 = vadd.s32 %v4386, 2464
        %v4695 = vadd.s32 %v4386, 2472
        %v4696 = vadd.s32 %v4386, 2480
        %v4697 = vadd.s32 %v4386, 2488
        %v4698 = vadd.s32 %v4386, 2496
        %v4699 = vadd.s32 %v4386, 2504
        %v4700 = vadd.s32 %v4386, 2512
        %v4701 = vadd.s32 %v4386, 2520
        %v4702 = vadd.s32 %v4386, 2528
        %v4703 = vadd.s32 %v4386, 2536
        %v4704 = vadd.s32 %v4386, 2544
        %v4705 = vadd.s32 %v4386, 2552
        %v4706 = vadd.s32 %v4386, 2560
        %v4707 = vadd.s32 %v4386, 2568
        %v4708 = vadd.s32 %v4386, 2576
        %v4709 = vadd.s32 %v4386, 2584
        %v4710 = vadd.s32 %v4386, 2592
        %v4711 = vadd.s32 %v4386, 2600
        %v4712 = vadd.s32 %v4386, 2608
        %v4713 = vadd.s32 %v4386, 2616
        %v4714 = vadd.s32 %v4386, 2624
        %v4715 = vadd.s32 %v4386, 2632
        %v4716 = vadd.s32 %v4386, 2640
        %v4717 = vadd.s32 %v4386, 2648
        %v4718 = vadd.s32 %v4386, 2656
        %v4719 = vadd.s32 %v4386, 2664
        %v4720 = vadd.s32 %v4386, 2672
        %v4721 = vadd.s32 %v4386, 2680
        %v4722 = vadd.s32 %v4386, 2688
        %v4723 = vadd.s32 %v4386, 2696
        %v4724 = vadd.s32 %v4386, 2704
        %v4725 = vadd.s32 %v4386, 2712
        %v4726 = vadd.s32 %v4386, 2720
        %v4727 = vadd.s32 %v4386, 2728
        %v4728 = vadd.s32 %v4386, 2736
        %v4729 = vadd.s32 %v4386, 2744
        %v4730 = vadd.s32 %v4386, 2752
        %v4731 = vadd.s32 %v4386, 2760
        %v4732 = vadd.s32 %v4386, 2768
        %v4733 = vadd.s32 %v4386, 2776
        %v4734 = vadd.s32 %v4386, 2784
        %v4735 = vadd.s32 %v4386, 2792
        %v4736 = vadd.s32 %v4386, 2800
        %v4737 = vadd.s32 %v4386, 2808
        %v4738 = vadd.s32 %v4386, 2816
        %v4739 = vadd.s32 %v4386, 2824
        %v4740 = vadd.s32 %v4386, 2832
        %v4741 = vadd.s32 %v4386, 2840
        %v4742 = vadd.s32 %v4386, 2848
        %v4743 = vadd.s32 %v4386, 2856
        %v4744 = vadd.s32 %v4386, 2864
        %v4745 = vadd.s32 %v4386, 2872
        %v4746 = vadd.s32 %v4386, 2880
        %v4747 = vadd.s32 %v4386, 2888
        %v4748 = vadd.s32 %v4386, 2896
        %v4749 = vadd.s32 %v4386, 2904
        %v4750 = vadd.s32 %v4386, 2912
        %v4751 = vadd.s32 %v4386, 2920
        %v4752 = vadd.s32 %v4386, 2928
        %v4753 = vadd.s32 %v4386, 2936
        %v4754 = vadd.s32 %v4386, 2944
        %v4755 = vadd.s32 %v4386, 2952
        %v4756 = vadd.s32 %v4386, 2960
        %v4757 = vadd.s32 %v4386, 2968
        %v4758 = vadd.s32 %v4386, 2976
        %v4759 = vadd.s32 %v4386, 2984
        %v4760 = vadd.s32 %v4386, 2992
        %v4761 = vadd.s32 %v4386, 3000
        %v4762 = vadd.s32 %v4386, 3008
        %v4763 = vadd.s32 %v4386, 3016
        %v4764 = vadd.s32 %v4386, 3024
        %v4765 = vadd.s32 %v4386, 3032
        %v4766 = vadd.s32 %v4386, 3040
        %v4767 = vadd.s32 %v4386, 3048
        %v4768 = vadd.s32 %v4386, 3056
        %v4769 = vadd.s32 %v4386, 3064
        %v4770 = vadd.s32 %v4386, 3072
        %v4771 = vadd.s32 %v4386, 3080
        %v4772 = vadd.s32 %v4386, 3088
        %v4773 = vadd.s32 %v4386, 3096
        %v4774 = vadd.s32 %v4386, 3104
        %v4775 = vadd.s32 %v4386, 3112
        %v4776 = vadd.s32 %v4386, 3120
        %v4777 = vadd.s32 %v4386, 3128
        %v4778 = vadd.s32 %v4386, 3136
        %v4779 = vadd.s32 %v4386, 3144
        %v4780 = vadd.s32 %v4386, 3152
        %v4781 = vadd.s32 %v4386, 3160
        %v4782 = vadd.s32 %v4386, 3168
        %v4783 = vadd.s32 %v4386, 3176
        %v4784 = vadd.s32 %v4386, 3184
        %v4785 = vadd.s32 %v4386, 3192
        %v4786 = vadd.s32 %v4386, 3200
        %v4787 = vadd.s32 %v4386, 3208
        %v4788 = vadd.s32 %v4386, 3216
        %v4789 = vadd.s32 %v4386, 3224
        %v4790 = vadd.s32 %v4386, 3232
        %v4791 = vadd.s32 %v4386, 3240
        %v4792 = vadd.s32 %v4386, 3248
        %v4793 = vadd.s32 %v4386, 3256
        %v4794 = vadd.s32 %v4386, 3264
        %v4795 = vadd.s32 %v4386, 3272
        %v4796 = vadd.s32 %v4386, 3280
        %v4797 = vadd.s32 %v4386, 3288
        %v4798 = vadd.s32 %v4386, 3296
        %v4799 = vadd.s32 %v4386, 3304
        %v4800 = vadd.s32 %v4386, 3312
        %v4801 = vadd.s32 %v4386, 3320
        %v4802 = vadd.s32 %v4386, 3328
        %v4803 = vadd.s32 %v4386, 3336
        %v4804 = vadd.s32 %v4386, 3344
        %v4805 = vadd.s32 %v4386, 3352
        %v4806 = vadd.s32 %v4386, 3360
        %v4807 = vadd.s32 %v4386, 3368
        %v4808 = vadd.s32 %v4386, 3376
        %v4809 = vadd.s32 %v4386, 3384
        %v4810 = vadd.s32 %v4386, 3392
        %v4811 = vadd.s32 %v4386, 3400
        %v4812 = vadd.s32 %v4386, 3408
        %v4813 = vadd.s32 %v4386, 3416
        %v4814 = vadd.s32 %v4386, 3424
        %v4815 = vadd.s32 %v4386, 3432
        %v4816 = vadd.s32 %v4386, 3440
        %v4817 = vadd.s32 %v4386, 3448
        %v4818 = vadd.s32 %v4386, 3456
        %v4819 = vadd.s32 %v4386, 3464
        %v4820 = vadd.s32 %v4386, 3472
        %v4821 = vadd.s32 %v4386, 3480
        %v4822 = vadd.s32 %v4386, 3488
        %v4823 = vadd.s32 %v4386, 3496
        %v4824 = vadd.s32 %v4386, 3504
        %v4825 = vadd.s32 %v4386, 3512
        %v4826 = vadd.s32 %v4386, 3520
        %v4827 = vadd.s32 %v4386, 3528
        %v4828 = vadd.s32 %v4386, 3536
        %v4829 = vadd.s32 %v4386, 3544
        %v4830 = vadd.s32 %v4386, 3552
        %v4831 = vadd.s32 %v4386, 3560
        %v4832 = vadd.s32 %v4386, 3568
        %v4833 = vadd.s32 %v4386, 3576
        %v4834 = vadd.s32 %v4386, 3584
        %v4835 = vadd.s32 %v4386, 3592
        %v4836 = vadd.s32 %v4386, 3600
        %v4837 = vadd.s32 %v4386, 3608
        %v4838 = vadd.s32 %v4386, 3616
        %v4839 = vadd.s32 %v4386, 3624
        %v4840 = vadd.s32 %v4386, 3632
        %v4841 = vadd.s32 %v4386, 3640
        %v4842 = vadd.s32 %v4386, 3648
        %v4843 = vadd.s32 %v4386, 3656
        %v4844 = vadd.s32 %v4386, 3664
        %v4845 = vadd.s32 %v4386, 3672
        %v4846 = vadd.s32 %v4386, 3680
        %v4847 = vadd.s32 %v4386, 3688
        %v4848 = vadd.s32 %v4386, 3696
        %v4849 = vadd.s32 %v4386, 3704
        %v4850 = vadd.s32 %v4386, 3712
        %v4851 = vadd.s32 %v4386, 3720
        %v4852 = vadd.s32 %v4386, 3728
        %v4853 = vadd.s32 %v4386, 3736
        %v4854 = vadd.s32 %v4386, 3744
        %v4855 = vadd.s32 %v4386, 3752
        %v4856 = vadd.s32 %v4386, 3760
        %v4857 = vadd.s32 %v4386, 3768
        %v4858 = vadd.s32 %v4386, 3776
        %v4859 = vadd.s32 %v4386, 3784
        %v4860 = vadd.s32 %v4386, 3792
        %v4861 = vadd.s32 %v4386, 3800
        %v4862 = vadd.s32 %v4386, 3808
        %v4863 = vadd.s32 %v4386, 3816
        %v4864 = vadd.s32 %v4386, 3824
        %v4865 = vadd.s32 %v4386, 3832
        %v4866 = vadd.s32 %v4386, 3840
        %v4867 = vadd.s32 %v4386, 3848
        %v4868 = vadd.s32 %v4386, 3856
        %v4869 = vadd.s32 %v4386, 3864
        %v4870 = vadd.s32 %v4386, 3872
        %v4871 = vadd.s32 %v4386, 3880
        %v4872 = vadd.s32 %v4386, 3888
        %v4873 = vadd.s32 %v4386, 3896
        %v4874 = vadd.s32 %v4386, 3904
        %v4875 = vadd.s32 %v4386, 3912
        %v4876 = vadd.s32 %v4386, 3920
        %v4877 = vadd.s32 %v4386, 3928
        %v4878 = vadd.s32 %v4386, 3936
        %v4879 = vadd.s32 %v4386, 3944
        %v4880 = vadd.s32 %v4386, 3952
        %v4881 = vadd.s32 %v4386, 3960
        %v4882 = vadd.s32 %v4386, 3968
        %v4883 = vadd.s32 %v4386, 3976
        %v4884 = vadd.s32 %v4386, 3984
        %v4885 = vadd.s32 %v4386, 3992
        %v4886 = vadd.s32 %v4386, 4000
        %v4887 = vadd.s32 %v4386, 4008
        %v4888 = vadd.s32 %v4386, 4016
        %v4889 = vadd.s32 %v4386, 4024
        %v4890 = vadd.s32 %v4386, 4032
        %v4891 = vadd.s32 %v4386, 4040
        %v4892 = vadd.s32 %v4386, 4048
        %v4893 = vadd.s32 %v4386, 4056
        %v4894 = vadd.s32 %v4386, 4064
        %v4895 = vadd.s32 %v4386, 4072
        %v4896 = vadd.s32 %v4386, 4080
        %v4897 = vadd.s32 %v4386, 4088
        %v4898 = vadd.s32 %v4386, 4096
        %v4899 = vadd.s32 %v4386, 4104
        %v4900 = vadd.s32 %v4386, 4112
        %v4901 = vadd.s32 %v4386, 4120
        %v4902 = vadd.s32 %v4386, 4128
        %v4903 = vadd.s32 %v4386, 4136
        %v4904 = vadd.s32 %v4386, 4144
        %v4905 = vadd.s32 %v4386, 4152
        %v4906 = vadd.s32 %v4386, 4160
        %v4907 = vadd.s32 %v4386, 4168
        %v4908 = vadd.s32 %v4386, 4176
        %v4909 = vadd.s32 %v4386, 4184
        %v4910 = vadd.s32 %v4386, 4192
        %v4911 = vadd.s32 %v4386, 4200
        %v4912 = vadd.s32 %v4386, 4208
        %v4913 = vadd.s32 %v4386, 4216
        %v4914 = vadd.s32 %v4386, 4224
        %v4915 = vadd.s32 %v4386, 4232
        %v4916 = vadd.s32 %v4386, 4240
        %v4917 = vadd.s32 %v4386, 4248
        %v4918 = vadd.s32 %v4386, 4256
        %v4919 = vadd.s32 %v4386, 4264
        %v4920 = vadd.s32 %v4386, 4272
        %v4921 = vadd.s32 %v4386, 4280
        %v4922 = vadd.s32 %v4386, 4288
        %v4923 = vadd.s32 %v4386, 4296
        %v4924 = vadd.s32 %v4386, 4304
        %v4925 = vadd.s32 %v4386, 4312
        %v4926 = vadd.s32 %v4386, 4320
        %v4927 = vadd.s32 %v4386, 4328
        %v4928 = vadd.s32 %v4386, 4336
        %v4929 = vadd.s32 %v4386, 4344
        %v4930 = vadd.s32 %v4386, 4352
        %v4931 = vadd.s32 %v4386, 4360
        %v4932 = vadd.s32 %v4386, 4368
        %v4933 = vadd.s32 %v4386, 4376
        %v4934 = vadd.s32 %v4386, 4384
        %v4935 = vadd.s32 %v4386, 4392
        %v4936 = vadd.s32 %v4386, 4400
        %v4937 = vadd.s32 %v4386, 4408
        %v4938 = vadd.s32 %v4386, 4416
        %v4939 = vadd.s32 %v4386, 4424
        %v4940 = vadd.s32 %v4386, 4432
        %v4941 = vadd.s32 %v4386, 4440
        %v4942 = vadd.s32 %v4386, 4448
        %v4943 = vadd.s32 %v4386, 4456
        %v4944 = vadd.s32 %v4386, 4464
        %v4945 = vadd.s32 %v4386, 4472
        %v4946 = vadd.s32 %v4386, 4480
        %v4947 = vadd.s32 %v4386, 4488
        %v4948 = vadd.s32 %v4386, 4496
        %v4949 = vadd.s32 %v4386, 4504
        %v4950 = vadd.s32 %v4386, 4512
        %v4951 = vadd.s32 %v4386, 4520
        %v4952 = vadd.s32 %v4386, 4528
        %v4953 = vadd.s32 %v4386, 4536
        %v4954 = vadd.s32 %v4386, 4544
        %v4955 = vadd.s32 %v4386, 4552
        %v4956 = vadd.s32 %v4386, 4560
        %v4957 = vadd.s32 %v4386, 4568
        %v4958 = vadd.s32 %v4386, 4576
        %v4959 = vadd.s32 %v4386, 4584
        %v4960 = vadd.s32 %v4386, 4592
        %v4961 = vadd.s32 %v4386, 4600
        %v4962 = vadd.s32 %v4386, 4608
        %v4963 = vadd.s32 %v4386, 4616
        %v4964 = vadd.s32 %v4386, 4624
        %v4965 = vadd.s32 %v4386, 4632
        %v4966 = vadd.s32 %v4386, 4640
        %v4967 = vadd.s32 %v4386, 4648
        %v4968 = vadd.s32 %v4386, 4656
        %v4969 = vadd.s32 %v4386, 4664
        %v4970 = vadd.s32 %v4386, 4672
        %v4971 = vadd.s32 %v4386, 4680
        %v4972 = vadd.s32 %v4386, 4688
        %v4973 = vadd.s32 %v4386, 4696
        %v4974 = vadd.s32 %v4386, 4704
        %v4975 = vadd.s32 %v4386, 4712
        %v4976 = vadd.s32 %v4386, 4720
        %v4977 = vadd.s32 %v4386, 4728
        %v4978 = vadd.s32 %v4386, 4736
        %v4979 = vadd.s32 %v4386, 4744
        %v4980 = vadd.s32 %v4386, 4752
        %v4981 = vadd.s32 %v4386, 4760
        %v4982 = vadd.s32 %v4386, 4768
        %v4983 = vadd.s32 %v4386, 4776
        %v4984 = vadd.s32 %v4386, 4784
        %v4985 = vadd.s32 %v4386, 4792
        %v4986 = vadd.s32 %v4386, 4800
        %v4987 = vadd.s32 %v4386, 4808
        %v4988 = vadd.s32 %v4386, 4816
        %v4989 = vadd.s32 %v4386, 4824
        %v4990 = vadd.s32 %v4386, 4832
        %v4991 = vadd.s32 %v4386, 4840
        %v4992 = vadd.s32 %v4386, 4848
        %v4993 = vadd.s32 %v4386, 4856
        %v4994 = vadd.s32 %v4386, 4864
        %v4995 = vadd.s32 %v4386, 4872
        %v4996 = vadd.s32 %v4386, 4880
        %v4997 = vadd.s32 %v4386, 4888
        %v4998 = vadd.s32 %v4386, 4896
        %v4999 = vadd.s32 %v4386, 4904
        %v5000 = vadd.s32 %v4386, 4912
        %v5001 = vadd.s32 %v4386, 4920
        %v5002 = vadd.s32 %v4386, 4928
        %v5003 = vadd.s32 %v4386, 4936
        %v5004 = vadd.s32 %v4386, 4944
        %v5005 = vadd.s32 %v4386, 4952
        %v5006 = vadd.s32 %v4386, 4960
        %v5007 = vadd.s32 %v4386, 4968
        %v5008 = vadd.s32 %v4386, 4976
        %v5009 = vadd.s32 %v4386, 4984
        %v5010 = vadd.s32 %v4386, 4992
        %v5011 = vadd.s32 %v4386, 5000
        %v5012 = vadd.s32 %v4386, 5008
        %v5013 = vadd.s32 %v4386, 5016
        %v5014 = vadd.s32 %v4386, 5024
        %v5015 = vadd.s32 %v4386, 5032
        %v5016 = vadd.s32 %v4386, 5040
        %v5017 = vadd.s32 %v4386, 5048
        %v5018 = vadd.s32 %v4386, 5056
        %v5019 = vadd.s32 %v4386, 5064
        %v5020 = vadd.s32 %v4386, 5072
        %v5021 = vadd.s32 %v4386, 5080
        %v5022 = vadd.s32 %v4386, 5088
        %v5023 = vadd.s32 %v4386, 5096
        %v5024 = vadd.s32 %v4386, 5104
        %v5025 = vadd.s32 %v4386, 5112
        %v5026 = vadd.s32 %v4386, 5120
        %v5027 = vadd.s32 %v4386, 5128
        %v5028 = vadd.s32 %v4386, 5136
        %v5029 = vadd.s32 %v4386, 5144
        %v5030 = vadd.s32 %v4386, 5152
        %v5031 = vadd.s32 %v4386, 5160
        %v5032 = vadd.s32 %v4386, 5168
        %v5033 = vadd.s32 %v4386, 5176
        %v5034 = vadd.s32 %v4386, 5184
        %v5035 = vadd.s32 %v4386, 5192
        %v5036 = vadd.s32 %v4386, 5200
        %v5037 = vadd.s32 %v4386, 5208
        %v5038 = vadd.s32 %v4386, 5216
        %v5039 = vadd.s32 %v4386, 5224
        %v5040 = vadd.s32 %v4386, 5232
        %v5041 = vadd.s32 %v4386, 5240
        %v5042 = vadd.s32 %v4386, 5248
        %v5043 = vadd.s32 %v4386, 5256
        %v5044 = vadd.s32 %v4386, 5264
        %v5045 = vadd.s32 %v4386, 5272
        %v5046 = vadd.s32 %v4386, 5280
        %v5047 = vadd.s32 %v4386, 5288
        %v5048 = vadd.s32 %v4386, 5296
        %v5049 = vadd.s32 %v4386, 5304
        %v5050 = vadd.s32 %v4386, 5312
        %v5051 = vadd.s32 %v4386, 5320
        %v5052 = vadd.s32 %v4386, 5328
        %v5053 = vadd.s32 %v4386, 5336
        %v5054 = vadd.s32 %v4386, 5344
        %v5055 = vadd.s32 %v4386, 5352
        %v5056 = vadd.s32 %v4386, 5360
        %v5057 = vadd.s32 %v4386, 5368
        %v5058 = vadd.s32 %v4386, 5376
        %v5059 = vadd.s32 %v4386, 5384
        %v5060 = vadd.s32 %v4386, 5392
        %v5061 = vadd.s32 %v4386, 5400
        %v5062 = vadd.s32 %v4386, 5408
        %v5063 = vadd.s32 %v4386, 5416
        %v5064 = vadd.s32 %v4386, 5424
        %v5065 = vadd.s32 %v4386, 5432
        %v5066 = vadd.s32 %v4386, 5440
        %v5067 = vadd.s32 %v4386, 5448
        %v5068 = vadd.s32 %v4386, 5456
        %v5069 = vadd.s32 %v4386, 5464
        %v5070 = vadd.s32 %v4386, 5472
        %v5071 = vadd.s32 %v4386, 5480
        %v5072 = vadd.s32 %v4386, 5488
        %v5073 = vadd.s32 %v4386, 5496
        %v5074 = vadd.s32 %v4386, 5504
        %v5075 = vadd.s32 %v4386, 5512
        %v5076 = vadd.s32 %v4386, 5520
        %v5077 = vadd.s32 %v4386, 5528
        %v5078 = vadd.s32 %v4386, 5536
        %v5079 = vadd.s32 %v4386, 5544
        %v5080 = vadd.s32 %v4386, 5552
        %v5081 = vadd.s32 %v4386, 5560
        %v5082 = vadd.s32 %v4386, 5568
        %v5083 = vadd.s32 %v4386, 5576
        %v5084 = vadd.s32 %v4386, 5584
        %v5085 = vadd.s32 %v4386, 5592
        %v5086 = vadd.s32 %v4386, 5600
        %v5087 = vadd.s32 %v4386, 5608
        %v5088 = vadd.s32 %v4386, 5616
        %v5089 = vadd.s32 %v4386, 5624
        %v5090 = vadd.s32 %v4386, 5632
        %v5091 = vadd.s32 %v4386, 5640
        %v5092 = vadd.s32 %v4386, 5648
        %v5093 = vadd.s32 %v4386, 5656
        %v5094 = vadd.s32 %v4386, 5664
        %v5095 = vadd.s32 %v4386, 5672
        %v5096 = vadd.s32 %v4386, 5680
        %v5097 = vadd.s32 %v4386, 5688
        %v5098 = vadd.s32 %v4386, 5696
        %v5099 = vadd.s32 %v4386, 5704
        %v5100 = vadd.s32 %v4386, 5712
        %v5101 = vadd.s32 %v4386, 5720
        %v5102 = vadd.s32 %v4386, 5728
        %v5103 = vadd.s32 %v4386, 5736
        %v5104 = vadd.s32 %v4386, 5744
        %v5105 = vadd.s32 %v4386, 5752
        %v5106 = vadd.s32 %v4386, 5760
        %v5107 = vadd.s32 %v4386, 5768
        %v5108 = vadd.s32 %v4386, 5776
        %v5109 = vadd.s32 %v4386, 5784
        %v5110 = vadd.s32 %v4386, 5792
        %v5111 = vadd.s32 %v4386, 5800
        %v5112 = vadd.s32 %v4386, 5808
        %v5113 = vadd.s32 %v4386, 5816
        %v5114 = vadd.s32 %v4386, 5824
        %v5115 = vadd.s32 %v4386, 5832
        %v5116 = vadd.s32 %v4386, 5840
        %v5117 = vadd.s32 %v4386, 5848
        %v5118 = vadd.s32 %v4386, 5856
        %v5119 = vadd.s32 %v4386, 5864
        %v5120 = vadd.s32 %v4386, 5872
        %v5121 = vadd.s32 %v4386, 5880
        %v5122 = vadd.s32 %v4386, 5888
        %v5123 = vadd.s32 %v4386, 5896
        %v5124 = vadd.s32 %v4386, 5904
        %v5125 = vadd.s32 %v4386, 5912
        %v5126 = vadd.s32 %v4386, 5920
        %v5127 = vadd.s32 %v4386, 5928
        %v5128 = vadd.s32 %v4386, 5936
        %v5129 = vadd.s32 %v4386, 5944
        %v5130 = vadd.s32 %v4386, 5952
        %v5131 = vadd.s32 %v4386, 5960
        %v5132 = vadd.s32 %v4386, 5968
        %v5133 = vadd.s32 %v4386, 5976
        %v5134 = vadd.s32 %v4386, 5984
        %v5135 = vadd.s32 %v4386, 5992
        %v5136 = vadd.s32 %v4386, 6000
        %v5137 = vadd.s32 %v4386, 6008
        %v5138 = vadd.s32 %v4386, 6016
        %v5139 = vadd.s32 %v4386, 6024
        %v5140 = vadd.s32 %v4386, 6032
        %v5141 = vadd.s32 %v4386, 6040
        %v5142 = vadd.s32 %v4386, 6048
        %v5143 = vadd.s32 %v4386, 6056
        %v5144 = vadd.s32 %v4386, 6064
        %v5145 = vadd.s32 %v4386, 6072
        %v5146 = vadd.s32 %v4386, 6080
        %v5147 = vadd.s32 %v4386, 6088
        %v5148 = vadd.s32 %v4386, 6096
        %v5149 = vadd.s32 %v4386, 6104
        %v5150 = vadd.s32 %v4386, 6112
        %v5151 = vadd.s32 %v4386, 6120
        %v5152 = vadd.s32 %v4386, 6128
        %v5153 = vadd.s32 %v4386, 6136
        %v5154 = vadd.s32 %v4386, 6144
        %v5155 = vadd.s32 %v4386, 6152
        %v5156 = vadd.s32 %v4386, 6160
        %v5157 = vadd.s32 %v4386, 6168
        %v5158 = vadd.s32 %v4386, 6176
        %v5159 = vadd.s32 %v4386, 6184
        %v5160 = vadd.s32 %v4386, 6192
        %v5161 = vadd.s32 %v4386, 6200
        %v5162 = vadd.s32 %v4386, 6208
        %v5163 = vadd.s32 %v4386, 6216
        %v5164 = vadd.s32 %v4386, 6224
        %v5165 = vadd.s32 %v4386, 6232
        %v5166 = vadd.s32 %v4386, 6240
        %v5167 = vadd.s32 %v4386, 6248
        %v5168 = vadd.s32 %v4386, 6256
        %v5169 = vadd.s32 %v4386, 6264
        %v5170 = vadd.s32 %v4386, 6272
        %v5171 = vadd.s32 %v4386, 6280
        %v5172 = vadd.s32 %v4386, 6288
        %v5173 = vadd.s32 %v4386, 6296
        %v5174 = vadd.s32 %v4386, 6304
        %v5175 = vadd.s32 %v4386, 6312
        %v5176 = vadd.s32 %v4386, 6320
        %v5177 = vadd.s32 %v4386, 6328
        %v5178 = vadd.s32 %v4386, 6336
        %v5179 = vadd.s32 %v4386, 6344
        %v5180 = vadd.s32 %v4386, 6352
        %v5181 = vadd.s32 %v4386, 6360
        %v5182 = vadd.s32 %v4386, 6368
        %v5183 = vadd.s32 %v4386, 6376
        %v5184 = vadd.s32 %v4386, 6384
        %v5185 = vadd.s32 %v4386, 6392
        %v5186 = vadd.s32 %v4386, 6400
        %v5187 = vadd.s32 %v4386, 6408
        %v5188 = vadd.s32 %v4386, 6416
        %v5189 = vadd.s32 %v4386, 6424
        %v5190 = vadd.s32 %v4386, 6432
        %v5191 = vadd.s32 %v4386, 6440
        %v5192 = vadd.s32 %v4386, 6448
        %v5193 = vadd.s32 %v4386, 6456
        %v5194 = vadd.s32 %v4386, 6464
        %v5195 = vadd.s32 %v4386, 6472
        %v5196 = vadd.s32 %v4386, 6480
        %v5197 = vadd.s32 %v4386, 6488
        %v5198 = vadd.s32 %v4386, 6496
        %v5199 = vadd.s32 %v4386, 6504
        %v5200 = vadd.s32 %v4386, 6512
        %v5201 = vadd.s32 %v4386, 6520
        %v5202 = vadd.s32 %v4386, 6528
        %v5203 = vadd.s32 %v4386, 6536
        %v5204 = vadd.s32 %v4386, 6544
        %v5205 = vadd.s32 %v4386, 6552
        %v5206 = vadd.s32 %v4386, 6560
        %v5207 = vadd.s32 %v4386, 6568
        %v5208 = vadd.s32 %v4386, 6576
        %v5209 = vadd.s32 %v4386, 6584
        %v5210 = vadd.s32 %v4386, 6592
        %v5211 = vadd.s32 %v4386, 6600
        %v5212 = vadd.s32 %v4386, 6608
        %v5213 = vadd.s32 %v4386, 6616
        %v5214 = vadd.s32 %v4386, 6624
        %v5215 = vadd.s32 %v4386, 6632
        %v5216 = vadd.s32 %v4386, 6640
        %v5217 = vadd.s32 %v4386, 6648
        %v5218 = vadd.s32 %v4386, 6656
        %v5219 = vadd.s32 %v4386, 6664
        %v5220 = vadd.s32 %v4386, 6672
        %v5221 = vadd.s32 %v4386, 6680
        %v5222 = vadd.s32 %v4386, 6688
        %v5223 = vadd.s32 %v4386, 6696
        %v5224 = vadd.s32 %v4386, 6704
        %v5225 = vadd.s32 %v4386, 6712
        %v5226 = vadd.s32 %v4386, 6720
        %v5227 = vadd.s32 %v4386, 6728
        %v5228 = vadd.s32 %v4386, 6736
        %v5229 = vadd.s32 %v4386, 6744
        %v5230 = vadd.s32 %v4386, 6752
        %v5231 = vadd.s32 %v4386, 6760
        %v5232 = vadd.s32 %v4386, 6768
        %v5233 = vadd.s32 %v4386, 6776
        %v5234 = vadd.s32 %v4386, 6784
        %v5235 = vadd.s32 %v4386, 6792
        %v5236 = vadd.s32 %v4386, 6800
        %v5237 = vadd.s32 %v4386, 6808
        %v5238 = vadd.s32 %v4386, 6816
        %v5239 = vadd.s32 %v4386, 6824
        %v5240 = vadd.s32 %v4386, 6832
        %v5241 = vadd.s32 %v4386, 6840
        %v5242 = vadd.s32 %v4386, 6848
        %v5243 = vadd.s32 %v4386, 6856
        %v5244 = vadd.s32 %v4386, 6864
        %v5245 = vadd.s32 %v4386, 6872
        %v5246 = vadd.s32 %v4386, 6880
        %v5247 = vadd.s32 %v4386, 6888
        %v5248 = vadd.s32 %v4386, 6896
        %v5249 = vadd.s32 %v4386, 6904
        %v5250 = vadd.s32 %v4386, 6912
        %v5251 = vadd.s32 %v4386, 6920
        %v5252 = vadd.s32 %v4386, 6928
        %v5253 = vadd.s32 %v4386, 6936
        %v5254 = vadd.s32 %v4386, 6944
        %v5255 = vadd.s32 %v4386, 6952
        %v5256 = vadd.s32 %v4386, 6960
        %v5257 = vadd.s32 %v4386, 6968
        %v5258 = vadd.s32 %v4386, 6976
        %v5259 = vadd.s32 %v4386, 6984
        %v5260 = vadd.s32 %v4386, 6992
        %v5261 = vadd.s32 %v4386, 7000
        %v5262 = vadd.s32 %v4386, 7008
        %v5263 = vadd.s32 %v4386, 7016
        %v5264 = vadd.s32 %v4386, 7024
        %v5265 = vadd.s32 %v4386, 7032
        %v5266 = vadd.s32 %v4386, 7040
        %v5267 = vadd.s32 %v4386, 7048
        %v5268 = vadd.s32 %v4386, 7056
        %v5269 = vadd.s32 %v4386, 7064
        %v5270 = vadd.s32 %v4386, 7072
        %v5271 = vadd.s32 %v4386, 7080
        %v5272 = vadd.s32 %v4386, 7088
        %v5273 = vadd.s32 %v4386, 7096
        %v5274 = vadd.s32 %v4386, 7104
        %v5275 = vadd.s32 %v4386, 7112
        %v5276 = vadd.s32 %v4386, 7120
        %v5277 = vadd.s32 %v4386, 7128
        %v5278 = vadd.s32 %v4386, 7136
        %v5279 = vadd.s32 %v4386, 7144
        %v5280 = vadd.s32 %v4386, 7152
        %v5281 = vadd.s32 %v4386, 7160
        %v5282 = vadd.s32 %v4386, 7168
        %v5283 = vadd.s32 %v4386, 7176
        %v5284 = vadd.s32 %v4386, 7184
        %v5285 = vadd.s32 %v4386, 7192
        %v5286 = vadd.s32 %v4386, 7200
        %v5287 = vadd.s32 %v4386, 7208
        %v5288 = vadd.s32 %v4386, 7216
        %v5289 = vadd.s32 %v4386, 7224
        %v5290 = vadd.s32 %v4386, 7232
        %v5291 = vadd.s32 %v4386, 7240
        %v5292 = vadd.s32 %v4386, 7248
        %v5293 = vadd.s32 %v4386, 7256
        %v5294 = vadd.s32 %v4386, 7264
        %v5295 = vadd.s32 %v4386, 7272
        %v5296 = vadd.s32 %v4386, 7280
        %v5297 = vadd.s32 %v4386, 7288
        %v5298 = vadd.s32 %v4386, 7296
        %v5299 = vadd.s32 %v4386, 7304
        %v5300 = vadd.s32 %v4386, 7312
        %v5301 = vadd.s32 %v4386, 7320
        %v5302 = vadd.s32 %v4386, 7328
        %v5303 = vadd.s32 %v4386, 7336
        %v5304 = vadd.s32 %v4386, 7344
        %v5305 = vadd.s32 %v4386, 7352
        %v5306 = vadd.s32 %v4386, 7360
        %v5307 = vadd.s32 %v4386, 7368
        %v5308 = vadd.s32 %v4386, 7376
        %v5309 = vadd.s32 %v4386, 7384
        %v5310 = vadd.s32 %v4386, 7392
        %v5311 = vadd.s32 %v4386, 7400
        %v5312 = vadd.s32 %v4386, 7408
        %v5313 = vadd.s32 %v4386, 7416
        %v5314 = vadd.s32 %v4386, 7424
        %v5315 = vadd.s32 %v4386, 7432
        %v5316 = vadd.s32 %v4386, 7440
        %v5317 = vadd.s32 %v4386, 7448
        %v5318 = vadd.s32 %v4386, 7456
        %v5319 = vadd.s32 %v4386, 7464
        %v5320 = vadd.s32 %v4386, 7472
        %v5321 = vadd.s32 %v4386, 7480
        %v5322 = vadd.s32 %v4386, 7488
        %v5323 = vadd.s32 %v4386, 7496
        %v5324 = vadd.s32 %v4386, 7504
        %v5325 = vadd.s32 %v4386, 7512
        %v5326 = vadd.s32 %v4386, 7520
        %v5327 = vadd.s32 %v4386, 7528
        %v5328 = vadd.s32 %v4386, 7536
        %v5329 = vadd.s32 %v4386, 7544
        %v5330 = vadd.s32 %v4386, 7552
        %v5331 = vadd.s32 %v4386, 7560
        %v5332 = vadd.s32 %v4386, 7568
        %v5333 = vadd.s32 %v4386, 7576
        %v5334 = vadd.s32 %v4386, 7584
        %v5335 = vadd.s32 %v4386, 7592
        %v5336 = vadd.s32 %v4386, 7600
        %v5337 = vadd.s32 %v4386, 7608
        %v5338 = vadd.s32 %v4386, 7616
        %v5339 = vadd.s32 %v4386, 7624
        %v5340 = vadd.s32 %v4386, 7632
        %v5341 = vadd.s32 %v4386, 7640
        %v5342 = vadd.s32 %v4386, 7648
        %v5343 = vadd.s32 %v4386, 7656
        %v5344 = vadd.s32 %v4386, 7664
        %v5345 = vadd.s32 %v4386, 7672
        %v5346 = vadd.s32 %v4386, 7680
        %v5347 = vadd.s32 %v4386, 7688
        %v5348 = vadd.s32 %v4386, 7696
        %v5349 = vadd.s32 %v4386, 7704
        %v5350 = vadd.s32 %v4386, 7712
        %v5351 = vadd.s32 %v4386, 7720
        %v5352 = vadd.s32 %v4386, 7728
        %v5353 = vadd.s32 %v4386, 7736
        %v5354 = vadd.s32 %v4386, 7744
        %v5355 = vadd.s32 %v4386, 7752
        %v5356 = vadd.s32 %v4386, 7760
        %v5357 = vadd.s32 %v4386, 7768
        %v5358 = vadd.s32 %v4386, 7776
        %v5359 = vadd.s32 %v4386, 7784
        %v5360 = vadd.s32 %v4386, 7792
        %v5361 = vadd.s32 %v4386, 7800
        %v5362 = vadd.s32 %v4386, 7808
        %v5363 = vadd.s32 %v4386, 7816
        %v5364 = vadd.s32 %v4386, 7824
        %v5365 = vadd.s32 %v4386, 7832
        %v5366 = vadd.s32 %v4386, 7840
        %v5367 = vadd.s32 %v4386, 7848
        %v5368 = vadd.s32 %v4386, 7856
        %v5369 = vadd.s32 %v4386, 7864
        %v5370 = vadd.s32 %v4386, 7872
        %v5371 = vadd.s32 %v4386, 7880
        %v5372 = vadd.s32 %v4386, 7888
        %v5373 = vadd.s32 %v4386, 7896
        %v5374 = vadd.s32 %v4386, 7904
        %v5375 = vadd.s32 %v4386, 7912
        %v5376 = vadd.s32 %v4386, 7920
        %v5377 = vadd.s32 %v4386, 7928
        %v5378 = vadd.s32 %v4386, 7936
        %v5379 = vadd.s32 %v4386, 7944
        %v5380 = vadd.s32 %v4386, 7952
        %v5381 = vadd.s32 %v4386, 7960
        %v5382 = vadd.s32 %v4386, 7968
        %v5383 = vadd.s32 %v4386, 7976
        %v5384 = vadd.s32 %v4386, 7984
        %v5385 = vadd.s32 %v4386, 7992
        %v5386 = vadd.s32 %v4386, 8000
        %v5387 = vadd.s32 %v4386, 8008
        %v5388 = vadd.s32 %v4386, 8016
        %v5389 = vadd.s32 %v4386, 8024
        %v5390 = vadd.s32 %v4386, 8032
        %v5391 = vadd.s32 %v4386, 8040
        %v5392 = vadd.s32 %v4386, 8048
        %v5393 = vadd.s32 %v4386, 8056
        %v5394 = vadd.s32 %v4386, 8064
        %v5395 = vadd.s32 %v4386, 8072
        %v5396 = vadd.s32 %v4386, 8080
        %v5397 = vadd.s32 %v4386, 8088
        %v5398 = vadd.s32 %v4386, 8096
        %v5399 = vadd.s32 %v4386, 8104
        %v5400 = vadd.s32 %v4386, 8112
        %v5401 = vadd.s32 %v4386, 8120
        %v5402 = vadd.s32 %v4386, 8128
        %v5403 = vadd.s32 %v4386, 8136
        %v5404 = vadd.s32 %v4386, 8144
        %v5405 = vadd.s32 %v4386, 8152
        %v5406 = vadd.s32 %v4386, 8160
        %v5407 = vadd.s32 %v4386, 8168
        %v5408 = vadd.s32 %v4386, 8176
        %v5409 = vadd.s32 %v4386, 8184
        %s5410 = ssub.s32 28800, %s4384
        %v5411 = vstv %s5410
        %vm5412 = vcmp.lt.s32.totalorder %v4386, %v5411
        %vm5413 = vcmp.lt.s32.totalorder %v4387, %v5411
        %vm5414 = vcmp.lt.s32.totalorder %v4388, %v5411
        %vm5415 = vcmp.lt.s32.totalorder %v4389, %v5411
        %vm5416 = vcmp.lt.s32.totalorder %v4390, %v5411
        %vm5417 = vcmp.lt.s32.totalorder %v4391, %v5411
        %vm5418 = vcmp.lt.s32.totalorder %v4392, %v5411
        %vm5419 = vcmp.lt.s32.totalorder %v4393, %v5411
        %vm5420 = vcmp.lt.s32.totalorder %v4394, %v5411
        %vm5421 = vcmp.lt.s32.totalorder %v4395, %v5411
        %vm5422 = vcmp.lt.s32.totalorder %v4396, %v5411
        %vm5423 = vcmp.lt.s32.totalorder %v4397, %v5411
        %vm5424 = vcmp.lt.s32.totalorder %v4398, %v5411
        %vm5425 = vcmp.lt.s32.totalorder %v4399, %v5411
        %vm5426 = vcmp.lt.s32.totalorder %v4400, %v5411
        %vm5427 = vcmp.lt.s32.totalorder %v4401, %v5411
        %vm5428 = vcmp.lt.s32.totalorder %v4402, %v5411
        %vm5429 = vcmp.lt.s32.totalorder %v4403, %v5411
        %vm5430 = vcmp.lt.s32.totalorder %v4404, %v5411
        %vm5431 = vcmp.lt.s32.totalorder %v4405, %v5411
        %vm5432 = vcmp.lt.s32.totalorder %v4406, %v5411
        %vm5433 = vcmp.lt.s32.totalorder %v4407, %v5411
        %vm5434 = vcmp.lt.s32.totalorder %v4408, %v5411
        %vm5435 = vcmp.lt.s32.totalorder %v4409, %v5411
        %vm5436 = vcmp.lt.s32.totalorder %v4410, %v5411
        %vm5437 = vcmp.lt.s32.totalorder %v4411, %v5411
        %vm5438 = vcmp.lt.s32.totalorder %v4412, %v5411
        %vm5439 = vcmp.lt.s32.totalorder %v4413, %v5411
        %vm5440 = vcmp.lt.s32.totalorder %v4414, %v5411
        %vm5441 = vcmp.lt.s32.totalorder %v4415, %v5411
        %vm5442 = vcmp.lt.s32.totalorder %v4416, %v5411
        %vm5443 = vcmp.lt.s32.totalorder %v4417, %v5411
        %vm5444 = vcmp.lt.s32.totalorder %v4418, %v5411
        %vm5445 = vcmp.lt.s32.totalorder %v4419, %v5411
        %vm5446 = vcmp.lt.s32.totalorder %v4420, %v5411
        %vm5447 = vcmp.lt.s32.totalorder %v4421, %v5411
        %vm5448 = vcmp.lt.s32.totalorder %v4422, %v5411
        %vm5449 = vcmp.lt.s32.totalorder %v4423, %v5411
        %vm5450 = vcmp.lt.s32.totalorder %v4424, %v5411
        %vm5451 = vcmp.lt.s32.totalorder %v4425, %v5411
        %vm5452 = vcmp.lt.s32.totalorder %v4426, %v5411
        %vm5453 = vcmp.lt.s32.totalorder %v4427, %v5411
        %vm5454 = vcmp.lt.s32.totalorder %v4428, %v5411
        %vm5455 = vcmp.lt.s32.totalorder %v4429, %v5411
        %vm5456 = vcmp.lt.s32.totalorder %v4430, %v5411
        %vm5457 = vcmp.lt.s32.totalorder %v4431, %v5411
        %vm5458 = vcmp.lt.s32.totalorder %v4432, %v5411
        %vm5459 = vcmp.lt.s32.totalorder %v4433, %v5411
        %vm5460 = vcmp.lt.s32.totalorder %v4434, %v5411
        %vm5461 = vcmp.lt.s32.totalorder %v4435, %v5411
        %vm5462 = vcmp.lt.s32.totalorder %v4436, %v5411
        %vm5463 = vcmp.lt.s32.totalorder %v4437, %v5411
        %vm5464 = vcmp.lt.s32.totalorder %v4438, %v5411
        %vm5465 = vcmp.lt.s32.totalorder %v4439, %v5411
        %vm5466 = vcmp.lt.s32.totalorder %v4440, %v5411
        %vm5467 = vcmp.lt.s32.totalorder %v4441, %v5411
        %vm5468 = vcmp.lt.s32.totalorder %v4442, %v5411
        %vm5469 = vcmp.lt.s32.totalorder %v4443, %v5411
        %vm5470 = vcmp.lt.s32.totalorder %v4444, %v5411
        %vm5471 = vcmp.lt.s32.totalorder %v4445, %v5411
        %vm5472 = vcmp.lt.s32.totalorder %v4446, %v5411
        %vm5473 = vcmp.lt.s32.totalorder %v4447, %v5411
        %vm5474 = vcmp.lt.s32.totalorder %v4448, %v5411
        %vm5475 = vcmp.lt.s32.totalorder %v4449, %v5411
        %vm5476 = vcmp.lt.s32.totalorder %v4450, %v5411
        %vm5477 = vcmp.lt.s32.totalorder %v4451, %v5411
        %vm5478 = vcmp.lt.s32.totalorder %v4452, %v5411
        %vm5479 = vcmp.lt.s32.totalorder %v4453, %v5411
        %vm5480 = vcmp.lt.s32.totalorder %v4454, %v5411
        %vm5481 = vcmp.lt.s32.totalorder %v4455, %v5411
        %vm5482 = vcmp.lt.s32.totalorder %v4456, %v5411
        %vm5483 = vcmp.lt.s32.totalorder %v4457, %v5411
        %vm5484 = vcmp.lt.s32.totalorder %v4458, %v5411
        %vm5485 = vcmp.lt.s32.totalorder %v4459, %v5411
        %vm5486 = vcmp.lt.s32.totalorder %v4460, %v5411
        %vm5487 = vcmp.lt.s32.totalorder %v4461, %v5411
        %vm5488 = vcmp.lt.s32.totalorder %v4462, %v5411
        %vm5489 = vcmp.lt.s32.totalorder %v4463, %v5411
        %vm5490 = vcmp.lt.s32.totalorder %v4464, %v5411
        %vm5491 = vcmp.lt.s32.totalorder %v4465, %v5411
        %vm5492 = vcmp.lt.s32.totalorder %v4466, %v5411
        %vm5493 = vcmp.lt.s32.totalorder %v4467, %v5411
        %vm5494 = vcmp.lt.s32.totalorder %v4468, %v5411
        %vm5495 = vcmp.lt.s32.totalorder %v4469, %v5411
        %vm5496 = vcmp.lt.s32.totalorder %v4470, %v5411
        %vm5497 = vcmp.lt.s32.totalorder %v4471, %v5411
        %vm5498 = vcmp.lt.s32.totalorder %v4472, %v5411
        %vm5499 = vcmp.lt.s32.totalorder %v4473, %v5411
        %vm5500 = vcmp.lt.s32.totalorder %v4474, %v5411
        %vm5501 = vcmp.lt.s32.totalorder %v4475, %v5411
        %vm5502 = vcmp.lt.s32.totalorder %v4476, %v5411
        %vm5503 = vcmp.lt.s32.totalorder %v4477, %v5411
        %vm5504 = vcmp.lt.s32.totalorder %v4478, %v5411
        %vm5505 = vcmp.lt.s32.totalorder %v4479, %v5411
        %vm5506 = vcmp.lt.s32.totalorder %v4480, %v5411
        %vm5507 = vcmp.lt.s32.totalorder %v4481, %v5411
        %vm5508 = vcmp.lt.s32.totalorder %v4482, %v5411
        %vm5509 = vcmp.lt.s32.totalorder %v4483, %v5411
        %vm5510 = vcmp.lt.s32.totalorder %v4484, %v5411
        %vm5511 = vcmp.lt.s32.totalorder %v4485, %v5411
        %vm5512 = vcmp.lt.s32.totalorder %v4486, %v5411
        %vm5513 = vcmp.lt.s32.totalorder %v4487, %v5411
        %vm5514 = vcmp.lt.s32.totalorder %v4488, %v5411
        %vm5515 = vcmp.lt.s32.totalorder %v4489, %v5411
        %vm5516 = vcmp.lt.s32.totalorder %v4490, %v5411
        %vm5517 = vcmp.lt.s32.totalorder %v4491, %v5411
        %vm5518 = vcmp.lt.s32.totalorder %v4492, %v5411
        %vm5519 = vcmp.lt.s32.totalorder %v4493, %v5411
        %vm5520 = vcmp.lt.s32.totalorder %v4494, %v5411
        %vm5521 = vcmp.lt.s32.totalorder %v4495, %v5411
        %vm5522 = vcmp.lt.s32.totalorder %v4496, %v5411
        %vm5523 = vcmp.lt.s32.totalorder %v4497, %v5411
        %vm5524 = vcmp.lt.s32.totalorder %v4498, %v5411
        %vm5525 = vcmp.lt.s32.totalorder %v4499, %v5411
        %vm5526 = vcmp.lt.s32.totalorder %v4500, %v5411
        %vm5527 = vcmp.lt.s32.totalorder %v4501, %v5411
        %vm5528 = vcmp.lt.s32.totalorder %v4502, %v5411
        %vm5529 = vcmp.lt.s32.totalorder %v4503, %v5411
        %vm5530 = vcmp.lt.s32.totalorder %v4504, %v5411
        %vm5531 = vcmp.lt.s32.totalorder %v4505, %v5411
        %vm5532 = vcmp.lt.s32.totalorder %v4506, %v5411
        %vm5533 = vcmp.lt.s32.totalorder %v4507, %v5411
        %vm5534 = vcmp.lt.s32.totalorder %v4508, %v5411
        %vm5535 = vcmp.lt.s32.totalorder %v4509, %v5411
        %vm5536 = vcmp.lt.s32.totalorder %v4510, %v5411
        %vm5537 = vcmp.lt.s32.totalorder %v4511, %v5411
        %vm5538 = vcmp.lt.s32.totalorder %v4512, %v5411
        %vm5539 = vcmp.lt.s32.totalorder %v4513, %v5411
        %vm5540 = vcmp.lt.s32.totalorder %v4514, %v5411
        %vm5541 = vcmp.lt.s32.totalorder %v4515, %v5411
        %vm5542 = vcmp.lt.s32.totalorder %v4516, %v5411
        %vm5543 = vcmp.lt.s32.totalorder %v4517, %v5411
        %vm5544 = vcmp.lt.s32.totalorder %v4518, %v5411
        %vm5545 = vcmp.lt.s32.totalorder %v4519, %v5411
        %vm5546 = vcmp.lt.s32.totalorder %v4520, %v5411
        %vm5547 = vcmp.lt.s32.totalorder %v4521, %v5411
        %vm5548 = vcmp.lt.s32.totalorder %v4522, %v5411
        %vm5549 = vcmp.lt.s32.totalorder %v4523, %v5411
        %vm5550 = vcmp.lt.s32.totalorder %v4524, %v5411
        %vm5551 = vcmp.lt.s32.totalorder %v4525, %v5411
        %vm5552 = vcmp.lt.s32.totalorder %v4526, %v5411
        %vm5553 = vcmp.lt.s32.totalorder %v4527, %v5411
        %vm5554 = vcmp.lt.s32.totalorder %v4528, %v5411
        %vm5555 = vcmp.lt.s32.totalorder %v4529, %v5411
        %vm5556 = vcmp.lt.s32.totalorder %v4530, %v5411
        %vm5557 = vcmp.lt.s32.totalorder %v4531, %v5411
        %vm5558 = vcmp.lt.s32.totalorder %v4532, %v5411
        %vm5559 = vcmp.lt.s32.totalorder %v4533, %v5411
        %vm5560 = vcmp.lt.s32.totalorder %v4534, %v5411
        %vm5561 = vcmp.lt.s32.totalorder %v4535, %v5411
        %vm5562 = vcmp.lt.s32.totalorder %v4536, %v5411
        %vm5563 = vcmp.lt.s32.totalorder %v4537, %v5411
        %vm5564 = vcmp.lt.s32.totalorder %v4538, %v5411
        %vm5565 = vcmp.lt.s32.totalorder %v4539, %v5411
        %vm5566 = vcmp.lt.s32.totalorder %v4540, %v5411
        %vm5567 = vcmp.lt.s32.totalorder %v4541, %v5411
        %vm5568 = vcmp.lt.s32.totalorder %v4542, %v5411
        %vm5569 = vcmp.lt.s32.totalorder %v4543, %v5411
        %vm5570 = vcmp.lt.s32.totalorder %v4544, %v5411
        %vm5571 = vcmp.lt.s32.totalorder %v4545, %v5411
        %vm5572 = vcmp.lt.s32.totalorder %v4546, %v5411
        %vm5573 = vcmp.lt.s32.totalorder %v4547, %v5411
        %vm5574 = vcmp.lt.s32.totalorder %v4548, %v5411
        %vm5575 = vcmp.lt.s32.totalorder %v4549, %v5411
        %vm5576 = vcmp.lt.s32.totalorder %v4550, %v5411
        %vm5577 = vcmp.lt.s32.totalorder %v4551, %v5411
        %vm5578 = vcmp.lt.s32.totalorder %v4552, %v5411
        %vm5579 = vcmp.lt.s32.totalorder %v4553, %v5411
        %vm5580 = vcmp.lt.s32.totalorder %v4554, %v5411
        %vm5581 = vcmp.lt.s32.totalorder %v4555, %v5411
        %vm5582 = vcmp.lt.s32.totalorder %v4556, %v5411
        %vm5583 = vcmp.lt.s32.totalorder %v4557, %v5411
        %vm5584 = vcmp.lt.s32.totalorder %v4558, %v5411
        %vm5585 = vcmp.lt.s32.totalorder %v4559, %v5411
        %vm5586 = vcmp.lt.s32.totalorder %v4560, %v5411
        %vm5587 = vcmp.lt.s32.totalorder %v4561, %v5411
        %vm5588 = vcmp.lt.s32.totalorder %v4562, %v5411
        %vm5589 = vcmp.lt.s32.totalorder %v4563, %v5411
        %vm5590 = vcmp.lt.s32.totalorder %v4564, %v5411
        %vm5591 = vcmp.lt.s32.totalorder %v4565, %v5411
        %vm5592 = vcmp.lt.s32.totalorder %v4566, %v5411
        %vm5593 = vcmp.lt.s32.totalorder %v4567, %v5411
        %vm5594 = vcmp.lt.s32.totalorder %v4568, %v5411
        %vm5595 = vcmp.lt.s32.totalorder %v4569, %v5411
        %vm5596 = vcmp.lt.s32.totalorder %v4570, %v5411
        %vm5597 = vcmp.lt.s32.totalorder %v4571, %v5411
        %vm5598 = vcmp.lt.s32.totalorder %v4572, %v5411
        %vm5599 = vcmp.lt.s32.totalorder %v4573, %v5411
        %vm5600 = vcmp.lt.s32.totalorder %v4574, %v5411
        %vm5601 = vcmp.lt.s32.totalorder %v4575, %v5411
        %vm5602 = vcmp.lt.s32.totalorder %v4576, %v5411
        %vm5603 = vcmp.lt.s32.totalorder %v4577, %v5411
        %vm5604 = vcmp.lt.s32.totalorder %v4578, %v5411
        %vm5605 = vcmp.lt.s32.totalorder %v4579, %v5411
        %vm5606 = vcmp.lt.s32.totalorder %v4580, %v5411
        %vm5607 = vcmp.lt.s32.totalorder %v4581, %v5411
        %vm5608 = vcmp.lt.s32.totalorder %v4582, %v5411
        %vm5609 = vcmp.lt.s32.totalorder %v4583, %v5411
        %vm5610 = vcmp.lt.s32.totalorder %v4584, %v5411
        %vm5611 = vcmp.lt.s32.totalorder %v4585, %v5411
        %vm5612 = vcmp.lt.s32.totalorder %v4586, %v5411
        %vm5613 = vcmp.lt.s32.totalorder %v4587, %v5411
        %vm5614 = vcmp.lt.s32.totalorder %v4588, %v5411
        %vm5615 = vcmp.lt.s32.totalorder %v4589, %v5411
        %vm5616 = vcmp.lt.s32.totalorder %v4590, %v5411
        %vm5617 = vcmp.lt.s32.totalorder %v4591, %v5411
        %vm5618 = vcmp.lt.s32.totalorder %v4592, %v5411
        %vm5619 = vcmp.lt.s32.totalorder %v4593, %v5411
        %vm5620 = vcmp.lt.s32.totalorder %v4594, %v5411
        %vm5621 = vcmp.lt.s32.totalorder %v4595, %v5411
        %vm5622 = vcmp.lt.s32.totalorder %v4596, %v5411
        %vm5623 = vcmp.lt.s32.totalorder %v4597, %v5411
        %vm5624 = vcmp.lt.s32.totalorder %v4598, %v5411
        %vm5625 = vcmp.lt.s32.totalorder %v4599, %v5411
        %vm5626 = vcmp.lt.s32.totalorder %v4600, %v5411
        %vm5627 = vcmp.lt.s32.totalorder %v4601, %v5411
        %vm5628 = vcmp.lt.s32.totalorder %v4602, %v5411
        %vm5629 = vcmp.lt.s32.totalorder %v4603, %v5411
        %vm5630 = vcmp.lt.s32.totalorder %v4604, %v5411
        %vm5631 = vcmp.lt.s32.totalorder %v4605, %v5411
        %vm5632 = vcmp.lt.s32.totalorder %v4606, %v5411
        %vm5633 = vcmp.lt.s32.totalorder %v4607, %v5411
        %vm5634 = vcmp.lt.s32.totalorder %v4608, %v5411
        %vm5635 = vcmp.lt.s32.totalorder %v4609, %v5411
        %vm5636 = vcmp.lt.s32.totalorder %v4610, %v5411
        %vm5637 = vcmp.lt.s32.totalorder %v4611, %v5411
        %vm5638 = vcmp.lt.s32.totalorder %v4612, %v5411
        %vm5639 = vcmp.lt.s32.totalorder %v4613, %v5411
        %vm5640 = vcmp.lt.s32.totalorder %v4614, %v5411
        %vm5641 = vcmp.lt.s32.totalorder %v4615, %v5411
        %vm5642 = vcmp.lt.s32.totalorder %v4616, %v5411
        %vm5643 = vcmp.lt.s32.totalorder %v4617, %v5411
        %vm5644 = vcmp.lt.s32.totalorder %v4618, %v5411
        %vm5645 = vcmp.lt.s32.totalorder %v4619, %v5411
        %vm5646 = vcmp.lt.s32.totalorder %v4620, %v5411
        %vm5647 = vcmp.lt.s32.totalorder %v4621, %v5411
        %vm5648 = vcmp.lt.s32.totalorder %v4622, %v5411
        %vm5649 = vcmp.lt.s32.totalorder %v4623, %v5411
        %vm5650 = vcmp.lt.s32.totalorder %v4624, %v5411
        %vm5651 = vcmp.lt.s32.totalorder %v4625, %v5411
        %vm5652 = vcmp.lt.s32.totalorder %v4626, %v5411
        %vm5653 = vcmp.lt.s32.totalorder %v4627, %v5411
        %vm5654 = vcmp.lt.s32.totalorder %v4628, %v5411
        %vm5655 = vcmp.lt.s32.totalorder %v4629, %v5411
        %vm5656 = vcmp.lt.s32.totalorder %v4630, %v5411
        %vm5657 = vcmp.lt.s32.totalorder %v4631, %v5411
        %vm5658 = vcmp.lt.s32.totalorder %v4632, %v5411
        %vm5659 = vcmp.lt.s32.totalorder %v4633, %v5411
        %vm5660 = vcmp.lt.s32.totalorder %v4634, %v5411
        %vm5661 = vcmp.lt.s32.totalorder %v4635, %v5411
        %vm5662 = vcmp.lt.s32.totalorder %v4636, %v5411
        %vm5663 = vcmp.lt.s32.totalorder %v4637, %v5411
        %vm5664 = vcmp.lt.s32.totalorder %v4638, %v5411
        %vm5665 = vcmp.lt.s32.totalorder %v4639, %v5411
        %vm5666 = vcmp.lt.s32.totalorder %v4640, %v5411
        %vm5667 = vcmp.lt.s32.totalorder %v4641, %v5411
        %vm5668 = vcmp.lt.s32.totalorder %v4642, %v5411
        %vm5669 = vcmp.lt.s32.totalorder %v4643, %v5411
        %vm5670 = vcmp.lt.s32.totalorder %v4644, %v5411
        %vm5671 = vcmp.lt.s32.totalorder %v4645, %v5411
        %vm5672 = vcmp.lt.s32.totalorder %v4646, %v5411
        %vm5673 = vcmp.lt.s32.totalorder %v4647, %v5411
        %vm5674 = vcmp.lt.s32.totalorder %v4648, %v5411
        %vm5675 = vcmp.lt.s32.totalorder %v4649, %v5411
        %vm5676 = vcmp.lt.s32.totalorder %v4650, %v5411
        %vm5677 = vcmp.lt.s32.totalorder %v4651, %v5411
        %vm5678 = vcmp.lt.s32.totalorder %v4652, %v5411
        %vm5679 = vcmp.lt.s32.totalorder %v4653, %v5411
        %vm5680 = vcmp.lt.s32.totalorder %v4654, %v5411
        %vm5681 = vcmp.lt.s32.totalorder %v4655, %v5411
        %vm5682 = vcmp.lt.s32.totalorder %v4656, %v5411
        %vm5683 = vcmp.lt.s32.totalorder %v4657, %v5411
        %vm5684 = vcmp.lt.s32.totalorder %v4658, %v5411
        %vm5685 = vcmp.lt.s32.totalorder %v4659, %v5411
        %vm5686 = vcmp.lt.s32.totalorder %v4660, %v5411
        %vm5687 = vcmp.lt.s32.totalorder %v4661, %v5411
        %vm5688 = vcmp.lt.s32.totalorder %v4662, %v5411
        %vm5689 = vcmp.lt.s32.totalorder %v4663, %v5411
        %vm5690 = vcmp.lt.s32.totalorder %v4664, %v5411
        %vm5691 = vcmp.lt.s32.totalorder %v4665, %v5411
        %vm5692 = vcmp.lt.s32.totalorder %v4666, %v5411
        %vm5693 = vcmp.lt.s32.totalorder %v4667, %v5411
        %vm5694 = vcmp.lt.s32.totalorder %v4668, %v5411
        %vm5695 = vcmp.lt.s32.totalorder %v4669, %v5411
        %vm5696 = vcmp.lt.s32.totalorder %v4670, %v5411
        %vm5697 = vcmp.lt.s32.totalorder %v4671, %v5411
        %vm5698 = vcmp.lt.s32.totalorder %v4672, %v5411
        %vm5699 = vcmp.lt.s32.totalorder %v4673, %v5411
        %vm5700 = vcmp.lt.s32.totalorder %v4674, %v5411
        %vm5701 = vcmp.lt.s32.totalorder %v4675, %v5411
        %vm5702 = vcmp.lt.s32.totalorder %v4676, %v5411
        %vm5703 = vcmp.lt.s32.totalorder %v4677, %v5411
        %vm5704 = vcmp.lt.s32.totalorder %v4678, %v5411
        %vm5705 = vcmp.lt.s32.totalorder %v4679, %v5411
        %vm5706 = vcmp.lt.s32.totalorder %v4680, %v5411
        %vm5707 = vcmp.lt.s32.totalorder %v4681, %v5411
        %vm5708 = vcmp.lt.s32.totalorder %v4682, %v5411
        %vm5709 = vcmp.lt.s32.totalorder %v4683, %v5411
        %vm5710 = vcmp.lt.s32.totalorder %v4684, %v5411
        %vm5711 = vcmp.lt.s32.totalorder %v4685, %v5411
        %vm5712 = vcmp.lt.s32.totalorder %v4686, %v5411
        %vm5713 = vcmp.lt.s32.totalorder %v4687, %v5411
        %vm5714 = vcmp.lt.s32.totalorder %v4688, %v5411
        %vm5715 = vcmp.lt.s32.totalorder %v4689, %v5411
        %vm5716 = vcmp.lt.s32.totalorder %v4690, %v5411
        %vm5717 = vcmp.lt.s32.totalorder %v4691, %v5411
        %vm5718 = vcmp.lt.s32.totalorder %v4692, %v5411
        %vm5719 = vcmp.lt.s32.totalorder %v4693, %v5411
        %vm5720 = vcmp.lt.s32.totalorder %v4694, %v5411
        %vm5721 = vcmp.lt.s32.totalorder %v4695, %v5411
        %vm5722 = vcmp.lt.s32.totalorder %v4696, %v5411
        %vm5723 = vcmp.lt.s32.totalorder %v4697, %v5411
        %vm5724 = vcmp.lt.s32.totalorder %v4698, %v5411
        %vm5725 = vcmp.lt.s32.totalorder %v4699, %v5411
        %vm5726 = vcmp.lt.s32.totalorder %v4700, %v5411
        %vm5727 = vcmp.lt.s32.totalorder %v4701, %v5411
        %vm5728 = vcmp.lt.s32.totalorder %v4702, %v5411
        %vm5729 = vcmp.lt.s32.totalorder %v4703, %v5411
        %vm5730 = vcmp.lt.s32.totalorder %v4704, %v5411
        %vm5731 = vcmp.lt.s32.totalorder %v4705, %v5411
        %vm5732 = vcmp.lt.s32.totalorder %v4706, %v5411
        %vm5733 = vcmp.lt.s32.totalorder %v4707, %v5411
        %vm5734 = vcmp.lt.s32.totalorder %v4708, %v5411
        %vm5735 = vcmp.lt.s32.totalorder %v4709, %v5411
        %vm5736 = vcmp.lt.s32.totalorder %v4710, %v5411
        %vm5737 = vcmp.lt.s32.totalorder %v4711, %v5411
        %vm5738 = vcmp.lt.s32.totalorder %v4712, %v5411
        %vm5739 = vcmp.lt.s32.totalorder %v4713, %v5411
        %vm5740 = vcmp.lt.s32.totalorder %v4714, %v5411
        %vm5741 = vcmp.lt.s32.totalorder %v4715, %v5411
        %vm5742 = vcmp.lt.s32.totalorder %v4716, %v5411
        %vm5743 = vcmp.lt.s32.totalorder %v4717, %v5411
        %vm5744 = vcmp.lt.s32.totalorder %v4718, %v5411
        %vm5745 = vcmp.lt.s32.totalorder %v4719, %v5411
        %vm5746 = vcmp.lt.s32.totalorder %v4720, %v5411
        %vm5747 = vcmp.lt.s32.totalorder %v4721, %v5411
        %vm5748 = vcmp.lt.s32.totalorder %v4722, %v5411
        %vm5749 = vcmp.lt.s32.totalorder %v4723, %v5411
        %vm5750 = vcmp.lt.s32.totalorder %v4724, %v5411
        %vm5751 = vcmp.lt.s32.totalorder %v4725, %v5411
        %vm5752 = vcmp.lt.s32.totalorder %v4726, %v5411
        %vm5753 = vcmp.lt.s32.totalorder %v4727, %v5411
        %vm5754 = vcmp.lt.s32.totalorder %v4728, %v5411
        %vm5755 = vcmp.lt.s32.totalorder %v4729, %v5411
        %vm5756 = vcmp.lt.s32.totalorder %v4730, %v5411
        %vm5757 = vcmp.lt.s32.totalorder %v4731, %v5411
        %vm5758 = vcmp.lt.s32.totalorder %v4732, %v5411
        %vm5759 = vcmp.lt.s32.totalorder %v4733, %v5411
        %vm5760 = vcmp.lt.s32.totalorder %v4734, %v5411
        %vm5761 = vcmp.lt.s32.totalorder %v4735, %v5411
        %vm5762 = vcmp.lt.s32.totalorder %v4736, %v5411
        %vm5763 = vcmp.lt.s32.totalorder %v4737, %v5411
        %vm5764 = vcmp.lt.s32.totalorder %v4738, %v5411
        %vm5765 = vcmp.lt.s32.totalorder %v4739, %v5411
        %vm5766 = vcmp.lt.s32.totalorder %v4740, %v5411
        %vm5767 = vcmp.lt.s32.totalorder %v4741, %v5411
        %vm5768 = vcmp.lt.s32.totalorder %v4742, %v5411
        %vm5769 = vcmp.lt.s32.totalorder %v4743, %v5411
        %vm5770 = vcmp.lt.s32.totalorder %v4744, %v5411
        %vm5771 = vcmp.lt.s32.totalorder %v4745, %v5411
        %vm5772 = vcmp.lt.s32.totalorder %v4746, %v5411
        %vm5773 = vcmp.lt.s32.totalorder %v4747, %v5411
        %vm5774 = vcmp.lt.s32.totalorder %v4748, %v5411
        %vm5775 = vcmp.lt.s32.totalorder %v4749, %v5411
        %vm5776 = vcmp.lt.s32.totalorder %v4750, %v5411
        %vm5777 = vcmp.lt.s32.totalorder %v4751, %v5411
        %vm5778 = vcmp.lt.s32.totalorder %v4752, %v5411
        %vm5779 = vcmp.lt.s32.totalorder %v4753, %v5411
        %vm5780 = vcmp.lt.s32.totalorder %v4754, %v5411
        %vm5781 = vcmp.lt.s32.totalorder %v4755, %v5411
        %vm5782 = vcmp.lt.s32.totalorder %v4756, %v5411
        %vm5783 = vcmp.lt.s32.totalorder %v4757, %v5411
        %vm5784 = vcmp.lt.s32.totalorder %v4758, %v5411
        %vm5785 = vcmp.lt.s32.totalorder %v4759, %v5411
        %vm5786 = vcmp.lt.s32.totalorder %v4760, %v5411
        %vm5787 = vcmp.lt.s32.totalorder %v4761, %v5411
        %vm5788 = vcmp.lt.s32.totalorder %v4762, %v5411
        %vm5789 = vcmp.lt.s32.totalorder %v4763, %v5411
        %vm5790 = vcmp.lt.s32.totalorder %v4764, %v5411
        %vm5791 = vcmp.lt.s32.totalorder %v4765, %v5411
        %vm5792 = vcmp.lt.s32.totalorder %v4766, %v5411
        %vm5793 = vcmp.lt.s32.totalorder %v4767, %v5411
        %vm5794 = vcmp.lt.s32.totalorder %v4768, %v5411
        %vm5795 = vcmp.lt.s32.totalorder %v4769, %v5411
        %vm5796 = vcmp.lt.s32.totalorder %v4770, %v5411
        %vm5797 = vcmp.lt.s32.totalorder %v4771, %v5411
        %vm5798 = vcmp.lt.s32.totalorder %v4772, %v5411
        %vm5799 = vcmp.lt.s32.totalorder %v4773, %v5411
        %vm5800 = vcmp.lt.s32.totalorder %v4774, %v5411
        %vm5801 = vcmp.lt.s32.totalorder %v4775, %v5411
        %vm5802 = vcmp.lt.s32.totalorder %v4776, %v5411
        %vm5803 = vcmp.lt.s32.totalorder %v4777, %v5411
        %vm5804 = vcmp.lt.s32.totalorder %v4778, %v5411
        %vm5805 = vcmp.lt.s32.totalorder %v4779, %v5411
        %vm5806 = vcmp.lt.s32.totalorder %v4780, %v5411
        %vm5807 = vcmp.lt.s32.totalorder %v4781, %v5411
        %vm5808 = vcmp.lt.s32.totalorder %v4782, %v5411
        %vm5809 = vcmp.lt.s32.totalorder %v4783, %v5411
        %vm5810 = vcmp.lt.s32.totalorder %v4784, %v5411
        %vm5811 = vcmp.lt.s32.totalorder %v4785, %v5411
        %vm5812 = vcmp.lt.s32.totalorder %v4786, %v5411
        %vm5813 = vcmp.lt.s32.totalorder %v4787, %v5411
        %vm5814 = vcmp.lt.s32.totalorder %v4788, %v5411
        %vm5815 = vcmp.lt.s32.totalorder %v4789, %v5411
        %vm5816 = vcmp.lt.s32.totalorder %v4790, %v5411
        %vm5817 = vcmp.lt.s32.totalorder %v4791, %v5411
        %vm5818 = vcmp.lt.s32.totalorder %v4792, %v5411
        %vm5819 = vcmp.lt.s32.totalorder %v4793, %v5411
        %vm5820 = vcmp.lt.s32.totalorder %v4794, %v5411
        %vm5821 = vcmp.lt.s32.totalorder %v4795, %v5411
        %vm5822 = vcmp.lt.s32.totalorder %v4796, %v5411
        %vm5823 = vcmp.lt.s32.totalorder %v4797, %v5411
        %vm5824 = vcmp.lt.s32.totalorder %v4798, %v5411
        %vm5825 = vcmp.lt.s32.totalorder %v4799, %v5411
        %vm5826 = vcmp.lt.s32.totalorder %v4800, %v5411
        %vm5827 = vcmp.lt.s32.totalorder %v4801, %v5411
        %vm5828 = vcmp.lt.s32.totalorder %v4802, %v5411
        %vm5829 = vcmp.lt.s32.totalorder %v4803, %v5411
        %vm5830 = vcmp.lt.s32.totalorder %v4804, %v5411
        %vm5831 = vcmp.lt.s32.totalorder %v4805, %v5411
        %vm5832 = vcmp.lt.s32.totalorder %v4806, %v5411
        %vm5833 = vcmp.lt.s32.totalorder %v4807, %v5411
        %vm5834 = vcmp.lt.s32.totalorder %v4808, %v5411
        %vm5835 = vcmp.lt.s32.totalorder %v4809, %v5411
        %vm5836 = vcmp.lt.s32.totalorder %v4810, %v5411
        %vm5837 = vcmp.lt.s32.totalorder %v4811, %v5411
        %vm5838 = vcmp.lt.s32.totalorder %v4812, %v5411
        %vm5839 = vcmp.lt.s32.totalorder %v4813, %v5411
        %vm5840 = vcmp.lt.s32.totalorder %v4814, %v5411
        %vm5841 = vcmp.lt.s32.totalorder %v4815, %v5411
        %vm5842 = vcmp.lt.s32.totalorder %v4816, %v5411
        %vm5843 = vcmp.lt.s32.totalorder %v4817, %v5411
        %vm5844 = vcmp.lt.s32.totalorder %v4818, %v5411
        %vm5845 = vcmp.lt.s32.totalorder %v4819, %v5411
        %vm5846 = vcmp.lt.s32.totalorder %v4820, %v5411
        %vm5847 = vcmp.lt.s32.totalorder %v4821, %v5411
        %vm5848 = vcmp.lt.s32.totalorder %v4822, %v5411
        %vm5849 = vcmp.lt.s32.totalorder %v4823, %v5411
        %vm5850 = vcmp.lt.s32.totalorder %v4824, %v5411
        %vm5851 = vcmp.lt.s32.totalorder %v4825, %v5411
        %vm5852 = vcmp.lt.s32.totalorder %v4826, %v5411
        %vm5853 = vcmp.lt.s32.totalorder %v4827, %v5411
        %vm5854 = vcmp.lt.s32.totalorder %v4828, %v5411
        %vm5855 = vcmp.lt.s32.totalorder %v4829, %v5411
        %vm5856 = vcmp.lt.s32.totalorder %v4830, %v5411
        %vm5857 = vcmp.lt.s32.totalorder %v4831, %v5411
        %vm5858 = vcmp.lt.s32.totalorder %v4832, %v5411
        %vm5859 = vcmp.lt.s32.totalorder %v4833, %v5411
        %vm5860 = vcmp.lt.s32.totalorder %v4834, %v5411
        %vm5861 = vcmp.lt.s32.totalorder %v4835, %v5411
        %vm5862 = vcmp.lt.s32.totalorder %v4836, %v5411
        %vm5863 = vcmp.lt.s32.totalorder %v4837, %v5411
        %vm5864 = vcmp.lt.s32.totalorder %v4838, %v5411
        %vm5865 = vcmp.lt.s32.totalorder %v4839, %v5411
        %vm5866 = vcmp.lt.s32.totalorder %v4840, %v5411
        %vm5867 = vcmp.lt.s32.totalorder %v4841, %v5411
        %vm5868 = vcmp.lt.s32.totalorder %v4842, %v5411
        %vm5869 = vcmp.lt.s32.totalorder %v4843, %v5411
        %vm5870 = vcmp.lt.s32.totalorder %v4844, %v5411
        %vm5871 = vcmp.lt.s32.totalorder %v4845, %v5411
        %vm5872 = vcmp.lt.s32.totalorder %v4846, %v5411
        %vm5873 = vcmp.lt.s32.totalorder %v4847, %v5411
        %vm5874 = vcmp.lt.s32.totalorder %v4848, %v5411
        %vm5875 = vcmp.lt.s32.totalorder %v4849, %v5411
        %vm5876 = vcmp.lt.s32.totalorder %v4850, %v5411
        %vm5877 = vcmp.lt.s32.totalorder %v4851, %v5411
        %vm5878 = vcmp.lt.s32.totalorder %v4852, %v5411
        %vm5879 = vcmp.lt.s32.totalorder %v4853, %v5411
        %vm5880 = vcmp.lt.s32.totalorder %v4854, %v5411
        %vm5881 = vcmp.lt.s32.totalorder %v4855, %v5411
        %vm5882 = vcmp.lt.s32.totalorder %v4856, %v5411
        %vm5883 = vcmp.lt.s32.totalorder %v4857, %v5411
        %vm5884 = vcmp.lt.s32.totalorder %v4858, %v5411
        %vm5885 = vcmp.lt.s32.totalorder %v4859, %v5411
        %vm5886 = vcmp.lt.s32.totalorder %v4860, %v5411
        %vm5887 = vcmp.lt.s32.totalorder %v4861, %v5411
        %vm5888 = vcmp.lt.s32.totalorder %v4862, %v5411
        %vm5889 = vcmp.lt.s32.totalorder %v4863, %v5411
        %vm5890 = vcmp.lt.s32.totalorder %v4864, %v5411
        %vm5891 = vcmp.lt.s32.totalorder %v4865, %v5411
        %vm5892 = vcmp.lt.s32.totalorder %v4866, %v5411
        %vm5893 = vcmp.lt.s32.totalorder %v4867, %v5411
        %vm5894 = vcmp.lt.s32.totalorder %v4868, %v5411
        %vm5895 = vcmp.lt.s32.totalorder %v4869, %v5411
        %vm5896 = vcmp.lt.s32.totalorder %v4870, %v5411
        %vm5897 = vcmp.lt.s32.totalorder %v4871, %v5411
        %vm5898 = vcmp.lt.s32.totalorder %v4872, %v5411
        %vm5899 = vcmp.lt.s32.totalorder %v4873, %v5411
        %vm5900 = vcmp.lt.s32.totalorder %v4874, %v5411
        %vm5901 = vcmp.lt.s32.totalorder %v4875, %v5411
        %vm5902 = vcmp.lt.s32.totalorder %v4876, %v5411
        %vm5903 = vcmp.lt.s32.totalorder %v4877, %v5411
        %vm5904 = vcmp.lt.s32.totalorder %v4878, %v5411
        %vm5905 = vcmp.lt.s32.totalorder %v4879, %v5411
        %vm5906 = vcmp.lt.s32.totalorder %v4880, %v5411
        %vm5907 = vcmp.lt.s32.totalorder %v4881, %v5411
        %vm5908 = vcmp.lt.s32.totalorder %v4882, %v5411
        %vm5909 = vcmp.lt.s32.totalorder %v4883, %v5411
        %vm5910 = vcmp.lt.s32.totalorder %v4884, %v5411
        %vm5911 = vcmp.lt.s32.totalorder %v4885, %v5411
        %vm5912 = vcmp.lt.s32.totalorder %v4886, %v5411
        %vm5913 = vcmp.lt.s32.totalorder %v4887, %v5411
        %vm5914 = vcmp.lt.s32.totalorder %v4888, %v5411
        %vm5915 = vcmp.lt.s32.totalorder %v4889, %v5411
        %vm5916 = vcmp.lt.s32.totalorder %v4890, %v5411
        %vm5917 = vcmp.lt.s32.totalorder %v4891, %v5411
        %vm5918 = vcmp.lt.s32.totalorder %v4892, %v5411
        %vm5919 = vcmp.lt.s32.totalorder %v4893, %v5411
        %vm5920 = vcmp.lt.s32.totalorder %v4894, %v5411
        %vm5921 = vcmp.lt.s32.totalorder %v4895, %v5411
        %vm5922 = vcmp.lt.s32.totalorder %v4896, %v5411
        %vm5923 = vcmp.lt.s32.totalorder %v4897, %v5411
        %vm5924 = vcmp.lt.s32.totalorder %v4898, %v5411
        %vm5925 = vcmp.lt.s32.totalorder %v4899, %v5411
        %vm5926 = vcmp.lt.s32.totalorder %v4900, %v5411
        %vm5927 = vcmp.lt.s32.totalorder %v4901, %v5411
        %vm5928 = vcmp.lt.s32.totalorder %v4902, %v5411
        %vm5929 = vcmp.lt.s32.totalorder %v4903, %v5411
        %vm5930 = vcmp.lt.s32.totalorder %v4904, %v5411
        %vm5931 = vcmp.lt.s32.totalorder %v4905, %v5411
        %vm5932 = vcmp.lt.s32.totalorder %v4906, %v5411
        %vm5933 = vcmp.lt.s32.totalorder %v4907, %v5411
        %vm5934 = vcmp.lt.s32.totalorder %v4908, %v5411
        %vm5935 = vcmp.lt.s32.totalorder %v4909, %v5411
        %vm5936 = vcmp.lt.s32.totalorder %v4910, %v5411
        %vm5937 = vcmp.lt.s32.totalorder %v4911, %v5411
        %vm5938 = vcmp.lt.s32.totalorder %v4912, %v5411
        %vm5939 = vcmp.lt.s32.totalorder %v4913, %v5411
        %vm5940 = vcmp.lt.s32.totalorder %v4914, %v5411
        %vm5941 = vcmp.lt.s32.totalorder %v4915, %v5411
        %vm5942 = vcmp.lt.s32.totalorder %v4916, %v5411
        %vm5943 = vcmp.lt.s32.totalorder %v4917, %v5411
        %vm5944 = vcmp.lt.s32.totalorder %v4918, %v5411
        %vm5945 = vcmp.lt.s32.totalorder %v4919, %v5411
        %vm5946 = vcmp.lt.s32.totalorder %v4920, %v5411
        %vm5947 = vcmp.lt.s32.totalorder %v4921, %v5411
        %vm5948 = vcmp.lt.s32.totalorder %v4922, %v5411
        %vm5949 = vcmp.lt.s32.totalorder %v4923, %v5411
        %vm5950 = vcmp.lt.s32.totalorder %v4924, %v5411
        %vm5951 = vcmp.lt.s32.totalorder %v4925, %v5411
        %vm5952 = vcmp.lt.s32.totalorder %v4926, %v5411
        %vm5953 = vcmp.lt.s32.totalorder %v4927, %v5411
        %vm5954 = vcmp.lt.s32.totalorder %v4928, %v5411
        %vm5955 = vcmp.lt.s32.totalorder %v4929, %v5411
        %vm5956 = vcmp.lt.s32.totalorder %v4930, %v5411
        %vm5957 = vcmp.lt.s32.totalorder %v4931, %v5411
        %vm5958 = vcmp.lt.s32.totalorder %v4932, %v5411
        %vm5959 = vcmp.lt.s32.totalorder %v4933, %v5411
        %vm5960 = vcmp.lt.s32.totalorder %v4934, %v5411
        %vm5961 = vcmp.lt.s32.totalorder %v4935, %v5411
        %vm5962 = vcmp.lt.s32.totalorder %v4936, %v5411
        %vm5963 = vcmp.lt.s32.totalorder %v4937, %v5411
        %vm5964 = vcmp.lt.s32.totalorder %v4938, %v5411
        %vm5965 = vcmp.lt.s32.totalorder %v4939, %v5411
        %vm5966 = vcmp.lt.s32.totalorder %v4940, %v5411
        %vm5967 = vcmp.lt.s32.totalorder %v4941, %v5411
        %vm5968 = vcmp.lt.s32.totalorder %v4942, %v5411
        %vm5969 = vcmp.lt.s32.totalorder %v4943, %v5411
        %vm5970 = vcmp.lt.s32.totalorder %v4944, %v5411
        %vm5971 = vcmp.lt.s32.totalorder %v4945, %v5411
        %vm5972 = vcmp.lt.s32.totalorder %v4946, %v5411
        %vm5973 = vcmp.lt.s32.totalorder %v4947, %v5411
        %vm5974 = vcmp.lt.s32.totalorder %v4948, %v5411
        %vm5975 = vcmp.lt.s32.totalorder %v4949, %v5411
        %vm5976 = vcmp.lt.s32.totalorder %v4950, %v5411
        %vm5977 = vcmp.lt.s32.totalorder %v4951, %v5411
        %vm5978 = vcmp.lt.s32.totalorder %v4952, %v5411
        %vm5979 = vcmp.lt.s32.totalorder %v4953, %v5411
        %vm5980 = vcmp.lt.s32.totalorder %v4954, %v5411
        %vm5981 = vcmp.lt.s32.totalorder %v4955, %v5411
        %vm5982 = vcmp.lt.s32.totalorder %v4956, %v5411
        %vm5983 = vcmp.lt.s32.totalorder %v4957, %v5411
        %vm5984 = vcmp.lt.s32.totalorder %v4958, %v5411
        %vm5985 = vcmp.lt.s32.totalorder %v4959, %v5411
        %vm5986 = vcmp.lt.s32.totalorder %v4960, %v5411
        %vm5987 = vcmp.lt.s32.totalorder %v4961, %v5411
        %vm5988 = vcmp.lt.s32.totalorder %v4962, %v5411
        %vm5989 = vcmp.lt.s32.totalorder %v4963, %v5411
        %vm5990 = vcmp.lt.s32.totalorder %v4964, %v5411
        %vm5991 = vcmp.lt.s32.totalorder %v4965, %v5411
        %vm5992 = vcmp.lt.s32.totalorder %v4966, %v5411
        %vm5993 = vcmp.lt.s32.totalorder %v4967, %v5411
        %vm5994 = vcmp.lt.s32.totalorder %v4968, %v5411
        %vm5995 = vcmp.lt.s32.totalorder %v4969, %v5411
        %vm5996 = vcmp.lt.s32.totalorder %v4970, %v5411
        %vm5997 = vcmp.lt.s32.totalorder %v4971, %v5411
        %vm5998 = vcmp.lt.s32.totalorder %v4972, %v5411
        %vm5999 = vcmp.lt.s32.totalorder %v4973, %v5411
        %vm6000 = vcmp.lt.s32.totalorder %v4974, %v5411
        %vm6001 = vcmp.lt.s32.totalorder %v4975, %v5411
        %vm6002 = vcmp.lt.s32.totalorder %v4976, %v5411
        %vm6003 = vcmp.lt.s32.totalorder %v4977, %v5411
        %vm6004 = vcmp.lt.s32.totalorder %v4978, %v5411
        %vm6005 = vcmp.lt.s32.totalorder %v4979, %v5411
        %vm6006 = vcmp.lt.s32.totalorder %v4980, %v5411
        %vm6007 = vcmp.lt.s32.totalorder %v4981, %v5411
        %vm6008 = vcmp.lt.s32.totalorder %v4982, %v5411
        %vm6009 = vcmp.lt.s32.totalorder %v4983, %v5411
        %vm6010 = vcmp.lt.s32.totalorder %v4984, %v5411
        %vm6011 = vcmp.lt.s32.totalorder %v4985, %v5411
        %vm6012 = vcmp.lt.s32.totalorder %v4986, %v5411
        %vm6013 = vcmp.lt.s32.totalorder %v4987, %v5411
        %vm6014 = vcmp.lt.s32.totalorder %v4988, %v5411
        %vm6015 = vcmp.lt.s32.totalorder %v4989, %v5411
        %vm6016 = vcmp.lt.s32.totalorder %v4990, %v5411
        %vm6017 = vcmp.lt.s32.totalorder %v4991, %v5411
        %vm6018 = vcmp.lt.s32.totalorder %v4992, %v5411
        %vm6019 = vcmp.lt.s32.totalorder %v4993, %v5411
        %vm6020 = vcmp.lt.s32.totalorder %v4994, %v5411
        %vm6021 = vcmp.lt.s32.totalorder %v4995, %v5411
        %vm6022 = vcmp.lt.s32.totalorder %v4996, %v5411
        %vm6023 = vcmp.lt.s32.totalorder %v4997, %v5411
        %vm6024 = vcmp.lt.s32.totalorder %v4998, %v5411
        %vm6025 = vcmp.lt.s32.totalorder %v4999, %v5411
        %vm6026 = vcmp.lt.s32.totalorder %v5000, %v5411
        %vm6027 = vcmp.lt.s32.totalorder %v5001, %v5411
        %vm6028 = vcmp.lt.s32.totalorder %v5002, %v5411
        %vm6029 = vcmp.lt.s32.totalorder %v5003, %v5411
        %vm6030 = vcmp.lt.s32.totalorder %v5004, %v5411
        %vm6031 = vcmp.lt.s32.totalorder %v5005, %v5411
        %vm6032 = vcmp.lt.s32.totalorder %v5006, %v5411
        %vm6033 = vcmp.lt.s32.totalorder %v5007, %v5411
        %vm6034 = vcmp.lt.s32.totalorder %v5008, %v5411
        %vm6035 = vcmp.lt.s32.totalorder %v5009, %v5411
        %vm6036 = vcmp.lt.s32.totalorder %v5010, %v5411
        %vm6037 = vcmp.lt.s32.totalorder %v5011, %v5411
        %vm6038 = vcmp.lt.s32.totalorder %v5012, %v5411
        %vm6039 = vcmp.lt.s32.totalorder %v5013, %v5411
        %vm6040 = vcmp.lt.s32.totalorder %v5014, %v5411
        %vm6041 = vcmp.lt.s32.totalorder %v5015, %v5411
        %vm6042 = vcmp.lt.s32.totalorder %v5016, %v5411
        %vm6043 = vcmp.lt.s32.totalorder %v5017, %v5411
        %vm6044 = vcmp.lt.s32.totalorder %v5018, %v5411
        %vm6045 = vcmp.lt.s32.totalorder %v5019, %v5411
        %vm6046 = vcmp.lt.s32.totalorder %v5020, %v5411
        %vm6047 = vcmp.lt.s32.totalorder %v5021, %v5411
        %vm6048 = vcmp.lt.s32.totalorder %v5022, %v5411
        %vm6049 = vcmp.lt.s32.totalorder %v5023, %v5411
        %vm6050 = vcmp.lt.s32.totalorder %v5024, %v5411
        %vm6051 = vcmp.lt.s32.totalorder %v5025, %v5411
        %vm6052 = vcmp.lt.s32.totalorder %v5026, %v5411
        %vm6053 = vcmp.lt.s32.totalorder %v5027, %v5411
        %vm6054 = vcmp.lt.s32.totalorder %v5028, %v5411
        %vm6055 = vcmp.lt.s32.totalorder %v5029, %v5411
        %vm6056 = vcmp.lt.s32.totalorder %v5030, %v5411
        %vm6057 = vcmp.lt.s32.totalorder %v5031, %v5411
        %vm6058 = vcmp.lt.s32.totalorder %v5032, %v5411
        %vm6059 = vcmp.lt.s32.totalorder %v5033, %v5411
        %vm6060 = vcmp.lt.s32.totalorder %v5034, %v5411
        %vm6061 = vcmp.lt.s32.totalorder %v5035, %v5411
        %vm6062 = vcmp.lt.s32.totalorder %v5036, %v5411
        %vm6063 = vcmp.lt.s32.totalorder %v5037, %v5411
        %vm6064 = vcmp.lt.s32.totalorder %v5038, %v5411
        %vm6065 = vcmp.lt.s32.totalorder %v5039, %v5411
        %vm6066 = vcmp.lt.s32.totalorder %v5040, %v5411
        %vm6067 = vcmp.lt.s32.totalorder %v5041, %v5411
        %vm6068 = vcmp.lt.s32.totalorder %v5042, %v5411
        %vm6069 = vcmp.lt.s32.totalorder %v5043, %v5411
        %vm6070 = vcmp.lt.s32.totalorder %v5044, %v5411
        %vm6071 = vcmp.lt.s32.totalorder %v5045, %v5411
        %vm6072 = vcmp.lt.s32.totalorder %v5046, %v5411
        %vm6073 = vcmp.lt.s32.totalorder %v5047, %v5411
        %vm6074 = vcmp.lt.s32.totalorder %v5048, %v5411
        %vm6075 = vcmp.lt.s32.totalorder %v5049, %v5411
        %vm6076 = vcmp.lt.s32.totalorder %v5050, %v5411
        %vm6077 = vcmp.lt.s32.totalorder %v5051, %v5411
        %vm6078 = vcmp.lt.s32.totalorder %v5052, %v5411
        %vm6079 = vcmp.lt.s32.totalorder %v5053, %v5411
        %vm6080 = vcmp.lt.s32.totalorder %v5054, %v5411
        %vm6081 = vcmp.lt.s32.totalorder %v5055, %v5411
        %vm6082 = vcmp.lt.s32.totalorder %v5056, %v5411
        %vm6083 = vcmp.lt.s32.totalorder %v5057, %v5411
        %vm6084 = vcmp.lt.s32.totalorder %v5058, %v5411
        %vm6085 = vcmp.lt.s32.totalorder %v5059, %v5411
        %vm6086 = vcmp.lt.s32.totalorder %v5060, %v5411
        %vm6087 = vcmp.lt.s32.totalorder %v5061, %v5411
        %vm6088 = vcmp.lt.s32.totalorder %v5062, %v5411
        %vm6089 = vcmp.lt.s32.totalorder %v5063, %v5411
        %vm6090 = vcmp.lt.s32.totalorder %v5064, %v5411
        %vm6091 = vcmp.lt.s32.totalorder %v5065, %v5411
        %vm6092 = vcmp.lt.s32.totalorder %v5066, %v5411
        %vm6093 = vcmp.lt.s32.totalorder %v5067, %v5411
        %vm6094 = vcmp.lt.s32.totalorder %v5068, %v5411
        %vm6095 = vcmp.lt.s32.totalorder %v5069, %v5411
        %vm6096 = vcmp.lt.s32.totalorder %v5070, %v5411
        %vm6097 = vcmp.lt.s32.totalorder %v5071, %v5411
        %vm6098 = vcmp.lt.s32.totalorder %v5072, %v5411
        %vm6099 = vcmp.lt.s32.totalorder %v5073, %v5411
        %vm6100 = vcmp.lt.s32.totalorder %v5074, %v5411
        %vm6101 = vcmp.lt.s32.totalorder %v5075, %v5411
        %vm6102 = vcmp.lt.s32.totalorder %v5076, %v5411
        %vm6103 = vcmp.lt.s32.totalorder %v5077, %v5411
        %vm6104 = vcmp.lt.s32.totalorder %v5078, %v5411
        %vm6105 = vcmp.lt.s32.totalorder %v5079, %v5411
        %vm6106 = vcmp.lt.s32.totalorder %v5080, %v5411
        %vm6107 = vcmp.lt.s32.totalorder %v5081, %v5411
        %vm6108 = vcmp.lt.s32.totalorder %v5082, %v5411
        %vm6109 = vcmp.lt.s32.totalorder %v5083, %v5411
        %vm6110 = vcmp.lt.s32.totalorder %v5084, %v5411
        %vm6111 = vcmp.lt.s32.totalorder %v5085, %v5411
        %vm6112 = vcmp.lt.s32.totalorder %v5086, %v5411
        %vm6113 = vcmp.lt.s32.totalorder %v5087, %v5411
        %vm6114 = vcmp.lt.s32.totalorder %v5088, %v5411
        %vm6115 = vcmp.lt.s32.totalorder %v5089, %v5411
        %vm6116 = vcmp.lt.s32.totalorder %v5090, %v5411
        %vm6117 = vcmp.lt.s32.totalorder %v5091, %v5411
        %vm6118 = vcmp.lt.s32.totalorder %v5092, %v5411
        %vm6119 = vcmp.lt.s32.totalorder %v5093, %v5411
        %vm6120 = vcmp.lt.s32.totalorder %v5094, %v5411
        %vm6121 = vcmp.lt.s32.totalorder %v5095, %v5411
        %vm6122 = vcmp.lt.s32.totalorder %v5096, %v5411
        %vm6123 = vcmp.lt.s32.totalorder %v5097, %v5411
        %vm6124 = vcmp.lt.s32.totalorder %v5098, %v5411
        %vm6125 = vcmp.lt.s32.totalorder %v5099, %v5411
        %vm6126 = vcmp.lt.s32.totalorder %v5100, %v5411
        %vm6127 = vcmp.lt.s32.totalorder %v5101, %v5411
        %vm6128 = vcmp.lt.s32.totalorder %v5102, %v5411
        %vm6129 = vcmp.lt.s32.totalorder %v5103, %v5411
        %vm6130 = vcmp.lt.s32.totalorder %v5104, %v5411
        %vm6131 = vcmp.lt.s32.totalorder %v5105, %v5411
        %vm6132 = vcmp.lt.s32.totalorder %v5106, %v5411
        %vm6133 = vcmp.lt.s32.totalorder %v5107, %v5411
        %vm6134 = vcmp.lt.s32.totalorder %v5108, %v5411
        %vm6135 = vcmp.lt.s32.totalorder %v5109, %v5411
        %vm6136 = vcmp.lt.s32.totalorder %v5110, %v5411
        %vm6137 = vcmp.lt.s32.totalorder %v5111, %v5411
        %vm6138 = vcmp.lt.s32.totalorder %v5112, %v5411
        %vm6139 = vcmp.lt.s32.totalorder %v5113, %v5411
        %vm6140 = vcmp.lt.s32.totalorder %v5114, %v5411
        %vm6141 = vcmp.lt.s32.totalorder %v5115, %v5411
        %vm6142 = vcmp.lt.s32.totalorder %v5116, %v5411
        %vm6143 = vcmp.lt.s32.totalorder %v5117, %v5411
        %vm6144 = vcmp.lt.s32.totalorder %v5118, %v5411
        %vm6145 = vcmp.lt.s32.totalorder %v5119, %v5411
        %vm6146 = vcmp.lt.s32.totalorder %v5120, %v5411
        %vm6147 = vcmp.lt.s32.totalorder %v5121, %v5411
        %vm6148 = vcmp.lt.s32.totalorder %v5122, %v5411
        %vm6149 = vcmp.lt.s32.totalorder %v5123, %v5411
        %vm6150 = vcmp.lt.s32.totalorder %v5124, %v5411
        %vm6151 = vcmp.lt.s32.totalorder %v5125, %v5411
        %vm6152 = vcmp.lt.s32.totalorder %v5126, %v5411
        %vm6153 = vcmp.lt.s32.totalorder %v5127, %v5411
        %vm6154 = vcmp.lt.s32.totalorder %v5128, %v5411
        %vm6155 = vcmp.lt.s32.totalorder %v5129, %v5411
        %vm6156 = vcmp.lt.s32.totalorder %v5130, %v5411
        %vm6157 = vcmp.lt.s32.totalorder %v5131, %v5411
        %vm6158 = vcmp.lt.s32.totalorder %v5132, %v5411
        %vm6159 = vcmp.lt.s32.totalorder %v5133, %v5411
        %vm6160 = vcmp.lt.s32.totalorder %v5134, %v5411
        %vm6161 = vcmp.lt.s32.totalorder %v5135, %v5411
        %vm6162 = vcmp.lt.s32.totalorder %v5136, %v5411
        %vm6163 = vcmp.lt.s32.totalorder %v5137, %v5411
        %vm6164 = vcmp.lt.s32.totalorder %v5138, %v5411
        %vm6165 = vcmp.lt.s32.totalorder %v5139, %v5411
        %vm6166 = vcmp.lt.s32.totalorder %v5140, %v5411
        %vm6167 = vcmp.lt.s32.totalorder %v5141, %v5411
        %vm6168 = vcmp.lt.s32.totalorder %v5142, %v5411
        %vm6169 = vcmp.lt.s32.totalorder %v5143, %v5411
        %vm6170 = vcmp.lt.s32.totalorder %v5144, %v5411
        %vm6171 = vcmp.lt.s32.totalorder %v5145, %v5411
        %vm6172 = vcmp.lt.s32.totalorder %v5146, %v5411
        %vm6173 = vcmp.lt.s32.totalorder %v5147, %v5411
        %vm6174 = vcmp.lt.s32.totalorder %v5148, %v5411
        %vm6175 = vcmp.lt.s32.totalorder %v5149, %v5411
        %vm6176 = vcmp.lt.s32.totalorder %v5150, %v5411
        %vm6177 = vcmp.lt.s32.totalorder %v5151, %v5411
        %vm6178 = vcmp.lt.s32.totalorder %v5152, %v5411
        %vm6179 = vcmp.lt.s32.totalorder %v5153, %v5411
        %vm6180 = vcmp.lt.s32.totalorder %v5154, %v5411
        %vm6181 = vcmp.lt.s32.totalorder %v5155, %v5411
        %vm6182 = vcmp.lt.s32.totalorder %v5156, %v5411
        %vm6183 = vcmp.lt.s32.totalorder %v5157, %v5411
        %vm6184 = vcmp.lt.s32.totalorder %v5158, %v5411
        %vm6185 = vcmp.lt.s32.totalorder %v5159, %v5411
        %vm6186 = vcmp.lt.s32.totalorder %v5160, %v5411
        %vm6187 = vcmp.lt.s32.totalorder %v5161, %v5411
        %vm6188 = vcmp.lt.s32.totalorder %v5162, %v5411
        %vm6189 = vcmp.lt.s32.totalorder %v5163, %v5411
        %vm6190 = vcmp.lt.s32.totalorder %v5164, %v5411
        %vm6191 = vcmp.lt.s32.totalorder %v5165, %v5411
        %vm6192 = vcmp.lt.s32.totalorder %v5166, %v5411
        %vm6193 = vcmp.lt.s32.totalorder %v5167, %v5411
        %vm6194 = vcmp.lt.s32.totalorder %v5168, %v5411
        %vm6195 = vcmp.lt.s32.totalorder %v5169, %v5411
        %vm6196 = vcmp.lt.s32.totalorder %v5170, %v5411
        %vm6197 = vcmp.lt.s32.totalorder %v5171, %v5411
        %vm6198 = vcmp.lt.s32.totalorder %v5172, %v5411
        %vm6199 = vcmp.lt.s32.totalorder %v5173, %v5411
        %vm6200 = vcmp.lt.s32.totalorder %v5174, %v5411
        %vm6201 = vcmp.lt.s32.totalorder %v5175, %v5411
        %vm6202 = vcmp.lt.s32.totalorder %v5176, %v5411
        %vm6203 = vcmp.lt.s32.totalorder %v5177, %v5411
        %vm6204 = vcmp.lt.s32.totalorder %v5178, %v5411
        %vm6205 = vcmp.lt.s32.totalorder %v5179, %v5411
        %vm6206 = vcmp.lt.s32.totalorder %v5180, %v5411
        %vm6207 = vcmp.lt.s32.totalorder %v5181, %v5411
        %vm6208 = vcmp.lt.s32.totalorder %v5182, %v5411
        %vm6209 = vcmp.lt.s32.totalorder %v5183, %v5411
        %vm6210 = vcmp.lt.s32.totalorder %v5184, %v5411
        %vm6211 = vcmp.lt.s32.totalorder %v5185, %v5411
        %vm6212 = vcmp.lt.s32.totalorder %v5186, %v5411
        %vm6213 = vcmp.lt.s32.totalorder %v5187, %v5411
        %vm6214 = vcmp.lt.s32.totalorder %v5188, %v5411
        %vm6215 = vcmp.lt.s32.totalorder %v5189, %v5411
        %vm6216 = vcmp.lt.s32.totalorder %v5190, %v5411
        %vm6217 = vcmp.lt.s32.totalorder %v5191, %v5411
        %vm6218 = vcmp.lt.s32.totalorder %v5192, %v5411
        %vm6219 = vcmp.lt.s32.totalorder %v5193, %v5411
        %vm6220 = vcmp.lt.s32.totalorder %v5194, %v5411
        %vm6221 = vcmp.lt.s32.totalorder %v5195, %v5411
        %vm6222 = vcmp.lt.s32.totalorder %v5196, %v5411
        %vm6223 = vcmp.lt.s32.totalorder %v5197, %v5411
        %vm6224 = vcmp.lt.s32.totalorder %v5198, %v5411
        %vm6225 = vcmp.lt.s32.totalorder %v5199, %v5411
        %vm6226 = vcmp.lt.s32.totalorder %v5200, %v5411
        %vm6227 = vcmp.lt.s32.totalorder %v5201, %v5411
        %vm6228 = vcmp.lt.s32.totalorder %v5202, %v5411
        %vm6229 = vcmp.lt.s32.totalorder %v5203, %v5411
        %vm6230 = vcmp.lt.s32.totalorder %v5204, %v5411
        %vm6231 = vcmp.lt.s32.totalorder %v5205, %v5411
        %vm6232 = vcmp.lt.s32.totalorder %v5206, %v5411
        %vm6233 = vcmp.lt.s32.totalorder %v5207, %v5411
        %vm6234 = vcmp.lt.s32.totalorder %v5208, %v5411
        %vm6235 = vcmp.lt.s32.totalorder %v5209, %v5411
        %vm6236 = vcmp.lt.s32.totalorder %v5210, %v5411
        %vm6237 = vcmp.lt.s32.totalorder %v5211, %v5411
        %vm6238 = vcmp.lt.s32.totalorder %v5212, %v5411
        %vm6239 = vcmp.lt.s32.totalorder %v5213, %v5411
        %vm6240 = vcmp.lt.s32.totalorder %v5214, %v5411
        %vm6241 = vcmp.lt.s32.totalorder %v5215, %v5411
        %vm6242 = vcmp.lt.s32.totalorder %v5216, %v5411
        %vm6243 = vcmp.lt.s32.totalorder %v5217, %v5411
        %vm6244 = vcmp.lt.s32.totalorder %v5218, %v5411
        %vm6245 = vcmp.lt.s32.totalorder %v5219, %v5411
        %vm6246 = vcmp.lt.s32.totalorder %v5220, %v5411
        %vm6247 = vcmp.lt.s32.totalorder %v5221, %v5411
        %vm6248 = vcmp.lt.s32.totalorder %v5222, %v5411
        %vm6249 = vcmp.lt.s32.totalorder %v5223, %v5411
        %vm6250 = vcmp.lt.s32.totalorder %v5224, %v5411
        %vm6251 = vcmp.lt.s32.totalorder %v5225, %v5411
        %vm6252 = vcmp.lt.s32.totalorder %v5226, %v5411
        %vm6253 = vcmp.lt.s32.totalorder %v5227, %v5411
        %vm6254 = vcmp.lt.s32.totalorder %v5228, %v5411
        %vm6255 = vcmp.lt.s32.totalorder %v5229, %v5411
        %vm6256 = vcmp.lt.s32.totalorder %v5230, %v5411
        %vm6257 = vcmp.lt.s32.totalorder %v5231, %v5411
        %vm6258 = vcmp.lt.s32.totalorder %v5232, %v5411
        %vm6259 = vcmp.lt.s32.totalorder %v5233, %v5411
        %vm6260 = vcmp.lt.s32.totalorder %v5234, %v5411
        %vm6261 = vcmp.lt.s32.totalorder %v5235, %v5411
        %vm6262 = vcmp.lt.s32.totalorder %v5236, %v5411
        %vm6263 = vcmp.lt.s32.totalorder %v5237, %v5411
        %vm6264 = vcmp.lt.s32.totalorder %v5238, %v5411
        %vm6265 = vcmp.lt.s32.totalorder %v5239, %v5411
        %vm6266 = vcmp.lt.s32.totalorder %v5240, %v5411
        %vm6267 = vcmp.lt.s32.totalorder %v5241, %v5411
        %vm6268 = vcmp.lt.s32.totalorder %v5242, %v5411
        %vm6269 = vcmp.lt.s32.totalorder %v5243, %v5411
        %vm6270 = vcmp.lt.s32.totalorder %v5244, %v5411
        %vm6271 = vcmp.lt.s32.totalorder %v5245, %v5411
        %vm6272 = vcmp.lt.s32.totalorder %v5246, %v5411
        %vm6273 = vcmp.lt.s32.totalorder %v5247, %v5411
        %vm6274 = vcmp.lt.s32.totalorder %v5248, %v5411
        %vm6275 = vcmp.lt.s32.totalorder %v5249, %v5411
        %vm6276 = vcmp.lt.s32.totalorder %v5250, %v5411
        %vm6277 = vcmp.lt.s32.totalorder %v5251, %v5411
        %vm6278 = vcmp.lt.s32.totalorder %v5252, %v5411
        %vm6279 = vcmp.lt.s32.totalorder %v5253, %v5411
        %vm6280 = vcmp.lt.s32.totalorder %v5254, %v5411
        %vm6281 = vcmp.lt.s32.totalorder %v5255, %v5411
        %vm6282 = vcmp.lt.s32.totalorder %v5256, %v5411
        %vm6283 = vcmp.lt.s32.totalorder %v5257, %v5411
        %vm6284 = vcmp.lt.s32.totalorder %v5258, %v5411
        %vm6285 = vcmp.lt.s32.totalorder %v5259, %v5411
        %vm6286 = vcmp.lt.s32.totalorder %v5260, %v5411
        %vm6287 = vcmp.lt.s32.totalorder %v5261, %v5411
        %vm6288 = vcmp.lt.s32.totalorder %v5262, %v5411
        %vm6289 = vcmp.lt.s32.totalorder %v5263, %v5411
        %vm6290 = vcmp.lt.s32.totalorder %v5264, %v5411
        %vm6291 = vcmp.lt.s32.totalorder %v5265, %v5411
        %vm6292 = vcmp.lt.s32.totalorder %v5266, %v5411
        %vm6293 = vcmp.lt.s32.totalorder %v5267, %v5411
        %vm6294 = vcmp.lt.s32.totalorder %v5268, %v5411
        %vm6295 = vcmp.lt.s32.totalorder %v5269, %v5411
        %vm6296 = vcmp.lt.s32.totalorder %v5270, %v5411
        %vm6297 = vcmp.lt.s32.totalorder %v5271, %v5411
        %vm6298 = vcmp.lt.s32.totalorder %v5272, %v5411
        %vm6299 = vcmp.lt.s32.totalorder %v5273, %v5411
        %vm6300 = vcmp.lt.s32.totalorder %v5274, %v5411
        %vm6301 = vcmp.lt.s32.totalorder %v5275, %v5411
        %vm6302 = vcmp.lt.s32.totalorder %v5276, %v5411
        %vm6303 = vcmp.lt.s32.totalorder %v5277, %v5411
        %vm6304 = vcmp.lt.s32.totalorder %v5278, %v5411
        %vm6305 = vcmp.lt.s32.totalorder %v5279, %v5411
        %vm6306 = vcmp.lt.s32.totalorder %v5280, %v5411
        %vm6307 = vcmp.lt.s32.totalorder %v5281, %v5411
        %vm6308 = vcmp.lt.s32.totalorder %v5282, %v5411
        %vm6309 = vcmp.lt.s32.totalorder %v5283, %v5411
        %vm6310 = vcmp.lt.s32.totalorder %v5284, %v5411
        %vm6311 = vcmp.lt.s32.totalorder %v5285, %v5411
        %vm6312 = vcmp.lt.s32.totalorder %v5286, %v5411
        %vm6313 = vcmp.lt.s32.totalorder %v5287, %v5411
        %vm6314 = vcmp.lt.s32.totalorder %v5288, %v5411
        %vm6315 = vcmp.lt.s32.totalorder %v5289, %v5411
        %vm6316 = vcmp.lt.s32.totalorder %v5290, %v5411
        %vm6317 = vcmp.lt.s32.totalorder %v5291, %v5411
        %vm6318 = vcmp.lt.s32.totalorder %v5292, %v5411
        %vm6319 = vcmp.lt.s32.totalorder %v5293, %v5411
        %vm6320 = vcmp.lt.s32.totalorder %v5294, %v5411
        %vm6321 = vcmp.lt.s32.totalorder %v5295, %v5411
        %vm6322 = vcmp.lt.s32.totalorder %v5296, %v5411
        %vm6323 = vcmp.lt.s32.totalorder %v5297, %v5411
        %vm6324 = vcmp.lt.s32.totalorder %v5298, %v5411
        %vm6325 = vcmp.lt.s32.totalorder %v5299, %v5411
        %vm6326 = vcmp.lt.s32.totalorder %v5300, %v5411
        %vm6327 = vcmp.lt.s32.totalorder %v5301, %v5411
        %vm6328 = vcmp.lt.s32.totalorder %v5302, %v5411
        %vm6329 = vcmp.lt.s32.totalorder %v5303, %v5411
        %vm6330 = vcmp.lt.s32.totalorder %v5304, %v5411
        %vm6331 = vcmp.lt.s32.totalorder %v5305, %v5411
        %vm6332 = vcmp.lt.s32.totalorder %v5306, %v5411
        %vm6333 = vcmp.lt.s32.totalorder %v5307, %v5411
        %vm6334 = vcmp.lt.s32.totalorder %v5308, %v5411
        %vm6335 = vcmp.lt.s32.totalorder %v5309, %v5411
        %vm6336 = vcmp.lt.s32.totalorder %v5310, %v5411
        %vm6337 = vcmp.lt.s32.totalorder %v5311, %v5411
        %vm6338 = vcmp.lt.s32.totalorder %v5312, %v5411
        %vm6339 = vcmp.lt.s32.totalorder %v5313, %v5411
        %vm6340 = vcmp.lt.s32.totalorder %v5314, %v5411
        %vm6341 = vcmp.lt.s32.totalorder %v5315, %v5411
        %vm6342 = vcmp.lt.s32.totalorder %v5316, %v5411
        %vm6343 = vcmp.lt.s32.totalorder %v5317, %v5411
        %vm6344 = vcmp.lt.s32.totalorder %v5318, %v5411
        %vm6345 = vcmp.lt.s32.totalorder %v5319, %v5411
        %vm6346 = vcmp.lt.s32.totalorder %v5320, %v5411
        %vm6347 = vcmp.lt.s32.totalorder %v5321, %v5411
        %vm6348 = vcmp.lt.s32.totalorder %v5322, %v5411
        %vm6349 = vcmp.lt.s32.totalorder %v5323, %v5411
        %vm6350 = vcmp.lt.s32.totalorder %v5324, %v5411
        %vm6351 = vcmp.lt.s32.totalorder %v5325, %v5411
        %vm6352 = vcmp.lt.s32.totalorder %v5326, %v5411
        %vm6353 = vcmp.lt.s32.totalorder %v5327, %v5411
        %vm6354 = vcmp.lt.s32.totalorder %v5328, %v5411
        %vm6355 = vcmp.lt.s32.totalorder %v5329, %v5411
        %vm6356 = vcmp.lt.s32.totalorder %v5330, %v5411
        %vm6357 = vcmp.lt.s32.totalorder %v5331, %v5411
        %vm6358 = vcmp.lt.s32.totalorder %v5332, %v5411
        %vm6359 = vcmp.lt.s32.totalorder %v5333, %v5411
        %vm6360 = vcmp.lt.s32.totalorder %v5334, %v5411
        %vm6361 = vcmp.lt.s32.totalorder %v5335, %v5411
        %vm6362 = vcmp.lt.s32.totalorder %v5336, %v5411
        %vm6363 = vcmp.lt.s32.totalorder %v5337, %v5411
        %vm6364 = vcmp.lt.s32.totalorder %v5338, %v5411
        %vm6365 = vcmp.lt.s32.totalorder %v5339, %v5411
        %vm6366 = vcmp.lt.s32.totalorder %v5340, %v5411
        %vm6367 = vcmp.lt.s32.totalorder %v5341, %v5411
        %vm6368 = vcmp.lt.s32.totalorder %v5342, %v5411
        %vm6369 = vcmp.lt.s32.totalorder %v5343, %v5411
        %vm6370 = vcmp.lt.s32.totalorder %v5344, %v5411
        %vm6371 = vcmp.lt.s32.totalorder %v5345, %v5411
        %vm6372 = vcmp.lt.s32.totalorder %v5346, %v5411
        %vm6373 = vcmp.lt.s32.totalorder %v5347, %v5411
        %vm6374 = vcmp.lt.s32.totalorder %v5348, %v5411
        %vm6375 = vcmp.lt.s32.totalorder %v5349, %v5411
        %vm6376 = vcmp.lt.s32.totalorder %v5350, %v5411
        %vm6377 = vcmp.lt.s32.totalorder %v5351, %v5411
        %vm6378 = vcmp.lt.s32.totalorder %v5352, %v5411
        %vm6379 = vcmp.lt.s32.totalorder %v5353, %v5411
        %vm6380 = vcmp.lt.s32.totalorder %v5354, %v5411
        %vm6381 = vcmp.lt.s32.totalorder %v5355, %v5411
        %vm6382 = vcmp.lt.s32.totalorder %v5356, %v5411
        %vm6383 = vcmp.lt.s32.totalorder %v5357, %v5411
        %vm6384 = vcmp.lt.s32.totalorder %v5358, %v5411
        %vm6385 = vcmp.lt.s32.totalorder %v5359, %v5411
        %vm6386 = vcmp.lt.s32.totalorder %v5360, %v5411
        %vm6387 = vcmp.lt.s32.totalorder %v5361, %v5411
        %vm6388 = vcmp.lt.s32.totalorder %v5362, %v5411
        %vm6389 = vcmp.lt.s32.totalorder %v5363, %v5411
        %vm6390 = vcmp.lt.s32.totalorder %v5364, %v5411
        %vm6391 = vcmp.lt.s32.totalorder %v5365, %v5411
        %vm6392 = vcmp.lt.s32.totalorder %v5366, %v5411
        %vm6393 = vcmp.lt.s32.totalorder %v5367, %v5411
        %vm6394 = vcmp.lt.s32.totalorder %v5368, %v5411
        %vm6395 = vcmp.lt.s32.totalorder %v5369, %v5411
        %vm6396 = vcmp.lt.s32.totalorder %v5370, %v5411
        %vm6397 = vcmp.lt.s32.totalorder %v5371, %v5411
        %vm6398 = vcmp.lt.s32.totalorder %v5372, %v5411
        %vm6399 = vcmp.lt.s32.totalorder %v5373, %v5411
        %vm6400 = vcmp.lt.s32.totalorder %v5374, %v5411
        %vm6401 = vcmp.lt.s32.totalorder %v5375, %v5411
        %vm6402 = vcmp.lt.s32.totalorder %v5376, %v5411
        %vm6403 = vcmp.lt.s32.totalorder %v5377, %v5411
        %vm6404 = vcmp.lt.s32.totalorder %v5378, %v5411
        %vm6405 = vcmp.lt.s32.totalorder %v5379, %v5411
        %vm6406 = vcmp.lt.s32.totalorder %v5380, %v5411
        %vm6407 = vcmp.lt.s32.totalorder %v5381, %v5411
        %vm6408 = vcmp.lt.s32.totalorder %v5382, %v5411
        %vm6409 = vcmp.lt.s32.totalorder %v5383, %v5411
        %vm6410 = vcmp.lt.s32.totalorder %v5384, %v5411
        %vm6411 = vcmp.lt.s32.totalorder %v5385, %v5411
        %vm6412 = vcmp.lt.s32.totalorder %v5386, %v5411
        %vm6413 = vcmp.lt.s32.totalorder %v5387, %v5411
        %vm6414 = vcmp.lt.s32.totalorder %v5388, %v5411
        %vm6415 = vcmp.lt.s32.totalorder %v5389, %v5411
        %vm6416 = vcmp.lt.s32.totalorder %v5390, %v5411
        %vm6417 = vcmp.lt.s32.totalorder %v5391, %v5411
        %vm6418 = vcmp.lt.s32.totalorder %v5392, %v5411
        %vm6419 = vcmp.lt.s32.totalorder %v5393, %v5411
        %vm6420 = vcmp.lt.s32.totalorder %v5394, %v5411
        %vm6421 = vcmp.lt.s32.totalorder %v5395, %v5411
        %vm6422 = vcmp.lt.s32.totalorder %v5396, %v5411
        %vm6423 = vcmp.lt.s32.totalorder %v5397, %v5411
        %vm6424 = vcmp.lt.s32.totalorder %v5398, %v5411
        %vm6425 = vcmp.lt.s32.totalorder %v5399, %v5411
        %vm6426 = vcmp.lt.s32.totalorder %v5400, %v5411
        %vm6427 = vcmp.lt.s32.totalorder %v5401, %v5411
        %vm6428 = vcmp.lt.s32.totalorder %v5402, %v5411
        %vm6429 = vcmp.lt.s32.totalorder %v5403, %v5411
        %vm6430 = vcmp.lt.s32.totalorder %v5404, %v5411
        %vm6431 = vcmp.lt.s32.totalorder %v5405, %v5411
        %vm6432 = vcmp.lt.s32.totalorder %v5406, %v5411
        %vm6433 = vcmp.lt.s32.totalorder %v5407, %v5411
        %vm6434 = vcmp.lt.s32.totalorder %v5408, %v5411
        %vm6435 = vcmp.lt.s32.totalorder %v5409, %v5411
        %v6436 = vsel %vm5412, %v3358, 0.0
        %v6437 = vsel %vm5413, %v3359, 0.0
        %v6438 = vsel %vm5414, %v3360, 0.0
        %v6439 = vsel %vm5415, %v3361, 0.0
        %v6440 = vsel %vm5416, %v3362, 0.0
        %v6441 = vsel %vm5417, %v3363, 0.0
        %v6442 = vsel %vm5418, %v3364, 0.0
        %v6443 = vsel %vm5419, %v3365, 0.0
        %v6444 = vsel %vm5420, %v3366, 0.0
        %v6445 = vsel %vm5421, %v3367, 0.0
        %v6446 = vsel %vm5422, %v3368, 0.0
        %v6447 = vsel %vm5423, %v3369, 0.0
        %v6448 = vsel %vm5424, %v3370, 0.0
        %v6449 = vsel %vm5425, %v3371, 0.0
        %v6450 = vsel %vm5426, %v3372, 0.0
        %v6451 = vsel %vm5427, %v3373, 0.0
        %v6452 = vsel %vm5428, %v3374, 0.0
        %v6453 = vsel %vm5429, %v3375, 0.0
        %v6454 = vsel %vm5430, %v3376, 0.0
        %v6455 = vsel %vm5431, %v3377, 0.0
        %v6456 = vsel %vm5432, %v3378, 0.0
        %v6457 = vsel %vm5433, %v3379, 0.0
        %v6458 = vsel %vm5434, %v3380, 0.0
        %v6459 = vsel %vm5435, %v3381, 0.0
        %v6460 = vsel %vm5436, %v3382, 0.0
        %v6461 = vsel %vm5437, %v3383, 0.0
        %v6462 = vsel %vm5438, %v3384, 0.0
        %v6463 = vsel %vm5439, %v3385, 0.0
        %v6464 = vsel %vm5440, %v3386, 0.0
        %v6465 = vsel %vm5441, %v3387, 0.0
        %v6466 = vsel %vm5442, %v3388, 0.0
        %v6467 = vsel %vm5443, %v3389, 0.0
        %v6468 = vsel %vm5444, %v3390, 0.0
        %v6469 = vsel %vm5445, %v3391, 0.0
        %v6470 = vsel %vm5446, %v3392, 0.0
        %v6471 = vsel %vm5447, %v3393, 0.0
        %v6472 = vsel %vm5448, %v3394, 0.0
        %v6473 = vsel %vm5449, %v3395, 0.0
        %v6474 = vsel %vm5450, %v3396, 0.0
        %v6475 = vsel %vm5451, %v3397, 0.0
        %v6476 = vsel %vm5452, %v3398, 0.0
        %v6477 = vsel %vm5453, %v3399, 0.0
        %v6478 = vsel %vm5454, %v3400, 0.0
        %v6479 = vsel %vm5455, %v3401, 0.0
        %v6480 = vsel %vm5456, %v3402, 0.0
        %v6481 = vsel %vm5457, %v3403, 0.0
        %v6482 = vsel %vm5458, %v3404, 0.0
        %v6483 = vsel %vm5459, %v3405, 0.0
        %v6484 = vsel %vm5460, %v3406, 0.0
        %v6485 = vsel %vm5461, %v3407, 0.0
        %v6486 = vsel %vm5462, %v3408, 0.0
        %v6487 = vsel %vm5463, %v3409, 0.0
        %v6488 = vsel %vm5464, %v3410, 0.0
        %v6489 = vsel %vm5465, %v3411, 0.0
        %v6490 = vsel %vm5466, %v3412, 0.0
        %v6491 = vsel %vm5467, %v3413, 0.0
        %v6492 = vsel %vm5468, %v3414, 0.0
        %v6493 = vsel %vm5469, %v3415, 0.0
        %v6494 = vsel %vm5470, %v3416, 0.0
        %v6495 = vsel %vm5471, %v3417, 0.0
        %v6496 = vsel %vm5472, %v3418, 0.0
        %v6497 = vsel %vm5473, %v3419, 0.0
        %v6498 = vsel %vm5474, %v3420, 0.0
        %v6499 = vsel %vm5475, %v3421, 0.0
        %v6500 = vsel %vm5476, %v3422, 0.0
        %v6501 = vsel %vm5477, %v3423, 0.0
        %v6502 = vsel %vm5478, %v3424, 0.0
        %v6503 = vsel %vm5479, %v3425, 0.0
        %v6504 = vsel %vm5480, %v3426, 0.0
        %v6505 = vsel %vm5481, %v3427, 0.0
        %v6506 = vsel %vm5482, %v3428, 0.0
        %v6507 = vsel %vm5483, %v3429, 0.0
        %v6508 = vsel %vm5484, %v3430, 0.0
        %v6509 = vsel %vm5485, %v3431, 0.0
        %v6510 = vsel %vm5486, %v3432, 0.0
        %v6511 = vsel %vm5487, %v3433, 0.0
        %v6512 = vsel %vm5488, %v3434, 0.0
        %v6513 = vsel %vm5489, %v3435, 0.0
        %v6514 = vsel %vm5490, %v3436, 0.0
        %v6515 = vsel %vm5491, %v3437, 0.0
        %v6516 = vsel %vm5492, %v3438, 0.0
        %v6517 = vsel %vm5493, %v3439, 0.0
        %v6518 = vsel %vm5494, %v3440, 0.0
        %v6519 = vsel %vm5495, %v3441, 0.0
        %v6520 = vsel %vm5496, %v3442, 0.0
        %v6521 = vsel %vm5497, %v3443, 0.0
        %v6522 = vsel %vm5498, %v3444, 0.0
        %v6523 = vsel %vm5499, %v3445, 0.0
        %v6524 = vsel %vm5500, %v3446, 0.0
        %v6525 = vsel %vm5501, %v3447, 0.0
        %v6526 = vsel %vm5502, %v3448, 0.0
        %v6527 = vsel %vm5503, %v3449, 0.0
        %v6528 = vsel %vm5504, %v3450, 0.0
        %v6529 = vsel %vm5505, %v3451, 0.0
        %v6530 = vsel %vm5506, %v3452, 0.0
        %v6531 = vsel %vm5507, %v3453, 0.0
        %v6532 = vsel %vm5508, %v3454, 0.0
        %v6533 = vsel %vm5509, %v3455, 0.0
        %v6534 = vsel %vm5510, %v3456, 0.0
        %v6535 = vsel %vm5511, %v3457, 0.0
        %v6536 = vsel %vm5512, %v3458, 0.0
        %v6537 = vsel %vm5513, %v3459, 0.0
        %v6538 = vsel %vm5514, %v3460, 0.0
        %v6539 = vsel %vm5515, %v3461, 0.0
        %v6540 = vsel %vm5516, %v3462, 0.0
        %v6541 = vsel %vm5517, %v3463, 0.0
        %v6542 = vsel %vm5518, %v3464, 0.0
        %v6543 = vsel %vm5519, %v3465, 0.0
        %v6544 = vsel %vm5520, %v3466, 0.0
        %v6545 = vsel %vm5521, %v3467, 0.0
        %v6546 = vsel %vm5522, %v3468, 0.0
        %v6547 = vsel %vm5523, %v3469, 0.0
        %v6548 = vsel %vm5524, %v3470, 0.0
        %v6549 = vsel %vm5525, %v3471, 0.0
        %v6550 = vsel %vm5526, %v3472, 0.0
        %v6551 = vsel %vm5527, %v3473, 0.0
        %v6552 = vsel %vm5528, %v3474, 0.0
        %v6553 = vsel %vm5529, %v3475, 0.0
        %v6554 = vsel %vm5530, %v3476, 0.0
        %v6555 = vsel %vm5531, %v3477, 0.0
        %v6556 = vsel %vm5532, %v3478, 0.0
        %v6557 = vsel %vm5533, %v3479, 0.0
        %v6558 = vsel %vm5534, %v3480, 0.0
        %v6559 = vsel %vm5535, %v3481, 0.0
        %v6560 = vsel %vm5536, %v3482, 0.0
        %v6561 = vsel %vm5537, %v3483, 0.0
        %v6562 = vsel %vm5538, %v3484, 0.0
        %v6563 = vsel %vm5539, %v3485, 0.0
        %v6564 = vsel %vm5540, %v3486, 0.0
        %v6565 = vsel %vm5541, %v3487, 0.0
        %v6566 = vsel %vm5542, %v3488, 0.0
        %v6567 = vsel %vm5543, %v3489, 0.0
        %v6568 = vsel %vm5544, %v3490, 0.0
        %v6569 = vsel %vm5545, %v3491, 0.0
        %v6570 = vsel %vm5546, %v3492, 0.0
        %v6571 = vsel %vm5547, %v3493, 0.0
        %v6572 = vsel %vm5548, %v3494, 0.0
        %v6573 = vsel %vm5549, %v3495, 0.0
        %v6574 = vsel %vm5550, %v3496, 0.0
        %v6575 = vsel %vm5551, %v3497, 0.0
        %v6576 = vsel %vm5552, %v3498, 0.0
        %v6577 = vsel %vm5553, %v3499, 0.0
        %v6578 = vsel %vm5554, %v3500, 0.0
        %v6579 = vsel %vm5555, %v3501, 0.0
        %v6580 = vsel %vm5556, %v3502, 0.0
        %v6581 = vsel %vm5557, %v3503, 0.0
        %v6582 = vsel %vm5558, %v3504, 0.0
        %v6583 = vsel %vm5559, %v3505, 0.0
        %v6584 = vsel %vm5560, %v3506, 0.0
        %v6585 = vsel %vm5561, %v3507, 0.0
        %v6586 = vsel %vm5562, %v3508, 0.0
        %v6587 = vsel %vm5563, %v3509, 0.0
        %v6588 = vsel %vm5564, %v3510, 0.0
        %v6589 = vsel %vm5565, %v3511, 0.0
        %v6590 = vsel %vm5566, %v3512, 0.0
        %v6591 = vsel %vm5567, %v3513, 0.0
        %v6592 = vsel %vm5568, %v3514, 0.0
        %v6593 = vsel %vm5569, %v3515, 0.0
        %v6594 = vsel %vm5570, %v3516, 0.0
        %v6595 = vsel %vm5571, %v3517, 0.0
        %v6596 = vsel %vm5572, %v3518, 0.0
        %v6597 = vsel %vm5573, %v3519, 0.0
        %v6598 = vsel %vm5574, %v3520, 0.0
        %v6599 = vsel %vm5575, %v3521, 0.0
        %v6600 = vsel %vm5576, %v3522, 0.0
        %v6601 = vsel %vm5577, %v3523, 0.0
        %v6602 = vsel %vm5578, %v3524, 0.0
        %v6603 = vsel %vm5579, %v3525, 0.0
        %v6604 = vsel %vm5580, %v3526, 0.0
        %v6605 = vsel %vm5581, %v3527, 0.0
        %v6606 = vsel %vm5582, %v3528, 0.0
        %v6607 = vsel %vm5583, %v3529, 0.0
        %v6608 = vsel %vm5584, %v3530, 0.0
        %v6609 = vsel %vm5585, %v3531, 0.0
        %v6610 = vsel %vm5586, %v3532, 0.0
        %v6611 = vsel %vm5587, %v3533, 0.0
        %v6612 = vsel %vm5588, %v3534, 0.0
        %v6613 = vsel %vm5589, %v3535, 0.0
        %v6614 = vsel %vm5590, %v3536, 0.0
        %v6615 = vsel %vm5591, %v3537, 0.0
        %v6616 = vsel %vm5592, %v3538, 0.0
        %v6617 = vsel %vm5593, %v3539, 0.0
        %v6618 = vsel %vm5594, %v3540, 0.0
        %v6619 = vsel %vm5595, %v3541, 0.0
        %v6620 = vsel %vm5596, %v3542, 0.0
        %v6621 = vsel %vm5597, %v3543, 0.0
        %v6622 = vsel %vm5598, %v3544, 0.0
        %v6623 = vsel %vm5599, %v3545, 0.0
        %v6624 = vsel %vm5600, %v3546, 0.0
        %v6625 = vsel %vm5601, %v3547, 0.0
        %v6626 = vsel %vm5602, %v3548, 0.0
        %v6627 = vsel %vm5603, %v3549, 0.0
        %v6628 = vsel %vm5604, %v3550, 0.0
        %v6629 = vsel %vm5605, %v3551, 0.0
        %v6630 = vsel %vm5606, %v3552, 0.0
        %v6631 = vsel %vm5607, %v3553, 0.0
        %v6632 = vsel %vm5608, %v3554, 0.0
        %v6633 = vsel %vm5609, %v3555, 0.0
        %v6634 = vsel %vm5610, %v3556, 0.0
        %v6635 = vsel %vm5611, %v3557, 0.0
        %v6636 = vsel %vm5612, %v3558, 0.0
        %v6637 = vsel %vm5613, %v3559, 0.0
        %v6638 = vsel %vm5614, %v3560, 0.0
        %v6639 = vsel %vm5615, %v3561, 0.0
        %v6640 = vsel %vm5616, %v3562, 0.0
        %v6641 = vsel %vm5617, %v3563, 0.0
        %v6642 = vsel %vm5618, %v3564, 0.0
        %v6643 = vsel %vm5619, %v3565, 0.0
        %v6644 = vsel %vm5620, %v3566, 0.0
        %v6645 = vsel %vm5621, %v3567, 0.0
        %v6646 = vsel %vm5622, %v3568, 0.0
        %v6647 = vsel %vm5623, %v3569, 0.0
        %v6648 = vsel %vm5624, %v3570, 0.0
        %v6649 = vsel %vm5625, %v3571, 0.0
        %v6650 = vsel %vm5626, %v3572, 0.0
        %v6651 = vsel %vm5627, %v3573, 0.0
        %v6652 = vsel %vm5628, %v3574, 0.0
        %v6653 = vsel %vm5629, %v3575, 0.0
        %v6654 = vsel %vm5630, %v3576, 0.0
        %v6655 = vsel %vm5631, %v3577, 0.0
        %v6656 = vsel %vm5632, %v3578, 0.0
        %v6657 = vsel %vm5633, %v3579, 0.0
        %v6658 = vsel %vm5634, %v3580, 0.0
        %v6659 = vsel %vm5635, %v3581, 0.0
        %v6660 = vsel %vm5636, %v3582, 0.0
        %v6661 = vsel %vm5637, %v3583, 0.0
        %v6662 = vsel %vm5638, %v3584, 0.0
        %v6663 = vsel %vm5639, %v3585, 0.0
        %v6664 = vsel %vm5640, %v3586, 0.0
        %v6665 = vsel %vm5641, %v3587, 0.0
        %v6666 = vsel %vm5642, %v3588, 0.0
        %v6667 = vsel %vm5643, %v3589, 0.0
        %v6668 = vsel %vm5644, %v3590, 0.0
        %v6669 = vsel %vm5645, %v3591, 0.0
        %v6670 = vsel %vm5646, %v3592, 0.0
        %v6671 = vsel %vm5647, %v3593, 0.0
        %v6672 = vsel %vm5648, %v3594, 0.0
        %v6673 = vsel %vm5649, %v3595, 0.0
        %v6674 = vsel %vm5650, %v3596, 0.0
        %v6675 = vsel %vm5651, %v3597, 0.0
        %v6676 = vsel %vm5652, %v3598, 0.0
        %v6677 = vsel %vm5653, %v3599, 0.0
        %v6678 = vsel %vm5654, %v3600, 0.0
        %v6679 = vsel %vm5655, %v3601, 0.0
        %v6680 = vsel %vm5656, %v3602, 0.0
        %v6681 = vsel %vm5657, %v3603, 0.0
        %v6682 = vsel %vm5658, %v3604, 0.0
        %v6683 = vsel %vm5659, %v3605, 0.0
        %v6684 = vsel %vm5660, %v3606, 0.0
        %v6685 = vsel %vm5661, %v3607, 0.0
        %v6686 = vsel %vm5662, %v3608, 0.0
        %v6687 = vsel %vm5663, %v3609, 0.0
        %v6688 = vsel %vm5664, %v3610, 0.0
        %v6689 = vsel %vm5665, %v3611, 0.0
        %v6690 = vsel %vm5666, %v3612, 0.0
        %v6691 = vsel %vm5667, %v3613, 0.0
        %v6692 = vsel %vm5668, %v3614, 0.0
        %v6693 = vsel %vm5669, %v3615, 0.0
        %v6694 = vsel %vm5670, %v3616, 0.0
        %v6695 = vsel %vm5671, %v3617, 0.0
        %v6696 = vsel %vm5672, %v3618, 0.0
        %v6697 = vsel %vm5673, %v3619, 0.0
        %v6698 = vsel %vm5674, %v3620, 0.0
        %v6699 = vsel %vm5675, %v3621, 0.0
        %v6700 = vsel %vm5676, %v3622, 0.0
        %v6701 = vsel %vm5677, %v3623, 0.0
        %v6702 = vsel %vm5678, %v3624, 0.0
        %v6703 = vsel %vm5679, %v3625, 0.0
        %v6704 = vsel %vm5680, %v3626, 0.0
        %v6705 = vsel %vm5681, %v3627, 0.0
        %v6706 = vsel %vm5682, %v3628, 0.0
        %v6707 = vsel %vm5683, %v3629, 0.0
        %v6708 = vsel %vm5684, %v3630, 0.0
        %v6709 = vsel %vm5685, %v3631, 0.0
        %v6710 = vsel %vm5686, %v3632, 0.0
        %v6711 = vsel %vm5687, %v3633, 0.0
        %v6712 = vsel %vm5688, %v3634, 0.0
        %v6713 = vsel %vm5689, %v3635, 0.0
        %v6714 = vsel %vm5690, %v3636, 0.0
        %v6715 = vsel %vm5691, %v3637, 0.0
        %v6716 = vsel %vm5692, %v3638, 0.0
        %v6717 = vsel %vm5693, %v3639, 0.0
        %v6718 = vsel %vm5694, %v3640, 0.0
        %v6719 = vsel %vm5695, %v3641, 0.0
        %v6720 = vsel %vm5696, %v3642, 0.0
        %v6721 = vsel %vm5697, %v3643, 0.0
        %v6722 = vsel %vm5698, %v3644, 0.0
        %v6723 = vsel %vm5699, %v3645, 0.0
        %v6724 = vsel %vm5700, %v3646, 0.0
        %v6725 = vsel %vm5701, %v3647, 0.0
        %v6726 = vsel %vm5702, %v3648, 0.0
        %v6727 = vsel %vm5703, %v3649, 0.0
        %v6728 = vsel %vm5704, %v3650, 0.0
        %v6729 = vsel %vm5705, %v3651, 0.0
        %v6730 = vsel %vm5706, %v3652, 0.0
        %v6731 = vsel %vm5707, %v3653, 0.0
        %v6732 = vsel %vm5708, %v3654, 0.0
        %v6733 = vsel %vm5709, %v3655, 0.0
        %v6734 = vsel %vm5710, %v3656, 0.0
        %v6735 = vsel %vm5711, %v3657, 0.0
        %v6736 = vsel %vm5712, %v3658, 0.0
        %v6737 = vsel %vm5713, %v3659, 0.0
        %v6738 = vsel %vm5714, %v3660, 0.0
        %v6739 = vsel %vm5715, %v3661, 0.0
        %v6740 = vsel %vm5716, %v3662, 0.0
        %v6741 = vsel %vm5717, %v3663, 0.0
        %v6742 = vsel %vm5718, %v3664, 0.0
        %v6743 = vsel %vm5719, %v3665, 0.0
        %v6744 = vsel %vm5720, %v3666, 0.0
        %v6745 = vsel %vm5721, %v3667, 0.0
        %v6746 = vsel %vm5722, %v3668, 0.0
        %v6747 = vsel %vm5723, %v3669, 0.0
        %v6748 = vsel %vm5724, %v3670, 0.0
        %v6749 = vsel %vm5725, %v3671, 0.0
        %v6750 = vsel %vm5726, %v3672, 0.0
        %v6751 = vsel %vm5727, %v3673, 0.0
        %v6752 = vsel %vm5728, %v3674, 0.0
        %v6753 = vsel %vm5729, %v3675, 0.0
        %v6754 = vsel %vm5730, %v3676, 0.0
        %v6755 = vsel %vm5731, %v3677, 0.0
        %v6756 = vsel %vm5732, %v3678, 0.0
        %v6757 = vsel %vm5733, %v3679, 0.0
        %v6758 = vsel %vm5734, %v3680, 0.0
        %v6759 = vsel %vm5735, %v3681, 0.0
        %v6760 = vsel %vm5736, %v3682, 0.0
        %v6761 = vsel %vm5737, %v3683, 0.0
        %v6762 = vsel %vm5738, %v3684, 0.0
        %v6763 = vsel %vm5739, %v3685, 0.0
        %v6764 = vsel %vm5740, %v3686, 0.0
        %v6765 = vsel %vm5741, %v3687, 0.0
        %v6766 = vsel %vm5742, %v3688, 0.0
        %v6767 = vsel %vm5743, %v3689, 0.0
        %v6768 = vsel %vm5744, %v3690, 0.0
        %v6769 = vsel %vm5745, %v3691, 0.0
        %v6770 = vsel %vm5746, %v3692, 0.0
        %v6771 = vsel %vm5747, %v3693, 0.0
        %v6772 = vsel %vm5748, %v3694, 0.0
        %v6773 = vsel %vm5749, %v3695, 0.0
        %v6774 = vsel %vm5750, %v3696, 0.0
        %v6775 = vsel %vm5751, %v3697, 0.0
        %v6776 = vsel %vm5752, %v3698, 0.0
        %v6777 = vsel %vm5753, %v3699, 0.0
        %v6778 = vsel %vm5754, %v3700, 0.0
        %v6779 = vsel %vm5755, %v3701, 0.0
        %v6780 = vsel %vm5756, %v3702, 0.0
        %v6781 = vsel %vm5757, %v3703, 0.0
        %v6782 = vsel %vm5758, %v3704, 0.0
        %v6783 = vsel %vm5759, %v3705, 0.0
        %v6784 = vsel %vm5760, %v3706, 0.0
        %v6785 = vsel %vm5761, %v3707, 0.0
        %v6786 = vsel %vm5762, %v3708, 0.0
        %v6787 = vsel %vm5763, %v3709, 0.0
        %v6788 = vsel %vm5764, %v3710, 0.0
        %v6789 = vsel %vm5765, %v3711, 0.0
        %v6790 = vsel %vm5766, %v3712, 0.0
        %v6791 = vsel %vm5767, %v3713, 0.0
        %v6792 = vsel %vm5768, %v3714, 0.0
        %v6793 = vsel %vm5769, %v3715, 0.0
        %v6794 = vsel %vm5770, %v3716, 0.0
        %v6795 = vsel %vm5771, %v3717, 0.0
        %v6796 = vsel %vm5772, %v3718, 0.0
        %v6797 = vsel %vm5773, %v3719, 0.0
        %v6798 = vsel %vm5774, %v3720, 0.0
        %v6799 = vsel %vm5775, %v3721, 0.0
        %v6800 = vsel %vm5776, %v3722, 0.0
        %v6801 = vsel %vm5777, %v3723, 0.0
        %v6802 = vsel %vm5778, %v3724, 0.0
        %v6803 = vsel %vm5779, %v3725, 0.0
        %v6804 = vsel %vm5780, %v3726, 0.0
        %v6805 = vsel %vm5781, %v3727, 0.0
        %v6806 = vsel %vm5782, %v3728, 0.0
        %v6807 = vsel %vm5783, %v3729, 0.0
        %v6808 = vsel %vm5784, %v3730, 0.0
        %v6809 = vsel %vm5785, %v3731, 0.0
        %v6810 = vsel %vm5786, %v3732, 0.0
        %v6811 = vsel %vm5787, %v3733, 0.0
        %v6812 = vsel %vm5788, %v3734, 0.0
        %v6813 = vsel %vm5789, %v3735, 0.0
        %v6814 = vsel %vm5790, %v3736, 0.0
        %v6815 = vsel %vm5791, %v3737, 0.0
        %v6816 = vsel %vm5792, %v3738, 0.0
        %v6817 = vsel %vm5793, %v3739, 0.0
        %v6818 = vsel %vm5794, %v3740, 0.0
        %v6819 = vsel %vm5795, %v3741, 0.0
        %v6820 = vsel %vm5796, %v3742, 0.0
        %v6821 = vsel %vm5797, %v3743, 0.0
        %v6822 = vsel %vm5798, %v3744, 0.0
        %v6823 = vsel %vm5799, %v3745, 0.0
        %v6824 = vsel %vm5800, %v3746, 0.0
        %v6825 = vsel %vm5801, %v3747, 0.0
        %v6826 = vsel %vm5802, %v3748, 0.0
        %v6827 = vsel %vm5803, %v3749, 0.0
        %v6828 = vsel %vm5804, %v3750, 0.0
        %v6829 = vsel %vm5805, %v3751, 0.0
        %v6830 = vsel %vm5806, %v3752, 0.0
        %v6831 = vsel %vm5807, %v3753, 0.0
        %v6832 = vsel %vm5808, %v3754, 0.0
        %v6833 = vsel %vm5809, %v3755, 0.0
        %v6834 = vsel %vm5810, %v3756, 0.0
        %v6835 = vsel %vm5811, %v3757, 0.0
        %v6836 = vsel %vm5812, %v3758, 0.0
        %v6837 = vsel %vm5813, %v3759, 0.0
        %v6838 = vsel %vm5814, %v3760, 0.0
        %v6839 = vsel %vm5815, %v3761, 0.0
        %v6840 = vsel %vm5816, %v3762, 0.0
        %v6841 = vsel %vm5817, %v3763, 0.0
        %v6842 = vsel %vm5818, %v3764, 0.0
        %v6843 = vsel %vm5819, %v3765, 0.0
        %v6844 = vsel %vm5820, %v3766, 0.0
        %v6845 = vsel %vm5821, %v3767, 0.0
        %v6846 = vsel %vm5822, %v3768, 0.0
        %v6847 = vsel %vm5823, %v3769, 0.0
        %v6848 = vsel %vm5824, %v3770, 0.0
        %v6849 = vsel %vm5825, %v3771, 0.0
        %v6850 = vsel %vm5826, %v3772, 0.0
        %v6851 = vsel %vm5827, %v3773, 0.0
        %v6852 = vsel %vm5828, %v3774, 0.0
        %v6853 = vsel %vm5829, %v3775, 0.0
        %v6854 = vsel %vm5830, %v3776, 0.0
        %v6855 = vsel %vm5831, %v3777, 0.0
        %v6856 = vsel %vm5832, %v3778, 0.0
        %v6857 = vsel %vm5833, %v3779, 0.0
        %v6858 = vsel %vm5834, %v3780, 0.0
        %v6859 = vsel %vm5835, %v3781, 0.0
        %v6860 = vsel %vm5836, %v3782, 0.0
        %v6861 = vsel %vm5837, %v3783, 0.0
        %v6862 = vsel %vm5838, %v3784, 0.0
        %v6863 = vsel %vm5839, %v3785, 0.0
        %v6864 = vsel %vm5840, %v3786, 0.0
        %v6865 = vsel %vm5841, %v3787, 0.0
        %v6866 = vsel %vm5842, %v3788, 0.0
        %v6867 = vsel %vm5843, %v3789, 0.0
        %v6868 = vsel %vm5844, %v3790, 0.0
        %v6869 = vsel %vm5845, %v3791, 0.0
        %v6870 = vsel %vm5846, %v3792, 0.0
        %v6871 = vsel %vm5847, %v3793, 0.0
        %v6872 = vsel %vm5848, %v3794, 0.0
        %v6873 = vsel %vm5849, %v3795, 0.0
        %v6874 = vsel %vm5850, %v3796, 0.0
        %v6875 = vsel %vm5851, %v3797, 0.0
        %v6876 = vsel %vm5852, %v3798, 0.0
        %v6877 = vsel %vm5853, %v3799, 0.0
        %v6878 = vsel %vm5854, %v3800, 0.0
        %v6879 = vsel %vm5855, %v3801, 0.0
        %v6880 = vsel %vm5856, %v3802, 0.0
        %v6881 = vsel %vm5857, %v3803, 0.0
        %v6882 = vsel %vm5858, %v3804, 0.0
        %v6883 = vsel %vm5859, %v3805, 0.0
        %v6884 = vsel %vm5860, %v3806, 0.0
        %v6885 = vsel %vm5861, %v3807, 0.0
        %v6886 = vsel %vm5862, %v3808, 0.0
        %v6887 = vsel %vm5863, %v3809, 0.0
        %v6888 = vsel %vm5864, %v3810, 0.0
        %v6889 = vsel %vm5865, %v3811, 0.0
        %v6890 = vsel %vm5866, %v3812, 0.0
        %v6891 = vsel %vm5867, %v3813, 0.0
        %v6892 = vsel %vm5868, %v3814, 0.0
        %v6893 = vsel %vm5869, %v3815, 0.0
        %v6894 = vsel %vm5870, %v3816, 0.0
        %v6895 = vsel %vm5871, %v3817, 0.0
        %v6896 = vsel %vm5872, %v3818, 0.0
        %v6897 = vsel %vm5873, %v3819, 0.0
        %v6898 = vsel %vm5874, %v3820, 0.0
        %v6899 = vsel %vm5875, %v3821, 0.0
        %v6900 = vsel %vm5876, %v3822, 0.0
        %v6901 = vsel %vm5877, %v3823, 0.0
        %v6902 = vsel %vm5878, %v3824, 0.0
        %v6903 = vsel %vm5879, %v3825, 0.0
        %v6904 = vsel %vm5880, %v3826, 0.0
        %v6905 = vsel %vm5881, %v3827, 0.0
        %v6906 = vsel %vm5882, %v3828, 0.0
        %v6907 = vsel %vm5883, %v3829, 0.0
        %v6908 = vsel %vm5884, %v3830, 0.0
        %v6909 = vsel %vm5885, %v3831, 0.0
        %v6910 = vsel %vm5886, %v3832, 0.0
        %v6911 = vsel %vm5887, %v3833, 0.0
        %v6912 = vsel %vm5888, %v3834, 0.0
        %v6913 = vsel %vm5889, %v3835, 0.0
        %v6914 = vsel %vm5890, %v3836, 0.0
        %v6915 = vsel %vm5891, %v3837, 0.0
        %v6916 = vsel %vm5892, %v3838, 0.0
        %v6917 = vsel %vm5893, %v3839, 0.0
        %v6918 = vsel %vm5894, %v3840, 0.0
        %v6919 = vsel %vm5895, %v3841, 0.0
        %v6920 = vsel %vm5896, %v3842, 0.0
        %v6921 = vsel %vm5897, %v3843, 0.0
        %v6922 = vsel %vm5898, %v3844, 0.0
        %v6923 = vsel %vm5899, %v3845, 0.0
        %v6924 = vsel %vm5900, %v3846, 0.0
        %v6925 = vsel %vm5901, %v3847, 0.0
        %v6926 = vsel %vm5902, %v3848, 0.0
        %v6927 = vsel %vm5903, %v3849, 0.0
        %v6928 = vsel %vm5904, %v3850, 0.0
        %v6929 = vsel %vm5905, %v3851, 0.0
        %v6930 = vsel %vm5906, %v3852, 0.0
        %v6931 = vsel %vm5907, %v3853, 0.0
        %v6932 = vsel %vm5908, %v3854, 0.0
        %v6933 = vsel %vm5909, %v3855, 0.0
        %v6934 = vsel %vm5910, %v3856, 0.0
        %v6935 = vsel %vm5911, %v3857, 0.0
        %v6936 = vsel %vm5912, %v3858, 0.0
        %v6937 = vsel %vm5913, %v3859, 0.0
        %v6938 = vsel %vm5914, %v3860, 0.0
        %v6939 = vsel %vm5915, %v3861, 0.0
        %v6940 = vsel %vm5916, %v3862, 0.0
        %v6941 = vsel %vm5917, %v3863, 0.0
        %v6942 = vsel %vm5918, %v3864, 0.0
        %v6943 = vsel %vm5919, %v3865, 0.0
        %v6944 = vsel %vm5920, %v3866, 0.0
        %v6945 = vsel %vm5921, %v3867, 0.0
        %v6946 = vsel %vm5922, %v3868, 0.0
        %v6947 = vsel %vm5923, %v3869, 0.0
        %v6948 = vsel %vm5924, %v3870, 0.0
        %v6949 = vsel %vm5925, %v3871, 0.0
        %v6950 = vsel %vm5926, %v3872, 0.0
        %v6951 = vsel %vm5927, %v3873, 0.0
        %v6952 = vsel %vm5928, %v3874, 0.0
        %v6953 = vsel %vm5929, %v3875, 0.0
        %v6954 = vsel %vm5930, %v3876, 0.0
        %v6955 = vsel %vm5931, %v3877, 0.0
        %v6956 = vsel %vm5932, %v3878, 0.0
        %v6957 = vsel %vm5933, %v3879, 0.0
        %v6958 = vsel %vm5934, %v3880, 0.0
        %v6959 = vsel %vm5935, %v3881, 0.0
        %v6960 = vsel %vm5936, %v3882, 0.0
        %v6961 = vsel %vm5937, %v3883, 0.0
        %v6962 = vsel %vm5938, %v3884, 0.0
        %v6963 = vsel %vm5939, %v3885, 0.0
        %v6964 = vsel %vm5940, %v3886, 0.0
        %v6965 = vsel %vm5941, %v3887, 0.0
        %v6966 = vsel %vm5942, %v3888, 0.0
        %v6967 = vsel %vm5943, %v3889, 0.0
        %v6968 = vsel %vm5944, %v3890, 0.0
        %v6969 = vsel %vm5945, %v3891, 0.0
        %v6970 = vsel %vm5946, %v3892, 0.0
        %v6971 = vsel %vm5947, %v3893, 0.0
        %v6972 = vsel %vm5948, %v3894, 0.0
        %v6973 = vsel %vm5949, %v3895, 0.0
        %v6974 = vsel %vm5950, %v3896, 0.0
        %v6975 = vsel %vm5951, %v3897, 0.0
        %v6976 = vsel %vm5952, %v3898, 0.0
        %v6977 = vsel %vm5953, %v3899, 0.0
        %v6978 = vsel %vm5954, %v3900, 0.0
        %v6979 = vsel %vm5955, %v3901, 0.0
        %v6980 = vsel %vm5956, %v3902, 0.0
        %v6981 = vsel %vm5957, %v3903, 0.0
        %v6982 = vsel %vm5958, %v3904, 0.0
        %v6983 = vsel %vm5959, %v3905, 0.0
        %v6984 = vsel %vm5960, %v3906, 0.0
        %v6985 = vsel %vm5961, %v3907, 0.0
        %v6986 = vsel %vm5962, %v3908, 0.0
        %v6987 = vsel %vm5963, %v3909, 0.0
        %v6988 = vsel %vm5964, %v3910, 0.0
        %v6989 = vsel %vm5965, %v3911, 0.0
        %v6990 = vsel %vm5966, %v3912, 0.0
        %v6991 = vsel %vm5967, %v3913, 0.0
        %v6992 = vsel %vm5968, %v3914, 0.0
        %v6993 = vsel %vm5969, %v3915, 0.0
        %v6994 = vsel %vm5970, %v3916, 0.0
        %v6995 = vsel %vm5971, %v3917, 0.0
        %v6996 = vsel %vm5972, %v3918, 0.0
        %v6997 = vsel %vm5973, %v3919, 0.0
        %v6998 = vsel %vm5974, %v3920, 0.0
        %v6999 = vsel %vm5975, %v3921, 0.0
        %v7000 = vsel %vm5976, %v3922, 0.0
        %v7001 = vsel %vm5977, %v3923, 0.0
        %v7002 = vsel %vm5978, %v3924, 0.0
        %v7003 = vsel %vm5979, %v3925, 0.0
        %v7004 = vsel %vm5980, %v3926, 0.0
        %v7005 = vsel %vm5981, %v3927, 0.0
        %v7006 = vsel %vm5982, %v3928, 0.0
        %v7007 = vsel %vm5983, %v3929, 0.0
        %v7008 = vsel %vm5984, %v3930, 0.0
        %v7009 = vsel %vm5985, %v3931, 0.0
        %v7010 = vsel %vm5986, %v3932, 0.0
        %v7011 = vsel %vm5987, %v3933, 0.0
        %v7012 = vsel %vm5988, %v3934, 0.0
        %v7013 = vsel %vm5989, %v3935, 0.0
        %v7014 = vsel %vm5990, %v3936, 0.0
        %v7015 = vsel %vm5991, %v3937, 0.0
        %v7016 = vsel %vm5992, %v3938, 0.0
        %v7017 = vsel %vm5993, %v3939, 0.0
        %v7018 = vsel %vm5994, %v3940, 0.0
        %v7019 = vsel %vm5995, %v3941, 0.0
        %v7020 = vsel %vm5996, %v3942, 0.0
        %v7021 = vsel %vm5997, %v3943, 0.0
        %v7022 = vsel %vm5998, %v3944, 0.0
        %v7023 = vsel %vm5999, %v3945, 0.0
        %v7024 = vsel %vm6000, %v3946, 0.0
        %v7025 = vsel %vm6001, %v3947, 0.0
        %v7026 = vsel %vm6002, %v3948, 0.0
        %v7027 = vsel %vm6003, %v3949, 0.0
        %v7028 = vsel %vm6004, %v3950, 0.0
        %v7029 = vsel %vm6005, %v3951, 0.0
        %v7030 = vsel %vm6006, %v3952, 0.0
        %v7031 = vsel %vm6007, %v3953, 0.0
        %v7032 = vsel %vm6008, %v3954, 0.0
        %v7033 = vsel %vm6009, %v3955, 0.0
        %v7034 = vsel %vm6010, %v3956, 0.0
        %v7035 = vsel %vm6011, %v3957, 0.0
        %v7036 = vsel %vm6012, %v3958, 0.0
        %v7037 = vsel %vm6013, %v3959, 0.0
        %v7038 = vsel %vm6014, %v3960, 0.0
        %v7039 = vsel %vm6015, %v3961, 0.0
        %v7040 = vsel %vm6016, %v3962, 0.0
        %v7041 = vsel %vm6017, %v3963, 0.0
        %v7042 = vsel %vm6018, %v3964, 0.0
        %v7043 = vsel %vm6019, %v3965, 0.0
        %v7044 = vsel %vm6020, %v3966, 0.0
        %v7045 = vsel %vm6021, %v3967, 0.0
        %v7046 = vsel %vm6022, %v3968, 0.0
        %v7047 = vsel %vm6023, %v3969, 0.0
        %v7048 = vsel %vm6024, %v3970, 0.0
        %v7049 = vsel %vm6025, %v3971, 0.0
        %v7050 = vsel %vm6026, %v3972, 0.0
        %v7051 = vsel %vm6027, %v3973, 0.0
        %v7052 = vsel %vm6028, %v3974, 0.0
        %v7053 = vsel %vm6029, %v3975, 0.0
        %v7054 = vsel %vm6030, %v3976, 0.0
        %v7055 = vsel %vm6031, %v3977, 0.0
        %v7056 = vsel %vm6032, %v3978, 0.0
        %v7057 = vsel %vm6033, %v3979, 0.0
        %v7058 = vsel %vm6034, %v3980, 0.0
        %v7059 = vsel %vm6035, %v3981, 0.0
        %v7060 = vsel %vm6036, %v3982, 0.0
        %v7061 = vsel %vm6037, %v3983, 0.0
        %v7062 = vsel %vm6038, %v3984, 0.0
        %v7063 = vsel %vm6039, %v3985, 0.0
        %v7064 = vsel %vm6040, %v3986, 0.0
        %v7065 = vsel %vm6041, %v3987, 0.0
        %v7066 = vsel %vm6042, %v3988, 0.0
        %v7067 = vsel %vm6043, %v3989, 0.0
        %v7068 = vsel %vm6044, %v3990, 0.0
        %v7069 = vsel %vm6045, %v3991, 0.0
        %v7070 = vsel %vm6046, %v3992, 0.0
        %v7071 = vsel %vm6047, %v3993, 0.0
        %v7072 = vsel %vm6048, %v3994, 0.0
        %v7073 = vsel %vm6049, %v3995, 0.0
        %v7074 = vsel %vm6050, %v3996, 0.0
        %v7075 = vsel %vm6051, %v3997, 0.0
        %v7076 = vsel %vm6052, %v3998, 0.0
        %v7077 = vsel %vm6053, %v3999, 0.0
        %v7078 = vsel %vm6054, %v4000, 0.0
        %v7079 = vsel %vm6055, %v4001, 0.0
        %v7080 = vsel %vm6056, %v4002, 0.0
        %v7081 = vsel %vm6057, %v4003, 0.0
        %v7082 = vsel %vm6058, %v4004, 0.0
        %v7083 = vsel %vm6059, %v4005, 0.0
        %v7084 = vsel %vm6060, %v4006, 0.0
        %v7085 = vsel %vm6061, %v4007, 0.0
        %v7086 = vsel %vm6062, %v4008, 0.0
        %v7087 = vsel %vm6063, %v4009, 0.0
        %v7088 = vsel %vm6064, %v4010, 0.0
        %v7089 = vsel %vm6065, %v4011, 0.0
        %v7090 = vsel %vm6066, %v4012, 0.0
        %v7091 = vsel %vm6067, %v4013, 0.0
        %v7092 = vsel %vm6068, %v4014, 0.0
        %v7093 = vsel %vm6069, %v4015, 0.0
        %v7094 = vsel %vm6070, %v4016, 0.0
        %v7095 = vsel %vm6071, %v4017, 0.0
        %v7096 = vsel %vm6072, %v4018, 0.0
        %v7097 = vsel %vm6073, %v4019, 0.0
        %v7098 = vsel %vm6074, %v4020, 0.0
        %v7099 = vsel %vm6075, %v4021, 0.0
        %v7100 = vsel %vm6076, %v4022, 0.0
        %v7101 = vsel %vm6077, %v4023, 0.0
        %v7102 = vsel %vm6078, %v4024, 0.0
        %v7103 = vsel %vm6079, %v4025, 0.0
        %v7104 = vsel %vm6080, %v4026, 0.0
        %v7105 = vsel %vm6081, %v4027, 0.0
        %v7106 = vsel %vm6082, %v4028, 0.0
        %v7107 = vsel %vm6083, %v4029, 0.0
        %v7108 = vsel %vm6084, %v4030, 0.0
        %v7109 = vsel %vm6085, %v4031, 0.0
        %v7110 = vsel %vm6086, %v4032, 0.0
        %v7111 = vsel %vm6087, %v4033, 0.0
        %v7112 = vsel %vm6088, %v4034, 0.0
        %v7113 = vsel %vm6089, %v4035, 0.0
        %v7114 = vsel %vm6090, %v4036, 0.0
        %v7115 = vsel %vm6091, %v4037, 0.0
        %v7116 = vsel %vm6092, %v4038, 0.0
        %v7117 = vsel %vm6093, %v4039, 0.0
        %v7118 = vsel %vm6094, %v4040, 0.0
        %v7119 = vsel %vm6095, %v4041, 0.0
        %v7120 = vsel %vm6096, %v4042, 0.0
        %v7121 = vsel %vm6097, %v4043, 0.0
        %v7122 = vsel %vm6098, %v4044, 0.0
        %v7123 = vsel %vm6099, %v4045, 0.0
        %v7124 = vsel %vm6100, %v4046, 0.0
        %v7125 = vsel %vm6101, %v4047, 0.0
        %v7126 = vsel %vm6102, %v4048, 0.0
        %v7127 = vsel %vm6103, %v4049, 0.0
        %v7128 = vsel %vm6104, %v4050, 0.0
        %v7129 = vsel %vm6105, %v4051, 0.0
        %v7130 = vsel %vm6106, %v4052, 0.0
        %v7131 = vsel %vm6107, %v4053, 0.0
        %v7132 = vsel %vm6108, %v4054, 0.0
        %v7133 = vsel %vm6109, %v4055, 0.0
        %v7134 = vsel %vm6110, %v4056, 0.0
        %v7135 = vsel %vm6111, %v4057, 0.0
        %v7136 = vsel %vm6112, %v4058, 0.0
        %v7137 = vsel %vm6113, %v4059, 0.0
        %v7138 = vsel %vm6114, %v4060, 0.0
        %v7139 = vsel %vm6115, %v4061, 0.0
        %v7140 = vsel %vm6116, %v4062, 0.0
        %v7141 = vsel %vm6117, %v4063, 0.0
        %v7142 = vsel %vm6118, %v4064, 0.0
        %v7143 = vsel %vm6119, %v4065, 0.0
        %v7144 = vsel %vm6120, %v4066, 0.0
        %v7145 = vsel %vm6121, %v4067, 0.0
        %v7146 = vsel %vm6122, %v4068, 0.0
        %v7147 = vsel %vm6123, %v4069, 0.0
        %v7148 = vsel %vm6124, %v4070, 0.0
        %v7149 = vsel %vm6125, %v4071, 0.0
        %v7150 = vsel %vm6126, %v4072, 0.0
        %v7151 = vsel %vm6127, %v4073, 0.0
        %v7152 = vsel %vm6128, %v4074, 0.0
        %v7153 = vsel %vm6129, %v4075, 0.0
        %v7154 = vsel %vm6130, %v4076, 0.0
        %v7155 = vsel %vm6131, %v4077, 0.0
        %v7156 = vsel %vm6132, %v4078, 0.0
        %v7157 = vsel %vm6133, %v4079, 0.0
        %v7158 = vsel %vm6134, %v4080, 0.0
        %v7159 = vsel %vm6135, %v4081, 0.0
        %v7160 = vsel %vm6136, %v4082, 0.0
        %v7161 = vsel %vm6137, %v4083, 0.0
        %v7162 = vsel %vm6138, %v4084, 0.0
        %v7163 = vsel %vm6139, %v4085, 0.0
        %v7164 = vsel %vm6140, %v4086, 0.0
        %v7165 = vsel %vm6141, %v4087, 0.0
        %v7166 = vsel %vm6142, %v4088, 0.0
        %v7167 = vsel %vm6143, %v4089, 0.0
        %v7168 = vsel %vm6144, %v4090, 0.0
        %v7169 = vsel %vm6145, %v4091, 0.0
        %v7170 = vsel %vm6146, %v4092, 0.0
        %v7171 = vsel %vm6147, %v4093, 0.0
        %v7172 = vsel %vm6148, %v4094, 0.0
        %v7173 = vsel %vm6149, %v4095, 0.0
        %v7174 = vsel %vm6150, %v4096, 0.0
        %v7175 = vsel %vm6151, %v4097, 0.0
        %v7176 = vsel %vm6152, %v4098, 0.0
        %v7177 = vsel %vm6153, %v4099, 0.0
        %v7178 = vsel %vm6154, %v4100, 0.0
        %v7179 = vsel %vm6155, %v4101, 0.0
        %v7180 = vsel %vm6156, %v4102, 0.0
        %v7181 = vsel %vm6157, %v4103, 0.0
        %v7182 = vsel %vm6158, %v4104, 0.0
        %v7183 = vsel %vm6159, %v4105, 0.0
        %v7184 = vsel %vm6160, %v4106, 0.0
        %v7185 = vsel %vm6161, %v4107, 0.0
        %v7186 = vsel %vm6162, %v4108, 0.0
        %v7187 = vsel %vm6163, %v4109, 0.0
        %v7188 = vsel %vm6164, %v4110, 0.0
        %v7189 = vsel %vm6165, %v4111, 0.0
        %v7190 = vsel %vm6166, %v4112, 0.0
        %v7191 = vsel %vm6167, %v4113, 0.0
        %v7192 = vsel %vm6168, %v4114, 0.0
        %v7193 = vsel %vm6169, %v4115, 0.0
        %v7194 = vsel %vm6170, %v4116, 0.0
        %v7195 = vsel %vm6171, %v4117, 0.0
        %v7196 = vsel %vm6172, %v4118, 0.0
        %v7197 = vsel %vm6173, %v4119, 0.0
        %v7198 = vsel %vm6174, %v4120, 0.0
        %v7199 = vsel %vm6175, %v4121, 0.0
        %v7200 = vsel %vm6176, %v4122, 0.0
        %v7201 = vsel %vm6177, %v4123, 0.0
        %v7202 = vsel %vm6178, %v4124, 0.0
        %v7203 = vsel %vm6179, %v4125, 0.0
        %v7204 = vsel %vm6180, %v4126, 0.0
        %v7205 = vsel %vm6181, %v4127, 0.0
        %v7206 = vsel %vm6182, %v4128, 0.0
        %v7207 = vsel %vm6183, %v4129, 0.0
        %v7208 = vsel %vm6184, %v4130, 0.0
        %v7209 = vsel %vm6185, %v4131, 0.0
        %v7210 = vsel %vm6186, %v4132, 0.0
        %v7211 = vsel %vm6187, %v4133, 0.0
        %v7212 = vsel %vm6188, %v4134, 0.0
        %v7213 = vsel %vm6189, %v4135, 0.0
        %v7214 = vsel %vm6190, %v4136, 0.0
        %v7215 = vsel %vm6191, %v4137, 0.0
        %v7216 = vsel %vm6192, %v4138, 0.0
        %v7217 = vsel %vm6193, %v4139, 0.0
        %v7218 = vsel %vm6194, %v4140, 0.0
        %v7219 = vsel %vm6195, %v4141, 0.0
        %v7220 = vsel %vm6196, %v4142, 0.0
        %v7221 = vsel %vm6197, %v4143, 0.0
        %v7222 = vsel %vm6198, %v4144, 0.0
        %v7223 = vsel %vm6199, %v4145, 0.0
        %v7224 = vsel %vm6200, %v4146, 0.0
        %v7225 = vsel %vm6201, %v4147, 0.0
        %v7226 = vsel %vm6202, %v4148, 0.0
        %v7227 = vsel %vm6203, %v4149, 0.0
        %v7228 = vsel %vm6204, %v4150, 0.0
        %v7229 = vsel %vm6205, %v4151, 0.0
        %v7230 = vsel %vm6206, %v4152, 0.0
        %v7231 = vsel %vm6207, %v4153, 0.0
        %v7232 = vsel %vm6208, %v4154, 0.0
        %v7233 = vsel %vm6209, %v4155, 0.0
        %v7234 = vsel %vm6210, %v4156, 0.0
        %v7235 = vsel %vm6211, %v4157, 0.0
        %v7236 = vsel %vm6212, %v4158, 0.0
        %v7237 = vsel %vm6213, %v4159, 0.0
        %v7238 = vsel %vm6214, %v4160, 0.0
        %v7239 = vsel %vm6215, %v4161, 0.0
        %v7240 = vsel %vm6216, %v4162, 0.0
        %v7241 = vsel %vm6217, %v4163, 0.0
        %v7242 = vsel %vm6218, %v4164, 0.0
        %v7243 = vsel %vm6219, %v4165, 0.0
        %v7244 = vsel %vm6220, %v4166, 0.0
        %v7245 = vsel %vm6221, %v4167, 0.0
        %v7246 = vsel %vm6222, %v4168, 0.0
        %v7247 = vsel %vm6223, %v4169, 0.0
        %v7248 = vsel %vm6224, %v4170, 0.0
        %v7249 = vsel %vm6225, %v4171, 0.0
        %v7250 = vsel %vm6226, %v4172, 0.0
        %v7251 = vsel %vm6227, %v4173, 0.0
        %v7252 = vsel %vm6228, %v4174, 0.0
        %v7253 = vsel %vm6229, %v4175, 0.0
        %v7254 = vsel %vm6230, %v4176, 0.0
        %v7255 = vsel %vm6231, %v4177, 0.0
        %v7256 = vsel %vm6232, %v4178, 0.0
        %v7257 = vsel %vm6233, %v4179, 0.0
        %v7258 = vsel %vm6234, %v4180, 0.0
        %v7259 = vsel %vm6235, %v4181, 0.0
        %v7260 = vsel %vm6236, %v4182, 0.0
        %v7261 = vsel %vm6237, %v4183, 0.0
        %v7262 = vsel %vm6238, %v4184, 0.0
        %v7263 = vsel %vm6239, %v4185, 0.0
        %v7264 = vsel %vm6240, %v4186, 0.0
        %v7265 = vsel %vm6241, %v4187, 0.0
        %v7266 = vsel %vm6242, %v4188, 0.0
        %v7267 = vsel %vm6243, %v4189, 0.0
        %v7268 = vsel %vm6244, %v4190, 0.0
        %v7269 = vsel %vm6245, %v4191, 0.0
        %v7270 = vsel %vm6246, %v4192, 0.0
        %v7271 = vsel %vm6247, %v4193, 0.0
        %v7272 = vsel %vm6248, %v4194, 0.0
        %v7273 = vsel %vm6249, %v4195, 0.0
        %v7274 = vsel %vm6250, %v4196, 0.0
        %v7275 = vsel %vm6251, %v4197, 0.0
        %v7276 = vsel %vm6252, %v4198, 0.0
        %v7277 = vsel %vm6253, %v4199, 0.0
        %v7278 = vsel %vm6254, %v4200, 0.0
        %v7279 = vsel %vm6255, %v4201, 0.0
        %v7280 = vsel %vm6256, %v4202, 0.0
        %v7281 = vsel %vm6257, %v4203, 0.0
        %v7282 = vsel %vm6258, %v4204, 0.0
        %v7283 = vsel %vm6259, %v4205, 0.0
        %v7284 = vsel %vm6260, %v4206, 0.0
        %v7285 = vsel %vm6261, %v4207, 0.0
        %v7286 = vsel %vm6262, %v4208, 0.0
        %v7287 = vsel %vm6263, %v4209, 0.0
        %v7288 = vsel %vm6264, %v4210, 0.0
        %v7289 = vsel %vm6265, %v4211, 0.0
        %v7290 = vsel %vm6266, %v4212, 0.0
        %v7291 = vsel %vm6267, %v4213, 0.0
        %v7292 = vsel %vm6268, %v4214, 0.0
        %v7293 = vsel %vm6269, %v4215, 0.0
        %v7294 = vsel %vm6270, %v4216, 0.0
        %v7295 = vsel %vm6271, %v4217, 0.0
        %v7296 = vsel %vm6272, %v4218, 0.0
        %v7297 = vsel %vm6273, %v4219, 0.0
        %v7298 = vsel %vm6274, %v4220, 0.0
        %v7299 = vsel %vm6275, %v4221, 0.0
        %v7300 = vsel %vm6276, %v4222, 0.0
        %v7301 = vsel %vm6277, %v4223, 0.0
        %v7302 = vsel %vm6278, %v4224, 0.0
        %v7303 = vsel %vm6279, %v4225, 0.0
        %v7304 = vsel %vm6280, %v4226, 0.0
        %v7305 = vsel %vm6281, %v4227, 0.0
        %v7306 = vsel %vm6282, %v4228, 0.0
        %v7307 = vsel %vm6283, %v4229, 0.0
        %v7308 = vsel %vm6284, %v4230, 0.0
        %v7309 = vsel %vm6285, %v4231, 0.0
        %v7310 = vsel %vm6286, %v4232, 0.0
        %v7311 = vsel %vm6287, %v4233, 0.0
        %v7312 = vsel %vm6288, %v4234, 0.0
        %v7313 = vsel %vm6289, %v4235, 0.0
        %v7314 = vsel %vm6290, %v4236, 0.0
        %v7315 = vsel %vm6291, %v4237, 0.0
        %v7316 = vsel %vm6292, %v4238, 0.0
        %v7317 = vsel %vm6293, %v4239, 0.0
        %v7318 = vsel %vm6294, %v4240, 0.0
        %v7319 = vsel %vm6295, %v4241, 0.0
        %v7320 = vsel %vm6296, %v4242, 0.0
        %v7321 = vsel %vm6297, %v4243, 0.0
        %v7322 = vsel %vm6298, %v4244, 0.0
        %v7323 = vsel %vm6299, %v4245, 0.0
        %v7324 = vsel %vm6300, %v4246, 0.0
        %v7325 = vsel %vm6301, %v4247, 0.0
        %v7326 = vsel %vm6302, %v4248, 0.0
        %v7327 = vsel %vm6303, %v4249, 0.0
        %v7328 = vsel %vm6304, %v4250, 0.0
        %v7329 = vsel %vm6305, %v4251, 0.0
        %v7330 = vsel %vm6306, %v4252, 0.0
        %v7331 = vsel %vm6307, %v4253, 0.0
        %v7332 = vsel %vm6308, %v4254, 0.0
        %v7333 = vsel %vm6309, %v4255, 0.0
        %v7334 = vsel %vm6310, %v4256, 0.0
        %v7335 = vsel %vm6311, %v4257, 0.0
        %v7336 = vsel %vm6312, %v4258, 0.0
        %v7337 = vsel %vm6313, %v4259, 0.0
        %v7338 = vsel %vm6314, %v4260, 0.0
        %v7339 = vsel %vm6315, %v4261, 0.0
        %v7340 = vsel %vm6316, %v4262, 0.0
        %v7341 = vsel %vm6317, %v4263, 0.0
        %v7342 = vsel %vm6318, %v4264, 0.0
        %v7343 = vsel %vm6319, %v4265, 0.0
        %v7344 = vsel %vm6320, %v4266, 0.0
        %v7345 = vsel %vm6321, %v4267, 0.0
        %v7346 = vsel %vm6322, %v4268, 0.0
        %v7347 = vsel %vm6323, %v4269, 0.0
        %v7348 = vsel %vm6324, %v4270, 0.0
        %v7349 = vsel %vm6325, %v4271, 0.0
        %v7350 = vsel %vm6326, %v4272, 0.0
        %v7351 = vsel %vm6327, %v4273, 0.0
        %v7352 = vsel %vm6328, %v4274, 0.0
        %v7353 = vsel %vm6329, %v4275, 0.0
        %v7354 = vsel %vm6330, %v4276, 0.0
        %v7355 = vsel %vm6331, %v4277, 0.0
        %v7356 = vsel %vm6332, %v4278, 0.0
        %v7357 = vsel %vm6333, %v4279, 0.0
        %v7358 = vsel %vm6334, %v4280, 0.0
        %v7359 = vsel %vm6335, %v4281, 0.0
        %v7360 = vsel %vm6336, %v4282, 0.0
        %v7361 = vsel %vm6337, %v4283, 0.0
        %v7362 = vsel %vm6338, %v4284, 0.0
        %v7363 = vsel %vm6339, %v4285, 0.0
        %v7364 = vsel %vm6340, %v4286, 0.0
        %v7365 = vsel %vm6341, %v4287, 0.0
        %v7366 = vsel %vm6342, %v4288, 0.0
        %v7367 = vsel %vm6343, %v4289, 0.0
        %v7368 = vsel %vm6344, %v4290, 0.0
        %v7369 = vsel %vm6345, %v4291, 0.0
        %v7370 = vsel %vm6346, %v4292, 0.0
        %v7371 = vsel %vm6347, %v4293, 0.0
        %v7372 = vsel %vm6348, %v4294, 0.0
        %v7373 = vsel %vm6349, %v4295, 0.0
        %v7374 = vsel %vm6350, %v4296, 0.0
        %v7375 = vsel %vm6351, %v4297, 0.0
        %v7376 = vsel %vm6352, %v4298, 0.0
        %v7377 = vsel %vm6353, %v4299, 0.0
        %v7378 = vsel %vm6354, %v4300, 0.0
        %v7379 = vsel %vm6355, %v4301, 0.0
        %v7380 = vsel %vm6356, %v4302, 0.0
        %v7381 = vsel %vm6357, %v4303, 0.0
        %v7382 = vsel %vm6358, %v4304, 0.0
        %v7383 = vsel %vm6359, %v4305, 0.0
        %v7384 = vsel %vm6360, %v4306, 0.0
        %v7385 = vsel %vm6361, %v4307, 0.0
        %v7386 = vsel %vm6362, %v4308, 0.0
        %v7387 = vsel %vm6363, %v4309, 0.0
        %v7388 = vsel %vm6364, %v4310, 0.0
        %v7389 = vsel %vm6365, %v4311, 0.0
        %v7390 = vsel %vm6366, %v4312, 0.0
        %v7391 = vsel %vm6367, %v4313, 0.0
        %v7392 = vsel %vm6368, %v4314, 0.0
        %v7393 = vsel %vm6369, %v4315, 0.0
        %v7394 = vsel %vm6370, %v4316, 0.0
        %v7395 = vsel %vm6371, %v4317, 0.0
        %v7396 = vsel %vm6372, %v4318, 0.0
        %v7397 = vsel %vm6373, %v4319, 0.0
        %v7398 = vsel %vm6374, %v4320, 0.0
        %v7399 = vsel %vm6375, %v4321, 0.0
        %v7400 = vsel %vm6376, %v4322, 0.0
        %v7401 = vsel %vm6377, %v4323, 0.0
        %v7402 = vsel %vm6378, %v4324, 0.0
        %v7403 = vsel %vm6379, %v4325, 0.0
        %v7404 = vsel %vm6380, %v4326, 0.0
        %v7405 = vsel %vm6381, %v4327, 0.0
        %v7406 = vsel %vm6382, %v4328, 0.0
        %v7407 = vsel %vm6383, %v4329, 0.0
        %v7408 = vsel %vm6384, %v4330, 0.0
        %v7409 = vsel %vm6385, %v4331, 0.0
        %v7410 = vsel %vm6386, %v4332, 0.0
        %v7411 = vsel %vm6387, %v4333, 0.0
        %v7412 = vsel %vm6388, %v4334, 0.0
        %v7413 = vsel %vm6389, %v4335, 0.0
        %v7414 = vsel %vm6390, %v4336, 0.0
        %v7415 = vsel %vm6391, %v4337, 0.0
        %v7416 = vsel %vm6392, %v4338, 0.0
        %v7417 = vsel %vm6393, %v4339, 0.0
        %v7418 = vsel %vm6394, %v4340, 0.0
        %v7419 = vsel %vm6395, %v4341, 0.0
        %v7420 = vsel %vm6396, %v4342, 0.0
        %v7421 = vsel %vm6397, %v4343, 0.0
        %v7422 = vsel %vm6398, %v4344, 0.0
        %v7423 = vsel %vm6399, %v4345, 0.0
        %v7424 = vsel %vm6400, %v4346, 0.0
        %v7425 = vsel %vm6401, %v4347, 0.0
        %v7426 = vsel %vm6402, %v4348, 0.0
        %v7427 = vsel %vm6403, %v4349, 0.0
        %v7428 = vsel %vm6404, %v4350, 0.0
        %v7429 = vsel %vm6405, %v4351, 0.0
        %v7430 = vsel %vm6406, %v4352, 0.0
        %v7431 = vsel %vm6407, %v4353, 0.0
        %v7432 = vsel %vm6408, %v4354, 0.0
        %v7433 = vsel %vm6409, %v4355, 0.0
        %v7434 = vsel %vm6410, %v4356, 0.0
        %v7435 = vsel %vm6411, %v4357, 0.0
        %v7436 = vsel %vm6412, %v4358, 0.0
        %v7437 = vsel %vm6413, %v4359, 0.0
        %v7438 = vsel %vm6414, %v4360, 0.0
        %v7439 = vsel %vm6415, %v4361, 0.0
        %v7440 = vsel %vm6416, %v4362, 0.0
        %v7441 = vsel %vm6417, %v4363, 0.0
        %v7442 = vsel %vm6418, %v4364, 0.0
        %v7443 = vsel %vm6419, %v4365, 0.0
        %v7444 = vsel %vm6420, %v4366, 0.0
        %v7445 = vsel %vm6421, %v4367, 0.0
        %v7446 = vsel %vm6422, %v4368, 0.0
        %v7447 = vsel %vm6423, %v4369, 0.0
        %v7448 = vsel %vm6424, %v4370, 0.0
        %v7449 = vsel %vm6425, %v4371, 0.0
        %v7450 = vsel %vm6426, %v4372, 0.0
        %v7451 = vsel %vm6427, %v4373, 0.0
        %v7452 = vsel %vm6428, %v4374, 0.0
        %v7453 = vsel %vm6429, %v4375, 0.0
        %v7454 = vsel %vm6430, %v4376, 0.0
        %v7455 = vsel %vm6431, %v4377, 0.0
        %v7456 = vsel %vm6432, %v4378, 0.0
        %v7457 = vsel %vm6433, %v4379, 0.0
        %v7458 = vsel %vm6434, %v4380, 0.0
        %v7459 = vsel %vm6435, %v4381, 0.0
        %v7460 = vadd.f32 %v6436, %v6444
        %v7461 = vadd.f32 %v7460, %v6452
        %v7462 = vadd.f32 %v7461, %v6460
        %v7463 = vadd.f32 %v7462, %v6468
        %v7464 = vadd.f32 %v7463, %v6476
        %v7465 = vadd.f32 %v7464, %v6484
        %v7466 = vadd.f32 %v7465, %v6492
        %v7467 = vadd.f32 %v7466, %v6500
        %v7468 = vadd.f32 %v7467, %v6508
        %v7469 = vadd.f32 %v7468, %v6516
        %v7470 = vadd.f32 %v7469, %v6524
        %v7471 = vadd.f32 %v7470, %v6532
        %v7472 = vadd.f32 %v7471, %v6540
        %v7473 = vadd.f32 %v7472, %v6548
        %v7474 = vadd.f32 %v7473, %v6556
        %v7475 = vadd.f32 %v7474, %v6564
        %v7476 = vadd.f32 %v7475, %v6572
        %v7477 = vadd.f32 %v7476, %v6580
        %v7478 = vadd.f32 %v7477, %v6588
        %v7479 = vadd.f32 %v7478, %v6596
        %v7480 = vadd.f32 %v7479, %v6604
        %v7481 = vadd.f32 %v7480, %v6612
        %v7482 = vadd.f32 %v7481, %v6620
        %v7483 = vadd.f32 %v7482, %v6628
        %v7484 = vadd.f32 %v7483, %v6636
        %v7485 = vadd.f32 %v7484, %v6644
        %v7486 = vadd.f32 %v7485, %v6652
        %v7487 = vadd.f32 %v7486, %v6660
        %v7488 = vadd.f32 %v7487, %v6668
        %v7489 = vadd.f32 %v7488, %v6676
        %v7490 = vadd.f32 %v7489, %v6684
        %v7491 = vadd.f32 %v7490, %v6692
        %v7492 = vadd.f32 %v7491, %v6700
        %v7493 = vadd.f32 %v7492, %v6708
        %v7494 = vadd.f32 %v7493, %v6716
        %v7495 = vadd.f32 %v7494, %v6724
        %v7496 = vadd.f32 %v7495, %v6732
        %v7497 = vadd.f32 %v7496, %v6740
        %v7498 = vadd.f32 %v7497, %v6748
        %v7499 = vadd.f32 %v7498, %v6756
        %v7500 = vadd.f32 %v7499, %v6764
        %v7501 = vadd.f32 %v7500, %v6772
        %v7502 = vadd.f32 %v7501, %v6780
        %v7503 = vadd.f32 %v7502, %v6788
        %v7504 = vadd.f32 %v7503, %v6796
        %v7505 = vadd.f32 %v7504, %v6804
        %v7506 = vadd.f32 %v7505, %v6812
        %v7507 = vadd.f32 %v7506, %v6820
        %v7508 = vadd.f32 %v7507, %v6828
        %v7509 = vadd.f32 %v7508, %v6836
        %v7510 = vadd.f32 %v7509, %v6844
        %v7511 = vadd.f32 %v7510, %v6852
        %v7512 = vadd.f32 %v7511, %v6860
        %v7513 = vadd.f32 %v7512, %v6868
        %v7514 = vadd.f32 %v7513, %v6876
        %v7515 = vadd.f32 %v7514, %v6884
        %v7516 = vadd.f32 %v7515, %v6892
        %v7517 = vadd.f32 %v7516, %v6900
        %v7518 = vadd.f32 %v7517, %v6908
        %v7519 = vadd.f32 %v7518, %v6916
        %v7520 = vadd.f32 %v7519, %v6924
        %v7521 = vadd.f32 %v7520, %v6932
        %v7522 = vadd.f32 %v7521, %v6940
        %v7523 = vadd.f32 %v7522, %v6948
        %v7524 = vadd.f32 %v7523, %v6956
        %v7525 = vadd.f32 %v7524, %v6964
        %v7526 = vadd.f32 %v7525, %v6972
        %v7527 = vadd.f32 %v7526, %v6980
        %v7528 = vadd.f32 %v7527, %v6988
        %v7529 = vadd.f32 %v7528, %v6996
        %v7530 = vadd.f32 %v7529, %v7004
        %v7531 = vadd.f32 %v7530, %v7012
        %v7532 = vadd.f32 %v7531, %v7020
        %v7533 = vadd.f32 %v7532, %v7028
        %v7534 = vadd.f32 %v7533, %v7036
        %v7535 = vadd.f32 %v7534, %v7044
        %v7536 = vadd.f32 %v7535, %v7052
        %v7537 = vadd.f32 %v7536, %v7060
        %v7538 = vadd.f32 %v7537, %v7068
        %v7539 = vadd.f32 %v7538, %v7076
        %v7540 = vadd.f32 %v7539, %v7084
        %v7541 = vadd.f32 %v7540, %v7092
        %v7542 = vadd.f32 %v7541, %v7100
        %v7543 = vadd.f32 %v7542, %v7108
        %v7544 = vadd.f32 %v7543, %v7116
        %v7545 = vadd.f32 %v7544, %v7124
        %v7546 = vadd.f32 %v7545, %v7132
        %v7547 = vadd.f32 %v7546, %v7140
        %v7548 = vadd.f32 %v7547, %v7148
        %v7549 = vadd.f32 %v7548, %v7156
        %v7550 = vadd.f32 %v7549, %v7164
        %v7551 = vadd.f32 %v7550, %v7172
        %v7552 = vadd.f32 %v7551, %v7180
        %v7553 = vadd.f32 %v7552, %v7188
        %v7554 = vadd.f32 %v7553, %v7196
        %v7555 = vadd.f32 %v7554, %v7204
        %v7556 = vadd.f32 %v7555, %v7212
        %v7557 = vadd.f32 %v7556, %v7220
        %v7558 = vadd.f32 %v7557, %v7228
        %v7559 = vadd.f32 %v7558, %v7236
        %v7560 = vadd.f32 %v7559, %v7244
        %v7561 = vadd.f32 %v7560, %v7252
        %v7562 = vadd.f32 %v7561, %v7260
        %v7563 = vadd.f32 %v7562, %v7268
        %v7564 = vadd.f32 %v7563, %v7276
        %v7565 = vadd.f32 %v7564, %v7284
        %v7566 = vadd.f32 %v7565, %v7292
        %v7567 = vadd.f32 %v7566, %v7300
        %v7568 = vadd.f32 %v7567, %v7308
        %v7569 = vadd.f32 %v7568, %v7316
        %v7570 = vadd.f32 %v7569, %v7324
        %v7571 = vadd.f32 %v7570, %v7332
        %v7572 = vadd.f32 %v7571, %v7340
        %v7573 = vadd.f32 %v7572, %v7348
        %v7574 = vadd.f32 %v7573, %v7356
        %v7575 = vadd.f32 %v7574, %v7364
        %v7576 = vadd.f32 %v7575, %v7372
        %v7577 = vadd.f32 %v7576, %v7380
        %v7578 = vadd.f32 %v7577, %v7388
        %v7579 = vadd.f32 %v7578, %v7396
        %v7580 = vadd.f32 %v7579, %v7404
        %v7581 = vadd.f32 %v7580, %v7412
        %v7582 = vadd.f32 %v7581, %v7420
        %v7583 = vadd.f32 %v7582, %v7428
        %v7584 = vadd.f32 %v7583, %v7436
        %v7585 = vadd.f32 %v7584, %v7444
        %v7586 = vadd.f32 %v7585, %v7452
        %v7587 = vadd.f32 %v6437, %v6445
        %v7588 = vadd.f32 %v7587, %v6453
        %v7589 = vadd.f32 %v7588, %v6461
        %v7590 = vadd.f32 %v7589, %v6469
        %v7591 = vadd.f32 %v7590, %v6477
        %v7592 = vadd.f32 %v7591, %v6485
        %v7593 = vadd.f32 %v7592, %v6493
        %v7594 = vadd.f32 %v7593, %v6501
        %v7595 = vadd.f32 %v7594, %v6509
        %v7596 = vadd.f32 %v7595, %v6517
        %v7597 = vadd.f32 %v7596, %v6525
        %v7598 = vadd.f32 %v7597, %v6533
        %v7599 = vadd.f32 %v7598, %v6541
        %v7600 = vadd.f32 %v7599, %v6549
        %v7601 = vadd.f32 %v7600, %v6557
        %v7602 = vadd.f32 %v7601, %v6565
        %v7603 = vadd.f32 %v7602, %v6573
        %v7604 = vadd.f32 %v7603, %v6581
        %v7605 = vadd.f32 %v7604, %v6589
        %v7606 = vadd.f32 %v7605, %v6597
        %v7607 = vadd.f32 %v7606, %v6605
        %v7608 = vadd.f32 %v7607, %v6613
        %v7609 = vadd.f32 %v7608, %v6621
        %v7610 = vadd.f32 %v7609, %v6629
        %v7611 = vadd.f32 %v7610, %v6637
        %v7612 = vadd.f32 %v7611, %v6645
        %v7613 = vadd.f32 %v7612, %v6653
        %v7614 = vadd.f32 %v7613, %v6661
        %v7615 = vadd.f32 %v7614, %v6669
        %v7616 = vadd.f32 %v7615, %v6677
        %v7617 = vadd.f32 %v7616, %v6685
        %v7618 = vadd.f32 %v7617, %v6693
        %v7619 = vadd.f32 %v7618, %v6701
        %v7620 = vadd.f32 %v7619, %v6709
        %v7621 = vadd.f32 %v7620, %v6717
        %v7622 = vadd.f32 %v7621, %v6725
        %v7623 = vadd.f32 %v7622, %v6733
        %v7624 = vadd.f32 %v7623, %v6741
        %v7625 = vadd.f32 %v7624, %v6749
        %v7626 = vadd.f32 %v7625, %v6757
        %v7627 = vadd.f32 %v7626, %v6765
        %v7628 = vadd.f32 %v7627, %v6773
        %v7629 = vadd.f32 %v7628, %v6781
        %v7630 = vadd.f32 %v7629, %v6789
        %v7631 = vadd.f32 %v7630, %v6797
        %v7632 = vadd.f32 %v7631, %v6805
        %v7633 = vadd.f32 %v7632, %v6813
        %v7634 = vadd.f32 %v7633, %v6821
        %v7635 = vadd.f32 %v7634, %v6829
        %v7636 = vadd.f32 %v7635, %v6837
        %v7637 = vadd.f32 %v7636, %v6845
        %v7638 = vadd.f32 %v7637, %v6853
        %v7639 = vadd.f32 %v7638, %v6861
        %v7640 = vadd.f32 %v7639, %v6869
        %v7641 = vadd.f32 %v7640, %v6877
        %v7642 = vadd.f32 %v7641, %v6885
        %v7643 = vadd.f32 %v7642, %v6893
        %v7644 = vadd.f32 %v7643, %v6901
        %v7645 = vadd.f32 %v7644, %v6909
        %v7646 = vadd.f32 %v7645, %v6917
        %v7647 = vadd.f32 %v7646, %v6925
        %v7648 = vadd.f32 %v7647, %v6933
        %v7649 = vadd.f32 %v7648, %v6941
        %v7650 = vadd.f32 %v7649, %v6949
        %v7651 = vadd.f32 %v7650, %v6957
        %v7652 = vadd.f32 %v7651, %v6965
        %v7653 = vadd.f32 %v7652, %v6973
        %v7654 = vadd.f32 %v7653, %v6981
        %v7655 = vadd.f32 %v7654, %v6989
        %v7656 = vadd.f32 %v7655, %v6997
        %v7657 = vadd.f32 %v7656, %v7005
        %v7658 = vadd.f32 %v7657, %v7013
        %v7659 = vadd.f32 %v7658, %v7021
        %v7660 = vadd.f32 %v7659, %v7029
        %v7661 = vadd.f32 %v7660, %v7037
        %v7662 = vadd.f32 %v7661, %v7045
        %v7663 = vadd.f32 %v7662, %v7053
        %v7664 = vadd.f32 %v7663, %v7061
        %v7665 = vadd.f32 %v7664, %v7069
        %v7666 = vadd.f32 %v7665, %v7077
        %v7667 = vadd.f32 %v7666, %v7085
        %v7668 = vadd.f32 %v7667, %v7093
        %v7669 = vadd.f32 %v7668, %v7101
        %v7670 = vadd.f32 %v7669, %v7109
        %v7671 = vadd.f32 %v7670, %v7117
        %v7672 = vadd.f32 %v7671, %v7125
        %v7673 = vadd.f32 %v7672, %v7133
        %v7674 = vadd.f32 %v7673, %v7141
        %v7675 = vadd.f32 %v7674, %v7149
        %v7676 = vadd.f32 %v7675, %v7157
        %v7677 = vadd.f32 %v7676, %v7165
        %v7678 = vadd.f32 %v7677, %v7173
        %v7679 = vadd.f32 %v7678, %v7181
        %v7680 = vadd.f32 %v7679, %v7189
        %v7681 = vadd.f32 %v7680, %v7197
        %v7682 = vadd.f32 %v7681, %v7205
        %v7683 = vadd.f32 %v7682, %v7213
        %v7684 = vadd.f32 %v7683, %v7221
        %v7685 = vadd.f32 %v7684, %v7229
        %v7686 = vadd.f32 %v7685, %v7237
        %v7687 = vadd.f32 %v7686, %v7245
        %v7688 = vadd.f32 %v7687, %v7253
        %v7689 = vadd.f32 %v7688, %v7261
        %v7690 = vadd.f32 %v7689, %v7269
        %v7691 = vadd.f32 %v7690, %v7277
        %v7692 = vadd.f32 %v7691, %v7285
        %v7693 = vadd.f32 %v7692, %v7293
        %v7694 = vadd.f32 %v7693, %v7301
        %v7695 = vadd.f32 %v7694, %v7309
        %v7696 = vadd.f32 %v7695, %v7317
        %v7697 = vadd.f32 %v7696, %v7325
        %v7698 = vadd.f32 %v7697, %v7333
        %v7699 = vadd.f32 %v7698, %v7341
        %v7700 = vadd.f32 %v7699, %v7349
        %v7701 = vadd.f32 %v7700, %v7357
        %v7702 = vadd.f32 %v7701, %v7365
        %v7703 = vadd.f32 %v7702, %v7373
        %v7704 = vadd.f32 %v7703, %v7381
        %v7705 = vadd.f32 %v7704, %v7389
        %v7706 = vadd.f32 %v7705, %v7397
        %v7707 = vadd.f32 %v7706, %v7405
        %v7708 = vadd.f32 %v7707, %v7413
        %v7709 = vadd.f32 %v7708, %v7421
        %v7710 = vadd.f32 %v7709, %v7429
        %v7711 = vadd.f32 %v7710, %v7437
        %v7712 = vadd.f32 %v7711, %v7445
        %v7713 = vadd.f32 %v7712, %v7453
        %v7714 = vadd.f32 %v6438, %v6446
        %v7715 = vadd.f32 %v7714, %v6454
        %v7716 = vadd.f32 %v7715, %v6462
        %v7717 = vadd.f32 %v7716, %v6470
        %v7718 = vadd.f32 %v7717, %v6478
        %v7719 = vadd.f32 %v7718, %v6486
        %v7720 = vadd.f32 %v7719, %v6494
        %v7721 = vadd.f32 %v7720, %v6502
        %v7722 = vadd.f32 %v7721, %v6510
        %v7723 = vadd.f32 %v7722, %v6518
        %v7724 = vadd.f32 %v7723, %v6526
        %v7725 = vadd.f32 %v7724, %v6534
        %v7726 = vadd.f32 %v7725, %v6542
        %v7727 = vadd.f32 %v7726, %v6550
        %v7728 = vadd.f32 %v7727, %v6558
        %v7729 = vadd.f32 %v7728, %v6566
        %v7730 = vadd.f32 %v7729, %v6574
        %v7731 = vadd.f32 %v7730, %v6582
        %v7732 = vadd.f32 %v7731, %v6590
        %v7733 = vadd.f32 %v7732, %v6598
        %v7734 = vadd.f32 %v7733, %v6606
        %v7735 = vadd.f32 %v7734, %v6614
        %v7736 = vadd.f32 %v7735, %v6622
        %v7737 = vadd.f32 %v7736, %v6630
        %v7738 = vadd.f32 %v7737, %v6638
        %v7739 = vadd.f32 %v7738, %v6646
        %v7740 = vadd.f32 %v7739, %v6654
        %v7741 = vadd.f32 %v7740, %v6662
        %v7742 = vadd.f32 %v7741, %v6670
        %v7743 = vadd.f32 %v7742, %v6678
        %v7744 = vadd.f32 %v7743, %v6686
        %v7745 = vadd.f32 %v7744, %v6694
        %v7746 = vadd.f32 %v7745, %v6702
        %v7747 = vadd.f32 %v7746, %v6710
        %v7748 = vadd.f32 %v7747, %v6718
        %v7749 = vadd.f32 %v7748, %v6726
        %v7750 = vadd.f32 %v7749, %v6734
        %v7751 = vadd.f32 %v7750, %v6742
        %v7752 = vadd.f32 %v7751, %v6750
        %v7753 = vadd.f32 %v7752, %v6758
        %v7754 = vadd.f32 %v7753, %v6766
        %v7755 = vadd.f32 %v7754, %v6774
        %v7756 = vadd.f32 %v7755, %v6782
        %v7757 = vadd.f32 %v7756, %v6790
        %v7758 = vadd.f32 %v7757, %v6798
        %v7759 = vadd.f32 %v7758, %v6806
        %v7760 = vadd.f32 %v7759, %v6814
        %v7761 = vadd.f32 %v7760, %v6822
        %v7762 = vadd.f32 %v7761, %v6830
        %v7763 = vadd.f32 %v7762, %v6838
        %v7764 = vadd.f32 %v7763, %v6846
        %v7765 = vadd.f32 %v7764, %v6854
        %v7766 = vadd.f32 %v7765, %v6862
        %v7767 = vadd.f32 %v7766, %v6870
        %v7768 = vadd.f32 %v7767, %v6878
        %v7769 = vadd.f32 %v7768, %v6886
        %v7770 = vadd.f32 %v7769, %v6894
        %v7771 = vadd.f32 %v7770, %v6902
        %v7772 = vadd.f32 %v7771, %v6910
        %v7773 = vadd.f32 %v7772, %v6918
        %v7774 = vadd.f32 %v7773, %v6926
        %v7775 = vadd.f32 %v7774, %v6934
        %v7776 = vadd.f32 %v7775, %v6942
        %v7777 = vadd.f32 %v7776, %v6950
        %v7778 = vadd.f32 %v7777, %v6958
        %v7779 = vadd.f32 %v7778, %v6966
        %v7780 = vadd.f32 %v7779, %v6974
        %v7781 = vadd.f32 %v7780, %v6982
        %v7782 = vadd.f32 %v7781, %v6990
        %v7783 = vadd.f32 %v7782, %v6998
        %v7784 = vadd.f32 %v7783, %v7006
        %v7785 = vadd.f32 %v7784, %v7014
        %v7786 = vadd.f32 %v7785, %v7022
        %v7787 = vadd.f32 %v7786, %v7030
        %v7788 = vadd.f32 %v7787, %v7038
        %v7789 = vadd.f32 %v7788, %v7046
        %v7790 = vadd.f32 %v7789, %v7054
        %v7791 = vadd.f32 %v7790, %v7062
        %v7792 = vadd.f32 %v7791, %v7070
        %v7793 = vadd.f32 %v7792, %v7078
        %v7794 = vadd.f32 %v7793, %v7086
        %v7795 = vadd.f32 %v7794, %v7094
        %v7796 = vadd.f32 %v7795, %v7102
        %v7797 = vadd.f32 %v7796, %v7110
        %v7798 = vadd.f32 %v7797, %v7118
        %v7799 = vadd.f32 %v7798, %v7126
        %v7800 = vadd.f32 %v7799, %v7134
        %v7801 = vadd.f32 %v7800, %v7142
        %v7802 = vadd.f32 %v7801, %v7150
        %v7803 = vadd.f32 %v7802, %v7158
        %v7804 = vadd.f32 %v7803, %v7166
        %v7805 = vadd.f32 %v7804, %v7174
        %v7806 = vadd.f32 %v7805, %v7182
        %v7807 = vadd.f32 %v7806, %v7190
        %v7808 = vadd.f32 %v7807, %v7198
        %v7809 = vadd.f32 %v7808, %v7206
        %v7810 = vadd.f32 %v7809, %v7214
        %v7811 = vadd.f32 %v7810, %v7222
        %v7812 = vadd.f32 %v7811, %v7230
        %v7813 = vadd.f32 %v7812, %v7238
        %v7814 = vadd.f32 %v7813, %v7246
        %v7815 = vadd.f32 %v7814, %v7254
        %v7816 = vadd.f32 %v7815, %v7262
        %v7817 = vadd.f32 %v7816, %v7270
        %v7818 = vadd.f32 %v7817, %v7278
        %v7819 = vadd.f32 %v7818, %v7286
        %v7820 = vadd.f32 %v7819, %v7294
        %v7821 = vadd.f32 %v7820, %v7302
        %v7822 = vadd.f32 %v7821, %v7310
        %v7823 = vadd.f32 %v7822, %v7318
        %v7824 = vadd.f32 %v7823, %v7326
        %v7825 = vadd.f32 %v7824, %v7334
        %v7826 = vadd.f32 %v7825, %v7342
        %v7827 = vadd.f32 %v7826, %v7350
        %v7828 = vadd.f32 %v7827, %v7358
        %v7829 = vadd.f32 %v7828, %v7366
        %v7830 = vadd.f32 %v7829, %v7374
        %v7831 = vadd.f32 %v7830, %v7382
        %v7832 = vadd.f32 %v7831, %v7390
        %v7833 = vadd.f32 %v7832, %v7398
        %v7834 = vadd.f32 %v7833, %v7406
        %v7835 = vadd.f32 %v7834, %v7414
        %v7836 = vadd.f32 %v7835, %v7422
        %v7837 = vadd.f32 %v7836, %v7430
        %v7838 = vadd.f32 %v7837, %v7438
        %v7839 = vadd.f32 %v7838, %v7446
        %v7840 = vadd.f32 %v7839, %v7454
        %v7841 = vadd.f32 %v6439, %v6447
        %v7842 = vadd.f32 %v7841, %v6455
        %v7843 = vadd.f32 %v7842, %v6463
        %v7844 = vadd.f32 %v7843, %v6471
        %v7845 = vadd.f32 %v7844, %v6479
        %v7846 = vadd.f32 %v7845, %v6487
        %v7847 = vadd.f32 %v7846, %v6495
        %v7848 = vadd.f32 %v7847, %v6503
        %v7849 = vadd.f32 %v7848, %v6511
        %v7850 = vadd.f32 %v7849, %v6519
        %v7851 = vadd.f32 %v7850, %v6527
        %v7852 = vadd.f32 %v7851, %v6535
        %v7853 = vadd.f32 %v7852, %v6543
        %v7854 = vadd.f32 %v7853, %v6551
        %v7855 = vadd.f32 %v7854, %v6559
        %v7856 = vadd.f32 %v7855, %v6567
        %v7857 = vadd.f32 %v7856, %v6575
        %v7858 = vadd.f32 %v7857, %v6583
        %v7859 = vadd.f32 %v7858, %v6591
        %v7860 = vadd.f32 %v7859, %v6599
        %v7861 = vadd.f32 %v7860, %v6607
        %v7862 = vadd.f32 %v7861, %v6615
        %v7863 = vadd.f32 %v7862, %v6623
        %v7864 = vadd.f32 %v7863, %v6631
        %v7865 = vadd.f32 %v7864, %v6639
        %v7866 = vadd.f32 %v7865, %v6647
        %v7867 = vadd.f32 %v7866, %v6655
        %v7868 = vadd.f32 %v7867, %v6663
        %v7869 = vadd.f32 %v7868, %v6671
        %v7870 = vadd.f32 %v7869, %v6679
        %v7871 = vadd.f32 %v7870, %v6687
        %v7872 = vadd.f32 %v7871, %v6695
        %v7873 = vadd.f32 %v7872, %v6703
        %v7874 = vadd.f32 %v7873, %v6711
        %v7875 = vadd.f32 %v7874, %v6719
        %v7876 = vadd.f32 %v7875, %v6727
        %v7877 = vadd.f32 %v7876, %v6735
        %v7878 = vadd.f32 %v7877, %v6743
        %v7879 = vadd.f32 %v7878, %v6751
        %v7880 = vadd.f32 %v7879, %v6759
        %v7881 = vadd.f32 %v7880, %v6767
        %v7882 = vadd.f32 %v7881, %v6775
        %v7883 = vadd.f32 %v7882, %v6783
        %v7884 = vadd.f32 %v7883, %v6791
        %v7885 = vadd.f32 %v7884, %v6799
        %v7886 = vadd.f32 %v7885, %v6807
        %v7887 = vadd.f32 %v7886, %v6815
        %v7888 = vadd.f32 %v7887, %v6823
        %v7889 = vadd.f32 %v7888, %v6831
        %v7890 = vadd.f32 %v7889, %v6839
        %v7891 = vadd.f32 %v7890, %v6847
        %v7892 = vadd.f32 %v7891, %v6855
        %v7893 = vadd.f32 %v7892, %v6863
        %v7894 = vadd.f32 %v7893, %v6871
        %v7895 = vadd.f32 %v7894, %v6879
        %v7896 = vadd.f32 %v7895, %v6887
        %v7897 = vadd.f32 %v7896, %v6895
        %v7898 = vadd.f32 %v7897, %v6903
        %v7899 = vadd.f32 %v7898, %v6911
        %v7900 = vadd.f32 %v7899, %v6919
        %v7901 = vadd.f32 %v7900, %v6927
        %v7902 = vadd.f32 %v7901, %v6935
        %v7903 = vadd.f32 %v7902, %v6943
        %v7904 = vadd.f32 %v7903, %v6951
        %v7905 = vadd.f32 %v7904, %v6959
        %v7906 = vadd.f32 %v7905, %v6967
        %v7907 = vadd.f32 %v7906, %v6975
        %v7908 = vadd.f32 %v7907, %v6983
        %v7909 = vadd.f32 %v7908, %v6991
        %v7910 = vadd.f32 %v7909, %v6999
        %v7911 = vadd.f32 %v7910, %v7007
        %v7912 = vadd.f32 %v7911, %v7015
        %v7913 = vadd.f32 %v7912, %v7023
        %v7914 = vadd.f32 %v7913, %v7031
        %v7915 = vadd.f32 %v7914, %v7039
        %v7916 = vadd.f32 %v7915, %v7047
        %v7917 = vadd.f32 %v7916, %v7055
        %v7918 = vadd.f32 %v7917, %v7063
        %v7919 = vadd.f32 %v7918, %v7071
        %v7920 = vadd.f32 %v7919, %v7079
        %v7921 = vadd.f32 %v7920, %v7087
        %v7922 = vadd.f32 %v7921, %v7095
        %v7923 = vadd.f32 %v7922, %v7103
        %v7924 = vadd.f32 %v7923, %v7111
        %v7925 = vadd.f32 %v7924, %v7119
        %v7926 = vadd.f32 %v7925, %v7127
        %v7927 = vadd.f32 %v7926, %v7135
        %v7928 = vadd.f32 %v7927, %v7143
        %v7929 = vadd.f32 %v7928, %v7151
        %v7930 = vadd.f32 %v7929, %v7159
        %v7931 = vadd.f32 %v7930, %v7167
        %v7932 = vadd.f32 %v7931, %v7175
        %v7933 = vadd.f32 %v7932, %v7183
        %v7934 = vadd.f32 %v7933, %v7191
        %v7935 = vadd.f32 %v7934, %v7199
        %v7936 = vadd.f32 %v7935, %v7207
        %v7937 = vadd.f32 %v7936, %v7215
        %v7938 = vadd.f32 %v7937, %v7223
        %v7939 = vadd.f32 %v7938, %v7231
        %v7940 = vadd.f32 %v7939, %v7239
        %v7941 = vadd.f32 %v7940, %v7247
        %v7942 = vadd.f32 %v7941, %v7255
        %v7943 = vadd.f32 %v7942, %v7263
        %v7944 = vadd.f32 %v7943, %v7271
        %v7945 = vadd.f32 %v7944, %v7279
        %v7946 = vadd.f32 %v7945, %v7287
        %v7947 = vadd.f32 %v7946, %v7295
        %v7948 = vadd.f32 %v7947, %v7303
        %v7949 = vadd.f32 %v7948, %v7311
        %v7950 = vadd.f32 %v7949, %v7319
        %v7951 = vadd.f32 %v7950, %v7327
        %v7952 = vadd.f32 %v7951, %v7335
        %v7953 = vadd.f32 %v7952, %v7343
        %v7954 = vadd.f32 %v7953, %v7351
        %v7955 = vadd.f32 %v7954, %v7359
        %v7956 = vadd.f32 %v7955, %v7367
        %v7957 = vadd.f32 %v7956, %v7375
        %v7958 = vadd.f32 %v7957, %v7383
        %v7959 = vadd.f32 %v7958, %v7391
        %v7960 = vadd.f32 %v7959, %v7399
        %v7961 = vadd.f32 %v7960, %v7407
        %v7962 = vadd.f32 %v7961, %v7415
        %v7963 = vadd.f32 %v7962, %v7423
        %v7964 = vadd.f32 %v7963, %v7431
        %v7965 = vadd.f32 %v7964, %v7439
        %v7966 = vadd.f32 %v7965, %v7447
        %v7967 = vadd.f32 %v7966, %v7455
        %v7968 = vadd.f32 %v6440, %v6448
        %v7969 = vadd.f32 %v7968, %v6456
        %v7970 = vadd.f32 %v7969, %v6464
        %v7971 = vadd.f32 %v7970, %v6472
        %v7972 = vadd.f32 %v7971, %v6480
        %v7973 = vadd.f32 %v7972, %v6488
        %v7974 = vadd.f32 %v7973, %v6496
        %v7975 = vadd.f32 %v7974, %v6504
        %v7976 = vadd.f32 %v7975, %v6512
        %v7977 = vadd.f32 %v7976, %v6520
        %v7978 = vadd.f32 %v7977, %v6528
        %v7979 = vadd.f32 %v7978, %v6536
        %v7980 = vadd.f32 %v7979, %v6544
        %v7981 = vadd.f32 %v7980, %v6552
        %v7982 = vadd.f32 %v7981, %v6560
        %v7983 = vadd.f32 %v7982, %v6568
        %v7984 = vadd.f32 %v7983, %v6576
        %v7985 = vadd.f32 %v7984, %v6584
        %v7986 = vadd.f32 %v7985, %v6592
        %v7987 = vadd.f32 %v7986, %v6600
        %v7988 = vadd.f32 %v7987, %v6608
        %v7989 = vadd.f32 %v7988, %v6616
        %v7990 = vadd.f32 %v7989, %v6624
        %v7991 = vadd.f32 %v7990, %v6632
        %v7992 = vadd.f32 %v7991, %v6640
        %v7993 = vadd.f32 %v7992, %v6648
        %v7994 = vadd.f32 %v7993, %v6656
        %v7995 = vadd.f32 %v7994, %v6664
        %v7996 = vadd.f32 %v7995, %v6672
        %v7997 = vadd.f32 %v7996, %v6680
        %v7998 = vadd.f32 %v7997, %v6688
        %v7999 = vadd.f32 %v7998, %v6696
        %v8000 = vadd.f32 %v7999, %v6704
        %v8001 = vadd.f32 %v8000, %v6712
        %v8002 = vadd.f32 %v8001, %v6720
        %v8003 = vadd.f32 %v8002, %v6728
        %v8004 = vadd.f32 %v8003, %v6736
        %v8005 = vadd.f32 %v8004, %v6744
        %v8006 = vadd.f32 %v8005, %v6752
        %v8007 = vadd.f32 %v8006, %v6760
        %v8008 = vadd.f32 %v8007, %v6768
        %v8009 = vadd.f32 %v8008, %v6776
        %v8010 = vadd.f32 %v8009, %v6784
        %v8011 = vadd.f32 %v8010, %v6792
        %v8012 = vadd.f32 %v8011, %v6800
        %v8013 = vadd.f32 %v8012, %v6808
        %v8014 = vadd.f32 %v8013, %v6816
        %v8015 = vadd.f32 %v8014, %v6824
        %v8016 = vadd.f32 %v8015, %v6832
        %v8017 = vadd.f32 %v8016, %v6840
        %v8018 = vadd.f32 %v8017, %v6848
        %v8019 = vadd.f32 %v8018, %v6856
        %v8020 = vadd.f32 %v8019, %v6864
        %v8021 = vadd.f32 %v8020, %v6872
        %v8022 = vadd.f32 %v8021, %v6880
        %v8023 = vadd.f32 %v8022, %v6888
        %v8024 = vadd.f32 %v8023, %v6896
        %v8025 = vadd.f32 %v8024, %v6904
        %v8026 = vadd.f32 %v8025, %v6912
        %v8027 = vadd.f32 %v8026, %v6920
        %v8028 = vadd.f32 %v8027, %v6928
        %v8029 = vadd.f32 %v8028, %v6936
        %v8030 = vadd.f32 %v8029, %v6944
        %v8031 = vadd.f32 %v8030, %v6952
        %v8032 = vadd.f32 %v8031, %v6960
        %v8033 = vadd.f32 %v8032, %v6968
        %v8034 = vadd.f32 %v8033, %v6976
        %v8035 = vadd.f32 %v8034, %v6984
        %v8036 = vadd.f32 %v8035, %v6992
        %v8037 = vadd.f32 %v8036, %v7000
        %v8038 = vadd.f32 %v8037, %v7008
        %v8039 = vadd.f32 %v8038, %v7016
        %v8040 = vadd.f32 %v8039, %v7024
        %v8041 = vadd.f32 %v8040, %v7032
        %v8042 = vadd.f32 %v8041, %v7040
        %v8043 = vadd.f32 %v8042, %v7048
        %v8044 = vadd.f32 %v8043, %v7056
        %v8045 = vadd.f32 %v8044, %v7064
        %v8046 = vadd.f32 %v8045, %v7072
        %v8047 = vadd.f32 %v8046, %v7080
        %v8048 = vadd.f32 %v8047, %v7088
        %v8049 = vadd.f32 %v8048, %v7096
        %v8050 = vadd.f32 %v8049, %v7104
        %v8051 = vadd.f32 %v8050, %v7112
        %v8052 = vadd.f32 %v8051, %v7120
        %v8053 = vadd.f32 %v8052, %v7128
        %v8054 = vadd.f32 %v8053, %v7136
        %v8055 = vadd.f32 %v8054, %v7144
        %v8056 = vadd.f32 %v8055, %v7152
        %v8057 = vadd.f32 %v8056, %v7160
        %v8058 = vadd.f32 %v8057, %v7168
        %v8059 = vadd.f32 %v8058, %v7176
        %v8060 = vadd.f32 %v8059, %v7184
        %v8061 = vadd.f32 %v8060, %v7192
        %v8062 = vadd.f32 %v8061, %v7200
        %v8063 = vadd.f32 %v8062, %v7208
        %v8064 = vadd.f32 %v8063, %v7216
        %v8065 = vadd.f32 %v8064, %v7224
        %v8066 = vadd.f32 %v8065, %v7232
        %v8067 = vadd.f32 %v8066, %v7240
        %v8068 = vadd.f32 %v8067, %v7248
        %v8069 = vadd.f32 %v8068, %v7256
        %v8070 = vadd.f32 %v8069, %v7264
        %v8071 = vadd.f32 %v8070, %v7272
        %v8072 = vadd.f32 %v8071, %v7280
        %v8073 = vadd.f32 %v8072, %v7288
        %v8074 = vadd.f32 %v8073, %v7296
        %v8075 = vadd.f32 %v8074, %v7304
        %v8076 = vadd.f32 %v8075, %v7312
        %v8077 = vadd.f32 %v8076, %v7320
        %v8078 = vadd.f32 %v8077, %v7328
        %v8079 = vadd.f32 %v8078, %v7336
        %v8080 = vadd.f32 %v8079, %v7344
        %v8081 = vadd.f32 %v8080, %v7352
        %v8082 = vadd.f32 %v8081, %v7360
        %v8083 = vadd.f32 %v8082, %v7368
        %v8084 = vadd.f32 %v8083, %v7376
        %v8085 = vadd.f32 %v8084, %v7384
        %v8086 = vadd.f32 %v8085, %v7392
        %v8087 = vadd.f32 %v8086, %v7400
        %v8088 = vadd.f32 %v8087, %v7408
        %v8089 = vadd.f32 %v8088, %v7416
        %v8090 = vadd.f32 %v8089, %v7424
        %v8091 = vadd.f32 %v8090, %v7432
        %v8092 = vadd.f32 %v8091, %v7440
        %v8093 = vadd.f32 %v8092, %v7448
        %v8094 = vadd.f32 %v8093, %v7456
        %v8095 = vadd.f32 %v6441, %v6449
        %v8096 = vadd.f32 %v8095, %v6457
        %v8097 = vadd.f32 %v8096, %v6465
        %v8098 = vadd.f32 %v8097, %v6473
        %v8099 = vadd.f32 %v8098, %v6481
        %v8100 = vadd.f32 %v8099, %v6489
        %v8101 = vadd.f32 %v8100, %v6497
        %v8102 = vadd.f32 %v8101, %v6505
        %v8103 = vadd.f32 %v8102, %v6513
        %v8104 = vadd.f32 %v8103, %v6521
        %v8105 = vadd.f32 %v8104, %v6529
        %v8106 = vadd.f32 %v8105, %v6537
        %v8107 = vadd.f32 %v8106, %v6545
        %v8108 = vadd.f32 %v8107, %v6553
        %v8109 = vadd.f32 %v8108, %v6561
        %v8110 = vadd.f32 %v8109, %v6569
        %v8111 = vadd.f32 %v8110, %v6577
        %v8112 = vadd.f32 %v8111, %v6585
        %v8113 = vadd.f32 %v8112, %v6593
        %v8114 = vadd.f32 %v8113, %v6601
        %v8115 = vadd.f32 %v8114, %v6609
        %v8116 = vadd.f32 %v8115, %v6617
        %v8117 = vadd.f32 %v8116, %v6625
        %v8118 = vadd.f32 %v8117, %v6633
        %v8119 = vadd.f32 %v8118, %v6641
        %v8120 = vadd.f32 %v8119, %v6649
        %v8121 = vadd.f32 %v8120, %v6657
        %v8122 = vadd.f32 %v8121, %v6665
        %v8123 = vadd.f32 %v8122, %v6673
        %v8124 = vadd.f32 %v8123, %v6681
        %v8125 = vadd.f32 %v8124, %v6689
        %v8126 = vadd.f32 %v8125, %v6697
        %v8127 = vadd.f32 %v8126, %v6705
        %v8128 = vadd.f32 %v8127, %v6713
        %v8129 = vadd.f32 %v8128, %v6721
        %v8130 = vadd.f32 %v8129, %v6729
        %v8131 = vadd.f32 %v8130, %v6737
        %v8132 = vadd.f32 %v8131, %v6745
        %v8133 = vadd.f32 %v8132, %v6753
        %v8134 = vadd.f32 %v8133, %v6761
        %v8135 = vadd.f32 %v8134, %v6769
        %v8136 = vadd.f32 %v8135, %v6777
        %v8137 = vadd.f32 %v8136, %v6785
        %v8138 = vadd.f32 %v8137, %v6793
        %v8139 = vadd.f32 %v8138, %v6801
        %v8140 = vadd.f32 %v8139, %v6809
        %v8141 = vadd.f32 %v8140, %v6817
        %v8142 = vadd.f32 %v8141, %v6825
        %v8143 = vadd.f32 %v8142, %v6833
        %v8144 = vadd.f32 %v8143, %v6841
        %v8145 = vadd.f32 %v8144, %v6849
        %v8146 = vadd.f32 %v8145, %v6857
        %v8147 = vadd.f32 %v8146, %v6865
        %v8148 = vadd.f32 %v8147, %v6873
        %v8149 = vadd.f32 %v8148, %v6881
        %v8150 = vadd.f32 %v8149, %v6889
        %v8151 = vadd.f32 %v8150, %v6897
        %v8152 = vadd.f32 %v8151, %v6905
        %v8153 = vadd.f32 %v8152, %v6913
        %v8154 = vadd.f32 %v8153, %v6921
        %v8155 = vadd.f32 %v8154, %v6929
        %v8156 = vadd.f32 %v8155, %v6937
        %v8157 = vadd.f32 %v8156, %v6945
        %v8158 = vadd.f32 %v8157, %v6953
        %v8159 = vadd.f32 %v8158, %v6961
        %v8160 = vadd.f32 %v8159, %v6969
        %v8161 = vadd.f32 %v8160, %v6977
        %v8162 = vadd.f32 %v8161, %v6985
        %v8163 = vadd.f32 %v8162, %v6993
        %v8164 = vadd.f32 %v8163, %v7001
        %v8165 = vadd.f32 %v8164, %v7009
        %v8166 = vadd.f32 %v8165, %v7017
        %v8167 = vadd.f32 %v8166, %v7025
        %v8168 = vadd.f32 %v8167, %v7033
        %v8169 = vadd.f32 %v8168, %v7041
        %v8170 = vadd.f32 %v8169, %v7049
        %v8171 = vadd.f32 %v8170, %v7057
        %v8172 = vadd.f32 %v8171, %v7065
        %v8173 = vadd.f32 %v8172, %v7073
        %v8174 = vadd.f32 %v8173, %v7081
        %v8175 = vadd.f32 %v8174, %v7089
        %v8176 = vadd.f32 %v8175, %v7097
        %v8177 = vadd.f32 %v8176, %v7105
        %v8178 = vadd.f32 %v8177, %v7113
        %v8179 = vadd.f32 %v8178, %v7121
        %v8180 = vadd.f32 %v8179, %v7129
        %v8181 = vadd.f32 %v8180, %v7137
        %v8182 = vadd.f32 %v8181, %v7145
        %v8183 = vadd.f32 %v8182, %v7153
        %v8184 = vadd.f32 %v8183, %v7161
        %v8185 = vadd.f32 %v8184, %v7169
        %v8186 = vadd.f32 %v8185, %v7177
        %v8187 = vadd.f32 %v8186, %v7185
        %v8188 = vadd.f32 %v8187, %v7193
        %v8189 = vadd.f32 %v8188, %v7201
        %v8190 = vadd.f32 %v8189, %v7209
        %v8191 = vadd.f32 %v8190, %v7217
        %v8192 = vadd.f32 %v8191, %v7225
        %v8193 = vadd.f32 %v8192, %v7233
        %v8194 = vadd.f32 %v8193, %v7241
        %v8195 = vadd.f32 %v8194, %v7249
        %v8196 = vadd.f32 %v8195, %v7257
        %v8197 = vadd.f32 %v8196, %v7265
        %v8198 = vadd.f32 %v8197, %v7273
        %v8199 = vadd.f32 %v8198, %v7281
        %v8200 = vadd.f32 %v8199, %v7289
        %v8201 = vadd.f32 %v8200, %v7297
        %v8202 = vadd.f32 %v8201, %v7305
        %v8203 = vadd.f32 %v8202, %v7313
        %v8204 = vadd.f32 %v8203, %v7321
        %v8205 = vadd.f32 %v8204, %v7329
        %v8206 = vadd.f32 %v8205, %v7337
        %v8207 = vadd.f32 %v8206, %v7345
        %v8208 = vadd.f32 %v8207, %v7353
        %v8209 = vadd.f32 %v8208, %v7361
        %v8210 = vadd.f32 %v8209, %v7369
        %v8211 = vadd.f32 %v8210, %v7377
        %v8212 = vadd.f32 %v8211, %v7385
        %v8213 = vadd.f32 %v8212, %v7393
        %v8214 = vadd.f32 %v8213, %v7401
        %v8215 = vadd.f32 %v8214, %v7409
        %v8216 = vadd.f32 %v8215, %v7417
        %v8217 = vadd.f32 %v8216, %v7425
        %v8218 = vadd.f32 %v8217, %v7433
        %v8219 = vadd.f32 %v8218, %v7441
        %v8220 = vadd.f32 %v8219, %v7449
        %v8221 = vadd.f32 %v8220, %v7457
        %v8222 = vadd.f32 %v6442, %v6450
        %v8223 = vadd.f32 %v8222, %v6458
        %v8224 = vadd.f32 %v8223, %v6466
        %v8225 = vadd.f32 %v8224, %v6474
        %v8226 = vadd.f32 %v8225, %v6482
        %v8227 = vadd.f32 %v8226, %v6490
        %v8228 = vadd.f32 %v8227, %v6498
        %v8229 = vadd.f32 %v8228, %v6506
        %v8230 = vadd.f32 %v8229, %v6514
        %v8231 = vadd.f32 %v8230, %v6522
        %v8232 = vadd.f32 %v8231, %v6530
        %v8233 = vadd.f32 %v8232, %v6538
        %v8234 = vadd.f32 %v8233, %v6546
        %v8235 = vadd.f32 %v8234, %v6554
        %v8236 = vadd.f32 %v8235, %v6562
        %v8237 = vadd.f32 %v8236, %v6570
        %v8238 = vadd.f32 %v8237, %v6578
        %v8239 = vadd.f32 %v8238, %v6586
        %v8240 = vadd.f32 %v8239, %v6594
        %v8241 = vadd.f32 %v8240, %v6602
        %v8242 = vadd.f32 %v8241, %v6610
        %v8243 = vadd.f32 %v8242, %v6618
        %v8244 = vadd.f32 %v8243, %v6626
        %v8245 = vadd.f32 %v8244, %v6634
        %v8246 = vadd.f32 %v8245, %v6642
        %v8247 = vadd.f32 %v8246, %v6650
        %v8248 = vadd.f32 %v8247, %v6658
        %v8249 = vadd.f32 %v8248, %v6666
        %v8250 = vadd.f32 %v8249, %v6674
        %v8251 = vadd.f32 %v8250, %v6682
        %v8252 = vadd.f32 %v8251, %v6690
        %v8253 = vadd.f32 %v8252, %v6698
        %v8254 = vadd.f32 %v8253, %v6706
        %v8255 = vadd.f32 %v8254, %v6714
        %v8256 = vadd.f32 %v8255, %v6722
        %v8257 = vadd.f32 %v8256, %v6730
        %v8258 = vadd.f32 %v8257, %v6738
        %v8259 = vadd.f32 %v8258, %v6746
        %v8260 = vadd.f32 %v8259, %v6754
        %v8261 = vadd.f32 %v8260, %v6762
        %v8262 = vadd.f32 %v8261, %v6770
        %v8263 = vadd.f32 %v8262, %v6778
        %v8264 = vadd.f32 %v8263, %v6786
        %v8265 = vadd.f32 %v8264, %v6794
        %v8266 = vadd.f32 %v8265, %v6802
        %v8267 = vadd.f32 %v8266, %v6810
        %v8268 = vadd.f32 %v8267, %v6818
        %v8269 = vadd.f32 %v8268, %v6826
        %v8270 = vadd.f32 %v8269, %v6834
        %v8271 = vadd.f32 %v8270, %v6842
        %v8272 = vadd.f32 %v8271, %v6850
        %v8273 = vadd.f32 %v8272, %v6858
        %v8274 = vadd.f32 %v8273, %v6866
        %v8275 = vadd.f32 %v8274, %v6874
        %v8276 = vadd.f32 %v8275, %v6882
        %v8277 = vadd.f32 %v8276, %v6890
        %v8278 = vadd.f32 %v8277, %v6898
        %v8279 = vadd.f32 %v8278, %v6906
        %v8280 = vadd.f32 %v8279, %v6914
        %v8281 = vadd.f32 %v8280, %v6922
        %v8282 = vadd.f32 %v8281, %v6930
        %v8283 = vadd.f32 %v8282, %v6938
        %v8284 = vadd.f32 %v8283, %v6946
        %v8285 = vadd.f32 %v8284, %v6954
        %v8286 = vadd.f32 %v8285, %v6962
        %v8287 = vadd.f32 %v8286, %v6970
        %v8288 = vadd.f32 %v8287, %v6978
        %v8289 = vadd.f32 %v8288, %v6986
        %v8290 = vadd.f32 %v8289, %v6994
        %v8291 = vadd.f32 %v8290, %v7002
        %v8292 = vadd.f32 %v8291, %v7010
        %v8293 = vadd.f32 %v8292, %v7018
        %v8294 = vadd.f32 %v8293, %v7026
        %v8295 = vadd.f32 %v8294, %v7034
        %v8296 = vadd.f32 %v8295, %v7042
        %v8297 = vadd.f32 %v8296, %v7050
        %v8298 = vadd.f32 %v8297, %v7058
        %v8299 = vadd.f32 %v8298, %v7066
        %v8300 = vadd.f32 %v8299, %v7074
        %v8301 = vadd.f32 %v8300, %v7082
        %v8302 = vadd.f32 %v8301, %v7090
        %v8303 = vadd.f32 %v8302, %v7098
        %v8304 = vadd.f32 %v8303, %v7106
        %v8305 = vadd.f32 %v8304, %v7114
        %v8306 = vadd.f32 %v8305, %v7122
        %v8307 = vadd.f32 %v8306, %v7130
        %v8308 = vadd.f32 %v8307, %v7138
        %v8309 = vadd.f32 %v8308, %v7146
        %v8310 = vadd.f32 %v8309, %v7154
        %v8311 = vadd.f32 %v8310, %v7162
        %v8312 = vadd.f32 %v8311, %v7170
        %v8313 = vadd.f32 %v8312, %v7178
        %v8314 = vadd.f32 %v8313, %v7186
        %v8315 = vadd.f32 %v8314, %v7194
        %v8316 = vadd.f32 %v8315, %v7202
        %v8317 = vadd.f32 %v8316, %v7210
        %v8318 = vadd.f32 %v8317, %v7218
        %v8319 = vadd.f32 %v8318, %v7226
        %v8320 = vadd.f32 %v8319, %v7234
        %v8321 = vadd.f32 %v8320, %v7242
        %v8322 = vadd.f32 %v8321, %v7250
        %v8323 = vadd.f32 %v8322, %v7258
        %v8324 = vadd.f32 %v8323, %v7266
        %v8325 = vadd.f32 %v8324, %v7274
        %v8326 = vadd.f32 %v8325, %v7282
        %v8327 = vadd.f32 %v8326, %v7290
        %v8328 = vadd.f32 %v8327, %v7298
        %v8329 = vadd.f32 %v8328, %v7306
        %v8330 = vadd.f32 %v8329, %v7314
        %v8331 = vadd.f32 %v8330, %v7322
        %v8332 = vadd.f32 %v8331, %v7330
        %v8333 = vadd.f32 %v8332, %v7338
        %v8334 = vadd.f32 %v8333, %v7346
        %v8335 = vadd.f32 %v8334, %v7354
        %v8336 = vadd.f32 %v8335, %v7362
        %v8337 = vadd.f32 %v8336, %v7370
        %v8338 = vadd.f32 %v8337, %v7378
        %v8339 = vadd.f32 %v8338, %v7386
        %v8340 = vadd.f32 %v8339, %v7394
        %v8341 = vadd.f32 %v8340, %v7402
        %v8342 = vadd.f32 %v8341, %v7410
        %v8343 = vadd.f32 %v8342, %v7418
        %v8344 = vadd.f32 %v8343, %v7426
        %v8345 = vadd.f32 %v8344, %v7434
        %v8346 = vadd.f32 %v8345, %v7442
        %v8347 = vadd.f32 %v8346, %v7450
        %v8348 = vadd.f32 %v8347, %v7458
        %v8349 = vadd.f32 %v6443, %v6451
        %v8350 = vadd.f32 %v8349, %v6459
        %v8351 = vadd.f32 %v8350, %v6467
        %v8352 = vadd.f32 %v8351, %v6475
        %v8353 = vadd.f32 %v8352, %v6483
        %v8354 = vadd.f32 %v8353, %v6491
        %v8355 = vadd.f32 %v8354, %v6499
        %v8356 = vadd.f32 %v8355, %v6507
        %v8357 = vadd.f32 %v8356, %v6515
        %v8358 = vadd.f32 %v8357, %v6523
        %v8359 = vadd.f32 %v8358, %v6531
        %v8360 = vadd.f32 %v8359, %v6539
        %v8361 = vadd.f32 %v8360, %v6547
        %v8362 = vadd.f32 %v8361, %v6555
        %v8363 = vadd.f32 %v8362, %v6563
        %v8364 = vadd.f32 %v8363, %v6571
        %v8365 = vadd.f32 %v8364, %v6579
        %v8366 = vadd.f32 %v8365, %v6587
        %v8367 = vadd.f32 %v8366, %v6595
        %v8368 = vadd.f32 %v8367, %v6603
        %v8369 = vadd.f32 %v8368, %v6611
        %v8370 = vadd.f32 %v8369, %v6619
        %v8371 = vadd.f32 %v8370, %v6627
        %v8372 = vadd.f32 %v8371, %v6635
        %v8373 = vadd.f32 %v8372, %v6643
        %v8374 = vadd.f32 %v8373, %v6651
        %v8375 = vadd.f32 %v8374, %v6659
        %v8376 = vadd.f32 %v8375, %v6667
        %v8377 = vadd.f32 %v8376, %v6675
        %v8378 = vadd.f32 %v8377, %v6683
        %v8379 = vadd.f32 %v8378, %v6691
        %v8380 = vadd.f32 %v8379, %v6699
        %v8381 = vadd.f32 %v8380, %v6707
        %v8382 = vadd.f32 %v8381, %v6715
        %v8383 = vadd.f32 %v8382, %v6723
        %v8384 = vadd.f32 %v8383, %v6731
        %v8385 = vadd.f32 %v8384, %v6739
        %v8386 = vadd.f32 %v8385, %v6747
        %v8387 = vadd.f32 %v8386, %v6755
        %v8388 = vadd.f32 %v8387, %v6763
        %v8389 = vadd.f32 %v8388, %v6771
        %v8390 = vadd.f32 %v8389, %v6779
        %v8391 = vadd.f32 %v8390, %v6787
        %v8392 = vadd.f32 %v8391, %v6795
        %v8393 = vadd.f32 %v8392, %v6803
        %v8394 = vadd.f32 %v8393, %v6811
        %v8395 = vadd.f32 %v8394, %v6819
        %v8396 = vadd.f32 %v8395, %v6827
        %v8397 = vadd.f32 %v8396, %v6835
        %v8398 = vadd.f32 %v8397, %v6843
        %v8399 = vadd.f32 %v8398, %v6851
        %v8400 = vadd.f32 %v8399, %v6859
        %v8401 = vadd.f32 %v8400, %v6867
        %v8402 = vadd.f32 %v8401, %v6875
        %v8403 = vadd.f32 %v8402, %v6883
        %v8404 = vadd.f32 %v8403, %v6891
        %v8405 = vadd.f32 %v8404, %v6899
        %v8406 = vadd.f32 %v8405, %v6907
        %v8407 = vadd.f32 %v8406, %v6915
        %v8408 = vadd.f32 %v8407, %v6923
        %v8409 = vadd.f32 %v8408, %v6931
        %v8410 = vadd.f32 %v8409, %v6939
        %v8411 = vadd.f32 %v8410, %v6947
        %v8412 = vadd.f32 %v8411, %v6955
        %v8413 = vadd.f32 %v8412, %v6963
        %v8414 = vadd.f32 %v8413, %v6971
        %v8415 = vadd.f32 %v8414, %v6979
        %v8416 = vadd.f32 %v8415, %v6987
        %v8417 = vadd.f32 %v8416, %v6995
        %v8418 = vadd.f32 %v8417, %v7003
        %v8419 = vadd.f32 %v8418, %v7011
        %v8420 = vadd.f32 %v8419, %v7019
        %v8421 = vadd.f32 %v8420, %v7027
        %v8422 = vadd.f32 %v8421, %v7035
        %v8423 = vadd.f32 %v8422, %v7043
        %v8424 = vadd.f32 %v8423, %v7051
        %v8425 = vadd.f32 %v8424, %v7059
        %v8426 = vadd.f32 %v8425, %v7067
        %v8427 = vadd.f32 %v8426, %v7075
        %v8428 = vadd.f32 %v8427, %v7083
        %v8429 = vadd.f32 %v8428, %v7091
        %v8430 = vadd.f32 %v8429, %v7099
        %v8431 = vadd.f32 %v8430, %v7107
        %v8432 = vadd.f32 %v8431, %v7115
        %v8433 = vadd.f32 %v8432, %v7123
        %v8434 = vadd.f32 %v8433, %v7131
        %v8435 = vadd.f32 %v8434, %v7139
        %v8436 = vadd.f32 %v8435, %v7147
        %v8437 = vadd.f32 %v8436, %v7155
        %v8438 = vadd.f32 %v8437, %v7163
        %v8439 = vadd.f32 %v8438, %v7171
        %v8440 = vadd.f32 %v8439, %v7179
        %v8441 = vadd.f32 %v8440, %v7187
        %v8442 = vadd.f32 %v8441, %v7195
        %v8443 = vadd.f32 %v8442, %v7203
        %v8444 = vadd.f32 %v8443, %v7211
        %v8445 = vadd.f32 %v8444, %v7219
        %v8446 = vadd.f32 %v8445, %v7227
        %v8447 = vadd.f32 %v8446, %v7235
        %v8448 = vadd.f32 %v8447, %v7243
        %v8449 = vadd.f32 %v8448, %v7251
        %v8450 = vadd.f32 %v8449, %v7259
        %v8451 = vadd.f32 %v8450, %v7267
        %v8452 = vadd.f32 %v8451, %v7275
        %v8453 = vadd.f32 %v8452, %v7283
        %v8454 = vadd.f32 %v8453, %v7291
        %v8455 = vadd.f32 %v8454, %v7299
        %v8456 = vadd.f32 %v8455, %v7307
        %v8457 = vadd.f32 %v8456, %v7315
        %v8458 = vadd.f32 %v8457, %v7323
        %v8459 = vadd.f32 %v8458, %v7331
        %v8460 = vadd.f32 %v8459, %v7339
        %v8461 = vadd.f32 %v8460, %v7347
        %v8462 = vadd.f32 %v8461, %v7355
        %v8463 = vadd.f32 %v8462, %v7363
        %v8464 = vadd.f32 %v8463, %v7371
        %v8465 = vadd.f32 %v8464, %v7379
        %v8466 = vadd.f32 %v8465, %v7387
        %v8467 = vadd.f32 %v8466, %v7395
        %v8468 = vadd.f32 %v8467, %v7403
        %v8469 = vadd.f32 %v8468, %v7411
        %v8470 = vadd.f32 %v8469, %v7419
        %v8471 = vadd.f32 %v8470, %v7427
        %v8472 = vadd.f32 %v8471, %v7435
        %v8473 = vadd.f32 %v8472, %v7443
        %v8474 = vadd.f32 %v8473, %v7451
        %v8475 = vadd.f32 %v8474, %v7459
        %v8476 = vld [vmem:[%s255] sm:$0xff]
        %v8477 = vld [vmem:[%s255 + $0x8] sm:$0xff]
        %v8478 = vld [vmem:[%s255 + $0x10] sm:$0xff]
        %v8479 = vld [vmem:[%s255 + $0x18] sm:$0xff]
        %v8480 = vld [vmem:[%s255 + $0x20] sm:$0xff]
        %v8481 = vld [vmem:[%s255 + $0x28] sm:$0xff]
        %v8482 = vld [vmem:[%s255 + $0x30] sm:$0xff]
        %v8483 = vld [vmem:[%s255 + $0x38] sm:$0xff]
        %v8484 = vadd.f32 %v8476, %v7586
        %v8485 = vadd.f32 %v8477, %v7713
        %v8486 = vadd.f32 %v8478, %v7840
        %v8487 = vadd.f32 %v8479, %v7967
        %v8488 = vadd.f32 %v8480, %v8094
        %v8489 = vadd.f32 %v8481, %v8221
        %v8490 = vadd.f32 %v8482, %v8348
        %v8491 = vadd.f32 %v8483, %v8475
        %8492 = vst [vmem:[%s255] sm:$0xff] %v8484
        %8493 = vst [vmem:[%s255 + $0x8] sm:$0xff] %v8485
        %8494 = vst [vmem:[%s255 + $0x10] sm:$0xff] %v8486
        %8495 = vst [vmem:[%s255 + $0x18] sm:$0xff] %v8487
        %8496 = vst [vmem:[%s255 + $0x20] sm:$0xff] %v8488
        %8497 = vst [vmem:[%s255 + $0x28] sm:$0xff] %v8489
        %8498 = vst [vmem:[%s255 + $0x30] sm:$0xff] %v8490
        %8499 = vst [vmem:[%s255 + $0x38] sm:$0xff] %v8491
        %s8500 = sand.u32 %s110, 1
        %s8501 = scalar_lea.sflag [#allocation4], %s8500
        %s8502 = sand.u32 %s110, 1
        %s8503 = smul.addr %s8502, 64
        %s8504 = scalar_lea.vmem [#allocation7], %s8503
        // Predicated region
        $region41: #{tpu_custom_call.1} parent=27 // pred_check
          %p8505 = pneg %p120
        $region42: #{tpu_custom_call.1} parent=27 // pred_check_branch
          %8507 = sbr.rel (%p8505) target = $region44
        $region43: #{tpu_custom_call.1} parent=27 // pred_region
          %8509 = vsyncadd %s8501, 0
          %s8510 = smul.addr %s26, 8
          %s8511 = smul.addr %s8510, 8
          %s8512 = scalar_lea.hbm %s2, %s8511
          %s8513 = sshll.u32 %s8504, 4
          %s8514 = int_to_ptr.vmem [resolvable:$true] %s8513
          %s8515 = sshll.u32 %s8512, 4
          %s8516 = int_to_ptr.hbm [resolvable:$true] %s8515
          %8521 = dma.vmem_to_hbm [thread:$0]  %s8514, 1024, %s8516, %s8501, 128, 128, 8
        $region44: #{tpu_custom_call.1} parent=27 // pred_fallthru
          _
      $region28: #{tpu_custom_call.1} parent=5 // pred_fallthru
        _
      %p8522 = scmp.le.s32.totalorder 2, %s17
      // Predicated region
      $region45: #{tpu_custom_call.1} parent=5 // pred_check
        %p8523 = pneg %p8522
      $region46: #{tpu_custom_call.1} parent=5 // pred_check_branch
        %8525 = sbr.rel (%p8523) target = $region48
      $region47: #{tpu_custom_call.1} parent=5 // pred_region
        %s8526 = ssub.s32 %s17, 2
        // Predicated region
        $region49: #{tpu_custom_call.1} parent=47 // pred_check
          %p8527 = pneg %p126
        $region50: #{tpu_custom_call.1} parent=47 // pred_check_branch
          %8529 = sbr.rel (%p8527) target = $region52
        $region51: #{tpu_custom_call.1} parent=47 // pred_region
          %s8530 = sand.u32 %s111, 1
          %s8531 = scalar_lea.sflag [#allocation4], %s8530
          %s8532 = sand.u32 %s111, 1
          %s8533 = smul.addr %s8532, 64
          %s8534 = scalar_lea.vmem [#allocation7], %s8533
          %8536 = dma.done %s8531, 1024
        $region52: #{tpu_custom_call.1} parent=47 // pred_fallthru
          _
      $region48: #{tpu_custom_call.1} parent=5 // pred_fallthru
        _
    $region6: #{tpu_custom_call.1} parent=1 // loop_footer
      %s21 = sadd.s32 1, %s17
    $region7: #{tpu_custom_call.1} parent=1 // loop_footer_branch
      %16 = sbr.rel target = $region3
    $region8: #{tpu_custom_call.1} parent=1 // loop_exit
      _
    %8537 = vsyncpa [#allocation3], 1
    %s8538 = scalar_lea.sflag [#allocation3], 1
    %8539 = vsyncpa %s8538, 1
    %8540 = vsyncpa [#allocation6], 1
    %s8541 = scalar_lea.sflag [#allocation6], 1
    %8542 = vsyncpa %s8541, 1
    %8543 = vsyncpa [#allocation4], 1
    %s8544 = scalar_lea.sflag [#allocation4], 1
    %8545 = vsyncpa %s8544, 1

</llo_original>
